<compile_context>
chip_gen: v7x
topology: tpu7x:2x2x1
jax: 0.10.0
libtpu: 0.0.40
codegen_flags: <defaults>
</compile_context>

<pallas_src>
import jax
import jax.numpy as jnp
from jax.experimental import pallas as pl
from jax.experimental.pallas import tpu as pltpu


def _lstm_kernel(x_ref,      # (T, Bp, I)   I == 1, f32
                 wih0_ref,   # (I, 4H)      f32 (VPU path)
                 whh0_ref,   # (H, 4H)      bf16 (MXU weight)
                 b0_ref,     # (1, 4H)      f32  (b_ih0 + b_hh0)
                 w1_ref,     # (2H, 4H)     bf16 [wih1; whh1] stacked
                 b1_ref,     # (1, 4H)      f32  (b_ih1 + b_hh1)
                 wfc_ref,    # (1, H)       f32
                 bfc_ref,    # (1, 1)       f32
                 out_ref,    # (Bp, 1)      f32
                 hcat_ref):  # VMEM scratch (Bp, 2H) bf16 — MXU staging buffer
    T, Bp, _ = x_ref.shape
    H = whh0_ref.shape[0]

    # ---- hoisted one-time broadcasts (JAX does not CSE broadcast_in_dim) ----
    wih0_b = jnp.broadcast_to(wih0_ref[...], (Bp, 4 * H))
    b0_b = jnp.broadcast_to(b0_ref[...], (Bp, 4 * H))
    b1_b = jnp.broadcast_to(b1_ref[...], (Bp, 4 * H))

    def sigmoid(v):
        # tanh form: 1 EUP push + cheap VPU mul/add (vs exp + reciprocal).
        return 0.5 * jnp.tanh(0.5 * v) + 0.5

    def act(gates, c):
        # PyTorch gate order: i, f, g, o
        i_g = sigmoid(gates[:, 0 * H:1 * H])
        f_g = sigmoid(gates[:, 1 * H:2 * H])
        g_g = jnp.tanh(gates[:, 2 * H:3 * H])
        o_g = sigmoid(gates[:, 3 * H:4 * H])
        c_new = f_g * c + i_g * g_g
        h_new = o_g * jnp.tanh(c_new)
        return h_new, c_new

    def l0_step(t, h1, c1):
        # Layer 0: rank-1 (I=1) input projection on the VPU + one K=H bf16
        # MXU push with f32 accumulation.
        g0 = (x_ref[t] * wih0_b + b0_b
              + jnp.dot(h1.astype(jnp.bfloat16), whh0_ref[...],
                        preferred_element_type=jnp.float32))
        return act(g0, c1)

    def l1_step(h1, h2, c2):
        # Layer 1: fused K=2H bf16 MXU push. The lane-aligned staging scratch
        # (h1 -> lanes [0:H], h2 -> lanes [H:2H]) replaces a per-step
        # concatenate copy with two plain stores.
        hcat_ref[:, :H] = h1.astype(jnp.bfloat16)
        hcat_ref[:, H:] = h2.astype(jnp.bfloat16)
        g1 = jnp.dot(hcat_ref[...], w1_ref[...],
                     preferred_element_type=jnp.float32) + b1_b
        return act(g1, c2)

    z = jnp.zeros((Bp, H), jnp.float32)

    # One-step layer skew: iteration t computes layer-1 for step t and
    # layer-0 for step t+1 (only shared dependency is h1(t)), so the two
    # MXU+EUP chains overlap across the loop body.
    h1, c1 = l0_step(0, z, z)                       # prologue: layer-0, step 0

    def body(t, carry):
        h1, c1, h2, c2 = carry
        h2n, c2n = l1_step(h1, h2, c2)              # layer-1, step t
        h1n, c1n = l0_step(t + 1, h1, c1)           # layer-0, step t+1
        return h1n, c1n, h2n, c2n

    unroll = True if T <= 32 else 8                 # bounded unroll for long T
    h1, c1, h2, c2 = jax.lax.fori_loop(0, T - 1, body, (h1, c1, z, z),
                                       unroll=unroll)
    h2, _ = l1_step(h1, h2, c2)                     # epilogue: layer-1, last step

    # FC head: VPU multiply + lane reduction (avoids an N=1 MXU push + drain).
    out_ref[...] = (jnp.sum(h2 * wfc_ref[...], axis=-1, keepdims=True)
                    + bfc_ref[...])


@jax.jit
def lstm_model_forward(x, params):
    """x: (B, T, I) float32 (batch_first, as in PyTorch). Returns (B, 1)."""
    B, T, I = x.shape
    H = params["whh0"].shape[0]

    # Pad batch to the f32 sublane tile (8 rows) so gate vregs / MXU result
    # rows / stores are dense.  Padded rows are discarded at the end.
    Bp = ((B + 7) // 8) * 8
    x_tbi = jnp.transpose(x, (1, 0, 2))                    # (T, B, I)
    if Bp != B:
        x_tbi = jnp.pad(x_tbi, ((0, 0), (0, Bp - B), (0, 0)))

    args = (x_tbi,
            params["wih0"], params["whh0"], params["b0"],
            params["w1"], params["b1"],
            params["wfc"], params["bfc"])

    # Resident VMEM footprint (input + weights + staging scratch + output);
    # only pass an explicit limit when it might exceed the default scoped
    # budget (32 MiB on v6e/v7x, 16 MiB on v5e).
    needed = (sum(a.size * a.dtype.itemsize for a in args)
              + Bp * 2 * H * 2 + Bp * 4)
    compiler_kwargs = {}
    if needed > 24 * 1024 * 1024:
        compiler_kwargs["vmem_limit_bytes"] = int(needed * 2 + (8 << 20))

    use_grid = (Bp >= 16) and (Bp % 16 == 0)
    if use_grid:
        # v7x: split the (independent-per-row) recurrence over the two
        # TensorCores via a parallel batch-chunk grid axis.  Harmless on
        # single-TC chips.
        nb = 2
        bb = Bp // nb
        out = pl.pallas_call(
            _lstm_kernel,
            out_shape=jax.ShapeDtypeStruct((Bp, 1), jnp.float32),
            grid=(nb,),
            in_specs=[pl.BlockSpec((T, bb, I), lambda i: (0, i, 0))] +
                     [pl.BlockSpec(a.shape, lambda i: (0, 0)) for a in args[1:]],
            out_specs=pl.BlockSpec((bb, 1), lambda i: (i, 0)),
            scratch_shapes=[pltpu.VMEM((bb, 2 * H), jnp.bfloat16)],
            compiler_params=pltpu.CompilerParams(
                dimension_semantics=("parallel",), **compiler_kwargs),
        )(*args)
    else:
        vmem = pl.BlockSpec(memory_space=pltpu.MemorySpace.VMEM)
        cp = (pltpu.CompilerParams(**compiler_kwargs)
              if compiler_kwargs else None)
        out = pl.pallas_call(
            _lstm_kernel,
            out_shape=jax.ShapeDtypeStruct((Bp, 1), jnp.float32),
            in_specs=[vmem] * 8,
            out_specs=vmem,
            scratch_shapes=[pltpu.VMEM((Bp, 2 * H), jnp.bfloat16)],
            compiler_params=cp,
        )(*args)

    return out[:B]


def init_params(key, input_size=1, hidden_size=128):
    """Deterministic init mimicking PyTorch's uniform(-1/sqrt(H), 1/sqrt(H)).

    Weights are pre-transposed to (in, 4H) / (H, 4H); layer-1's input and
    hidden weights are pre-stacked into one (2H, 4H) matrix.  MXU weights
    (whh0, w1) are stored in bf16; everything else stays f32.
    """
    H, I = hidden_size, input_size
    s = 1.0 / jnp.sqrt(jnp.float32(H))
    keys = jax.random.split(key, 10)
    u = lambda k, shape: jax.random.uniform(k, shape, jnp.float32, -s, s)

    wih0 = u(keys[0], (I, 4 * H))                                    # f32 (VPU)
    whh0 = u(keys[1], (H, 4 * H)).astype(jnp.bfloat16)               # bf16 (MXU)
    b0 = u(keys[2], (1, 4 * H)) + u(keys[3], (1, 4 * H))             # b_ih0+b_hh0
    wih1 = u(keys[4], (H, 4 * H))
    whh1 = u(keys[5], (H, 4 * H))
    b1 = u(keys[6], (1, 4 * H)) + u(keys[7], (1, 4 * H))             # b_ih1+b_hh1
    w1 = jnp.concatenate([wih1, whh1], axis=0).astype(jnp.bfloat16)  # (2H,4H)
    wfc = u(keys[8], (1, H))
    bfc = u(keys[9], (1, 1))
    return dict(wih0=wih0, whh0=whh0, b0=b0, w1=w1, b1=b1, wfc=wfc, bfc=bfc)


def _reference_forward(x, params):
    """Pure-JAX f32 reference (same math, weights upcast) for sanity check."""
    B, T, I = x.shape
    H = params["whh0"].shape[0]
    wih0 = params["wih0"]
    whh0 = params["whh0"].astype(jnp.float32)
    w1 = params["w1"].astype(jnp.float32)

    def act(g, c):
        i = jax.nn.sigmoid(g[:, 0 * H:1 * H])
        f = jax.nn.sigmoid(g[:, 1 * H:2 * H])
        gg = jnp.tanh(g[:, 2 * H:3 * H])
        o = jax.nn.sigmoid(g[:, 3 * H:4 * H])
        c_new = f * c + i * gg
        return o * jnp.tanh(c_new), c_new

    def step(carry, x_t):
        h1, c1, h2, c2 = carry
        g0 = x_t @ wih0 + h1 @ whh0 + params["b0"]
        h1, c1 = act(g0, c1)
        g1 = jnp.concatenate([h1, h2], axis=-1) @ w1 + params["b1"]
        h2, c2 = act(g1, c2)
        return (h1, c1, h2, c2), None

    z = jnp.zeros((B, H), jnp.float32)
    (h1, c1, h2, c2), _ = jax.lax.scan(step, (z, z, z, z),
                                       jnp.transpose(x, (1, 0, 2)))
    return jnp.sum(h2 * params["wfc"], axis=-1, keepdims=True) + params["bfc"]


if __name__ == "__main__":
    key = jax.random.PRNGKey(0)
    k_param, k_x = jax.random.split(key)

    B, T, I, H = 2, 8, 1, 128
    params = init_params(k_param, input_size=I, hidden_size=H)
    x = jax.random.normal(k_x, (B, T, I), dtype=jnp.float32)

    out = jax.block_until_ready(lstm_model_forward(x, params))

    ref = _reference_forward(x, params)
    assert out.shape == (B, 1), out.shape
    # bf16 MXU operands -> relax tolerance vs. the f32 reference.
    assert jnp.allclose(out, ref, atol=2e-2, rtol=2e-2), (out, ref)
    print("KERNEL_OK")
</pallas_src>

<mosaic_0001>
module attributes {stable_mosaic.version = 11 : i64} {
  func.func @_lstm_kernel(%arg0: memref<8x8x1xf32, #tpu.memory_space<vmem>>, %arg1: memref<1x512xf32, #tpu.memory_space<vmem>>, %arg2: memref<128x512xbf16, #tpu.memory_space<vmem>>, %arg3: memref<1x512xf32, #tpu.memory_space<vmem>>, %arg4: memref<256x512xbf16, #tpu.memory_space<vmem>>, %arg5: memref<1x512xf32, #tpu.memory_space<vmem>>, %arg6: memref<1x128xf32, #tpu.memory_space<vmem>>, %arg7: memref<1x1xf32, #tpu.memory_space<vmem>>, %arg8: memref<8x1xf32, #tpu.memory_space<vmem>>, %arg9: memref<8x256xbf16, #tpu.memory_space<vmem>>) attributes {dimension_semantics = [], scalar_prefetch = 0 : i64, scratch_operands = 1 : i64, tpu.core_type = #tpu.core_type<tc>} {
    %c0 = arith.constant 0 : index
    %c0_0 = arith.constant 0 : index
    %0 = vector.load %arg1[%c0, %c0_0] : memref<1x512xf32, #tpu.memory_space<vmem>>, vector<1x512xf32>
    %1 = vector.shape_cast %0 : vector<1x512xf32> to vector<1x512xf32>
    %2 = vector.broadcast %1 : vector<1x512xf32> to vector<8x512xf32>
    %c0_1 = arith.constant 0 : index
    %c0_2 = arith.constant 0 : index
    %3 = vector.load %arg3[%c0_1, %c0_2] : memref<1x512xf32, #tpu.memory_space<vmem>>, vector<1x512xf32>
    %4 = vector.shape_cast %3 : vector<1x512xf32> to vector<1x512xf32>
    %5 = vector.broadcast %4 : vector<1x512xf32> to vector<8x512xf32>
    %c0_3 = arith.constant 0 : index
    %c0_4 = arith.constant 0 : index
    %6 = vector.load %arg5[%c0_3, %c0_4] : memref<1x512xf32, #tpu.memory_space<vmem>>, vector<1x512xf32>
    %7 = vector.shape_cast %6 : vector<1x512xf32> to vector<1x512xf32>
    %8 = vector.broadcast %7 : vector<1x512xf32> to vector<8x512xf32>
    %cst = arith.constant 0.000000e+00 : f32
    %9 = vector.broadcast %cst : f32 to vector<8x128xf32>
    %c0_5 = arith.constant 0 : index
    %c0_6 = arith.constant 0 : index
    %c0_7 = arith.constant 0 : index
    %10 = vector.load %arg0[%c0_5, %c0_6, %c0_7] : memref<8x8x1xf32, #tpu.memory_space<vmem>>, vector<1x8x1xf32>
    %11 = vector.shape_cast %10 : vector<1x8x1xf32> to vector<8x1xf32>
    %12 = vector.broadcast %11 : vector<8x1xf32> to vector<8x512xf32>
    %13 = arith.mulf %12, %2 : vector<8x512xf32>
    %14 = arith.addf %13, %5 : vector<8x512xf32>
    %15 = arith.truncf %9 : vector<8x128xf32> to vector<8x128xbf16>
    %c0_8 = arith.constant 0 : index
    %c0_9 = arith.constant 0 : index
    %16 = vector.load %arg2[%c0_8, %c0_9] : memref<128x512xbf16, #tpu.memory_space<vmem>>, vector<128x512xbf16>
    %cst_10 = arith.constant dense<0.000000e+00> : vector<8x512xf32>
    %17 = tpu.matmul %15, %16, %cst_10 {dimension_numbers = #tpu.dot_dimension_numbers<[1], [0], [0], [1], [0, 0, 1, 1], [], []>} : vector<8x128xbf16>, vector<128x512xbf16>, vector<8x512xf32> -> vector<8x512xf32>
    %18 = arith.addf %14, %17 : vector<8x512xf32>
    %19 = vector.extract_strided_slice %18 {offsets = [0, 0], sizes = [8, 128], strides = [1, 1]} : vector<8x512xf32> to vector<8x128xf32>
    %cst_11 = arith.constant 5.000000e-01 : f32
    %20 = vector.broadcast %cst_11 : f32 to vector<8x128xf32>
    %21 = arith.mulf %20, %19 : vector<8x128xf32>
    %22 = math.tanh %21 : vector<8x128xf32>
    %cst_12 = arith.constant 5.000000e-01 : f32
    %23 = vector.broadcast %cst_12 : f32 to vector<8x128xf32>
    %24 = arith.mulf %23, %22 : vector<8x128xf32>
    %cst_13 = arith.constant 5.000000e-01 : f32
    %25 = vector.broadcast %cst_13 : f32 to vector<8x128xf32>
    %26 = arith.addf %24, %25 : vector<8x128xf32>
    %27 = vector.extract_strided_slice %18 {offsets = [0, 128], sizes = [8, 128], strides = [1, 1]} : vector<8x512xf32> to vector<8x128xf32>
    %cst_14 = arith.constant 5.000000e-01 : f32
    %28 = vector.broadcast %cst_14 : f32 to vector<8x128xf32>
    %29 = arith.mulf %28, %27 : vector<8x128xf32>
    %30 = math.tanh %29 : vector<8x128xf32>
    %cst_15 = arith.constant 5.000000e-01 : f32
    %31 = vector.broadcast %cst_15 : f32 to vector<8x128xf32>
    %32 = arith.mulf %31, %30 : vector<8x128xf32>
    %cst_16 = arith.constant 5.000000e-01 : f32
    %33 = vector.broadcast %cst_16 : f32 to vector<8x128xf32>
    %34 = arith.addf %32, %33 : vector<8x128xf32>
    %35 = vector.extract_strided_slice %18 {offsets = [0, 256], sizes = [8, 128], strides = [1, 1]} : vector<8x512xf32> to vector<8x128xf32>
    %36 = math.tanh %35 : vector<8x128xf32>
    %37 = vector.extract_strided_slice %18 {offsets = [0, 384], sizes = [8, 128], strides = [1, 1]} : vector<8x512xf32> to vector<8x128xf32>
    %cst_17 = arith.constant 5.000000e-01 : f32
    %38 = vector.broadcast %cst_17 : f32 to vector<8x128xf32>
    %39 = arith.mulf %38, %37 : vector<8x128xf32>
    %40 = math.tanh %39 : vector<8x128xf32>
    %cst_18 = arith.constant 5.000000e-01 : f32
    %41 = vector.broadcast %cst_18 : f32 to vector<8x128xf32>
    %42 = arith.mulf %41, %40 : vector<8x128xf32>
    %cst_19 = arith.constant 5.000000e-01 : f32
    %43 = vector.broadcast %cst_19 : f32 to vector<8x128xf32>
    %44 = arith.addf %42, %43 : vector<8x128xf32>
    %45 = arith.mulf %34, %9 : vector<8x128xf32>
    %46 = arith.mulf %26, %36 : vector<8x128xf32>
    %47 = arith.addf %45, %46 : vector<8x128xf32>
    %48 = math.tanh %47 : vector<8x128xf32>
    %49 = arith.mulf %44, %48 : vector<8x128xf32>
    %c0_i32 = arith.constant 0 : i32
    %50 = arith.truncf %49 : vector<8x128xf32> to vector<8x128xbf16>
    %c0_20 = arith.constant 0 : index
    %c0_21 = arith.constant 0 : index
    %51 = vector.load %arg9[%c0_20, %c0_21] : memref<8x256xbf16, #tpu.memory_space<vmem>>, vector<8x128xbf16>
    tpu.vector_store %arg9[%c0_20, %c0_21], %50 {strides = array<i32>} : memref<8x256xbf16, #tpu.memory_space<vmem>>, vector<8x128xbf16>,
    %52 = arith.truncf %9 : vector<8x128xf32> to vector<8x128xbf16>
    %c0_22 = arith.constant 0 : index
    %c128 = arith.constant 128 : index
    %53 = vector.load %arg9[%c0_22, %c128] : memref<8x256xbf16, #tpu.memory_space<vmem>>, vector<8x128xbf16>
    tpu.vector_store %arg9[%c0_22, %c128], %52 {strides = array<i32>} : memref<8x256xbf16, #tpu.memory_space<vmem>>, vector<8x128xbf16>,
    %c0_23 = arith.constant 0 : index
    %c0_24 = arith.constant 0 : index
    %54 = vector.load %arg9[%c0_23, %c0_24] : memref<8x256xbf16, #tpu.memory_space<vmem>>, vector<8x256xbf16>
    %c0_25 = arith.constant 0 : index
    %c0_26 = arith.constant 0 : index
    %55 = vector.load %arg4[%c0_25, %c0_26] : memref<256x512xbf16, #tpu.memory_space<vmem>>, vector<256x512xbf16>
    %cst_27 = arith.constant dense<0.000000e+00> : vector<8x512xf32>
    %56 = tpu.matmul %54, %55, %cst_27 {dimension_numbers = #tpu.dot_dimension_numbers<[1], [0], [0], [1], [0, 0, 1, 1], [], []>} : vector<8x256xbf16>, vector<256x512xbf16>, vector<8x512xf32> -> vector<8x512xf32>
    %57 = arith.addf %56, %8 : vector<8x512xf32>
    %58 = vector.extract_strided_slice %57 {offsets = [0, 0], sizes = [8, 128], strides = [1, 1]} : vector<8x512xf32> to vector<8x128xf32>
    %cst_28 = arith.constant 5.000000e-01 : f32
    %59 = vector.broadcast %cst_28 : f32 to vector<8x128xf32>
    %60 = arith.mulf %59, %58 : vector<8x128xf32>
    %61 = math.tanh %60 : vector<8x128xf32>
    %cst_29 = arith.constant 5.000000e-01 : f32
    %62 = vector.broadcast %cst_29 : f32 to vector<8x128xf32>
    %63 = arith.mulf %62, %61 : vector<8x128xf32>
    %cst_30 = arith.constant 5.000000e-01 : f32
    %64 = vector.broadcast %cst_30 : f32 to vector<8x128xf32>
    %65 = arith.addf %63, %64 : vector<8x128xf32>
    %66 = vector.extract_strided_slice %57 {offsets = [0, 128], sizes = [8, 128], strides = [1, 1]} : vector<8x512xf32> to vector<8x128xf32>
    %cst_31 = arith.constant 5.000000e-01 : f32
    %67 = vector.broadcast %cst_31 : f32 to vector<8x128xf32>
    %68 = arith.mulf %67, %66 : vector<8x128xf32>
    %69 = math.tanh %68 : vector<8x128xf32>
    %cst_32 = arith.constant 5.000000e-01 : f32
    %70 = vector.broadcast %cst_32 : f32 to vector<8x128xf32>
    %71 = arith.mulf %70, %69 : vector<8x128xf32>
    %cst_33 = arith.constant 5.000000e-01 : f32
    %72 = vector.broadcast %cst_33 : f32 to vector<8x128xf32>
    %73 = arith.addf %71, %72 : vector<8x128xf32>
    %74 = vector.extract_strided_slice %57 {offsets = [0, 256], sizes = [8, 128], strides = [1, 1]} : vector<8x512xf32> to vector<8x128xf32>
    %75 = math.tanh %74 : vector<8x128xf32>
    %76 = vector.extract_strided_slice %57 {offsets = [0, 384], sizes = [8, 128], strides = [1, 1]} : vector<8x512xf32> to vector<8x128xf32>
    %cst_34 = arith.constant 5.000000e-01 : f32
    %77 = vector.broadcast %cst_34 : f32 to vector<8x128xf32>
    %78 = arith.mulf %77, %76 : vector<8x128xf32>
    %79 = math.tanh %78 : vector<8x128xf32>
    %cst_35 = arith.constant 5.000000e-01 : f32
    %80 = vector.broadcast %cst_35 : f32 to vector<8x128xf32>
    %81 = arith.mulf %80, %79 : vector<8x128xf32>
    %cst_36 = arith.constant 5.000000e-01 : f32
    %82 = vector.broadcast %cst_36 : f32 to vector<8x128xf32>
    %83 = arith.addf %81, %82 : vector<8x128xf32>
    %84 = arith.mulf %73, %9 : vector<8x128xf32>
    %85 = arith.mulf %65, %75 : vector<8x128xf32>
    %86 = arith.addf %84, %85 : vector<8x128xf32>
    %87 = math.tanh %86 : vector<8x128xf32>
    %88 = arith.mulf %83, %87 : vector<8x128xf32>
    %c1_i32 = arith.constant 1 : i32
    %89 = arith.addi %c0_i32, %c1_i32 : i32
    %90 = arith.index_cast %89 : i32 to index
    %c0_37 = arith.constant 0 : index
    %c0_38 = arith.constant 0 : index
    %91 = vector.load %arg0[%90, %c0_37, %c0_38] : memref<8x8x1xf32, #tpu.memory_space<vmem>>, vector<1x8x1xf32>
    %92 = vector.shape_cast %91 : vector<1x8x1xf32> to vector<8x1xf32>
    %93 = vector.broadcast %92 : vector<8x1xf32> to vector<8x512xf32>
    %94 = arith.mulf %93, %2 : vector<8x512xf32>
    %95 = arith.addf %94, %5 : vector<8x512xf32>
    %96 = arith.truncf %49 : vector<8x128xf32> to vector<8x128xbf16>
    %c0_39 = arith.constant 0 : index
    %c0_40 = arith.constant 0 : index
    %97 = vector.load %arg2[%c0_39, %c0_40] : memref<128x512xbf16, #tpu.memory_space<vmem>>, vector<128x512xbf16>
    %cst_41 = arith.constant dense<0.000000e+00> : vector<8x512xf32>
    %98 = tpu.matmul %96, %97, %cst_41 {dimension_numbers = #tpu.dot_dimension_numbers<[1], [0], [0], [1], [0, 0, 1, 1], [], []>} : vector<8x128xbf16>, vector<128x512xbf16>, vector<8x512xf32> -> vector<8x512xf32>
    %99 = arith.addf %95, %98 : vector<8x512xf32>
    %100 = vector.extract_strided_slice %99 {offsets = [0, 0], sizes = [8, 128], strides = [1, 1]} : vector<8x512xf32> to vector<8x128xf32>
    %cst_42 = arith.constant 5.000000e-01 : f32
    %101 = vector.broadcast %cst_42 : f32 to vector<8x128xf32>
    %102 = arith.mulf %101, %100 : vector<8x128xf32>
    %103 = math.tanh %102 : vector<8x128xf32>
    %cst_43 = arith.constant 5.000000e-01 : f32
    %104 = vector.broadcast %cst_43 : f32 to vector<8x128xf32>
    %105 = arith.mulf %104, %103 : vector<8x128xf32>
    %cst_44 = arith.constant 5.000000e-01 : f32
    %106 = vector.broadcast %cst_44 : f32 to vector<8x128xf32>
    %107 = arith.addf %105, %106 : vector<8x128xf32>
    %108 = vector.extract_strided_slice %99 {offsets = [0, 128], sizes = [8, 128], strides = [1, 1]} : vector<8x512xf32> to vector<8x128xf32>
    %cst_45 = arith.constant 5.000000e-01 : f32
    %109 = vector.broadcast %cst_45 : f32 to vector<8x128xf32>
    %110 = arith.mulf %109, %108 : vector<8x128xf32>
    %111 = math.tanh %110 : vector<8x128xf32>
    %cst_46 = arith.constant 5.000000e-01 : f32
    %112 = vector.broadcast %cst_46 : f32 to vector<8x128xf32>
    %113 = arith.mulf %112, %111 : vector<8x128xf32>
    %cst_47 = arith.constant 5.000000e-01 : f32
    %114 = vector.broadcast %cst_47 : f32 to vector<8x128xf32>
    %115 = arith.addf %113, %114 : vector<8x128xf32>
    %116 = vector.extract_strided_slice %99 {offsets = [0, 256], sizes = [8, 128], strides = [1, 1]} : vector<8x512xf32> to vector<8x128xf32>
    %117 = math.tanh %116 : vector<8x128xf32>
    %118 = vector.extract_strided_slice %99 {offsets = [0, 384], sizes = [8, 128], strides = [1, 1]} : vector<8x512xf32> to vector<8x128xf32>
    %cst_48 = arith.constant 5.000000e-01 : f32
    %119 = vector.broadcast %cst_48 : f32 to vector<8x128xf32>
    %120 = arith.mulf %119, %118 : vector<8x128xf32>
    %121 = math.tanh %120 : vector<8x128xf32>
    %cst_49 = arith.constant 5.000000e-01 : f32
    %122 = vector.broadcast %cst_49 : f32 to vector<8x128xf32>
    %123 = arith.mulf %122, %121 : vector<8x128xf32>
    %cst_50 = arith.constant 5.000000e-01 : f32
    %124 = vector.broadcast %cst_50 : f32 to vector<8x128xf32>
    %125 = arith.addf %123, %124 : vector<8x128xf32>
    %126 = arith.mulf %115, %47 : vector<8x128xf32>
    %127 = arith.mulf %107, %117 : vector<8x128xf32>
    %128 = arith.addf %126, %127 : vector<8x128xf32>
    %129 = math.tanh %128 : vector<8x128xf32>
    %130 = arith.mulf %125, %129 : vector<8x128xf32>
    %c1_i32_51 = arith.constant 1 : i32
    %131 = arith.truncf %130 : vector<8x128xf32> to vector<8x128xbf16>
    %c0_52 = arith.constant 0 : index
    %c0_53 = arith.constant 0 : index
    %132 = vector.load %arg9[%c0_52, %c0_53] : memref<8x256xbf16, #tpu.memory_space<vmem>>, vector<8x128xbf16>
    tpu.vector_store %arg9[%c0_52, %c0_53], %131 {strides = array<i32>} : memref<8x256xbf16, #tpu.memory_space<vmem>>, vector<8x128xbf16>,
    %133 = arith.truncf %88 : vector<8x128xf32> to vector<8x128xbf16>
    %c0_54 = arith.constant 0 : index
    %c128_55 = arith.constant 128 : index
    %134 = vector.load %arg9[%c0_54, %c128_55] : memref<8x256xbf16, #tpu.memory_space<vmem>>, vector<8x128xbf16>
    tpu.vector_store %arg9[%c0_54, %c128_55], %133 {strides = array<i32>} : memref<8x256xbf16, #tpu.memory_space<vmem>>, vector<8x128xbf16>,
    %c0_56 = arith.constant 0 : index
    %c0_57 = arith.constant 0 : index
    %135 = vector.load %arg9[%c0_56, %c0_57] : memref<8x256xbf16, #tpu.memory_space<vmem>>, vector<8x256xbf16>
    %c0_58 = arith.constant 0 : index
    %c0_59 = arith.constant 0 : index
    %136 = vector.load %arg4[%c0_58, %c0_59] : memref<256x512xbf16, #tpu.memory_space<vmem>>, vector<256x512xbf16>
    %cst_60 = arith.constant dense<0.000000e+00> : vector<8x512xf32>
    %137 = tpu.matmul %135, %136, %cst_60 {dimension_numbers = #tpu.dot_dimension_numbers<[1], [0], [0], [1], [0, 0, 1, 1], [], []>} : vector<8x256xbf16>, vector<256x512xbf16>, vector<8x512xf32> -> vector<8x512xf32>
    %138 = arith.addf %137, %8 : vector<8x512xf32>
    %139 = vector.extract_strided_slice %138 {offsets = [0, 0], sizes = [8, 128], strides = [1, 1]} : vector<8x512xf32> to vector<8x128xf32>
    %cst_61 = arith.constant 5.000000e-01 : f32
    %140 = vector.broadcast %cst_61 : f32 to vector<8x128xf32>
    %141 = arith.mulf %140, %139 : vector<8x128xf32>
    %142 = math.tanh %141 : vector<8x128xf32>
    %cst_62 = arith.constant 5.000000e-01 : f32
    %143 = vector.broadcast %cst_62 : f32 to vector<8x128xf32>
    %144 = arith.mulf %143, %142 : vector<8x128xf32>
    %cst_63 = arith.constant 5.000000e-01 : f32
    %145 = vector.broadcast %cst_63 : f32 to vector<8x128xf32>
    %146 = arith.addf %144, %145 : vector<8x128xf32>
    %147 = vector.extract_strided_slice %138 {offsets = [0, 128], sizes = [8, 128], strides = [1, 1]} : vector<8x512xf32> to vector<8x128xf32>
    %cst_64 = arith.constant 5.000000e-01 : f32
    %148 = vector.broadcast %cst_64 : f32 to vector<8x128xf32>
    %149 = arith.mulf %148, %147 : vector<8x128xf32>
    %150 = math.tanh %149 : vector<8x128xf32>
    %cst_65 = arith.constant 5.000000e-01 : f32
    %151 = vector.broadcast %cst_65 : f32 to vector<8x128xf32>
    %152 = arith.mulf %151, %150 : vector<8x128xf32>
    %cst_66 = arith.constant 5.000000e-01 : f32
    %153 = vector.broadcast %cst_66 : f32 to vector<8x128xf32>
    %154 = arith.addf %152, %153 : vector<8x128xf32>
    %155 = vector.extract_strided_slice %138 {offsets = [0, 256], sizes = [8, 128], strides = [1, 1]} : vector<8x512xf32> to vector<8x128xf32>
    %156 = math.tanh %155 : vector<8x128xf32>
    %157 = vector.extract_strided_slice %138 {offsets = [0, 384], sizes = [8, 128], strides = [1, 1]} : vector<8x512xf32> to vector<8x128xf32>
    %cst_67 = arith.constant 5.000000e-01 : f32
    %158 = vector.broadcast %cst_67 : f32 to vector<8x128xf32>
    %159 = arith.mulf %158, %157 : vector<8x128xf32>
    %160 = math.tanh %159 : vector<8x128xf32>
    %cst_68 = arith.constant 5.000000e-01 : f32
    %161 = vector.broadcast %cst_68 : f32 to vector<8x128xf32>
    %162 = arith.mulf %161, %160 : vector<8x128xf32>
    %cst_69 = arith.constant 5.000000e-01 : f32
    %163 = vector.broadcast %cst_69 : f32 to vector<8x128xf32>
    %164 = arith.addf %162, %163 : vector<8x128xf32>
    %165 = arith.mulf %154, %86 : vector<8x128xf32>
    %166 = arith.mulf %146, %156 : vector<8x128xf32>
    %167 = arith.addf %165, %166 : vector<8x128xf32>
    %168 = math.tanh %167 : vector<8x128xf32>
    %169 = arith.mulf %164, %168 : vector<8x128xf32>
    %c1_i32_70 = arith.constant 1 : i32
    %170 = arith.addi %c1_i32_51, %c1_i32_70 : i32
    %171 = arith.index_cast %170 : i32 to index
    %c0_71 = arith.constant 0 : index
    %c0_72 = arith.constant 0 : index
    %172 = vector.load %arg0[%171, %c0_71, %c0_72] : memref<8x8x1xf32, #tpu.memory_space<vmem>>, vector<1x8x1xf32>
    %173 = vector.shape_cast %172 : vector<1x8x1xf32> to vector<8x1xf32>
    %174 = vector.broadcast %173 : vector<8x1xf32> to vector<8x512xf32>
    %175 = arith.mulf %174, %2 : vector<8x512xf32>
    %176 = arith.addf %175, %5 : vector<8x512xf32>
    %177 = arith.truncf %130 : vector<8x128xf32> to vector<8x128xbf16>
    %c0_73 = arith.constant 0 : index
    %c0_74 = arith.constant 0 : index
    %178 = vector.load %arg2[%c0_73, %c0_74] : memref<128x512xbf16, #tpu.memory_space<vmem>>, vector<128x512xbf16>
    %cst_75 = arith.constant dense<0.000000e+00> : vector<8x512xf32>
    %179 = tpu.matmul %177, %178, %cst_75 {dimension_numbers = #tpu.dot_dimension_numbers<[1], [0], [0], [1], [0, 0, 1, 1], [], []>} : vector<8x128xbf16>, vector<128x512xbf16>, vector<8x512xf32> -> vector<8x512xf32>
    %180 = arith.addf %176, %179 : vector<8x512xf32>
    %181 = vector.extract_strided_slice %180 {offsets = [0, 0], sizes = [8, 128], strides = [1, 1]} : vector<8x512xf32> to vector<8x128xf32>
    %cst_76 = arith.constant 5.000000e-01 : f32
    %182 = vector.broadcast %cst_76 : f32 to vector<8x128xf32>
    %183 = arith.mulf %182, %181 : vector<8x128xf32>
    %184 = math.tanh %183 : vector<8x128xf32>
    %cst_77 = arith.constant 5.000000e-01 : f32
    %185 = vector.broadcast %cst_77 : f32 to vector<8x128xf32>
    %186 = arith.mulf %185, %184 : vector<8x128xf32>
    %cst_78 = arith.constant 5.000000e-01 : f32
    %187 = vector.broadcast %cst_78 : f32 to vector<8x128xf32>
    %188 = arith.addf %186, %187 : vector<8x128xf32>
    %189 = vector.extract_strided_slice %180 {offsets = [0, 128], sizes = [8, 128], strides = [1, 1]} : vector<8x512xf32> to vector<8x128xf32>
    %cst_79 = arith.constant 5.000000e-01 : f32
    %190 = vector.broadcast %cst_79 : f32 to vector<8x128xf32>
    %191 = arith.mulf %190, %189 : vector<8x128xf32>
    %192 = math.tanh %191 : vector<8x128xf32>
    %cst_80 = arith.constant 5.000000e-01 : f32
    %193 = vector.broadcast %cst_80 : f32 to vector<8x128xf32>
    %194 = arith.mulf %193, %192 : vector<8x128xf32>
    %cst_81 = arith.constant 5.000000e-01 : f32
    %195 = vector.broadcast %cst_81 : f32 to vector<8x128xf32>
    %196 = arith.addf %194, %195 : vector<8x128xf32>
    %197 = vector.extract_strided_slice %180 {offsets = [0, 256], sizes = [8, 128], strides = [1, 1]} : vector<8x512xf32> to vector<8x128xf32>
    %198 = math.tanh %197 : vector<8x128xf32>
    %199 = vector.extract_strided_slice %180 {offsets = [0, 384], sizes = [8, 128], strides = [1, 1]} : vector<8x512xf32> to vector<8x128xf32>
    %cst_82 = arith.constant 5.000000e-01 : f32
    %200 = vector.broadcast %cst_82 : f32 to vector<8x128xf32>
    %201 = arith.mulf %200, %199 : vector<8x128xf32>
    %202 = math.tanh %201 : vector<8x128xf32>
    %cst_83 = arith.constant 5.000000e-01 : f32
    %203 = vector.broadcast %cst_83 : f32 to vector<8x128xf32>
    %204 = arith.mulf %203, %202 : vector<8x128xf32>
    %cst_84 = arith.constant 5.000000e-01 : f32
    %205 = vector.broadcast %cst_84 : f32 to vector<8x128xf32>
    %206 = arith.addf %204, %205 : vector<8x128xf32>
    %207 = arith.mulf %196, %128 : vector<8x128xf32>
    %208 = arith.mulf %188, %198 : vector<8x128xf32>
    %209 = arith.addf %207, %208 : vector<8x128xf32>
    %210 = math.tanh %209 : vector<8x128xf32>
    %211 = arith.mulf %206, %210 : vector<8x128xf32>
    %c2_i32 = arith.constant 2 : i32
    %212 = arith.truncf %211 : vector<8x128xf32> to vector<8x128xbf16>
    %c0_85 = arith.constant 0 : index
    %c0_86 = arith.constant 0 : index
    %213 = vector.load %arg9[%c0_85, %c0_86] : memref<8x256xbf16, #tpu.memory_space<vmem>>, vector<8x128xbf16>
    tpu.vector_store %arg9[%c0_85, %c0_86], %212 {strides = array<i32>} : memref<8x256xbf16, #tpu.memory_space<vmem>>, vector<8x128xbf16>,
    %214 = arith.truncf %169 : vector<8x128xf32> to vector<8x128xbf16>
    %c0_87 = arith.constant 0 : index
    %c128_88 = arith.constant 128 : index
    %215 = vector.load %arg9[%c0_87, %c128_88] : memref<8x256xbf16, #tpu.memory_space<vmem>>, vector<8x128xbf16>
    tpu.vector_store %arg9[%c0_87, %c128_88], %214 {strides = array<i32>} : memref<8x256xbf16, #tpu.memory_space<vmem>>, vector<8x128xbf16>,
    %c0_89 = arith.constant 0 : index
    %c0_90 = arith.constant 0 : index
    %216 = vector.load %arg9[%c0_89, %c0_90] : memref<8x256xbf16, #tpu.memory_space<vmem>>, vector<8x256xbf16>
    %c0_91 = arith.constant 0 : index
    %c0_92 = arith.constant 0 : index
    %217 = vector.load %arg4[%c0_91, %c0_92] : memref<256x512xbf16, #tpu.memory_space<vmem>>, vector<256x512xbf16>
    %cst_93 = arith.constant dense<0.000000e+00> : vector<8x512xf32>
    %218 = tpu.matmul %216, %217, %cst_93 {dimension_numbers = #tpu.dot_dimension_numbers<[1], [0], [0], [1], [0, 0, 1, 1], [], []>} : vector<8x256xbf16>, vector<256x512xbf16>, vector<8x512xf32> -> vector<8x512xf32>
    %219 = arith.addf %218, %8 : vector<8x512xf32>
    %220 = vector.extract_strided_slice %219 {offsets = [0, 0], sizes = [8, 128], strides = [1, 1]} : vector<8x512xf32> to vector<8x128xf32>
    %cst_94 = arith.constant 5.000000e-01 : f32
    %221 = vector.broadcast %cst_94 : f32 to vector<8x128xf32>
    %222 = arith.mulf %221, %220 : vector<8x128xf32>
    %223 = math.tanh %222 : vector<8x128xf32>
    %cst_95 = arith.constant 5.000000e-01 : f32
    %224 = vector.broadcast %cst_95 : f32 to vector<8x128xf32>
    %225 = arith.mulf %224, %223 : vector<8x128xf32>
    %cst_96 = arith.constant 5.000000e-01 : f32
    %226 = vector.broadcast %cst_96 : f32 to vector<8x128xf32>
    %227 = arith.addf %225, %226 : vector<8x128xf32>
    %228 = vector.extract_strided_slice %219 {offsets = [0, 128], sizes = [8, 128], strides = [1, 1]} : vector<8x512xf32> to vector<8x128xf32>
    %cst_97 = arith.constant 5.000000e-01 : f32
    %229 = vector.broadcast %cst_97 : f32 to vector<8x128xf32>
    %230 = arith.mulf %229, %228 : vector<8x128xf32>
    %231 = math.tanh %230 : vector<8x128xf32>
    %cst_98 = arith.constant 5.000000e-01 : f32
    %232 = vector.broadcast %cst_98 : f32 to vector<8x128xf32>
    %233 = arith.mulf %232, %231 : vector<8x128xf32>
    %cst_99 = arith.constant 5.000000e-01 : f32
    %234 = vector.broadcast %cst_99 : f32 to vector<8x128xf32>
    %235 = arith.addf %233, %234 : vector<8x128xf32>
    %236 = vector.extract_strided_slice %219 {offsets = [0, 256], sizes = [8, 128], strides = [1, 1]} : vector<8x512xf32> to vector<8x128xf32>
    %237 = math.tanh %236 : vector<8x128xf32>
    %238 = vector.extract_strided_slice %219 {offsets = [0, 384], sizes = [8, 128], strides = [1, 1]} : vector<8x512xf32> to vector<8x128xf32>
    %cst_100 = arith.constant 5.000000e-01 : f32
    %239 = vector.broadcast %cst_100 : f32 to vector<8x128xf32>
    %240 = arith.mulf %239, %238 : vector<8x128xf32>
    %241 = math.tanh %240 : vector<8x128xf32>
    %cst_101 = arith.constant 5.000000e-01 : f32
    %242 = vector.broadcast %cst_101 : f32 to vector<8x128xf32>
    %243 = arith.mulf %242, %241 : vector<8x128xf32>
    %cst_102 = arith.constant 5.000000e-01 : f32
    %244 = vector.broadcast %cst_102 : f32 to vector<8x128xf32>
    %245 = arith.addf %243, %244 : vector<8x128xf32>
    %246 = arith.mulf %235, %167 : vector<8x128xf32>
    %247 = arith.mulf %227, %237 : vector<8x128xf32>
    %248 = arith.addf %246, %247 : vector<8x128xf32>
    %249 = math.tanh %248 : vector<8x128xf32>
    %250 = arith.mulf %245, %249 : vector<8x128xf32>
    %c1_i32_103 = arith.constant 1 : i32
    %251 = arith.addi %c2_i32, %c1_i32_103 : i32
    %252 = arith.index_cast %251 : i32 to index
    %c0_104 = arith.constant 0 : index
    %c0_105 = arith.constant 0 : index
    %253 = vector.load %arg0[%252, %c0_104, %c0_105] : memref<8x8x1xf32, #tpu.memory_space<vmem>>, vector<1x8x1xf32>
    %254 = vector.shape_cast %253 : vector<1x8x1xf32> to vector<8x1xf32>
    %255 = vector.broadcast %254 : vector<8x1xf32> to vector<8x512xf32>
    %256 = arith.mulf %255, %2 : vector<8x512xf32>
    %257 = arith.addf %256, %5 : vector<8x512xf32>
    %258 = arith.truncf %211 : vector<8x128xf32> to vector<8x128xbf16>
    %c0_106 = arith.constant 0 : index
    %c0_107 = arith.constant 0 : index
    %259 = vector.load %arg2[%c0_106, %c0_107] : memref<128x512xbf16, #tpu.memory_space<vmem>>, vector<128x512xbf16>
    %cst_108 = arith.constant dense<0.000000e+00> : vector<8x512xf32>
    %260 = tpu.matmul %258, %259, %cst_108 {dimension_numbers = #tpu.dot_dimension_numbers<[1], [0], [0], [1], [0, 0, 1, 1], [], []>} : vector<8x128xbf16>, vector<128x512xbf16>, vector<8x512xf32> -> vector<8x512xf32>
    %261 = arith.addf %257, %260 : vector<8x512xf32>
    %262 = vector.extract_strided_slice %261 {offsets = [0, 0], sizes = [8, 128], strides = [1, 1]} : vector<8x512xf32> to vector<8x128xf32>
    %cst_109 = arith.constant 5.000000e-01 : f32
    %263 = vector.broadcast %cst_109 : f32 to vector<8x128xf32>
    %264 = arith.mulf %263, %262 : vector<8x128xf32>
    %265 = math.tanh %264 : vector<8x128xf32>
    %cst_110 = arith.constant 5.000000e-01 : f32
    %266 = vector.broadcast %cst_110 : f32 to vector<8x128xf32>
    %267 = arith.mulf %266, %265 : vector<8x128xf32>
    %cst_111 = arith.constant 5.000000e-01 : f32
    %268 = vector.broadcast %cst_111 : f32 to vector<8x128xf32>
    %269 = arith.addf %267, %268 : vector<8x128xf32>
    %270 = vector.extract_strided_slice %261 {offsets = [0, 128], sizes = [8, 128], strides = [1, 1]} : vector<8x512xf32> to vector<8x128xf32>
    %cst_112 = arith.constant 5.000000e-01 : f32
    %271 = vector.broadcast %cst_112 : f32 to vector<8x128xf32>
    %272 = arith.mulf %271, %270 : vector<8x128xf32>
    %273 = math.tanh %272 : vector<8x128xf32>
    %cst_113 = arith.constant 5.000000e-01 : f32
    %274 = vector.broadcast %cst_113 : f32 to vector<8x128xf32>
    %275 = arith.mulf %274, %273 : vector<8x128xf32>
    %cst_114 = arith.constant 5.000000e-01 : f32
    %276 = vector.broadcast %cst_114 : f32 to vector<8x128xf32>
    %277 = arith.addf %275, %276 : vector<8x128xf32>
    %278 = vector.extract_strided_slice %261 {offsets = [0, 256], sizes = [8, 128], strides = [1, 1]} : vector<8x512xf32> to vector<8x128xf32>
    %279 = math.tanh %278 : vector<8x128xf32>
    %280 = vector.extract_strided_slice %261 {offsets = [0, 384], sizes = [8, 128], strides = [1, 1]} : vector<8x512xf32> to vector<8x128xf32>
    %cst_115 = arith.constant 5.000000e-01 : f32
    %281 = vector.broadcast %cst_115 : f32 to vector<8x128xf32>
    %282 = arith.mulf %281, %280 : vector<8x128xf32>
    %283 = math.tanh %282 : vector<8x128xf32>
    %cst_116 = arith.constant 5.000000e-01 : f32
    %284 = vector.broadcast %cst_116 : f32 to vector<8x128xf32>
    %285 = arith.mulf %284, %283 : vector<8x128xf32>
    %cst_117 = arith.constant 5.000000e-01 : f32
    %286 = vector.broadcast %cst_117 : f32 to vector<8x128xf32>
    %287 = arith.addf %285, %286 : vector<8x128xf32>
    %288 = arith.mulf %277, %209 : vector<8x128xf32>
    %289 = arith.mulf %269, %279 : vector<8x128xf32>
    %290 = arith.addf %288, %289 : vector<8x128xf32>
    %291 = math.tanh %290 : vector<8x128xf32>
    %292 = arith.mulf %287, %291 : vector<8x128xf32>
    %c3_i32 = arith.constant 3 : i32
    %293 = arith.truncf %292 : vector<8x128xf32> to vector<8x128xbf16>
    %c0_118 = arith.constant 0 : index
    %c0_119 = arith.constant 0 : index
    %294 = vector.load %arg9[%c0_118, %c0_119] : memref<8x256xbf16, #tpu.memory_space<vmem>>, vector<8x128xbf16>
    tpu.vector_store %arg9[%c0_118, %c0_119], %293 {strides = array<i32>} : memref<8x256xbf16, #tpu.memory_space<vmem>>, vector<8x128xbf16>,
    %295 = arith.truncf %250 : vector<8x128xf32> to vector<8x128xbf16>
    %c0_120 = arith.constant 0 : index
    %c128_121 = arith.constant 128 : index
    %296 = vector.load %arg9[%c0_120, %c128_121] : memref<8x256xbf16, #tpu.memory_space<vmem>>, vector<8x128xbf16>
    tpu.vector_store %arg9[%c0_120, %c128_121], %295 {strides = array<i32>} : memref<8x256xbf16, #tpu.memory_space<vmem>>, vector<8x128xbf16>,
    %c0_122 = arith.constant 0 : index
    %c0_123 = arith.constant 0 : index
    %297 = vector.load %arg9[%c0_122, %c0_123] : memref<8x256xbf16, #tpu.memory_space<vmem>>, vector<8x256xbf16>
    %c0_124 = arith.constant 0 : index
    %c0_125 = arith.constant 0 : index
    %298 = vector.load %arg4[%c0_124, %c0_125] : memref<256x512xbf16, #tpu.memory_space<vmem>>, vector<256x512xbf16>
    %cst_126 = arith.constant dense<0.000000e+00> : vector<8x512xf32>
    %299 = tpu.matmul %297, %298, %cst_126 {dimension_numbers = #tpu.dot_dimension_numbers<[1], [0], [0], [1], [0, 0, 1, 1], [], []>} : vector<8x256xbf16>, vector<256x512xbf16>, vector<8x512xf32> -> vector<8x512xf32>
    %300 = arith.addf %299, %8 : vector<8x512xf32>
    %301 = vector.extract_strided_slice %300 {offsets = [0, 0], sizes = [8, 128], strides = [1, 1]} : vector<8x512xf32> to vector<8x128xf32>
    %cst_127 = arith.constant 5.000000e-01 : f32
    %302 = vector.broadcast %cst_127 : f32 to vector<8x128xf32>
    %303 = arith.mulf %302, %301 : vector<8x128xf32>
    %304 = math.tanh %303 : vector<8x128xf32>
    %cst_128 = arith.constant 5.000000e-01 : f32
    %305 = vector.broadcast %cst_128 : f32 to vector<8x128xf32>
    %306 = arith.mulf %305, %304 : vector<8x128xf32>
    %cst_129 = arith.constant 5.000000e-01 : f32
    %307 = vector.broadcast %cst_129 : f32 to vector<8x128xf32>
    %308 = arith.addf %306, %307 : vector<8x128xf32>
    %309 = vector.extract_strided_slice %300 {offsets = [0, 128], sizes = [8, 128], strides = [1, 1]} : vector<8x512xf32> to vector<8x128xf32>
    %cst_130 = arith.constant 5.000000e-01 : f32
    %310 = vector.broadcast %cst_130 : f32 to vector<8x128xf32>
    %311 = arith.mulf %310, %309 : vector<8x128xf32>
    %312 = math.tanh %311 : vector<8x128xf32>
    %cst_131 = arith.constant 5.000000e-01 : f32
    %313 = vector.broadcast %cst_131 : f32 to vector<8x128xf32>
    %314 = arith.mulf %313, %312 : vector<8x128xf32>
    %cst_132 = arith.constant 5.000000e-01 : f32
    %315 = vector.broadcast %cst_132 : f32 to vector<8x128xf32>
    %316 = arith.addf %314, %315 : vector<8x128xf32>
    %317 = vector.extract_strided_slice %300 {offsets = [0, 256], sizes = [8, 128], strides = [1, 1]} : vector<8x512xf32> to vector<8x128xf32>
    %318 = math.tanh %317 : vector<8x128xf32>
    %319 = vector.extract_strided_slice %300 {offsets = [0, 384], sizes = [8, 128], strides = [1, 1]} : vector<8x512xf32> to vector<8x128xf32>
    %cst_133 = arith.constant 5.000000e-01 : f32
    %320 = vector.broadcast %cst_133 : f32 to vector<8x128xf32>
    %321 = arith.mulf %320, %319 : vector<8x128xf32>
    %322 = math.tanh %321 : vector<8x128xf32>
    %cst_134 = arith.constant 5.000000e-01 : f32
    %323 = vector.broadcast %cst_134 : f32 to vector<8x128xf32>
    %324 = arith.mulf %323, %322 : vector<8x128xf32>
    %cst_135 = arith.constant 5.000000e-01 : f32
    %325 = vector.broadcast %cst_135 : f32 to vector<8x128xf32>
    %326 = arith.addf %324, %325 : vector<8x128xf32>
    %327 = arith.mulf %316, %248 : vector<8x128xf32>
    %328 = arith.mulf %308, %318 : vector<8x128xf32>
    %329 = arith.addf %327, %328 : vector<8x128xf32>
    %330 = math.tanh %329 : vector<8x128xf32>
    %331 = arith.mulf %326, %330 : vector<8x128xf32>
    %c1_i32_136 = arith.constant 1 : i32
    %332 = arith.addi %c3_i32, %c1_i32_136 : i32
    %333 = arith.index_cast %332 : i32 to index
    %c0_137 = arith.constant 0 : index
    %c0_138 = arith.constant 0 : index
    %334 = vector.load %arg0[%333, %c0_137, %c0_138] : memref<8x8x1xf32, #tpu.memory_space<vmem>>, vector<1x8x1xf32>
    %335 = vector.shape_cast %334 : vector<1x8x1xf32> to vector<8x1xf32>
    %336 = vector.broadcast %335 : vector<8x1xf32> to vector<8x512xf32>
    %337 = arith.mulf %336, %2 : vector<8x512xf32>
    %338 = arith.addf %337, %5 : vector<8x512xf32>
    %339 = arith.truncf %292 : vector<8x128xf32> to vector<8x128xbf16>
    %c0_139 = arith.constant 0 : index
    %c0_140 = arith.constant 0 : index
    %340 = vector.load %arg2[%c0_139, %c0_140] : memref<128x512xbf16, #tpu.memory_space<vmem>>, vector<128x512xbf16>
    %cst_141 = arith.constant dense<0.000000e+00> : vector<8x512xf32>
    %341 = tpu.matmul %339, %340, %cst_141 {dimension_numbers = #tpu.dot_dimension_numbers<[1], [0], [0], [1], [0, 0, 1, 1], [], []>} : vector<8x128xbf16>, vector<128x512xbf16>, vector<8x512xf32> -> vector<8x512xf32>
    %342 = arith.addf %338, %341 : vector<8x512xf32>
    %343 = vector.extract_strided_slice %342 {offsets = [0, 0], sizes = [8, 128], strides = [1, 1]} : vector<8x512xf32> to vector<8x128xf32>
    %cst_142 = arith.constant 5.000000e-01 : f32
    %344 = vector.broadcast %cst_142 : f32 to vector<8x128xf32>
    %345 = arith.mulf %344, %343 : vector<8x128xf32>
    %346 = math.tanh %345 : vector<8x128xf32>
    %cst_143 = arith.constant 5.000000e-01 : f32
    %347 = vector.broadcast %cst_143 : f32 to vector<8x128xf32>
    %348 = arith.mulf %347, %346 : vector<8x128xf32>
    %cst_144 = arith.constant 5.000000e-01 : f32
    %349 = vector.broadcast %cst_144 : f32 to vector<8x128xf32>
    %350 = arith.addf %348, %349 : vector<8x128xf32>
    %351 = vector.extract_strided_slice %342 {offsets = [0, 128], sizes = [8, 128], strides = [1, 1]} : vector<8x512xf32> to vector<8x128xf32>
    %cst_145 = arith.constant 5.000000e-01 : f32
    %352 = vector.broadcast %cst_145 : f32 to vector<8x128xf32>
    %353 = arith.mulf %352, %351 : vector<8x128xf32>
    %354 = math.tanh %353 : vector<8x128xf32>
    %cst_146 = arith.constant 5.000000e-01 : f32
    %355 = vector.broadcast %cst_146 : f32 to vector<8x128xf32>
    %356 = arith.mulf %355, %354 : vector<8x128xf32>
    %cst_147 = arith.constant 5.000000e-01 : f32
    %357 = vector.broadcast %cst_147 : f32 to vector<8x128xf32>
    %358 = arith.addf %356, %357 : vector<8x128xf32>
    %359 = vector.extract_strided_slice %342 {offsets = [0, 256], sizes = [8, 128], strides = [1, 1]} : vector<8x512xf32> to vector<8x128xf32>
    %360 = math.tanh %359 : vector<8x128xf32>
    %361 = vector.extract_strided_slice %342 {offsets = [0, 384], sizes = [8, 128], strides = [1, 1]} : vector<8x512xf32> to vector<8x128xf32>
    %cst_148 = arith.constant 5.000000e-01 : f32
    %362 = vector.broadcast %cst_148 : f32 to vector<8x128xf32>
    %363 = arith.mulf %362, %361 : vector<8x128xf32>
    %364 = math.tanh %363 : vector<8x128xf32>
    %cst_149 = arith.constant 5.000000e-01 : f32
    %365 = vector.broadcast %cst_149 : f32 to vector<8x128xf32>
    %366 = arith.mulf %365, %364 : vector<8x128xf32>
    %cst_150 = arith.constant 5.000000e-01 : f32
    %367 = vector.broadcast %cst_150 : f32 to vector<8x128xf32>
    %368 = arith.addf %366, %367 : vector<8x128xf32>
    %369 = arith.mulf %358, %290 : vector<8x128xf32>
    %370 = arith.mulf %350, %360 : vector<8x128xf32>
    %371 = arith.addf %369, %370 : vector<8x128xf32>
    %372 = math.tanh %371 : vector<8x128xf32>
    %373 = arith.mulf %368, %372 : vector<8x128xf32>
    %c4_i32 = arith.constant 4 : i32
    %374 = arith.truncf %373 : vector<8x128xf32> to vector<8x128xbf16>
    %c0_151 = arith.constant 0 : index
    %c0_152 = arith.constant 0 : index
    %375 = vector.load %arg9[%c0_151, %c0_152] : memref<8x256xbf16, #tpu.memory_space<vmem>>, vector<8x128xbf16>
    tpu.vector_store %arg9[%c0_151, %c0_152], %374 {strides = array<i32>} : memref<8x256xbf16, #tpu.memory_space<vmem>>, vector<8x128xbf16>,
    %376 = arith.truncf %331 : vector<8x128xf32> to vector<8x128xbf16>
    %c0_153 = arith.constant 0 : index
    %c128_154 = arith.constant 128 : index
    %377 = vector.load %arg9[%c0_153, %c128_154] : memref<8x256xbf16, #tpu.memory_space<vmem>>, vector<8x128xbf16>
    tpu.vector_store %arg9[%c0_153, %c128_154], %376 {strides = array<i32>} : memref<8x256xbf16, #tpu.memory_space<vmem>>, vector<8x128xbf16>,
    %c0_155 = arith.constant 0 : index
    %c0_156 = arith.constant 0 : index
    %378 = vector.load %arg9[%c0_155, %c0_156] : memref<8x256xbf16, #tpu.memory_space<vmem>>, vector<8x256xbf16>
    %c0_157 = arith.constant 0 : index
    %c0_158 = arith.constant 0 : index
    %379 = vector.load %arg4[%c0_157, %c0_158] : memref<256x512xbf16, #tpu.memory_space<vmem>>, vector<256x512xbf16>
    %cst_159 = arith.constant dense<0.000000e+00> : vector<8x512xf32>
    %380 = tpu.matmul %378, %379, %cst_159 {dimension_numbers = #tpu.dot_dimension_numbers<[1], [0], [0], [1], [0, 0, 1, 1], [], []>} : vector<8x256xbf16>, vector<256x512xbf16>, vector<8x512xf32> -> vector<8x512xf32>
    %381 = arith.addf %380, %8 : vector<8x512xf32>
    %382 = vector.extract_strided_slice %381 {offsets = [0, 0], sizes = [8, 128], strides = [1, 1]} : vector<8x512xf32> to vector<8x128xf32>
    %cst_160 = arith.constant 5.000000e-01 : f32
    %383 = vector.broadcast %cst_160 : f32 to vector<8x128xf32>
    %384 = arith.mulf %383, %382 : vector<8x128xf32>
    %385 = math.tanh %384 : vector<8x128xf32>
    %cst_161 = arith.constant 5.000000e-01 : f32
    %386 = vector.broadcast %cst_161 : f32 to vector<8x128xf32>
    %387 = arith.mulf %386, %385 : vector<8x128xf32>
    %cst_162 = arith.constant 5.000000e-01 : f32
    %388 = vector.broadcast %cst_162 : f32 to vector<8x128xf32>
    %389 = arith.addf %387, %388 : vector<8x128xf32>
    %390 = vector.extract_strided_slice %381 {offsets = [0, 128], sizes = [8, 128], strides = [1, 1]} : vector<8x512xf32> to vector<8x128xf32>
    %cst_163 = arith.constant 5.000000e-01 : f32
    %391 = vector.broadcast %cst_163 : f32 to vector<8x128xf32>
    %392 = arith.mulf %391, %390 : vector<8x128xf32>
    %393 = math.tanh %392 : vector<8x128xf32>
    %cst_164 = arith.constant 5.000000e-01 : f32
    %394 = vector.broadcast %cst_164 : f32 to vector<8x128xf32>
    %395 = arith.mulf %394, %393 : vector<8x128xf32>
    %cst_165 = arith.constant 5.000000e-01 : f32
    %396 = vector.broadcast %cst_165 : f32 to vector<8x128xf32>
    %397 = arith.addf %395, %396 : vector<8x128xf32>
    %398 = vector.extract_strided_slice %381 {offsets = [0, 256], sizes = [8, 128], strides = [1, 1]} : vector<8x512xf32> to vector<8x128xf32>
    %399 = math.tanh %398 : vector<8x128xf32>
    %400 = vector.extract_strided_slice %381 {offsets = [0, 384], sizes = [8, 128], strides = [1, 1]} : vector<8x512xf32> to vector<8x128xf32>
    %cst_166 = arith.constant 5.000000e-01 : f32
    %401 = vector.broadcast %cst_166 : f32 to vector<8x128xf32>
    %402 = arith.mulf %401, %400 : vector<8x128xf32>
    %403 = math.tanh %402 : vector<8x128xf32>
    %cst_167 = arith.constant 5.000000e-01 : f32
    %404 = vector.broadcast %cst_167 : f32 to vector<8x128xf32>
    %405 = arith.mulf %404, %403 : vector<8x128xf32>
    %cst_168 = arith.constant 5.000000e-01 : f32
    %406 = vector.broadcast %cst_168 : f32 to vector<8x128xf32>
    %407 = arith.addf %405, %406 : vector<8x128xf32>
    %408 = arith.mulf %397, %329 : vector<8x128xf32>
    %409 = arith.mulf %389, %399 : vector<8x128xf32>
    %410 = arith.addf %408, %409 : vector<8x128xf32>
    %411 = math.tanh %410 : vector<8x128xf32>
    %412 = arith.mulf %407, %411 : vector<8x128xf32>
    %c1_i32_169 = arith.constant 1 : i32
    %413 = arith.addi %c4_i32, %c1_i32_169 : i32
    %414 = arith.index_cast %413 : i32 to index
    %c0_170 = arith.constant 0 : index
    %c0_171 = arith.constant 0 : index
    %415 = vector.load %arg0[%414, %c0_170, %c0_171] : memref<8x8x1xf32, #tpu.memory_space<vmem>>, vector<1x8x1xf32>
    %416 = vector.shape_cast %415 : vector<1x8x1xf32> to vector<8x1xf32>
    %417 = vector.broadcast %416 : vector<8x1xf32> to vector<8x512xf32>
    %418 = arith.mulf %417, %2 : vector<8x512xf32>
    %419 = arith.addf %418, %5 : vector<8x512xf32>
    %420 = arith.truncf %373 : vector<8x128xf32> to vector<8x128xbf16>
    %c0_172 = arith.constant 0 : index
    %c0_173 = arith.constant 0 : index
    %421 = vector.load %arg2[%c0_172, %c0_173] : memref<128x512xbf16, #tpu.memory_space<vmem>>, vector<128x512xbf16>
    %cst_174 = arith.constant dense<0.000000e+00> : vector<8x512xf32>
    %422 = tpu.matmul %420, %421, %cst_174 {dimension_numbers = #tpu.dot_dimension_numbers<[1], [0], [0], [1], [0, 0, 1, 1], [], []>} : vector<8x128xbf16>, vector<128x512xbf16>, vector<8x512xf32> -> vector<8x512xf32>
    %423 = arith.addf %419, %422 : vector<8x512xf32>
    %424 = vector.extract_strided_slice %423 {offsets = [0, 0], sizes = [8, 128], strides = [1, 1]} : vector<8x512xf32> to vector<8x128xf32>
    %cst_175 = arith.constant 5.000000e-01 : f32
    %425 = vector.broadcast %cst_175 : f32 to vector<8x128xf32>
    %426 = arith.mulf %425, %424 : vector<8x128xf32>
    %427 = math.tanh %426 : vector<8x128xf32>
    %cst_176 = arith.constant 5.000000e-01 : f32
    %428 = vector.broadcast %cst_176 : f32 to vector<8x128xf32>
    %429 = arith.mulf %428, %427 : vector<8x128xf32>
    %cst_177 = arith.constant 5.000000e-01 : f32
    %430 = vector.broadcast %cst_177 : f32 to vector<8x128xf32>
    %431 = arith.addf %429, %430 : vector<8x128xf32>
    %432 = vector.extract_strided_slice %423 {offsets = [0, 128], sizes = [8, 128], strides = [1, 1]} : vector<8x512xf32> to vector<8x128xf32>
    %cst_178 = arith.constant 5.000000e-01 : f32
    %433 = vector.broadcast %cst_178 : f32 to vector<8x128xf32>
    %434 = arith.mulf %433, %432 : vector<8x128xf32>
    %435 = math.tanh %434 : vector<8x128xf32>
    %cst_179 = arith.constant 5.000000e-01 : f32
    %436 = vector.broadcast %cst_179 : f32 to vector<8x128xf32>
    %437 = arith.mulf %436, %435 : vector<8x128xf32>
    %cst_180 = arith.constant 5.000000e-01 : f32
    %438 = vector.broadcast %cst_180 : f32 to vector<8x128xf32>
    %439 = arith.addf %437, %438 : vector<8x128xf32>
    %440 = vector.extract_strided_slice %423 {offsets = [0, 256], sizes = [8, 128], strides = [1, 1]} : vector<8x512xf32> to vector<8x128xf32>
    %441 = math.tanh %440 : vector<8x128xf32>
    %442 = vector.extract_strided_slice %423 {offsets = [0, 384], sizes = [8, 128], strides = [1, 1]} : vector<8x512xf32> to vector<8x128xf32>
    %cst_181 = arith.constant 5.000000e-01 : f32
    %443 = vector.broadcast %cst_181 : f32 to vector<8x128xf32>
    %444 = arith.mulf %443, %442 : vector<8x128xf32>
    %445 = math.tanh %444 : vector<8x128xf32>
    %cst_182 = arith.constant 5.000000e-01 : f32
    %446 = vector.broadcast %cst_182 : f32 to vector<8x128xf32>
    %447 = arith.mulf %446, %445 : vector<8x128xf32>
    %cst_183 = arith.constant 5.000000e-01 : f32
    %448 = vector.broadcast %cst_183 : f32 to vector<8x128xf32>
    %449 = arith.addf %447, %448 : vector<8x128xf32>
    %450 = arith.mulf %439, %371 : vector<8x128xf32>
    %451 = arith.mulf %431, %441 : vector<8x128xf32>
    %452 = arith.addf %450, %451 : vector<8x128xf32>
    %453 = math.tanh %452 : vector<8x128xf32>
    %454 = arith.mulf %449, %453 : vector<8x128xf32>
    %c5_i32 = arith.constant 5 : i32
    %455 = arith.truncf %454 : vector<8x128xf32> to vector<8x128xbf16>
    %c0_184 = arith.constant 0 : index
    %c0_185 = arith.constant 0 : index
    %456 = vector.load %arg9[%c0_184, %c0_185] : memref<8x256xbf16, #tpu.memory_space<vmem>>, vector<8x128xbf16>
    tpu.vector_store %arg9[%c0_184, %c0_185], %455 {strides = array<i32>} : memref<8x256xbf16, #tpu.memory_space<vmem>>, vector<8x128xbf16>,
    %457 = arith.truncf %412 : vector<8x128xf32> to vector<8x128xbf16>
    %c0_186 = arith.constant 0 : index
    %c128_187 = arith.constant 128 : index
    %458 = vector.load %arg9[%c0_186, %c128_187] : memref<8x256xbf16, #tpu.memory_space<vmem>>, vector<8x128xbf16>
    tpu.vector_store %arg9[%c0_186, %c128_187], %457 {strides = array<i32>} : memref<8x256xbf16, #tpu.memory_space<vmem>>, vector<8x128xbf16>,
    %c0_188 = arith.constant 0 : index
    %c0_189 = arith.constant 0 : index
    %459 = vector.load %arg9[%c0_188, %c0_189] : memref<8x256xbf16, #tpu.memory_space<vmem>>, vector<8x256xbf16>
    %c0_190 = arith.constant 0 : index
    %c0_191 = arith.constant 0 : index
    %460 = vector.load %arg4[%c0_190, %c0_191] : memref<256x512xbf16, #tpu.memory_space<vmem>>, vector<256x512xbf16>
    %cst_192 = arith.constant dense<0.000000e+00> : vector<8x512xf32>
    %461 = tpu.matmul %459, %460, %cst_192 {dimension_numbers = #tpu.dot_dimension_numbers<[1], [0], [0], [1], [0, 0, 1, 1], [], []>} : vector<8x256xbf16>, vector<256x512xbf16>, vector<8x512xf32> -> vector<8x512xf32>
    %462 = arith.addf %461, %8 : vector<8x512xf32>
    %463 = vector.extract_strided_slice %462 {offsets = [0, 0], sizes = [8, 128], strides = [1, 1]} : vector<8x512xf32> to vector<8x128xf32>
    %cst_193 = arith.constant 5.000000e-01 : f32
    %464 = vector.broadcast %cst_193 : f32 to vector<8x128xf32>
    %465 = arith.mulf %464, %463 : vector<8x128xf32>
    %466 = math.tanh %465 : vector<8x128xf32>
    %cst_194 = arith.constant 5.000000e-01 : f32
    %467 = vector.broadcast %cst_194 : f32 to vector<8x128xf32>
    %468 = arith.mulf %467, %466 : vector<8x128xf32>
    %cst_195 = arith.constant 5.000000e-01 : f32
    %469 = vector.broadcast %cst_195 : f32 to vector<8x128xf32>
    %470 = arith.addf %468, %469 : vector<8x128xf32>
    %471 = vector.extract_strided_slice %462 {offsets = [0, 128], sizes = [8, 128], strides = [1, 1]} : vector<8x512xf32> to vector<8x128xf32>
    %cst_196 = arith.constant 5.000000e-01 : f32
    %472 = vector.broadcast %cst_196 : f32 to vector<8x128xf32>
    %473 = arith.mulf %472, %471 : vector<8x128xf32>
    %474 = math.tanh %473 : vector<8x128xf32>
    %cst_197 = arith.constant 5.000000e-01 : f32
    %475 = vector.broadcast %cst_197 : f32 to vector<8x128xf32>
    %476 = arith.mulf %475, %474 : vector<8x128xf32>
    %cst_198 = arith.constant 5.000000e-01 : f32
    %477 = vector.broadcast %cst_198 : f32 to vector<8x128xf32>
    %478 = arith.addf %476, %477 : vector<8x128xf32>
    %479 = vector.extract_strided_slice %462 {offsets = [0, 256], sizes = [8, 128], strides = [1, 1]} : vector<8x512xf32> to vector<8x128xf32>
    %480 = math.tanh %479 : vector<8x128xf32>
    %481 = vector.extract_strided_slice %462 {offsets = [0, 384], sizes = [8, 128], strides = [1, 1]} : vector<8x512xf32> to vector<8x128xf32>
    %cst_199 = arith.constant 5.000000e-01 : f32
    %482 = vector.broadcast %cst_199 : f32 to vector<8x128xf32>
    %483 = arith.mulf %482, %481 : vector<8x128xf32>
    %484 = math.tanh %483 : vector<8x128xf32>
    %cst_200 = arith.constant 5.000000e-01 : f32
    %485 = vector.broadcast %cst_200 : f32 to vector<8x128xf32>
    %486 = arith.mulf %485, %484 : vector<8x128xf32>
    %cst_201 = arith.constant 5.000000e-01 : f32
    %487 = vector.broadcast %cst_201 : f32 to vector<8x128xf32>
    %488 = arith.addf %486, %487 : vector<8x128xf32>
    %489 = arith.mulf %478, %410 : vector<8x128xf32>
    %490 = arith.mulf %470, %480 : vector<8x128xf32>
    %491 = arith.addf %489, %490 : vector<8x128xf32>
    %492 = math.tanh %491 : vector<8x128xf32>
    %493 = arith.mulf %488, %492 : vector<8x128xf32>
    %c1_i32_202 = arith.constant 1 : i32
    %494 = arith.addi %c5_i32, %c1_i32_202 : i32
    %495 = arith.index_cast %494 : i32 to index
    %c0_203 = arith.constant 0 : index
    %c0_204 = arith.constant 0 : index
    %496 = vector.load %arg0[%495, %c0_203, %c0_204] : memref<8x8x1xf32, #tpu.memory_space<vmem>>, vector<1x8x1xf32>
    %497 = vector.shape_cast %496 : vector<1x8x1xf32> to vector<8x1xf32>
    %498 = vector.broadcast %497 : vector<8x1xf32> to vector<8x512xf32>
    %499 = arith.mulf %498, %2 : vector<8x512xf32>
    %500 = arith.addf %499, %5 : vector<8x512xf32>
    %501 = arith.truncf %454 : vector<8x128xf32> to vector<8x128xbf16>
    %c0_205 = arith.constant 0 : index
    %c0_206 = arith.constant 0 : index
    %502 = vector.load %arg2[%c0_205, %c0_206] : memref<128x512xbf16, #tpu.memory_space<vmem>>, vector<128x512xbf16>
    %cst_207 = arith.constant dense<0.000000e+00> : vector<8x512xf32>
    %503 = tpu.matmul %501, %502, %cst_207 {dimension_numbers = #tpu.dot_dimension_numbers<[1], [0], [0], [1], [0, 0, 1, 1], [], []>} : vector<8x128xbf16>, vector<128x512xbf16>, vector<8x512xf32> -> vector<8x512xf32>
    %504 = arith.addf %500, %503 : vector<8x512xf32>
    %505 = vector.extract_strided_slice %504 {offsets = [0, 0], sizes = [8, 128], strides = [1, 1]} : vector<8x512xf32> to vector<8x128xf32>
    %cst_208 = arith.constant 5.000000e-01 : f32
    %506 = vector.broadcast %cst_208 : f32 to vector<8x128xf32>
    %507 = arith.mulf %506, %505 : vector<8x128xf32>
    %508 = math.tanh %507 : vector<8x128xf32>
    %cst_209 = arith.constant 5.000000e-01 : f32
    %509 = vector.broadcast %cst_209 : f32 to vector<8x128xf32>
    %510 = arith.mulf %509, %508 : vector<8x128xf32>
    %cst_210 = arith.constant 5.000000e-01 : f32
    %511 = vector.broadcast %cst_210 : f32 to vector<8x128xf32>
    %512 = arith.addf %510, %511 : vector<8x128xf32>
    %513 = vector.extract_strided_slice %504 {offsets = [0, 128], sizes = [8, 128], strides = [1, 1]} : vector<8x512xf32> to vector<8x128xf32>
    %cst_211 = arith.constant 5.000000e-01 : f32
    %514 = vector.broadcast %cst_211 : f32 to vector<8x128xf32>
    %515 = arith.mulf %514, %513 : vector<8x128xf32>
    %516 = math.tanh %515 : vector<8x128xf32>
    %cst_212 = arith.constant 5.000000e-01 : f32
    %517 = vector.broadcast %cst_212 : f32 to vector<8x128xf32>
    %518 = arith.mulf %517, %516 : vector<8x128xf32>
    %cst_213 = arith.constant 5.000000e-01 : f32
    %519 = vector.broadcast %cst_213 : f32 to vector<8x128xf32>
    %520 = arith.addf %518, %519 : vector<8x128xf32>
    %521 = vector.extract_strided_slice %504 {offsets = [0, 256], sizes = [8, 128], strides = [1, 1]} : vector<8x512xf32> to vector<8x128xf32>
    %522 = math.tanh %521 : vector<8x128xf32>
    %523 = vector.extract_strided_slice %504 {offsets = [0, 384], sizes = [8, 128], strides = [1, 1]} : vector<8x512xf32> to vector<8x128xf32>
    %cst_214 = arith.constant 5.000000e-01 : f32
    %524 = vector.broadcast %cst_214 : f32 to vector<8x128xf32>
    %525 = arith.mulf %524, %523 : vector<8x128xf32>
    %526 = math.tanh %525 : vector<8x128xf32>
    %cst_215 = arith.constant 5.000000e-01 : f32
    %527 = vector.broadcast %cst_215 : f32 to vector<8x128xf32>
    %528 = arith.mulf %527, %526 : vector<8x128xf32>
    %cst_216 = arith.constant 5.000000e-01 : f32
    %529 = vector.broadcast %cst_216 : f32 to vector<8x128xf32>
    %530 = arith.addf %528, %529 : vector<8x128xf32>
    %531 = arith.mulf %520, %452 : vector<8x128xf32>
    %532 = arith.mulf %512, %522 : vector<8x128xf32>
    %533 = arith.addf %531, %532 : vector<8x128xf32>
    %534 = math.tanh %533 : vector<8x128xf32>
    %535 = arith.mulf %530, %534 : vector<8x128xf32>
    %c6_i32 = arith.constant 6 : i32
    %536 = arith.truncf %535 : vector<8x128xf32> to vector<8x128xbf16>
    %c0_217 = arith.constant 0 : index
    %c0_218 = arith.constant 0 : index
    %537 = vector.load %arg9[%c0_217, %c0_218] : memref<8x256xbf16, #tpu.memory_space<vmem>>, vector<8x128xbf16>
    tpu.vector_store %arg9[%c0_217, %c0_218], %536 {strides = array<i32>} : memref<8x256xbf16, #tpu.memory_space<vmem>>, vector<8x128xbf16>,
    %538 = arith.truncf %493 : vector<8x128xf32> to vector<8x128xbf16>
    %c0_219 = arith.constant 0 : index
    %c128_220 = arith.constant 128 : index
    %539 = vector.load %arg9[%c0_219, %c128_220] : memref<8x256xbf16, #tpu.memory_space<vmem>>, vector<8x128xbf16>
    tpu.vector_store %arg9[%c0_219, %c128_220], %538 {strides = array<i32>} : memref<8x256xbf16, #tpu.memory_space<vmem>>, vector<8x128xbf16>,
    %c0_221 = arith.constant 0 : index
    %c0_222 = arith.constant 0 : index
    %540 = vector.load %arg9[%c0_221, %c0_222] : memref<8x256xbf16, #tpu.memory_space<vmem>>, vector<8x256xbf16>
    %c0_223 = arith.constant 0 : index
    %c0_224 = arith.constant 0 : index
    %541 = vector.load %arg4[%c0_223, %c0_224] : memref<256x512xbf16, #tpu.memory_space<vmem>>, vector<256x512xbf16>
    %cst_225 = arith.constant dense<0.000000e+00> : vector<8x512xf32>
    %542 = tpu.matmul %540, %541, %cst_225 {dimension_numbers = #tpu.dot_dimension_numbers<[1], [0], [0], [1], [0, 0, 1, 1], [], []>} : vector<8x256xbf16>, vector<256x512xbf16>, vector<8x512xf32> -> vector<8x512xf32>
    %543 = arith.addf %542, %8 : vector<8x512xf32>
    %544 = vector.extract_strided_slice %543 {offsets = [0, 0], sizes = [8, 128], strides = [1, 1]} : vector<8x512xf32> to vector<8x128xf32>
    %cst_226 = arith.constant 5.000000e-01 : f32
    %545 = vector.broadcast %cst_226 : f32 to vector<8x128xf32>
    %546 = arith.mulf %545, %544 : vector<8x128xf32>
    %547 = math.tanh %546 : vector<8x128xf32>
    %cst_227 = arith.constant 5.000000e-01 : f32
    %548 = vector.broadcast %cst_227 : f32 to vector<8x128xf32>
    %549 = arith.mulf %548, %547 : vector<8x128xf32>
    %cst_228 = arith.constant 5.000000e-01 : f32
    %550 = vector.broadcast %cst_228 : f32 to vector<8x128xf32>
    %551 = arith.addf %549, %550 : vector<8x128xf32>
    %552 = vector.extract_strided_slice %543 {offsets = [0, 128], sizes = [8, 128], strides = [1, 1]} : vector<8x512xf32> to vector<8x128xf32>
    %cst_229 = arith.constant 5.000000e-01 : f32
    %553 = vector.broadcast %cst_229 : f32 to vector<8x128xf32>
    %554 = arith.mulf %553, %552 : vector<8x128xf32>
    %555 = math.tanh %554 : vector<8x128xf32>
    %cst_230 = arith.constant 5.000000e-01 : f32
    %556 = vector.broadcast %cst_230 : f32 to vector<8x128xf32>
    %557 = arith.mulf %556, %555 : vector<8x128xf32>
    %cst_231 = arith.constant 5.000000e-01 : f32
    %558 = vector.broadcast %cst_231 : f32 to vector<8x128xf32>
    %559 = arith.addf %557, %558 : vector<8x128xf32>
    %560 = vector.extract_strided_slice %543 {offsets = [0, 256], sizes = [8, 128], strides = [1, 1]} : vector<8x512xf32> to vector<8x128xf32>
    %561 = math.tanh %560 : vector<8x128xf32>
    %562 = vector.extract_strided_slice %543 {offsets = [0, 384], sizes = [8, 128], strides = [1, 1]} : vector<8x512xf32> to vector<8x128xf32>
    %cst_232 = arith.constant 5.000000e-01 : f32
    %563 = vector.broadcast %cst_232 : f32 to vector<8x128xf32>
    %564 = arith.mulf %563, %562 : vector<8x128xf32>
    %565 = math.tanh %564 : vector<8x128xf32>
    %cst_233 = arith.constant 5.000000e-01 : f32
    %566 = vector.broadcast %cst_233 : f32 to vector<8x128xf32>
    %567 = arith.mulf %566, %565 : vector<8x128xf32>
    %cst_234 = arith.constant 5.000000e-01 : f32
    %568 = vector.broadcast %cst_234 : f32 to vector<8x128xf32>
    %569 = arith.addf %567, %568 : vector<8x128xf32>
    %570 = arith.mulf %559, %491 : vector<8x128xf32>
    %571 = arith.mulf %551, %561 : vector<8x128xf32>
    %572 = arith.addf %570, %571 : vector<8x128xf32>
    %573 = math.tanh %572 : vector<8x128xf32>
    %574 = arith.mulf %569, %573 : vector<8x128xf32>
    %c1_i32_235 = arith.constant 1 : i32
    %575 = arith.addi %c6_i32, %c1_i32_235 : i32
    %576 = arith.index_cast %575 : i32 to index
    %c0_236 = arith.constant 0 : index
    %c0_237 = arith.constant 0 : index
    %577 = vector.load %arg0[%576, %c0_236, %c0_237] : memref<8x8x1xf32, #tpu.memory_space<vmem>>, vector<1x8x1xf32>
    %578 = vector.shape_cast %577 : vector<1x8x1xf32> to vector<8x1xf32>
    %579 = vector.broadcast %578 : vector<8x1xf32> to vector<8x512xf32>
    %580 = arith.mulf %579, %2 : vector<8x512xf32>
    %581 = arith.addf %580, %5 : vector<8x512xf32>
    %582 = arith.truncf %535 : vector<8x128xf32> to vector<8x128xbf16>
    %c0_238 = arith.constant 0 : index
    %c0_239 = arith.constant 0 : index
    %583 = vector.load %arg2[%c0_238, %c0_239] : memref<128x512xbf16, #tpu.memory_space<vmem>>, vector<128x512xbf16>
    %cst_240 = arith.constant dense<0.000000e+00> : vector<8x512xf32>
    %584 = tpu.matmul %582, %583, %cst_240 {dimension_numbers = #tpu.dot_dimension_numbers<[1], [0], [0], [1], [0, 0, 1, 1], [], []>} : vector<8x128xbf16>, vector<128x512xbf16>, vector<8x512xf32> -> vector<8x512xf32>
    %585 = arith.addf %581, %584 : vector<8x512xf32>
    %586 = vector.extract_strided_slice %585 {offsets = [0, 0], sizes = [8, 128], strides = [1, 1]} : vector<8x512xf32> to vector<8x128xf32>
    %cst_241 = arith.constant 5.000000e-01 : f32
    %587 = vector.broadcast %cst_241 : f32 to vector<8x128xf32>
    %588 = arith.mulf %587, %586 : vector<8x128xf32>
    %589 = math.tanh %588 : vector<8x128xf32>
    %cst_242 = arith.constant 5.000000e-01 : f32
    %590 = vector.broadcast %cst_242 : f32 to vector<8x128xf32>
    %591 = arith.mulf %590, %589 : vector<8x128xf32>
    %cst_243 = arith.constant 5.000000e-01 : f32
    %592 = vector.broadcast %cst_243 : f32 to vector<8x128xf32>
    %593 = arith.addf %591, %592 : vector<8x128xf32>
    %594 = vector.extract_strided_slice %585 {offsets = [0, 128], sizes = [8, 128], strides = [1, 1]} : vector<8x512xf32> to vector<8x128xf32>
    %cst_244 = arith.constant 5.000000e-01 : f32
    %595 = vector.broadcast %cst_244 : f32 to vector<8x128xf32>
    %596 = arith.mulf %595, %594 : vector<8x128xf32>
    %597 = math.tanh %596 : vector<8x128xf32>
    %cst_245 = arith.constant 5.000000e-01 : f32
    %598 = vector.broadcast %cst_245 : f32 to vector<8x128xf32>
    %599 = arith.mulf %598, %597 : vector<8x128xf32>
    %cst_246 = arith.constant 5.000000e-01 : f32
    %600 = vector.broadcast %cst_246 : f32 to vector<8x128xf32>
    %601 = arith.addf %599, %600 : vector<8x128xf32>
    %602 = vector.extract_strided_slice %585 {offsets = [0, 256], sizes = [8, 128], strides = [1, 1]} : vector<8x512xf32> to vector<8x128xf32>
    %603 = math.tanh %602 : vector<8x128xf32>
    %604 = vector.extract_strided_slice %585 {offsets = [0, 384], sizes = [8, 128], strides = [1, 1]} : vector<8x512xf32> to vector<8x128xf32>
    %cst_247 = arith.constant 5.000000e-01 : f32
    %605 = vector.broadcast %cst_247 : f32 to vector<8x128xf32>
    %606 = arith.mulf %605, %604 : vector<8x128xf32>
    %607 = math.tanh %606 : vector<8x128xf32>
    %cst_248 = arith.constant 5.000000e-01 : f32
    %608 = vector.broadcast %cst_248 : f32 to vector<8x128xf32>
    %609 = arith.mulf %608, %607 : vector<8x128xf32>
    %cst_249 = arith.constant 5.000000e-01 : f32
    %610 = vector.broadcast %cst_249 : f32 to vector<8x128xf32>
    %611 = arith.addf %609, %610 : vector<8x128xf32>
    %612 = arith.mulf %601, %533 : vector<8x128xf32>
    %613 = arith.mulf %593, %603 : vector<8x128xf32>
    %614 = arith.addf %612, %613 : vector<8x128xf32>
    %615 = math.tanh %614 : vector<8x128xf32>
    %616 = arith.mulf %611, %615 : vector<8x128xf32>
    %c7_i32 = arith.constant 7 : i32
    %617 = arith.truncf %616 : vector<8x128xf32> to vector<8x128xbf16>
    %c0_250 = arith.constant 0 : index
    %c0_251 = arith.constant 0 : index
    %618 = vector.load %arg9[%c0_250, %c0_251] : memref<8x256xbf16, #tpu.memory_space<vmem>>, vector<8x128xbf16>
    tpu.vector_store %arg9[%c0_250, %c0_251], %617 {strides = array<i32>} : memref<8x256xbf16, #tpu.memory_space<vmem>>, vector<8x128xbf16>,
    %619 = arith.truncf %574 : vector<8x128xf32> to vector<8x128xbf16>
    %c0_252 = arith.constant 0 : index
    %c128_253 = arith.constant 128 : index
    %620 = vector.load %arg9[%c0_252, %c128_253] : memref<8x256xbf16, #tpu.memory_space<vmem>>, vector<8x128xbf16>
    tpu.vector_store %arg9[%c0_252, %c128_253], %619 {strides = array<i32>} : memref<8x256xbf16, #tpu.memory_space<vmem>>, vector<8x128xbf16>,
    %c0_254 = arith.constant 0 : index
    %c0_255 = arith.constant 0 : index
    %621 = vector.load %arg9[%c0_254, %c0_255] : memref<8x256xbf16, #tpu.memory_space<vmem>>, vector<8x256xbf16>
    %c0_256 = arith.constant 0 : index
    %c0_257 = arith.constant 0 : index
    %622 = vector.load %arg4[%c0_256, %c0_257] : memref<256x512xbf16, #tpu.memory_space<vmem>>, vector<256x512xbf16>
    %cst_258 = arith.constant dense<0.000000e+00> : vector<8x512xf32>
    %623 = tpu.matmul %621, %622, %cst_258 {dimension_numbers = #tpu.dot_dimension_numbers<[1], [0], [0], [1], [0, 0, 1, 1], [], []>} : vector<8x256xbf16>, vector<256x512xbf16>, vector<8x512xf32> -> vector<8x512xf32>
    %624 = arith.addf %623, %8 : vector<8x512xf32>
    %625 = vector.extract_strided_slice %624 {offsets = [0, 0], sizes = [8, 128], strides = [1, 1]} : vector<8x512xf32> to vector<8x128xf32>
    %cst_259 = arith.constant 5.000000e-01 : f32
    %626 = vector.broadcast %cst_259 : f32 to vector<8x128xf32>
    %627 = arith.mulf %626, %625 : vector<8x128xf32>
    %628 = math.tanh %627 : vector<8x128xf32>
    %cst_260 = arith.constant 5.000000e-01 : f32
    %629 = vector.broadcast %cst_260 : f32 to vector<8x128xf32>
    %630 = arith.mulf %629, %628 : vector<8x128xf32>
    %cst_261 = arith.constant 5.000000e-01 : f32
    %631 = vector.broadcast %cst_261 : f32 to vector<8x128xf32>
    %632 = arith.addf %630, %631 : vector<8x128xf32>
    %633 = vector.extract_strided_slice %624 {offsets = [0, 128], sizes = [8, 128], strides = [1, 1]} : vector<8x512xf32> to vector<8x128xf32>
    %cst_262 = arith.constant 5.000000e-01 : f32
    %634 = vector.broadcast %cst_262 : f32 to vector<8x128xf32>
    %635 = arith.mulf %634, %633 : vector<8x128xf32>
    %636 = math.tanh %635 : vector<8x128xf32>
    %cst_263 = arith.constant 5.000000e-01 : f32
    %637 = vector.broadcast %cst_263 : f32 to vector<8x128xf32>
    %638 = arith.mulf %637, %636 : vector<8x128xf32>
    %cst_264 = arith.constant 5.000000e-01 : f32
    %639 = vector.broadcast %cst_264 : f32 to vector<8x128xf32>
    %640 = arith.addf %638, %639 : vector<8x128xf32>
    %641 = vector.extract_strided_slice %624 {offsets = [0, 256], sizes = [8, 128], strides = [1, 1]} : vector<8x512xf32> to vector<8x128xf32>
    %642 = math.tanh %641 : vector<8x128xf32>
    %643 = vector.extract_strided_slice %624 {offsets = [0, 384], sizes = [8, 128], strides = [1, 1]} : vector<8x512xf32> to vector<8x128xf32>
    %cst_265 = arith.constant 5.000000e-01 : f32
    %644 = vector.broadcast %cst_265 : f32 to vector<8x128xf32>
    %645 = arith.mulf %644, %643 : vector<8x128xf32>
    %646 = math.tanh %645 : vector<8x128xf32>
    %cst_266 = arith.constant 5.000000e-01 : f32
    %647 = vector.broadcast %cst_266 : f32 to vector<8x128xf32>
    %648 = arith.mulf %647, %646 : vector<8x128xf32>
    %cst_267 = arith.constant 5.000000e-01 : f32
    %649 = vector.broadcast %cst_267 : f32 to vector<8x128xf32>
    %650 = arith.addf %648, %649 : vector<8x128xf32>
    %651 = arith.mulf %640, %572 : vector<8x128xf32>
    %652 = arith.mulf %632, %642 : vector<8x128xf32>
    %653 = arith.addf %651, %652 : vector<8x128xf32>
    %654 = math.tanh %653 : vector<8x128xf32>
    %655 = arith.mulf %650, %654 : vector<8x128xf32>
    %c0_268 = arith.constant 0 : index
    %c0_269 = arith.constant 0 : index
    %656 = vector.load %arg6[%c0_268, %c0_269] : memref<1x128xf32, #tpu.memory_space<vmem>>, vector<1x128xf32>
    %657 = vector.broadcast %656 : vector<1x128xf32> to vector<8x128xf32>
    %658 = arith.mulf %655, %657 : vector<8x128xf32>
    %cst_270 = arith.constant dense<0.000000e+00> : vector<8xf32>
    %659 = vector.multi_reduction <add>, %658, %cst_270 [1] : vector<8x128xf32> to vector<8xf32>
    %660 = vector.shape_cast %659 : vector<8xf32> to vector<8x1xf32>
    %c0_271 = arith.constant 0 : index
    %c0_272 = arith.constant 0 : index
    %661 = vector.load %arg7[%c0_271, %c0_272] : memref<1x1xf32, #tpu.memory_space<vmem>>, vector<1x1xf32>
    %662 = vector.broadcast %661 : vector<1x1xf32> to vector<8x1xf32>
    %663 = arith.addf %660, %662 : vector<8x1xf32>
    %c0_273 = arith.constant 0 : index
    %c0_274 = arith.constant 0 : index
    %664 = vector.load %arg8[%c0_273, %c0_274] : memref<8x1xf32, #tpu.memory_space<vmem>>, vector<8x1xf32>
    tpu.vector_store %arg8[%c0_273, %c0_274], %663 {strides = array<i32>} : memref<8x1xf32, #tpu.memory_space<vmem>>, vector<8x1xf32>,
    return
  }
}

</mosaic_0001>

<llo_original>
// kernel: lstm_model_forward.1
$region0: #{lstm_model_forward.1}
  #allocation0 [shape = 'u32[]', space=smem, size = 0x4, offset = 0x4, fixed_abs, tag = 'smem constant byte address 0x4 - core index']
  #allocation1 [shape = 'u32[144,128]{1,0:T(1,128)}', space=vmem, size = 0x12000, scoped, tag = 'internal scratch']
  #allocation2 [shape = 'bf16[8,256]{1,0:T(8,128)(2,1)}', space=vmem, size = 0x1000, scoped, tag = 'scratch operand']
  #allocation3 [shape = 'f32[1,1]{1,0:T(1,128)S(1)}', space=vmem, size = 0x200, scoped, tag = 'scoped memory for lstm_model_forward.1']
  %s0 = inlined_call_operand.vmem [shape: f32[8,8,1], index: 0, kind: input, shape index: {}]
  %s1 = inlined_call_operand.vmem [shape: f32[1,512], index: 1, kind: input, shape index: {}]
  %s2 = inlined_call_operand.hbm [shape: bf16[128,512], index: 2, kind: input, shape index: {}]
  %s3 = inlined_call_operand.vmem [shape: f32[1,512], index: 3, kind: input, shape index: {}]
  %s4 = inlined_call_operand.hbm [shape: bf16[256,512], index: 4, kind: input, shape index: {}]
  %s5 = inlined_call_operand.vmem [shape: f32[1,512], index: 5, kind: input, shape index: {}]
  %s6 = inlined_call_operand.vmem [shape: f32[1,128], index: 6, kind: input, shape index: {}]
  %s7 = inlined_call_operand.<no memory space> [shape: f32[1,1], index: 7, kind: input, shape index: {}]
  %s8 = inlined_call_operand.vmem [shape: f32[8,1], index: 8, kind: output, shape index: {}]
  %s9 = sld [smem:[#allocation0]]
  $region50: #{lstm_model_forward.1} parent=0
    _
  %s11 = ssub.s32 1, %s9
  %s12 = scalar_select 0, %s11, %s9
  %v13 = vstv %s7
  %14 = vst [vmem:[#allocation3] sm:$0x1] %v13
  $region1: #{lstm_model_forward.1} parent=0
    #allocation4 [shape = 'u8[131072]{0}', space=vmem, size = 0x20000, scoped, tag = 'input window, operand 2, single buffered']
    #allocation5 [shape = 's32[1]{0}', space=sflag, size = 0x4, scoped, tag = 'scoped memory for lstm_model_forward.1']
    #allocation6 [shape = 'u8[262144]{0}', space=vmem, size = 0x40000, scoped, tag = 'input window, operand 4, single buffered']
    #allocation7 [shape = 's32[1]{0}', space=sflag, size = 0x4, scoped, tag = 'scoped memory for lstm_model_forward.1']
    %15 = vsyncpa [#allocation5], 0
    %16 = vsyncpa [#allocation7], 0
    // Predicated region
    $region2: #{lstm_model_forward.1} parent=1 // pred_check
      _
    $region3: #{lstm_model_forward.1} parent=1 // pred_check_branch
      %18 = sbr.rel (0) target = $region5
    $region4: #{lstm_model_forward.1} parent=1 // pred_region
      _
    $region5: #{lstm_model_forward.1} parent=1 // pred_fallthru
      _
    // Predicated region
    $region6: #{lstm_model_forward.1} parent=1 // pred_check
      _
    $region7: #{lstm_model_forward.1} parent=1 // pred_check_branch
      %20 = sbr.rel (0) target = $region9
    $region8: #{lstm_model_forward.1} parent=1 // pred_region
      _
    $region9: #{lstm_model_forward.1} parent=1 // pred_fallthru
      _
    // Predicated region
    $region10: #{lstm_model_forward.1} parent=1 // pred_check
      _
    $region11: #{lstm_model_forward.1} parent=1 // pred_check_branch
      %22 = sbr.rel (0) target = $region13
    $region12: #{lstm_model_forward.1} parent=1 // pred_region
      %s24 = ssub.s32 4096, 4096
      %25 = vsyncadd [#allocation5], %s24
      %s26 = sshll.u32 [#allocation4], 4
      %s27 = int_to_ptr.vmem [resolvable:$true] %s26
      %32 = dma.hbm_to_vmem [thread:$0]  %s2, 4096, %s27, [#allocation5], 256, 256, 16
    $region13: #{lstm_model_forward.1} parent=1 // pred_fallthru
      _
    // Predicated region
    $region14: #{lstm_model_forward.1} parent=1 // pred_check
      _
    $region15: #{lstm_model_forward.1} parent=1 // pred_check_branch
      %34 = sbr.rel (0) target = $region17
    $region16: #{lstm_model_forward.1} parent=1 // pred_region
      _
    $region17: #{lstm_model_forward.1} parent=1 // pred_fallthru
      _
    // Predicated region
    $region18: #{lstm_model_forward.1} parent=1 // pred_check
      _
    $region19: #{lstm_model_forward.1} parent=1 // pred_check_branch
      %36 = sbr.rel (0) target = $region21
    $region20: #{lstm_model_forward.1} parent=1 // pred_region
      %s38 = ssub.s32 8192, 8192
      %39 = vsyncadd [#allocation7], %s38
      %s40 = sshll.u32 [#allocation6], 4
      %s41 = int_to_ptr.vmem [resolvable:$true] %s40
      %46 = dma.hbm_to_vmem [thread:$0]  %s4, 8192, %s41, [#allocation7], 256, 256, 16
    $region21: #{lstm_model_forward.1} parent=1 // pred_fallthru
      _
    // Predicated region
    $region22: #{lstm_model_forward.1} parent=1 // pred_check
      _
    $region23: #{lstm_model_forward.1} parent=1 // pred_check_branch
      %48 = sbr.rel (0) target = $region25
    $region24: #{lstm_model_forward.1} parent=1 // pred_region
      _
    $region25: #{lstm_model_forward.1} parent=1 // pred_fallthru
      _
    // Predicated region
    $region26: #{lstm_model_forward.1} parent=1 // pred_check
      _
    $region27: #{lstm_model_forward.1} parent=1 // pred_check_branch
      %50 = sbr.rel (0) target = $region29
    $region28: #{lstm_model_forward.1} parent=1 // pred_region
      _
    $region29: #{lstm_model_forward.1} parent=1 // pred_fallthru
      _
    // Predicated region
    $region30: #{lstm_model_forward.1} parent=1 // pred_check
      _
    $region31: #{lstm_model_forward.1} parent=1 // pred_check_branch
      %52 = sbr.rel (0) target = $region33
    $region32: #{lstm_model_forward.1} parent=1 // pred_region
      _
    $region33: #{lstm_model_forward.1} parent=1 // pred_fallthru
      _
    // Predicated region
    $region34: #{lstm_model_forward.1} parent=1 // pred_check
      _
    $region35: #{lstm_model_forward.1} parent=1 // pred_check_branch
      %54 = sbr.rel (0) target = $region37
    $region36: #{lstm_model_forward.1} parent=1 // pred_region
      %55 = dma.done [#allocation5], 4096
    $region37: #{lstm_model_forward.1} parent=1 // pred_fallthru
      _
    // Predicated region
    $region38: #{lstm_model_forward.1} parent=1 // pred_check
      _
    $region39: #{lstm_model_forward.1} parent=1 // pred_check_branch
      %57 = sbr.rel (0) target = $region41
    $region40: #{lstm_model_forward.1} parent=1 // pred_region
      %58 = dma.done [#allocation7], 8192
    $region41: #{lstm_model_forward.1} parent=1 // pred_fallthru
      _
    %v60 = vld [vmem:[%s1] sm:$0xf]
    %v62 = vlaneseq
    %v63 = vshrl.u32 %v62, 7
    %v64 = vsub.s32 0, %v63
    %v65 = vrot.slane %v60, %v64
    %v66 = vlaneseq
    %v67 = vshrl.u32 %v66, 7
    %v68 = vsub.s32 1, %v67
    %v69 = vrot.slane %v60, %v68
    %v70 = vlaneseq
    %v71 = vshrl.u32 %v70, 7
    %v72 = vsub.s32 2, %v71
    %v73 = vrot.slane %v60, %v72
    %v74 = vlaneseq
    %v75 = vshrl.u32 %v74, 7
    %v76 = vsub.s32 3, %v75
    %v77 = vrot.slane %v60, %v76
    %v82 = vld [vmem:[%s3] sm:$0xf]
    %v84 = vlaneseq
    %v85 = vshrl.u32 %v84, 7
    %v86 = vsub.s32 0, %v85
    %v87 = vrot.slane %v82, %v86
    %v88 = vlaneseq
    %v89 = vshrl.u32 %v88, 7
    %v90 = vsub.s32 1, %v89
    %v91 = vrot.slane %v82, %v90
    %v92 = vlaneseq
    %v93 = vshrl.u32 %v92, 7
    %v94 = vsub.s32 2, %v93
    %v95 = vrot.slane %v82, %v94
    %v96 = vlaneseq
    %v97 = vshrl.u32 %v96, 7
    %v98 = vsub.s32 3, %v97
    %v99 = vrot.slane %v82, %v98
    %v104 = vld [vmem:[%s5] sm:$0xf]
    %v106 = vlaneseq
    %v107 = vshrl.u32 %v106, 7
    %v108 = vsub.s32 0, %v107
    %v109 = vrot.slane %v104, %v108
    %v110 = vlaneseq
    %v111 = vshrl.u32 %v110, 7
    %v112 = vsub.s32 1, %v111
    %v113 = vrot.slane %v104, %v112
    %v114 = vlaneseq
    %v115 = vshrl.u32 %v114, 7
    %v116 = vsub.s32 2, %v115
    %v117 = vrot.slane %v104, %v116
    %v118 = vlaneseq
    %v119 = vshrl.u32 %v118, 7
    %v120 = vsub.s32 3, %v119
    %v121 = vrot.slane %v104, %v120
    %v126 = vld [vmem:[%s0] sm:$0xff]
    %128 = vset.pattern.permute.xlu0 0
    %129 = vperm.xlu0 %128, %v126
    %v130 = vpop.permute.xlu0 %129
    %v132 = vmul.f32 %v130, %v65
    %v133 = vmul.f32 %v130, %v69
    %v134 = vmul.f32 %v130, %v73
    %v135 = vmul.f32 %v130, %v77
    %v136 = vadd.f32 %v132, %v87
    %v137 = vadd.f32 %v133, %v91
    %v138 = vadd.f32 %v134, %v95
    %v139 = vadd.f32 %v135, %v99
    %v140 = vld [vmem:[#allocation4] sm:$0xff]
    %v141 = vld [vmem:[#allocation4 + $0x8] sm:$0xff]
    %v142 = vld [vmem:[#allocation4 + $0x10] sm:$0xff]
    %v143 = vld [vmem:[#allocation4 + $0x18] sm:$0xff]
    %v144 = vld [vmem:[#allocation4 + $0x20] sm:$0xff]
    %v145 = vld [vmem:[#allocation4 + $0x28] sm:$0xff]
    %v146 = vld [vmem:[#allocation4 + $0x30] sm:$0xff]
    %v147 = vld [vmem:[#allocation4 + $0x38] sm:$0xff]
    %v148 = vld [vmem:[#allocation4 + $0x40] sm:$0xff]
    %v149 = vld [vmem:[#allocation4 + $0x48] sm:$0xff]
    %v150 = vld [vmem:[#allocation4 + $0x50] sm:$0xff]
    %v151 = vld [vmem:[#allocation4 + $0x58] sm:$0xff]
    %v152 = vld [vmem:[#allocation4 + $0x60] sm:$0xff]
    %v153 = vld [vmem:[#allocation4 + $0x68] sm:$0xff]
    %v154 = vld [vmem:[#allocation4 + $0x70] sm:$0xff]
    %v155 = vld [vmem:[#allocation4 + $0x78] sm:$0xff]
    %v156 = vld [vmem:[#allocation4 + $0x80] sm:$0xff]
    %v157 = vld [vmem:[#allocation4 + $0x88] sm:$0xff]
    %v158 = vld [vmem:[#allocation4 + $0x90] sm:$0xff]
    %v159 = vld [vmem:[#allocation4 + $0x98] sm:$0xff]
    %v160 = vld [vmem:[#allocation4 + $0xa0] sm:$0xff]
    %v161 = vld [vmem:[#allocation4 + $0xa8] sm:$0xff]
    %v162 = vld [vmem:[#allocation4 + $0xb0] sm:$0xff]
    %v163 = vld [vmem:[#allocation4 + $0xb8] sm:$0xff]
    %v164 = vld [vmem:[#allocation4 + $0xc0] sm:$0xff]
    %v165 = vld [vmem:[#allocation4 + $0xc8] sm:$0xff]
    %v166 = vld [vmem:[#allocation4 + $0xd0] sm:$0xff]
    %v167 = vld [vmem:[#allocation4 + $0xd8] sm:$0xff]
    %v168 = vld [vmem:[#allocation4 + $0xe0] sm:$0xff]
    %v169 = vld [vmem:[#allocation4 + $0xe8] sm:$0xff]
    %v170 = vld [vmem:[#allocation4 + $0xf0] sm:$0xff]
    %v171 = vld [vmem:[#allocation4 + $0xf8] sm:$0xff]
    %v204 = vunpack.c.l.b16 %v140
    %v205 = vunpack.c.h.b16 %v140
    %v206 = vunpack.c.l.b16 %v141
    %v207 = vunpack.c.h.b16 %v141
    %v208 = vunpack.c.l.b16 %v142
    %v209 = vunpack.c.h.b16 %v142
    %v210 = vunpack.c.l.b16 %v143
    %v211 = vunpack.c.h.b16 %v143
    %v212 = vunpack.c.l.b16 %v144
    %v213 = vunpack.c.h.b16 %v144
    %v214 = vunpack.c.l.b16 %v145
    %v215 = vunpack.c.h.b16 %v145
    %v216 = vunpack.c.l.b16 %v146
    %v217 = vunpack.c.h.b16 %v146
    %v218 = vunpack.c.l.b16 %v147
    %v219 = vunpack.c.h.b16 %v147
    %v220 = vunpack.c.l.b16 %v148
    %v221 = vunpack.c.h.b16 %v148
    %v222 = vunpack.c.l.b16 %v149
    %v223 = vunpack.c.h.b16 %v149
    %v224 = vunpack.c.l.b16 %v150
    %v225 = vunpack.c.h.b16 %v150
    %v226 = vunpack.c.l.b16 %v151
    %v227 = vunpack.c.h.b16 %v151
    %v228 = vunpack.c.l.b16 %v152
    %v229 = vunpack.c.h.b16 %v152
    %v230 = vunpack.c.l.b16 %v153
    %v231 = vunpack.c.h.b16 %v153
    %v232 = vunpack.c.l.b16 %v154
    %v233 = vunpack.c.h.b16 %v154
    %v234 = vunpack.c.l.b16 %v155
    %v235 = vunpack.c.h.b16 %v155
    %v236 = vunpack.c.l.b16 %v156
    %v237 = vunpack.c.h.b16 %v156
    %v238 = vunpack.c.l.b16 %v157
    %v239 = vunpack.c.h.b16 %v157
    %v240 = vunpack.c.l.b16 %v158
    %v241 = vunpack.c.h.b16 %v158
    %v242 = vunpack.c.l.b16 %v159
    %v243 = vunpack.c.h.b16 %v159
    %v244 = vunpack.c.l.b16 %v160
    %v245 = vunpack.c.h.b16 %v160
    %v246 = vunpack.c.l.b16 %v161
    %v247 = vunpack.c.h.b16 %v161
    %v248 = vunpack.c.l.b16 %v162
    %v249 = vunpack.c.h.b16 %v162
    %v250 = vunpack.c.l.b16 %v163
    %v251 = vunpack.c.h.b16 %v163
    %v252 = vunpack.c.l.b16 %v164
    %v253 = vunpack.c.h.b16 %v164
    %v254 = vunpack.c.l.b16 %v165
    %v255 = vunpack.c.h.b16 %v165
    %v256 = vunpack.c.l.b16 %v166
    %v257 = vunpack.c.h.b16 %v166
    %v258 = vunpack.c.l.b16 %v167
    %v259 = vunpack.c.h.b16 %v167
    %v260 = vunpack.c.l.b16 %v168
    %v261 = vunpack.c.h.b16 %v168
    %v262 = vunpack.c.l.b16 %v169
    %v263 = vunpack.c.h.b16 %v169
    %v264 = vunpack.c.l.b16 %v170
    %v265 = vunpack.c.h.b16 %v170
    %v266 = vunpack.c.l.b16 %v171
    %v267 = vunpack.c.h.b16 %v171
    %v268 = vpack.c.b16 %v208, %v204
    %v269 = vpack.c.b16 %v209, %v205
    %v270 = vpack.c.b16 %v210, %v206
    %v271 = vpack.c.b16 %v211, %v207
    %v272 = vpack.c.b16 %v216, %v212
    %v273 = vpack.c.b16 %v217, %v213
    %v274 = vpack.c.b16 %v218, %v214
    %v275 = vpack.c.b16 %v219, %v215
    %v276 = vpack.c.b16 %v224, %v220
    %v277 = vpack.c.b16 %v225, %v221
    %v278 = vpack.c.b16 %v226, %v222
    %v279 = vpack.c.b16 %v227, %v223
    %v280 = vpack.c.b16 %v232, %v228
    %v281 = vpack.c.b16 %v233, %v229
    %v282 = vpack.c.b16 %v234, %v230
    %v283 = vpack.c.b16 %v235, %v231
    %v284 = vpack.c.b16 %v240, %v236
    %v285 = vpack.c.b16 %v241, %v237
    %v286 = vpack.c.b16 %v242, %v238
    %v287 = vpack.c.b16 %v243, %v239
    %v288 = vpack.c.b16 %v248, %v244
    %v289 = vpack.c.b16 %v249, %v245
    %v290 = vpack.c.b16 %v250, %v246
    %v291 = vpack.c.b16 %v251, %v247
    %v292 = vpack.c.b16 %v256, %v252
    %v293 = vpack.c.b16 %v257, %v253
    %v294 = vpack.c.b16 %v258, %v254
    %v295 = vpack.c.b16 %v259, %v255
    %v296 = vpack.c.b16 %v264, %v260
    %v297 = vpack.c.b16 %v265, %v261
    %v298 = vpack.c.b16 %v266, %v262
    %v299 = vpack.c.b16 %v267, %v263
    %332 = vmatprep.subr.bf16.mxu0 %v269
    %333 = vmatpush1.bf16.msra.mxu0 %v268
    %334 = vmatprep.subr.bf16.mxu0 %v273
    %335 = vmatpush1.bf16.msra.mxu0 %v272
    %336 = vmatprep.subr.bf16.mxu0 %v277
    %337 = vmatpush1.bf16.msra.mxu0 %v276
    %338 = vmatprep.subr.bf16.mxu0 %v281
    %339 = vmatpush1.bf16.msra.mxu0 %v280
    %340 = vmatprep.subr.bf16.mxu0 %v285
    %341 = vmatpush1.bf16.msra.mxu0 %v284
    %342 = vmatprep.subr.bf16.mxu0 %v289
    %343 = vmatpush1.bf16.msra.mxu0 %v288
    %344 = vmatprep.subr.bf16.mxu0 %v293
    %345 = vmatpush1.bf16.msra.mxu0 %v292
    %346 = vmatprep.subr.bf16.mxu0 %v297
    %347 = vmatpush1.bf16.msra.mxu0 %v296
    %348 = vmatprep.subr.bf16.mxu0 0
    %349 = vmatpush1.bf16.msra.mxu0 0
    %350 = vmatprep.subr.bf16.mxu0 0
    %351 = vmatpush1.bf16.msra.mxu0 0
    %352 = vmatprep.subr.bf16.mxu0 0
    %353 = vmatpush1.bf16.msra.mxu0 0
    %354 = vmatprep.subr.bf16.mxu0 0
    %355 = vmatpush1.bf16.msra.mxu0 0
    %356 = vmatprep.subr.bf16.mxu0 0
    %357 = vmatpush1.bf16.msra.mxu0 0
    %358 = vmatprep.subr.bf16.mxu0 0
    %359 = vmatpush1.bf16.msra.mxu0 0
    %360 = vmatprep.subr.bf16.mxu0 0
    %361 = vmatpush1.bf16.msra.mxu0 0
    %362 = vmatprep.subr.bf16.mxu0 0
    %363 = vmatpush1.bf16.msra.mxu0 0
    %364 = vmatprep.mubr.bf16.mxu0 0
    %365 = vmatmul.mubr.bf16.gmra.mrb[0].mxu0 0
    %v366 = vpop.f32.mrb[0].mxu0
    %v367 = vadd.f32 0.0, %v366
    %v368 = vpop.f32.mrb[0].mxu0
    %v369 = vadd.f32 0.0, %v368
    %v370 = vpop.f32.mrb[0].mxu0
    %v371 = vpop.f32.mrb[0].mxu0
    %372 = vdwg.mxu0
    %373 = vmatprep.subr.bf16.mxu0 %v271
    %374 = vmatpush1.bf16.msra.mxu0 %v270
    %375 = vmatprep.subr.bf16.mxu0 %v275
    %376 = vmatpush1.bf16.msra.mxu0 %v274
    %377 = vmatprep.subr.bf16.mxu0 %v279
    %378 = vmatpush1.bf16.msra.mxu0 %v278
    %379 = vmatprep.subr.bf16.mxu0 %v283
    %380 = vmatpush1.bf16.msra.mxu0 %v282
    %381 = vmatprep.subr.bf16.mxu0 %v287
    %382 = vmatpush1.bf16.msra.mxu0 %v286
    %383 = vmatprep.subr.bf16.mxu0 %v291
    %384 = vmatpush1.bf16.msra.mxu0 %v290
    %385 = vmatprep.subr.bf16.mxu0 %v295
    %386 = vmatpush1.bf16.msra.mxu0 %v294
    %387 = vmatprep.subr.bf16.mxu0 %v299
    %388 = vmatpush1.bf16.msra.mxu0 %v298
    %389 = vmatprep.subr.bf16.mxu0 0
    %390 = vmatpush1.bf16.msra.mxu0 0
    %391 = vmatprep.subr.bf16.mxu0 0
    %392 = vmatpush1.bf16.msra.mxu0 0
    %393 = vmatprep.subr.bf16.mxu0 0
    %394 = vmatpush1.bf16.msra.mxu0 0
    %395 = vmatprep.subr.bf16.mxu0 0
    %396 = vmatpush1.bf16.msra.mxu0 0
    %397 = vmatprep.subr.bf16.mxu0 0
    %398 = vmatpush1.bf16.msra.mxu0 0
    %399 = vmatprep.subr.bf16.mxu0 0
    %400 = vmatpush1.bf16.msra.mxu0 0
    %401 = vmatprep.subr.bf16.mxu0 0
    %402 = vmatpush1.bf16.msra.mxu0 0
    %403 = vmatprep.subr.bf16.mxu0 0
    %404 = vmatpush1.bf16.msra.mxu0 0
    %405 = vmatprep.mubr.bf16.mxu0 0
    %406 = vmatmul.mubr.bf16.gmra.mrb[0].mxu0 0
    %v407 = vpop.f32.mrb[0].mxu0
    %v408 = vadd.f32 0.0, %v407
    %v409 = vpop.f32.mrb[0].mxu0
    %v410 = vadd.f32 0.0, %v409
    %v411 = vpop.f32.mrb[0].mxu0
    %v412 = vpop.f32.mrb[0].mxu0
    %413 = vdwg.mxu0
    %v414 = vadd.f32 %v136, %v367
    %v415 = vadd.f32 %v137, %v369
    %v416 = vadd.f32 %v138, %v408
    %v417 = vadd.f32 %v139, %v410
    %v418 = vmul.f32 %v414, 0.5
    %v419 = vtanh.pop %v418
    %v420 = vmul.f32 %v419, 0.5
    %v421 = vadd.f32 %v420, 0.5
    %v422 = vmul.f32 %v415, 0.5
    %v423 = vtanh.pop %v422
    %v424 = vmul.f32 %v423, 0.5
    %v425 = vadd.f32 %v424, 0.5
    %v426 = vtanh.pop %v416
    %v427 = vmul.f32 %v417, 0.5
    %v428 = vtanh.pop %v427
    %v429 = vmul.f32 %v428, 0.5
    %v430 = vadd.f32 %v429, 0.5
    %v431 = vmul.f32 %v425, 0.0
    %v432 = vmul.f32 %v421, %v426
    %v433 = vadd.f32 %v431, %v432
    %v434 = vtanh.pop %v433
    %v435 = vmul.f32 %v430, %v434
    %v436 = vpack.c.bf16 %v435, %v435
    %437 = vst [vmem:[#allocation2] sm:$0xf] %v436
    %438 = vst [vmem:[#allocation2 + $0x4] sm:$0xf] 0
    %v439 = vld [vmem:[#allocation2] sm:$0xff]
    %v440 = vld [vmem:[#allocation6] sm:$0xff]
    %v441 = vld [vmem:[#allocation6 + $0x8] sm:$0xff]
    %v442 = vld [vmem:[#allocation6 + $0x10] sm:$0xff]
    %v443 = vld [vmem:[#allocation6 + $0x18] sm:$0xff]
    %v444 = vld [vmem:[#allocation6 + $0x20] sm:$0xff]
    %v445 = vld [vmem:[#allocation6 + $0x28] sm:$0xff]
    %v446 = vld [vmem:[#allocation6 + $0x30] sm:$0xff]
    %v447 = vld [vmem:[#allocation6 + $0x38] sm:$0xff]
    %v448 = vld [vmem:[#allocation6 + $0x40] sm:$0xff]
    %v449 = vld [vmem:[#allocation6 + $0x48] sm:$0xff]
    %v450 = vld [vmem:[#allocation6 + $0x50] sm:$0xff]
    %v451 = vld [vmem:[#allocation6 + $0x58] sm:$0xff]
    %v452 = vld [vmem:[#allocation6 + $0x60] sm:$0xff]
    %v453 = vld [vmem:[#allocation6 + $0x68] sm:$0xff]
    %v454 = vld [vmem:[#allocation6 + $0x70] sm:$0xff]
    %v455 = vld [vmem:[#allocation6 + $0x78] sm:$0xff]
    %v456 = vld [vmem:[#allocation6 + $0x80] sm:$0xff]
    %v457 = vld [vmem:[#allocation6 + $0x88] sm:$0xff]
    %v458 = vld [vmem:[#allocation6 + $0x90] sm:$0xff]
    %v459 = vld [vmem:[#allocation6 + $0x98] sm:$0xff]
    %v460 = vld [vmem:[#allocation6 + $0xa0] sm:$0xff]
    %v461 = vld [vmem:[#allocation6 + $0xa8] sm:$0xff]
    %v462 = vld [vmem:[#allocation6 + $0xb0] sm:$0xff]
    %v463 = vld [vmem:[#allocation6 + $0xb8] sm:$0xff]
    %v464 = vld [vmem:[#allocation6 + $0xc0] sm:$0xff]
    %v465 = vld [vmem:[#allocation6 + $0xc8] sm:$0xff]
    %v466 = vld [vmem:[#allocation6 + $0xd0] sm:$0xff]
    %v467 = vld [vmem:[#allocation6 + $0xd8] sm:$0xff]
    %v468 = vld [vmem:[#allocation6 + $0xe0] sm:$0xff]
    %v469 = vld [vmem:[#allocation6 + $0xe8] sm:$0xff]
    %v470 = vld [vmem:[#allocation6 + $0xf0] sm:$0xff]
    %v471 = vld [vmem:[#allocation6 + $0xf8] sm:$0xff]
    %v472 = vld [vmem:[#allocation6 + $0x100] sm:$0xff]
    %v473 = vld [vmem:[#allocation6 + $0x108] sm:$0xff]
    %v474 = vld [vmem:[#allocation6 + $0x110] sm:$0xff]
    %v475 = vld [vmem:[#allocation6 + $0x118] sm:$0xff]
    %v476 = vld [vmem:[#allocation6 + $0x120] sm:$0xff]
    %v477 = vld [vmem:[#allocation6 + $0x128] sm:$0xff]
    %v478 = vld [vmem:[#allocation6 + $0x130] sm:$0xff]
    %v479 = vld [vmem:[#allocation6 + $0x138] sm:$0xff]
    %v480 = vld [vmem:[#allocation6 + $0x140] sm:$0xff]
    %v481 = vld [vmem:[#allocation6 + $0x148] sm:$0xff]
    %v482 = vld [vmem:[#allocation6 + $0x150] sm:$0xff]
    %v483 = vld [vmem:[#allocation6 + $0x158] sm:$0xff]
    %v484 = vld [vmem:[#allocation6 + $0x160] sm:$0xff]
    %v485 = vld [vmem:[#allocation6 + $0x168] sm:$0xff]
    %v486 = vld [vmem:[#allocation6 + $0x170] sm:$0xff]
    %v487 = vld [vmem:[#allocation6 + $0x178] sm:$0xff]
    %v488 = vld [vmem:[#allocation6 + $0x180] sm:$0xff]
    %v489 = vld [vmem:[#allocation6 + $0x188] sm:$0xff]
    %v490 = vld [vmem:[#allocation6 + $0x190] sm:$0xff]
    %v491 = vld [vmem:[#allocation6 + $0x198] sm:$0xff]
    %v492 = vld [vmem:[#allocation6 + $0x1a0] sm:$0xff]
    %v493 = vld [vmem:[#allocation6 + $0x1a8] sm:$0xff]
    %v494 = vld [vmem:[#allocation6 + $0x1b0] sm:$0xff]
    %v495 = vld [vmem:[#allocation6 + $0x1b8] sm:$0xff]
    %v496 = vld [vmem:[#allocation6 + $0x1c0] sm:$0xff]
    %v497 = vld [vmem:[#allocation6 + $0x1c8] sm:$0xff]
    %v498 = vld [vmem:[#allocation6 + $0x1d0] sm:$0xff]
    %v499 = vld [vmem:[#allocation6 + $0x1d8] sm:$0xff]
    %v500 = vld [vmem:[#allocation6 + $0x1e0] sm:$0xff]
    %v501 = vld [vmem:[#allocation6 + $0x1e8] sm:$0xff]
    %v502 = vld [vmem:[#allocation6 + $0x1f0] sm:$0xff]
    %v503 = vld [vmem:[#allocation6 + $0x1f8] sm:$0xff]
    %v505 = vunpack.c.l.b16 %v439
    %v506 = vunpack.c.h.b16 %v439
    %v507 = vpack.c.b16 %v505, %v505
    %v508 = vpack.c.b16 %v506, %v506
    %v575 = vunpack.c.l.b16 %v440
    %v576 = vunpack.c.h.b16 %v440
    %v577 = vunpack.c.l.b16 %v441
    %v578 = vunpack.c.h.b16 %v441
    %v579 = vunpack.c.l.b16 %v442
    %v580 = vunpack.c.h.b16 %v442
    %v581 = vunpack.c.l.b16 %v443
    %v582 = vunpack.c.h.b16 %v443
    %v583 = vunpack.c.l.b16 %v444
    %v584 = vunpack.c.h.b16 %v444
    %v585 = vunpack.c.l.b16 %v445
    %v586 = vunpack.c.h.b16 %v445
    %v587 = vunpack.c.l.b16 %v446
    %v588 = vunpack.c.h.b16 %v446
    %v589 = vunpack.c.l.b16 %v447
    %v590 = vunpack.c.h.b16 %v447
    %v591 = vunpack.c.l.b16 %v448
    %v592 = vunpack.c.h.b16 %v448
    %v593 = vunpack.c.l.b16 %v449
    %v594 = vunpack.c.h.b16 %v449
    %v595 = vunpack.c.l.b16 %v450
    %v596 = vunpack.c.h.b16 %v450
    %v597 = vunpack.c.l.b16 %v451
    %v598 = vunpack.c.h.b16 %v451
    %v599 = vunpack.c.l.b16 %v452
    %v600 = vunpack.c.h.b16 %v452
    %v601 = vunpack.c.l.b16 %v453
    %v602 = vunpack.c.h.b16 %v453
    %v603 = vunpack.c.l.b16 %v454
    %v604 = vunpack.c.h.b16 %v454
    %v605 = vunpack.c.l.b16 %v455
    %v606 = vunpack.c.h.b16 %v455
    %v607 = vunpack.c.l.b16 %v456
    %v608 = vunpack.c.h.b16 %v456
    %v609 = vunpack.c.l.b16 %v457
    %v610 = vunpack.c.h.b16 %v457
    %v611 = vunpack.c.l.b16 %v458
    %v612 = vunpack.c.h.b16 %v458
    %v613 = vunpack.c.l.b16 %v459
    %v614 = vunpack.c.h.b16 %v459
    %v615 = vunpack.c.l.b16 %v460
    %v616 = vunpack.c.h.b16 %v460
    %v617 = vunpack.c.l.b16 %v461
    %v618 = vunpack.c.h.b16 %v461
    %v619 = vunpack.c.l.b16 %v462
    %v620 = vunpack.c.h.b16 %v462
    %v621 = vunpack.c.l.b16 %v463
    %v622 = vunpack.c.h.b16 %v463
    %v623 = vunpack.c.l.b16 %v464
    %v624 = vunpack.c.h.b16 %v464
    %v625 = vunpack.c.l.b16 %v465
    %v626 = vunpack.c.h.b16 %v465
    %v627 = vunpack.c.l.b16 %v466
    %v628 = vunpack.c.h.b16 %v466
    %v629 = vunpack.c.l.b16 %v467
    %v630 = vunpack.c.h.b16 %v467
    %v631 = vunpack.c.l.b16 %v468
    %v632 = vunpack.c.h.b16 %v468
    %v633 = vunpack.c.l.b16 %v469
    %v634 = vunpack.c.h.b16 %v469
    %v635 = vunpack.c.l.b16 %v470
    %v636 = vunpack.c.h.b16 %v470
    %v637 = vunpack.c.l.b16 %v471
    %v638 = vunpack.c.h.b16 %v471
    %v639 = vunpack.c.l.b16 %v472
    %v640 = vunpack.c.h.b16 %v472
    %v641 = vunpack.c.l.b16 %v473
    %v642 = vunpack.c.h.b16 %v473
    %v643 = vunpack.c.l.b16 %v474
    %v644 = vunpack.c.h.b16 %v474
    %v645 = vunpack.c.l.b16 %v475
    %v646 = vunpack.c.h.b16 %v475
    %v647 = vunpack.c.l.b16 %v476
    %v648 = vunpack.c.h.b16 %v476
    %v649 = vunpack.c.l.b16 %v477
    %v650 = vunpack.c.h.b16 %v477
    %v651 = vunpack.c.l.b16 %v478
    %v652 = vunpack.c.h.b16 %v478
    %v653 = vunpack.c.l.b16 %v479
    %v654 = vunpack.c.h.b16 %v479
    %v655 = vunpack.c.l.b16 %v480
    %v656 = vunpack.c.h.b16 %v480
    %v657 = vunpack.c.l.b16 %v481
    %v658 = vunpack.c.h.b16 %v481
    %v659 = vunpack.c.l.b16 %v482
    %v660 = vunpack.c.h.b16 %v482
    %v661 = vunpack.c.l.b16 %v483
    %v662 = vunpack.c.h.b16 %v483
    %v663 = vunpack.c.l.b16 %v484
    %v664 = vunpack.c.h.b16 %v484
    %v665 = vunpack.c.l.b16 %v485
    %v666 = vunpack.c.h.b16 %v485
    %v667 = vunpack.c.l.b16 %v486
    %v668 = vunpack.c.h.b16 %v486
    %v669 = vunpack.c.l.b16 %v487
    %v670 = vunpack.c.h.b16 %v487
    %v671 = vunpack.c.l.b16 %v488
    %v672 = vunpack.c.h.b16 %v488
    %v673 = vunpack.c.l.b16 %v489
    %v674 = vunpack.c.h.b16 %v489
    %v675 = vunpack.c.l.b16 %v490
    %v676 = vunpack.c.h.b16 %v490
    %v677 = vunpack.c.l.b16 %v491
    %v678 = vunpack.c.h.b16 %v491
    %v679 = vunpack.c.l.b16 %v492
    %v680 = vunpack.c.h.b16 %v492
    %v681 = vunpack.c.l.b16 %v493
    %v682 = vunpack.c.h.b16 %v493
    %v683 = vunpack.c.l.b16 %v494
    %v684 = vunpack.c.h.b16 %v494
    %v685 = vunpack.c.l.b16 %v495
    %v686 = vunpack.c.h.b16 %v495
    %v687 = vunpack.c.l.b16 %v496
    %v688 = vunpack.c.h.b16 %v496
    %v689 = vunpack.c.l.b16 %v497
    %v690 = vunpack.c.h.b16 %v497
    %v691 = vunpack.c.l.b16 %v498
    %v692 = vunpack.c.h.b16 %v498
    %v693 = vunpack.c.l.b16 %v499
    %v694 = vunpack.c.h.b16 %v499
    %v695 = vunpack.c.l.b16 %v500
    %v696 = vunpack.c.h.b16 %v500
    %v697 = vunpack.c.l.b16 %v501
    %v698 = vunpack.c.h.b16 %v501
    %v699 = vunpack.c.l.b16 %v502
    %v700 = vunpack.c.h.b16 %v502
    %v701 = vunpack.c.l.b16 %v503
    %v702 = vunpack.c.h.b16 %v503
    %v703 = vpack.c.b16 %v579, %v575
    %v704 = vpack.c.b16 %v580, %v576
    %v705 = vpack.c.b16 %v581, %v577
    %v706 = vpack.c.b16 %v582, %v578
    %v707 = vpack.c.b16 %v587, %v583
    %v708 = vpack.c.b16 %v588, %v584
    %v709 = vpack.c.b16 %v589, %v585
    %v710 = vpack.c.b16 %v590, %v586
    %v711 = vpack.c.b16 %v595, %v591
    %v712 = vpack.c.b16 %v596, %v592
    %v713 = vpack.c.b16 %v597, %v593
    %v714 = vpack.c.b16 %v598, %v594
    %v715 = vpack.c.b16 %v603, %v599
    %v716 = vpack.c.b16 %v604, %v600
    %v717 = vpack.c.b16 %v605, %v601
    %v718 = vpack.c.b16 %v606, %v602
    %v719 = vpack.c.b16 %v611, %v607
    %v720 = vpack.c.b16 %v612, %v608
    %v721 = vpack.c.b16 %v613, %v609
    %v722 = vpack.c.b16 %v614, %v610
    %v723 = vpack.c.b16 %v619, %v615
    %v724 = vpack.c.b16 %v620, %v616
    %v725 = vpack.c.b16 %v621, %v617
    %v726 = vpack.c.b16 %v622, %v618
    %v727 = vpack.c.b16 %v627, %v623
    %v728 = vpack.c.b16 %v628, %v624
    %v729 = vpack.c.b16 %v629, %v625
    %v730 = vpack.c.b16 %v630, %v626
    %v731 = vpack.c.b16 %v635, %v631
    %v732 = vpack.c.b16 %v636, %v632
    %v733 = vpack.c.b16 %v637, %v633
    %v734 = vpack.c.b16 %v638, %v634
    %v735 = vpack.c.b16 %v643, %v639
    %v736 = vpack.c.b16 %v644, %v640
    %v737 = vpack.c.b16 %v645, %v641
    %v738 = vpack.c.b16 %v646, %v642
    %v739 = vpack.c.b16 %v651, %v647
    %v740 = vpack.c.b16 %v652, %v648
    %v741 = vpack.c.b16 %v653, %v649
    %v742 = vpack.c.b16 %v654, %v650
    %v743 = vpack.c.b16 %v659, %v655
    %v744 = vpack.c.b16 %v660, %v656
    %v745 = vpack.c.b16 %v661, %v657
    %v746 = vpack.c.b16 %v662, %v658
    %v747 = vpack.c.b16 %v667, %v663
    %v748 = vpack.c.b16 %v668, %v664
    %v749 = vpack.c.b16 %v669, %v665
    %v750 = vpack.c.b16 %v670, %v666
    %v751 = vpack.c.b16 %v675, %v671
    %v752 = vpack.c.b16 %v676, %v672
    %v753 = vpack.c.b16 %v677, %v673
    %v754 = vpack.c.b16 %v678, %v674
    %v755 = vpack.c.b16 %v683, %v679
    %v756 = vpack.c.b16 %v684, %v680
    %v757 = vpack.c.b16 %v685, %v681
    %v758 = vpack.c.b16 %v686, %v682
    %v759 = vpack.c.b16 %v691, %v687
    %v760 = vpack.c.b16 %v692, %v688
    %v761 = vpack.c.b16 %v693, %v689
    %v762 = vpack.c.b16 %v694, %v690
    %v763 = vpack.c.b16 %v699, %v695
    %v764 = vpack.c.b16 %v700, %v696
    %v765 = vpack.c.b16 %v701, %v697
    %v766 = vpack.c.b16 %v702, %v698
    %831 = vmatprep.subr.bf16.mxu0 %v704
    %832 = vmatpush1.bf16.msra.mxu0 %v703
    %833 = vmatprep.subr.bf16.mxu0 %v708
    %834 = vmatpush1.bf16.msra.mxu0 %v707
    %835 = vmatprep.subr.bf16.mxu0 %v712
    %836 = vmatpush1.bf16.msra.mxu0 %v711
    %837 = vmatprep.subr.bf16.mxu0 %v716
    %838 = vmatpush1.bf16.msra.mxu0 %v715
    %839 = vmatprep.subr.bf16.mxu0 %v720
    %840 = vmatpush1.bf16.msra.mxu0 %v719
    %841 = vmatprep.subr.bf16.mxu0 %v724
    %842 = vmatpush1.bf16.msra.mxu0 %v723
    %843 = vmatprep.subr.bf16.mxu0 %v728
    %844 = vmatpush1.bf16.msra.mxu0 %v727
    %845 = vmatprep.subr.bf16.mxu0 %v732
    %846 = vmatpush1.bf16.msra.mxu0 %v731
    %847 = vmatprep.subr.bf16.mxu0 %v736
    %848 = vmatpush1.bf16.msra.mxu0 %v735
    %849 = vmatprep.subr.bf16.mxu0 %v740
    %850 = vmatpush1.bf16.msra.mxu0 %v739
    %851 = vmatprep.subr.bf16.mxu0 %v744
    %852 = vmatpush1.bf16.msra.mxu0 %v743
    %853 = vmatprep.subr.bf16.mxu0 %v748
    %854 = vmatpush1.bf16.msra.mxu0 %v747
    %855 = vmatprep.subr.bf16.mxu0 %v752
    %856 = vmatpush1.bf16.msra.mxu0 %v751
    %857 = vmatprep.subr.bf16.mxu0 %v756
    %858 = vmatpush1.bf16.msra.mxu0 %v755
    %859 = vmatprep.subr.bf16.mxu0 %v760
    %860 = vmatpush1.bf16.msra.mxu0 %v759
    %861 = vmatprep.subr.bf16.mxu0 %v764
    %862 = vmatpush1.bf16.msra.mxu0 %v763
    %863 = vmatprep.mubr.bf16.mxu0 %v508
    %864 = vmatmul.mubr.bf16.gmra.mrb[0].mxu0 %v507
    %v865 = vpop.f32.mrb[0].mxu0
    %v866 = vadd.f32 %v109, %v865
    %v867 = vpop.f32.mrb[0].mxu0
    %v868 = vadd.f32 %v113, %v867
    %v869 = vpop.f32.mrb[0].mxu0
    %v870 = vpop.f32.mrb[0].mxu0
    %871 = vdwg.mxu0
    %872 = vmatprep.subr.bf16.mxu0 %v706
    %873 = vmatpush1.bf16.msra.mxu0 %v705
    %874 = vmatprep.subr.bf16.mxu0 %v710
    %875 = vmatpush1.bf16.msra.mxu0 %v709
    %876 = vmatprep.subr.bf16.mxu0 %v714
    %877 = vmatpush1.bf16.msra.mxu0 %v713
    %878 = vmatprep.subr.bf16.mxu0 %v718
    %879 = vmatpush1.bf16.msra.mxu0 %v717
    %880 = vmatprep.subr.bf16.mxu0 %v722
    %881 = vmatpush1.bf16.msra.mxu0 %v721
    %882 = vmatprep.subr.bf16.mxu0 %v726
    %883 = vmatpush1.bf16.msra.mxu0 %v725
    %884 = vmatprep.subr.bf16.mxu0 %v730
    %885 = vmatpush1.bf16.msra.mxu0 %v729
    %886 = vmatprep.subr.bf16.mxu0 %v734
    %887 = vmatpush1.bf16.msra.mxu0 %v733
    %888 = vmatprep.subr.bf16.mxu0 %v738
    %889 = vmatpush1.bf16.msra.mxu0 %v737
    %890 = vmatprep.subr.bf16.mxu0 %v742
    %891 = vmatpush1.bf16.msra.mxu0 %v741
    %892 = vmatprep.subr.bf16.mxu0 %v746
    %893 = vmatpush1.bf16.msra.mxu0 %v745
    %894 = vmatprep.subr.bf16.mxu0 %v750
    %895 = vmatpush1.bf16.msra.mxu0 %v749
    %896 = vmatprep.subr.bf16.mxu0 %v754
    %897 = vmatpush1.bf16.msra.mxu0 %v753
    %898 = vmatprep.subr.bf16.mxu0 %v758
    %899 = vmatpush1.bf16.msra.mxu0 %v757
    %900 = vmatprep.subr.bf16.mxu0 %v762
    %901 = vmatpush1.bf16.msra.mxu0 %v761
    %902 = vmatprep.subr.bf16.mxu0 %v766
    %903 = vmatpush1.bf16.msra.mxu0 %v765
    %904 = vmatprep.mubr.bf16.mxu0 %v508
    %905 = vmatmul.mubr.bf16.gmra.mrb[0].mxu0 %v507
    %v906 = vpop.f32.mrb[0].mxu0
    %v907 = vadd.f32 %v117, %v906
    %v908 = vpop.f32.mrb[0].mxu0
    %v909 = vadd.f32 %v121, %v908
    %v910 = vpop.f32.mrb[0].mxu0
    %v911 = vpop.f32.mrb[0].mxu0
    %912 = vdwg.mxu0
    %v913 = vmul.f32 %v866, 0.5
    %v914 = vtanh.pop %v913
    %v915 = vmul.f32 %v914, 0.5
    %v916 = vadd.f32 %v915, 0.5
    %v917 = vmul.f32 %v868, 0.5
    %v918 = vtanh.pop %v917
    %v919 = vmul.f32 %v918, 0.5
    %v920 = vadd.f32 %v919, 0.5
    %v921 = vtanh.pop %v907
    %v922 = vmul.f32 %v909, 0.5
    %v923 = vtanh.pop %v922
    %v924 = vmul.f32 %v923, 0.5
    %v925 = vadd.f32 %v924, 0.5
    %v926 = vmul.f32 %v920, 0.0
    %v927 = vmul.f32 %v916, %v921
    %v928 = vadd.f32 %v926, %v927
    %v929 = vtanh.pop %v928
    %v930 = vmul.f32 %v925, %v929
    %s931 = scalar_lea.vmem %s0, 8
    %v932 = vld [vmem:[%s931] sm:$0xff]
    %934 = vset.pattern.permute.xlu0 0
    %935 = vperm.xlu0 %934, %v932
    %v936 = vpop.permute.xlu0 %935
    %v938 = vmul.f32 %v936, %v65
    %v939 = vmul.f32 %v936, %v69
    %v940 = vmul.f32 %v936, %v73
    %v941 = vmul.f32 %v936, %v77
    %v942 = vadd.f32 %v938, %v87
    %v943 = vadd.f32 %v939, %v91
    %v944 = vadd.f32 %v940, %v95
    %v945 = vadd.f32 %v941, %v99
    %v946 = vld [vmem:[#allocation4] sm:$0xff]
    %v947 = vld [vmem:[#allocation4 + $0x8] sm:$0xff]
    %v948 = vld [vmem:[#allocation4 + $0x10] sm:$0xff]
    %v949 = vld [vmem:[#allocation4 + $0x18] sm:$0xff]
    %v950 = vld [vmem:[#allocation4 + $0x20] sm:$0xff]
    %v951 = vld [vmem:[#allocation4 + $0x28] sm:$0xff]
    %v952 = vld [vmem:[#allocation4 + $0x30] sm:$0xff]
    %v953 = vld [vmem:[#allocation4 + $0x38] sm:$0xff]
    %v954 = vld [vmem:[#allocation4 + $0x40] sm:$0xff]
    %v955 = vld [vmem:[#allocation4 + $0x48] sm:$0xff]
    %v956 = vld [vmem:[#allocation4 + $0x50] sm:$0xff]
    %v957 = vld [vmem:[#allocation4 + $0x58] sm:$0xff]
    %v958 = vld [vmem:[#allocation4 + $0x60] sm:$0xff]
    %v959 = vld [vmem:[#allocation4 + $0x68] sm:$0xff]
    %v960 = vld [vmem:[#allocation4 + $0x70] sm:$0xff]
    %v961 = vld [vmem:[#allocation4 + $0x78] sm:$0xff]
    %v962 = vld [vmem:[#allocation4 + $0x80] sm:$0xff]
    %v963 = vld [vmem:[#allocation4 + $0x88] sm:$0xff]
    %v964 = vld [vmem:[#allocation4 + $0x90] sm:$0xff]
    %v965 = vld [vmem:[#allocation4 + $0x98] sm:$0xff]
    %v966 = vld [vmem:[#allocation4 + $0xa0] sm:$0xff]
    %v967 = vld [vmem:[#allocation4 + $0xa8] sm:$0xff]
    %v968 = vld [vmem:[#allocation4 + $0xb0] sm:$0xff]
    %v969 = vld [vmem:[#allocation4 + $0xb8] sm:$0xff]
    %v970 = vld [vmem:[#allocation4 + $0xc0] sm:$0xff]
    %v971 = vld [vmem:[#allocation4 + $0xc8] sm:$0xff]
    %v972 = vld [vmem:[#allocation4 + $0xd0] sm:$0xff]
    %v973 = vld [vmem:[#allocation4 + $0xd8] sm:$0xff]
    %v974 = vld [vmem:[#allocation4 + $0xe0] sm:$0xff]
    %v975 = vld [vmem:[#allocation4 + $0xe8] sm:$0xff]
    %v976 = vld [vmem:[#allocation4 + $0xf0] sm:$0xff]
    %v977 = vld [vmem:[#allocation4 + $0xf8] sm:$0xff]
    %v1010 = vunpack.c.l.b16 %v946
    %v1011 = vunpack.c.h.b16 %v946
    %v1012 = vunpack.c.l.b16 %v947
    %v1013 = vunpack.c.h.b16 %v947
    %v1014 = vunpack.c.l.b16 %v948
    %v1015 = vunpack.c.h.b16 %v948
    %v1016 = vunpack.c.l.b16 %v949
    %v1017 = vunpack.c.h.b16 %v949
    %v1018 = vunpack.c.l.b16 %v950
    %v1019 = vunpack.c.h.b16 %v950
    %v1020 = vunpack.c.l.b16 %v951
    %v1021 = vunpack.c.h.b16 %v951
    %v1022 = vunpack.c.l.b16 %v952
    %v1023 = vunpack.c.h.b16 %v952
    %v1024 = vunpack.c.l.b16 %v953
    %v1025 = vunpack.c.h.b16 %v953
    %v1026 = vunpack.c.l.b16 %v954
    %v1027 = vunpack.c.h.b16 %v954
    %v1028 = vunpack.c.l.b16 %v955
    %v1029 = vunpack.c.h.b16 %v955
    %v1030 = vunpack.c.l.b16 %v956
    %v1031 = vunpack.c.h.b16 %v956
    %v1032 = vunpack.c.l.b16 %v957
    %v1033 = vunpack.c.h.b16 %v957
    %v1034 = vunpack.c.l.b16 %v958
    %v1035 = vunpack.c.h.b16 %v958
    %v1036 = vunpack.c.l.b16 %v959
    %v1037 = vunpack.c.h.b16 %v959
    %v1038 = vunpack.c.l.b16 %v960
    %v1039 = vunpack.c.h.b16 %v960
    %v1040 = vunpack.c.l.b16 %v961
    %v1041 = vunpack.c.h.b16 %v961
    %v1042 = vunpack.c.l.b16 %v962
    %v1043 = vunpack.c.h.b16 %v962
    %v1044 = vunpack.c.l.b16 %v963
    %v1045 = vunpack.c.h.b16 %v963
    %v1046 = vunpack.c.l.b16 %v964
    %v1047 = vunpack.c.h.b16 %v964
    %v1048 = vunpack.c.l.b16 %v965
    %v1049 = vunpack.c.h.b16 %v965
    %v1050 = vunpack.c.l.b16 %v966
    %v1051 = vunpack.c.h.b16 %v966
    %v1052 = vunpack.c.l.b16 %v967
    %v1053 = vunpack.c.h.b16 %v967
    %v1054 = vunpack.c.l.b16 %v968
    %v1055 = vunpack.c.h.b16 %v968
    %v1056 = vunpack.c.l.b16 %v969
    %v1057 = vunpack.c.h.b16 %v969
    %v1058 = vunpack.c.l.b16 %v970
    %v1059 = vunpack.c.h.b16 %v970
    %v1060 = vunpack.c.l.b16 %v971
    %v1061 = vunpack.c.h.b16 %v971
    %v1062 = vunpack.c.l.b16 %v972
    %v1063 = vunpack.c.h.b16 %v972
    %v1064 = vunpack.c.l.b16 %v973
    %v1065 = vunpack.c.h.b16 %v973
    %v1066 = vunpack.c.l.b16 %v974
    %v1067 = vunpack.c.h.b16 %v974
    %v1068 = vunpack.c.l.b16 %v975
    %v1069 = vunpack.c.h.b16 %v975
    %v1070 = vunpack.c.l.b16 %v976
    %v1071 = vunpack.c.h.b16 %v976
    %v1072 = vunpack.c.l.b16 %v977
    %v1073 = vunpack.c.h.b16 %v977
    %v1074 = vpack.c.b16 %v1014, %v1010
    %v1075 = vpack.c.b16 %v1015, %v1011
    %v1076 = vpack.c.b16 %v1016, %v1012
    %v1077 = vpack.c.b16 %v1017, %v1013
    %v1078 = vpack.c.b16 %v1022, %v1018
    %v1079 = vpack.c.b16 %v1023, %v1019
    %v1080 = vpack.c.b16 %v1024, %v1020
    %v1081 = vpack.c.b16 %v1025, %v1021
    %v1082 = vpack.c.b16 %v1030, %v1026
    %v1083 = vpack.c.b16 %v1031, %v1027
    %v1084 = vpack.c.b16 %v1032, %v1028
    %v1085 = vpack.c.b16 %v1033, %v1029
    %v1086 = vpack.c.b16 %v1038, %v1034
    %v1087 = vpack.c.b16 %v1039, %v1035
    %v1088 = vpack.c.b16 %v1040, %v1036
    %v1089 = vpack.c.b16 %v1041, %v1037
    %v1090 = vpack.c.b16 %v1046, %v1042
    %v1091 = vpack.c.b16 %v1047, %v1043
    %v1092 = vpack.c.b16 %v1048, %v1044
    %v1093 = vpack.c.b16 %v1049, %v1045
    %v1094 = vpack.c.b16 %v1054, %v1050
    %v1095 = vpack.c.b16 %v1055, %v1051
    %v1096 = vpack.c.b16 %v1056, %v1052
    %v1097 = vpack.c.b16 %v1057, %v1053
    %v1098 = vpack.c.b16 %v1062, %v1058
    %v1099 = vpack.c.b16 %v1063, %v1059
    %v1100 = vpack.c.b16 %v1064, %v1060
    %v1101 = vpack.c.b16 %v1065, %v1061
    %v1102 = vpack.c.b16 %v1070, %v1066
    %v1103 = vpack.c.b16 %v1071, %v1067
    %v1104 = vpack.c.b16 %v1072, %v1068
    %v1105 = vpack.c.b16 %v1073, %v1069
    %1138 = vmatprep.subr.bf16.mxu0 %v1075
    %1139 = vmatpush1.bf16.msra.mxu0 %v1074
    %1140 = vmatprep.subr.bf16.mxu0 %v1079
    %1141 = vmatpush1.bf16.msra.mxu0 %v1078
    %1142 = vmatprep.subr.bf16.mxu0 %v1083
    %1143 = vmatpush1.bf16.msra.mxu0 %v1082
    %1144 = vmatprep.subr.bf16.mxu0 %v1087
    %1145 = vmatpush1.bf16.msra.mxu0 %v1086
    %1146 = vmatprep.subr.bf16.mxu0 %v1091
    %1147 = vmatpush1.bf16.msra.mxu0 %v1090
    %1148 = vmatprep.subr.bf16.mxu0 %v1095
    %1149 = vmatpush1.bf16.msra.mxu0 %v1094
    %1150 = vmatprep.subr.bf16.mxu0 %v1099
    %1151 = vmatpush1.bf16.msra.mxu0 %v1098
    %1152 = vmatprep.subr.bf16.mxu0 %v1103
    %1153 = vmatpush1.bf16.msra.mxu0 %v1102
    %1154 = vmatprep.subr.bf16.mxu0 0
    %1155 = vmatpush1.bf16.msra.mxu0 0
    %1156 = vmatprep.subr.bf16.mxu0 0
    %1157 = vmatpush1.bf16.msra.mxu0 0
    %1158 = vmatprep.subr.bf16.mxu0 0
    %1159 = vmatpush1.bf16.msra.mxu0 0
    %1160 = vmatprep.subr.bf16.mxu0 0
    %1161 = vmatpush1.bf16.msra.mxu0 0
    %1162 = vmatprep.subr.bf16.mxu0 0
    %1163 = vmatpush1.bf16.msra.mxu0 0
    %1164 = vmatprep.subr.bf16.mxu0 0
    %1165 = vmatpush1.bf16.msra.mxu0 0
    %1166 = vmatprep.subr.bf16.mxu0 0
    %1167 = vmatpush1.bf16.msra.mxu0 0
    %1168 = vmatprep.subr.bf16.mxu0 0
    %1169 = vmatpush1.bf16.msra.mxu0 0
    %1170 = vmatprep.mubr.bf16.mxu0 0
    %1171 = vmatmul.mubr.bf16.gmra.mrb[0].mxu0 %v436
    %v1172 = vpop.f32.mrb[0].mxu0
    %v1173 = vadd.f32 0.0, %v1172
    %v1174 = vpop.f32.mrb[0].mxu0
    %v1175 = vadd.f32 0.0, %v1174
    %v1176 = vpop.f32.mrb[0].mxu0
    %v1177 = vpop.f32.mrb[0].mxu0
    %1178 = vdwg.mxu0
    %1179 = vmatprep.subr.bf16.mxu0 %v1077
    %1180 = vmatpush1.bf16.msra.mxu0 %v1076
    %1181 = vmatprep.subr.bf16.mxu0 %v1081
    %1182 = vmatpush1.bf16.msra.mxu0 %v1080
    %1183 = vmatprep.subr.bf16.mxu0 %v1085
    %1184 = vmatpush1.bf16.msra.mxu0 %v1084
    %1185 = vmatprep.subr.bf16.mxu0 %v1089
    %1186 = vmatpush1.bf16.msra.mxu0 %v1088
    %1187 = vmatprep.subr.bf16.mxu0 %v1093
    %1188 = vmatpush1.bf16.msra.mxu0 %v1092
    %1189 = vmatprep.subr.bf16.mxu0 %v1097
    %1190 = vmatpush1.bf16.msra.mxu0 %v1096
    %1191 = vmatprep.subr.bf16.mxu0 %v1101
    %1192 = vmatpush1.bf16.msra.mxu0 %v1100
    %1193 = vmatprep.subr.bf16.mxu0 %v1105
    %1194 = vmatpush1.bf16.msra.mxu0 %v1104
    %1195 = vmatprep.subr.bf16.mxu0 0
    %1196 = vmatpush1.bf16.msra.mxu0 0
    %1197 = vmatprep.subr.bf16.mxu0 0
    %1198 = vmatpush1.bf16.msra.mxu0 0
    %1199 = vmatprep.subr.bf16.mxu0 0
    %1200 = vmatpush1.bf16.msra.mxu0 0
    %1201 = vmatprep.subr.bf16.mxu0 0
    %1202 = vmatpush1.bf16.msra.mxu0 0
    %1203 = vmatprep.subr.bf16.mxu0 0
    %1204 = vmatpush1.bf16.msra.mxu0 0
    %1205 = vmatprep.subr.bf16.mxu0 0
    %1206 = vmatpush1.bf16.msra.mxu0 0
    %1207 = vmatprep.subr.bf16.mxu0 0
    %1208 = vmatpush1.bf16.msra.mxu0 0
    %1209 = vmatprep.subr.bf16.mxu0 0
    %1210 = vmatpush1.bf16.msra.mxu0 0
    %1211 = vmatprep.mubr.bf16.mxu0 0
    %1212 = vmatmul.mubr.bf16.gmra.mrb[0].mxu0 %v436
    %v1213 = vpop.f32.mrb[0].mxu0
    %v1214 = vadd.f32 0.0, %v1213
    %v1215 = vpop.f32.mrb[0].mxu0
    %v1216 = vadd.f32 0.0, %v1215
    %v1217 = vpop.f32.mrb[0].mxu0
    %v1218 = vpop.f32.mrb[0].mxu0
    %1219 = vdwg.mxu0
    %v1220 = vadd.f32 %v942, %v1173
    %v1221 = vadd.f32 %v943, %v1175
    %v1222 = vadd.f32 %v944, %v1214
    %v1223 = vadd.f32 %v945, %v1216
    %v1224 = vmul.f32 %v1220, 0.5
    %v1225 = vtanh.pop %v1224
    %v1226 = vmul.f32 %v1225, 0.5
    %v1227 = vadd.f32 %v1226, 0.5
    %v1228 = vmul.f32 %v1221, 0.5
    %v1229 = vtanh.pop %v1228
    %v1230 = vmul.f32 %v1229, 0.5
    %v1231 = vadd.f32 %v1230, 0.5
    %v1232 = vtanh.pop %v1222
    %v1233 = vmul.f32 %v1223, 0.5
    %v1234 = vtanh.pop %v1233
    %v1235 = vmul.f32 %v1234, 0.5
    %v1236 = vadd.f32 %v1235, 0.5
    %v1237 = vmul.f32 %v1231, %v433
    %v1238 = vmul.f32 %v1227, %v1232
    %v1239 = vadd.f32 %v1237, %v1238
    %v1240 = vtanh.pop %v1239
    %v1241 = vmul.f32 %v1236, %v1240
    %v1242 = vpack.c.bf16 %v1241, %v1241
    %1243 = vst [vmem:[#allocation2] sm:$0xf] %v1242
    %v1244 = vpack.c.bf16 %v930, %v930
    %1245 = vst [vmem:[#allocation2 + $0x4] sm:$0xf] %v1244
    %v1246 = vld [vmem:[#allocation2] sm:$0xff]
    %v1247 = vld [vmem:[#allocation6] sm:$0xff]
    %v1248 = vld [vmem:[#allocation6 + $0x8] sm:$0xff]
    %v1249 = vld [vmem:[#allocation6 + $0x10] sm:$0xff]
    %v1250 = vld [vmem:[#allocation6 + $0x18] sm:$0xff]
    %v1251 = vld [vmem:[#allocation6 + $0x20] sm:$0xff]
    %v1252 = vld [vmem:[#allocation6 + $0x28] sm:$0xff]
    %v1253 = vld [vmem:[#allocation6 + $0x30] sm:$0xff]
    %v1254 = vld [vmem:[#allocation6 + $0x38] sm:$0xff]
    %v1255 = vld [vmem:[#allocation6 + $0x40] sm:$0xff]
    %v1256 = vld [vmem:[#allocation6 + $0x48] sm:$0xff]
    %v1257 = vld [vmem:[#allocation6 + $0x50] sm:$0xff]
    %v1258 = vld [vmem:[#allocation6 + $0x58] sm:$0xff]
    %v1259 = vld [vmem:[#allocation6 + $0x60] sm:$0xff]
    %v1260 = vld [vmem:[#allocation6 + $0x68] sm:$0xff]
    %v1261 = vld [vmem:[#allocation6 + $0x70] sm:$0xff]
    %v1262 = vld [vmem:[#allocation6 + $0x78] sm:$0xff]
    %v1263 = vld [vmem:[#allocation6 + $0x80] sm:$0xff]
    %v1264 = vld [vmem:[#allocation6 + $0x88] sm:$0xff]
    %v1265 = vld [vmem:[#allocation6 + $0x90] sm:$0xff]
    %v1266 = vld [vmem:[#allocation6 + $0x98] sm:$0xff]
    %v1267 = vld [vmem:[#allocation6 + $0xa0] sm:$0xff]
    %v1268 = vld [vmem:[#allocation6 + $0xa8] sm:$0xff]
    %v1269 = vld [vmem:[#allocation6 + $0xb0] sm:$0xff]
    %v1270 = vld [vmem:[#allocation6 + $0xb8] sm:$0xff]
    %v1271 = vld [vmem:[#allocation6 + $0xc0] sm:$0xff]
    %v1272 = vld [vmem:[#allocation6 + $0xc8] sm:$0xff]
    %v1273 = vld [vmem:[#allocation6 + $0xd0] sm:$0xff]
    %v1274 = vld [vmem:[#allocation6 + $0xd8] sm:$0xff]
    %v1275 = vld [vmem:[#allocation6 + $0xe0] sm:$0xff]
    %v1276 = vld [vmem:[#allocation6 + $0xe8] sm:$0xff]
    %v1277 = vld [vmem:[#allocation6 + $0xf0] sm:$0xff]
    %v1278 = vld [vmem:[#allocation6 + $0xf8] sm:$0xff]
    %v1279 = vld [vmem:[#allocation6 + $0x100] sm:$0xff]
    %v1280 = vld [vmem:[#allocation6 + $0x108] sm:$0xff]
    %v1281 = vld [vmem:[#allocation6 + $0x110] sm:$0xff]
    %v1282 = vld [vmem:[#allocation6 + $0x118] sm:$0xff]
    %v1283 = vld [vmem:[#allocation6 + $0x120] sm:$0xff]
    %v1284 = vld [vmem:[#allocation6 + $0x128] sm:$0xff]
    %v1285 = vld [vmem:[#allocation6 + $0x130] sm:$0xff]
    %v1286 = vld [vmem:[#allocation6 + $0x138] sm:$0xff]
    %v1287 = vld [vmem:[#allocation6 + $0x140] sm:$0xff]
    %v1288 = vld [vmem:[#allocation6 + $0x148] sm:$0xff]
    %v1289 = vld [vmem:[#allocation6 + $0x150] sm:$0xff]
    %v1290 = vld [vmem:[#allocation6 + $0x158] sm:$0xff]
    %v1291 = vld [vmem:[#allocation6 + $0x160] sm:$0xff]
    %v1292 = vld [vmem:[#allocation6 + $0x168] sm:$0xff]
    %v1293 = vld [vmem:[#allocation6 + $0x170] sm:$0xff]
    %v1294 = vld [vmem:[#allocation6 + $0x178] sm:$0xff]
    %v1295 = vld [vmem:[#allocation6 + $0x180] sm:$0xff]
    %v1296 = vld [vmem:[#allocation6 + $0x188] sm:$0xff]
    %v1297 = vld [vmem:[#allocation6 + $0x190] sm:$0xff]
    %v1298 = vld [vmem:[#allocation6 + $0x198] sm:$0xff]
    %v1299 = vld [vmem:[#allocation6 + $0x1a0] sm:$0xff]
    %v1300 = vld [vmem:[#allocation6 + $0x1a8] sm:$0xff]
    %v1301 = vld [vmem:[#allocation6 + $0x1b0] sm:$0xff]
    %v1302 = vld [vmem:[#allocation6 + $0x1b8] sm:$0xff]
    %v1303 = vld [vmem:[#allocation6 + $0x1c0] sm:$0xff]
    %v1304 = vld [vmem:[#allocation6 + $0x1c8] sm:$0xff]
    %v1305 = vld [vmem:[#allocation6 + $0x1d0] sm:$0xff]
    %v1306 = vld [vmem:[#allocation6 + $0x1d8] sm:$0xff]
    %v1307 = vld [vmem:[#allocation6 + $0x1e0] sm:$0xff]
    %v1308 = vld [vmem:[#allocation6 + $0x1e8] sm:$0xff]
    %v1309 = vld [vmem:[#allocation6 + $0x1f0] sm:$0xff]
    %v1310 = vld [vmem:[#allocation6 + $0x1f8] sm:$0xff]
    %v1312 = vunpack.c.l.b16 %v1246
    %v1313 = vunpack.c.h.b16 %v1246
    %v1314 = vpack.c.b16 %v1312, %v1312
    %v1315 = vpack.c.b16 %v1313, %v1313
    %v1382 = vunpack.c.l.b16 %v1247
    %v1383 = vunpack.c.h.b16 %v1247
    %v1384 = vunpack.c.l.b16 %v1248
    %v1385 = vunpack.c.h.b16 %v1248
    %v1386 = vunpack.c.l.b16 %v1249
    %v1387 = vunpack.c.h.b16 %v1249
    %v1388 = vunpack.c.l.b16 %v1250
    %v1389 = vunpack.c.h.b16 %v1250
    %v1390 = vunpack.c.l.b16 %v1251
    %v1391 = vunpack.c.h.b16 %v1251
    %v1392 = vunpack.c.l.b16 %v1252
    %v1393 = vunpack.c.h.b16 %v1252
    %v1394 = vunpack.c.l.b16 %v1253
    %v1395 = vunpack.c.h.b16 %v1253
    %v1396 = vunpack.c.l.b16 %v1254
    %v1397 = vunpack.c.h.b16 %v1254
    %v1398 = vunpack.c.l.b16 %v1255
    %v1399 = vunpack.c.h.b16 %v1255
    %v1400 = vunpack.c.l.b16 %v1256
    %v1401 = vunpack.c.h.b16 %v1256
    %v1402 = vunpack.c.l.b16 %v1257
    %v1403 = vunpack.c.h.b16 %v1257
    %v1404 = vunpack.c.l.b16 %v1258
    %v1405 = vunpack.c.h.b16 %v1258
    %v1406 = vunpack.c.l.b16 %v1259
    %v1407 = vunpack.c.h.b16 %v1259
    %v1408 = vunpack.c.l.b16 %v1260
    %v1409 = vunpack.c.h.b16 %v1260
    %v1410 = vunpack.c.l.b16 %v1261
    %v1411 = vunpack.c.h.b16 %v1261
    %v1412 = vunpack.c.l.b16 %v1262
    %v1413 = vunpack.c.h.b16 %v1262
    %v1414 = vunpack.c.l.b16 %v1263
    %v1415 = vunpack.c.h.b16 %v1263
    %v1416 = vunpack.c.l.b16 %v1264
    %v1417 = vunpack.c.h.b16 %v1264
    %v1418 = vunpack.c.l.b16 %v1265
    %v1419 = vunpack.c.h.b16 %v1265
    %v1420 = vunpack.c.l.b16 %v1266
    %v1421 = vunpack.c.h.b16 %v1266
    %v1422 = vunpack.c.l.b16 %v1267
    %v1423 = vunpack.c.h.b16 %v1267
    %v1424 = vunpack.c.l.b16 %v1268
    %v1425 = vunpack.c.h.b16 %v1268
    %v1426 = vunpack.c.l.b16 %v1269
    %v1427 = vunpack.c.h.b16 %v1269
    %v1428 = vunpack.c.l.b16 %v1270
    %v1429 = vunpack.c.h.b16 %v1270
    %v1430 = vunpack.c.l.b16 %v1271
    %v1431 = vunpack.c.h.b16 %v1271
    %v1432 = vunpack.c.l.b16 %v1272
    %v1433 = vunpack.c.h.b16 %v1272
    %v1434 = vunpack.c.l.b16 %v1273
    %v1435 = vunpack.c.h.b16 %v1273
    %v1436 = vunpack.c.l.b16 %v1274
    %v1437 = vunpack.c.h.b16 %v1274
    %v1438 = vunpack.c.l.b16 %v1275
    %v1439 = vunpack.c.h.b16 %v1275
    %v1440 = vunpack.c.l.b16 %v1276
    %v1441 = vunpack.c.h.b16 %v1276
    %v1442 = vunpack.c.l.b16 %v1277
    %v1443 = vunpack.c.h.b16 %v1277
    %v1444 = vunpack.c.l.b16 %v1278
    %v1445 = vunpack.c.h.b16 %v1278
    %v1446 = vunpack.c.l.b16 %v1279
    %v1447 = vunpack.c.h.b16 %v1279
    %v1448 = vunpack.c.l.b16 %v1280
    %v1449 = vunpack.c.h.b16 %v1280
    %v1450 = vunpack.c.l.b16 %v1281
    %v1451 = vunpack.c.h.b16 %v1281
    %v1452 = vunpack.c.l.b16 %v1282
    %v1453 = vunpack.c.h.b16 %v1282
    %v1454 = vunpack.c.l.b16 %v1283
    %v1455 = vunpack.c.h.b16 %v1283
    %v1456 = vunpack.c.l.b16 %v1284
    %v1457 = vunpack.c.h.b16 %v1284
    %v1458 = vunpack.c.l.b16 %v1285
    %v1459 = vunpack.c.h.b16 %v1285
    %v1460 = vunpack.c.l.b16 %v1286
    %v1461 = vunpack.c.h.b16 %v1286
    %v1462 = vunpack.c.l.b16 %v1287
    %v1463 = vunpack.c.h.b16 %v1287
    %v1464 = vunpack.c.l.b16 %v1288
    %v1465 = vunpack.c.h.b16 %v1288
    %v1466 = vunpack.c.l.b16 %v1289
    %v1467 = vunpack.c.h.b16 %v1289
    %v1468 = vunpack.c.l.b16 %v1290
    %v1469 = vunpack.c.h.b16 %v1290
    %v1470 = vunpack.c.l.b16 %v1291
    %v1471 = vunpack.c.h.b16 %v1291
    %v1472 = vunpack.c.l.b16 %v1292
    %v1473 = vunpack.c.h.b16 %v1292
    %v1474 = vunpack.c.l.b16 %v1293
    %v1475 = vunpack.c.h.b16 %v1293
    %v1476 = vunpack.c.l.b16 %v1294
    %v1477 = vunpack.c.h.b16 %v1294
    %v1478 = vunpack.c.l.b16 %v1295
    %v1479 = vunpack.c.h.b16 %v1295
    %v1480 = vunpack.c.l.b16 %v1296
    %v1481 = vunpack.c.h.b16 %v1296
    %v1482 = vunpack.c.l.b16 %v1297
    %v1483 = vunpack.c.h.b16 %v1297
    %v1484 = vunpack.c.l.b16 %v1298
    %v1485 = vunpack.c.h.b16 %v1298
    %v1486 = vunpack.c.l.b16 %v1299
    %v1487 = vunpack.c.h.b16 %v1299
    %v1488 = vunpack.c.l.b16 %v1300
    %v1489 = vunpack.c.h.b16 %v1300
    %v1490 = vunpack.c.l.b16 %v1301
    %v1491 = vunpack.c.h.b16 %v1301
    %v1492 = vunpack.c.l.b16 %v1302
    %v1493 = vunpack.c.h.b16 %v1302
    %v1494 = vunpack.c.l.b16 %v1303
    %v1495 = vunpack.c.h.b16 %v1303
    %v1496 = vunpack.c.l.b16 %v1304
    %v1497 = vunpack.c.h.b16 %v1304
    %v1498 = vunpack.c.l.b16 %v1305
    %v1499 = vunpack.c.h.b16 %v1305
    %v1500 = vunpack.c.l.b16 %v1306
    %v1501 = vunpack.c.h.b16 %v1306
    %v1502 = vunpack.c.l.b16 %v1307
    %v1503 = vunpack.c.h.b16 %v1307
    %v1504 = vunpack.c.l.b16 %v1308
    %v1505 = vunpack.c.h.b16 %v1308
    %v1506 = vunpack.c.l.b16 %v1309
    %v1507 = vunpack.c.h.b16 %v1309
    %v1508 = vunpack.c.l.b16 %v1310
    %v1509 = vunpack.c.h.b16 %v1310
    %v1510 = vpack.c.b16 %v1386, %v1382
    %v1511 = vpack.c.b16 %v1387, %v1383
    %v1512 = vpack.c.b16 %v1388, %v1384
    %v1513 = vpack.c.b16 %v1389, %v1385
    %v1514 = vpack.c.b16 %v1394, %v1390
    %v1515 = vpack.c.b16 %v1395, %v1391
    %v1516 = vpack.c.b16 %v1396, %v1392
    %v1517 = vpack.c.b16 %v1397, %v1393
    %v1518 = vpack.c.b16 %v1402, %v1398
    %v1519 = vpack.c.b16 %v1403, %v1399
    %v1520 = vpack.c.b16 %v1404, %v1400
    %v1521 = vpack.c.b16 %v1405, %v1401
    %v1522 = vpack.c.b16 %v1410, %v1406
    %v1523 = vpack.c.b16 %v1411, %v1407
    %v1524 = vpack.c.b16 %v1412, %v1408
    %v1525 = vpack.c.b16 %v1413, %v1409
    %v1526 = vpack.c.b16 %v1418, %v1414
    %v1527 = vpack.c.b16 %v1419, %v1415
    %v1528 = vpack.c.b16 %v1420, %v1416
    %v1529 = vpack.c.b16 %v1421, %v1417
    %v1530 = vpack.c.b16 %v1426, %v1422
    %v1531 = vpack.c.b16 %v1427, %v1423
    %v1532 = vpack.c.b16 %v1428, %v1424
    %v1533 = vpack.c.b16 %v1429, %v1425
    %v1534 = vpack.c.b16 %v1434, %v1430
    %v1535 = vpack.c.b16 %v1435, %v1431
    %v1536 = vpack.c.b16 %v1436, %v1432
    %v1537 = vpack.c.b16 %v1437, %v1433
    %v1538 = vpack.c.b16 %v1442, %v1438
    %v1539 = vpack.c.b16 %v1443, %v1439
    %v1540 = vpack.c.b16 %v1444, %v1440
    %v1541 = vpack.c.b16 %v1445, %v1441
    %v1542 = vpack.c.b16 %v1450, %v1446
    %v1543 = vpack.c.b16 %v1451, %v1447
    %v1544 = vpack.c.b16 %v1452, %v1448
    %v1545 = vpack.c.b16 %v1453, %v1449
    %v1546 = vpack.c.b16 %v1458, %v1454
    %v1547 = vpack.c.b16 %v1459, %v1455
    %v1548 = vpack.c.b16 %v1460, %v1456
    %v1549 = vpack.c.b16 %v1461, %v1457
    %v1550 = vpack.c.b16 %v1466, %v1462
    %v1551 = vpack.c.b16 %v1467, %v1463
    %v1552 = vpack.c.b16 %v1468, %v1464
    %v1553 = vpack.c.b16 %v1469, %v1465
    %v1554 = vpack.c.b16 %v1474, %v1470
    %v1555 = vpack.c.b16 %v1475, %v1471
    %v1556 = vpack.c.b16 %v1476, %v1472
    %v1557 = vpack.c.b16 %v1477, %v1473
    %v1558 = vpack.c.b16 %v1482, %v1478
    %v1559 = vpack.c.b16 %v1483, %v1479
    %v1560 = vpack.c.b16 %v1484, %v1480
    %v1561 = vpack.c.b16 %v1485, %v1481
    %v1562 = vpack.c.b16 %v1490, %v1486
    %v1563 = vpack.c.b16 %v1491, %v1487
    %v1564 = vpack.c.b16 %v1492, %v1488
    %v1565 = vpack.c.b16 %v1493, %v1489
    %v1566 = vpack.c.b16 %v1498, %v1494
    %v1567 = vpack.c.b16 %v1499, %v1495
    %v1568 = vpack.c.b16 %v1500, %v1496
    %v1569 = vpack.c.b16 %v1501, %v1497
    %v1570 = vpack.c.b16 %v1506, %v1502
    %v1571 = vpack.c.b16 %v1507, %v1503
    %v1572 = vpack.c.b16 %v1508, %v1504
    %v1573 = vpack.c.b16 %v1509, %v1505
    %1638 = vmatprep.subr.bf16.mxu0 %v1511
    %1639 = vmatpush1.bf16.msra.mxu0 %v1510
    %1640 = vmatprep.subr.bf16.mxu0 %v1515
    %1641 = vmatpush1.bf16.msra.mxu0 %v1514
    %1642 = vmatprep.subr.bf16.mxu0 %v1519
    %1643 = vmatpush1.bf16.msra.mxu0 %v1518
    %1644 = vmatprep.subr.bf16.mxu0 %v1523
    %1645 = vmatpush1.bf16.msra.mxu0 %v1522
    %1646 = vmatprep.subr.bf16.mxu0 %v1527
    %1647 = vmatpush1.bf16.msra.mxu0 %v1526
    %1648 = vmatprep.subr.bf16.mxu0 %v1531
    %1649 = vmatpush1.bf16.msra.mxu0 %v1530
    %1650 = vmatprep.subr.bf16.mxu0 %v1535
    %1651 = vmatpush1.bf16.msra.mxu0 %v1534
    %1652 = vmatprep.subr.bf16.mxu0 %v1539
    %1653 = vmatpush1.bf16.msra.mxu0 %v1538
    %1654 = vmatprep.subr.bf16.mxu0 %v1543
    %1655 = vmatpush1.bf16.msra.mxu0 %v1542
    %1656 = vmatprep.subr.bf16.mxu0 %v1547
    %1657 = vmatpush1.bf16.msra.mxu0 %v1546
    %1658 = vmatprep.subr.bf16.mxu0 %v1551
    %1659 = vmatpush1.bf16.msra.mxu0 %v1550
    %1660 = vmatprep.subr.bf16.mxu0 %v1555
    %1661 = vmatpush1.bf16.msra.mxu0 %v1554
    %1662 = vmatprep.subr.bf16.mxu0 %v1559
    %1663 = vmatpush1.bf16.msra.mxu0 %v1558
    %1664 = vmatprep.subr.bf16.mxu0 %v1563
    %1665 = vmatpush1.bf16.msra.mxu0 %v1562
    %1666 = vmatprep.subr.bf16.mxu0 %v1567
    %1667 = vmatpush1.bf16.msra.mxu0 %v1566
    %1668 = vmatprep.subr.bf16.mxu0 %v1571
    %1669 = vmatpush1.bf16.msra.mxu0 %v1570
    %1670 = vmatprep.mubr.bf16.mxu0 %v1315
    %1671 = vmatmul.mubr.bf16.gmra.mrb[0].mxu0 %v1314
    %v1672 = vpop.f32.mrb[0].mxu0
    %v1673 = vadd.f32 %v109, %v1672
    %v1674 = vpop.f32.mrb[0].mxu0
    %v1675 = vadd.f32 %v113, %v1674
    %v1676 = vpop.f32.mrb[0].mxu0
    %v1677 = vpop.f32.mrb[0].mxu0
    %1678 = vdwg.mxu0
    %1679 = vmatprep.subr.bf16.mxu0 %v1513
    %1680 = vmatpush1.bf16.msra.mxu0 %v1512
    %1681 = vmatprep.subr.bf16.mxu0 %v1517
    %1682 = vmatpush1.bf16.msra.mxu0 %v1516
    %1683 = vmatprep.subr.bf16.mxu0 %v1521
    %1684 = vmatpush1.bf16.msra.mxu0 %v1520
    %1685 = vmatprep.subr.bf16.mxu0 %v1525
    %1686 = vmatpush1.bf16.msra.mxu0 %v1524
    %1687 = vmatprep.subr.bf16.mxu0 %v1529
    %1688 = vmatpush1.bf16.msra.mxu0 %v1528
    %1689 = vmatprep.subr.bf16.mxu0 %v1533
    %1690 = vmatpush1.bf16.msra.mxu0 %v1532
    %1691 = vmatprep.subr.bf16.mxu0 %v1537
    %1692 = vmatpush1.bf16.msra.mxu0 %v1536
    %1693 = vmatprep.subr.bf16.mxu0 %v1541
    %1694 = vmatpush1.bf16.msra.mxu0 %v1540
    %1695 = vmatprep.subr.bf16.mxu0 %v1545
    %1696 = vmatpush1.bf16.msra.mxu0 %v1544
    %1697 = vmatprep.subr.bf16.mxu0 %v1549
    %1698 = vmatpush1.bf16.msra.mxu0 %v1548
    %1699 = vmatprep.subr.bf16.mxu0 %v1553
    %1700 = vmatpush1.bf16.msra.mxu0 %v1552
    %1701 = vmatprep.subr.bf16.mxu0 %v1557
    %1702 = vmatpush1.bf16.msra.mxu0 %v1556
    %1703 = vmatprep.subr.bf16.mxu0 %v1561
    %1704 = vmatpush1.bf16.msra.mxu0 %v1560
    %1705 = vmatprep.subr.bf16.mxu0 %v1565
    %1706 = vmatpush1.bf16.msra.mxu0 %v1564
    %1707 = vmatprep.subr.bf16.mxu0 %v1569
    %1708 = vmatpush1.bf16.msra.mxu0 %v1568
    %1709 = vmatprep.subr.bf16.mxu0 %v1573
    %1710 = vmatpush1.bf16.msra.mxu0 %v1572
    %1711 = vmatprep.mubr.bf16.mxu0 %v1315
    %1712 = vmatmul.mubr.bf16.gmra.mrb[0].mxu0 %v1314
    %v1713 = vpop.f32.mrb[0].mxu0
    %v1714 = vadd.f32 %v117, %v1713
    %v1715 = vpop.f32.mrb[0].mxu0
    %v1716 = vadd.f32 %v121, %v1715
    %v1717 = vpop.f32.mrb[0].mxu0
    %v1718 = vpop.f32.mrb[0].mxu0
    %1719 = vdwg.mxu0
    %v1720 = vmul.f32 %v1673, 0.5
    %v1721 = vtanh.pop %v1720
    %v1722 = vmul.f32 %v1721, 0.5
    %v1723 = vadd.f32 %v1722, 0.5
    %v1724 = vmul.f32 %v1675, 0.5
    %v1725 = vtanh.pop %v1724
    %v1726 = vmul.f32 %v1725, 0.5
    %v1727 = vadd.f32 %v1726, 0.5
    %v1728 = vtanh.pop %v1714
    %v1729 = vmul.f32 %v1716, 0.5
    %v1730 = vtanh.pop %v1729
    %v1731 = vmul.f32 %v1730, 0.5
    %v1732 = vadd.f32 %v1731, 0.5
    %v1733 = vmul.f32 %v1727, %v928
    %v1734 = vmul.f32 %v1723, %v1728
    %v1735 = vadd.f32 %v1733, %v1734
    %v1736 = vtanh.pop %v1735
    %v1737 = vmul.f32 %v1732, %v1736
    %s1738 = scalar_lea.vmem %s0, 16
    %v1739 = vld [vmem:[%s1738] sm:$0xff]
    %1741 = vset.pattern.permute.xlu0 0
    %1742 = vperm.xlu0 %1741, %v1739
    %v1743 = vpop.permute.xlu0 %1742
    %v1745 = vmul.f32 %v1743, %v65
    %v1746 = vmul.f32 %v1743, %v69
    %v1747 = vmul.f32 %v1743, %v73
    %v1748 = vmul.f32 %v1743, %v77
    %v1749 = vadd.f32 %v1745, %v87
    %v1750 = vadd.f32 %v1746, %v91
    %v1751 = vadd.f32 %v1747, %v95
    %v1752 = vadd.f32 %v1748, %v99
    %v1753 = vld [vmem:[#allocation4] sm:$0xff]
    %v1754 = vld [vmem:[#allocation4 + $0x8] sm:$0xff]
    %v1755 = vld [vmem:[#allocation4 + $0x10] sm:$0xff]
    %v1756 = vld [vmem:[#allocation4 + $0x18] sm:$0xff]
    %v1757 = vld [vmem:[#allocation4 + $0x20] sm:$0xff]
    %v1758 = vld [vmem:[#allocation4 + $0x28] sm:$0xff]
    %v1759 = vld [vmem:[#allocation4 + $0x30] sm:$0xff]
    %v1760 = vld [vmem:[#allocation4 + $0x38] sm:$0xff]
    %v1761 = vld [vmem:[#allocation4 + $0x40] sm:$0xff]
    %v1762 = vld [vmem:[#allocation4 + $0x48] sm:$0xff]
    %v1763 = vld [vmem:[#allocation4 + $0x50] sm:$0xff]
    %v1764 = vld [vmem:[#allocation4 + $0x58] sm:$0xff]
    %v1765 = vld [vmem:[#allocation4 + $0x60] sm:$0xff]
    %v1766 = vld [vmem:[#allocation4 + $0x68] sm:$0xff]
    %v1767 = vld [vmem:[#allocation4 + $0x70] sm:$0xff]
    %v1768 = vld [vmem:[#allocation4 + $0x78] sm:$0xff]
    %v1769 = vld [vmem:[#allocation4 + $0x80] sm:$0xff]
    %v1770 = vld [vmem:[#allocation4 + $0x88] sm:$0xff]
    %v1771 = vld [vmem:[#allocation4 + $0x90] sm:$0xff]
    %v1772 = vld [vmem:[#allocation4 + $0x98] sm:$0xff]
    %v1773 = vld [vmem:[#allocation4 + $0xa0] sm:$0xff]
    %v1774 = vld [vmem:[#allocation4 + $0xa8] sm:$0xff]
    %v1775 = vld [vmem:[#allocation4 + $0xb0] sm:$0xff]
    %v1776 = vld [vmem:[#allocation4 + $0xb8] sm:$0xff]
    %v1777 = vld [vmem:[#allocation4 + $0xc0] sm:$0xff]
    %v1778 = vld [vmem:[#allocation4 + $0xc8] sm:$0xff]
    %v1779 = vld [vmem:[#allocation4 + $0xd0] sm:$0xff]
    %v1780 = vld [vmem:[#allocation4 + $0xd8] sm:$0xff]
    %v1781 = vld [vmem:[#allocation4 + $0xe0] sm:$0xff]
    %v1782 = vld [vmem:[#allocation4 + $0xe8] sm:$0xff]
    %v1783 = vld [vmem:[#allocation4 + $0xf0] sm:$0xff]
    %v1784 = vld [vmem:[#allocation4 + $0xf8] sm:$0xff]
    %v1817 = vunpack.c.l.b16 %v1753
    %v1818 = vunpack.c.h.b16 %v1753
    %v1819 = vunpack.c.l.b16 %v1754
    %v1820 = vunpack.c.h.b16 %v1754
    %v1821 = vunpack.c.l.b16 %v1755
    %v1822 = vunpack.c.h.b16 %v1755
    %v1823 = vunpack.c.l.b16 %v1756
    %v1824 = vunpack.c.h.b16 %v1756
    %v1825 = vunpack.c.l.b16 %v1757
    %v1826 = vunpack.c.h.b16 %v1757
    %v1827 = vunpack.c.l.b16 %v1758
    %v1828 = vunpack.c.h.b16 %v1758
    %v1829 = vunpack.c.l.b16 %v1759
    %v1830 = vunpack.c.h.b16 %v1759
    %v1831 = vunpack.c.l.b16 %v1760
    %v1832 = vunpack.c.h.b16 %v1760
    %v1833 = vunpack.c.l.b16 %v1761
    %v1834 = vunpack.c.h.b16 %v1761
    %v1835 = vunpack.c.l.b16 %v1762
    %v1836 = vunpack.c.h.b16 %v1762
    %v1837 = vunpack.c.l.b16 %v1763
    %v1838 = vunpack.c.h.b16 %v1763
    %v1839 = vunpack.c.l.b16 %v1764
    %v1840 = vunpack.c.h.b16 %v1764
    %v1841 = vunpack.c.l.b16 %v1765
    %v1842 = vunpack.c.h.b16 %v1765
    %v1843 = vunpack.c.l.b16 %v1766
    %v1844 = vunpack.c.h.b16 %v1766
    %v1845 = vunpack.c.l.b16 %v1767
    %v1846 = vunpack.c.h.b16 %v1767
    %v1847 = vunpack.c.l.b16 %v1768
    %v1848 = vunpack.c.h.b16 %v1768
    %v1849 = vunpack.c.l.b16 %v1769
    %v1850 = vunpack.c.h.b16 %v1769
    %v1851 = vunpack.c.l.b16 %v1770
    %v1852 = vunpack.c.h.b16 %v1770
    %v1853 = vunpack.c.l.b16 %v1771
    %v1854 = vunpack.c.h.b16 %v1771
    %v1855 = vunpack.c.l.b16 %v1772
    %v1856 = vunpack.c.h.b16 %v1772
    %v1857 = vunpack.c.l.b16 %v1773
    %v1858 = vunpack.c.h.b16 %v1773
    %v1859 = vunpack.c.l.b16 %v1774
    %v1860 = vunpack.c.h.b16 %v1774
    %v1861 = vunpack.c.l.b16 %v1775
    %v1862 = vunpack.c.h.b16 %v1775
    %v1863 = vunpack.c.l.b16 %v1776
    %v1864 = vunpack.c.h.b16 %v1776
    %v1865 = vunpack.c.l.b16 %v1777
    %v1866 = vunpack.c.h.b16 %v1777
    %v1867 = vunpack.c.l.b16 %v1778
    %v1868 = vunpack.c.h.b16 %v1778
    %v1869 = vunpack.c.l.b16 %v1779
    %v1870 = vunpack.c.h.b16 %v1779
    %v1871 = vunpack.c.l.b16 %v1780
    %v1872 = vunpack.c.h.b16 %v1780
    %v1873 = vunpack.c.l.b16 %v1781
    %v1874 = vunpack.c.h.b16 %v1781
    %v1875 = vunpack.c.l.b16 %v1782
    %v1876 = vunpack.c.h.b16 %v1782
    %v1877 = vunpack.c.l.b16 %v1783
    %v1878 = vunpack.c.h.b16 %v1783
    %v1879 = vunpack.c.l.b16 %v1784
    %v1880 = vunpack.c.h.b16 %v1784
    %v1881 = vpack.c.b16 %v1821, %v1817
    %v1882 = vpack.c.b16 %v1822, %v1818
    %v1883 = vpack.c.b16 %v1823, %v1819
    %v1884 = vpack.c.b16 %v1824, %v1820
    %v1885 = vpack.c.b16 %v1829, %v1825
    %v1886 = vpack.c.b16 %v1830, %v1826
    %v1887 = vpack.c.b16 %v1831, %v1827
    %v1888 = vpack.c.b16 %v1832, %v1828
    %v1889 = vpack.c.b16 %v1837, %v1833
    %v1890 = vpack.c.b16 %v1838, %v1834
    %v1891 = vpack.c.b16 %v1839, %v1835
    %v1892 = vpack.c.b16 %v1840, %v1836
    %v1893 = vpack.c.b16 %v1845, %v1841
    %v1894 = vpack.c.b16 %v1846, %v1842
    %v1895 = vpack.c.b16 %v1847, %v1843
    %v1896 = vpack.c.b16 %v1848, %v1844
    %v1897 = vpack.c.b16 %v1853, %v1849
    %v1898 = vpack.c.b16 %v1854, %v1850
    %v1899 = vpack.c.b16 %v1855, %v1851
    %v1900 = vpack.c.b16 %v1856, %v1852
    %v1901 = vpack.c.b16 %v1861, %v1857
    %v1902 = vpack.c.b16 %v1862, %v1858
    %v1903 = vpack.c.b16 %v1863, %v1859
    %v1904 = vpack.c.b16 %v1864, %v1860
    %v1905 = vpack.c.b16 %v1869, %v1865
    %v1906 = vpack.c.b16 %v1870, %v1866
    %v1907 = vpack.c.b16 %v1871, %v1867
    %v1908 = vpack.c.b16 %v1872, %v1868
    %v1909 = vpack.c.b16 %v1877, %v1873
    %v1910 = vpack.c.b16 %v1878, %v1874
    %v1911 = vpack.c.b16 %v1879, %v1875
    %v1912 = vpack.c.b16 %v1880, %v1876
    %1945 = vmatprep.subr.bf16.mxu0 %v1882
    %1946 = vmatpush1.bf16.msra.mxu0 %v1881
    %1947 = vmatprep.subr.bf16.mxu0 %v1886
    %1948 = vmatpush1.bf16.msra.mxu0 %v1885
    %1949 = vmatprep.subr.bf16.mxu0 %v1890
    %1950 = vmatpush1.bf16.msra.mxu0 %v1889
    %1951 = vmatprep.subr.bf16.mxu0 %v1894
    %1952 = vmatpush1.bf16.msra.mxu0 %v1893
    %1953 = vmatprep.subr.bf16.mxu0 %v1898
    %1954 = vmatpush1.bf16.msra.mxu0 %v1897
    %1955 = vmatprep.subr.bf16.mxu0 %v1902
    %1956 = vmatpush1.bf16.msra.mxu0 %v1901
    %1957 = vmatprep.subr.bf16.mxu0 %v1906
    %1958 = vmatpush1.bf16.msra.mxu0 %v1905
    %1959 = vmatprep.subr.bf16.mxu0 %v1910
    %1960 = vmatpush1.bf16.msra.mxu0 %v1909
    %1961 = vmatprep.subr.bf16.mxu0 0
    %1962 = vmatpush1.bf16.msra.mxu0 0
    %1963 = vmatprep.subr.bf16.mxu0 0
    %1964 = vmatpush1.bf16.msra.mxu0 0
    %1965 = vmatprep.subr.bf16.mxu0 0
    %1966 = vmatpush1.bf16.msra.mxu0 0
    %1967 = vmatprep.subr.bf16.mxu0 0
    %1968 = vmatpush1.bf16.msra.mxu0 0
    %1969 = vmatprep.subr.bf16.mxu0 0
    %1970 = vmatpush1.bf16.msra.mxu0 0
    %1971 = vmatprep.subr.bf16.mxu0 0
    %1972 = vmatpush1.bf16.msra.mxu0 0
    %1973 = vmatprep.subr.bf16.mxu0 0
    %1974 = vmatpush1.bf16.msra.mxu0 0
    %1975 = vmatprep.subr.bf16.mxu0 0
    %1976 = vmatpush1.bf16.msra.mxu0 0
    %1977 = vmatprep.mubr.bf16.mxu0 0
    %1978 = vmatmul.mubr.bf16.gmra.mrb[0].mxu0 %v1242
    %v1979 = vpop.f32.mrb[0].mxu0
    %v1980 = vadd.f32 0.0, %v1979
    %v1981 = vpop.f32.mrb[0].mxu0
    %v1982 = vadd.f32 0.0, %v1981
    %v1983 = vpop.f32.mrb[0].mxu0
    %v1984 = vpop.f32.mrb[0].mxu0
    %1985 = vdwg.mxu0
    %1986 = vmatprep.subr.bf16.mxu0 %v1884
    %1987 = vmatpush1.bf16.msra.mxu0 %v1883
    %1988 = vmatprep.subr.bf16.mxu0 %v1888
    %1989 = vmatpush1.bf16.msra.mxu0 %v1887
    %1990 = vmatprep.subr.bf16.mxu0 %v1892
    %1991 = vmatpush1.bf16.msra.mxu0 %v1891
    %1992 = vmatprep.subr.bf16.mxu0 %v1896
    %1993 = vmatpush1.bf16.msra.mxu0 %v1895
    %1994 = vmatprep.subr.bf16.mxu0 %v1900
    %1995 = vmatpush1.bf16.msra.mxu0 %v1899
    %1996 = vmatprep.subr.bf16.mxu0 %v1904
    %1997 = vmatpush1.bf16.msra.mxu0 %v1903
    %1998 = vmatprep.subr.bf16.mxu0 %v1908
    %1999 = vmatpush1.bf16.msra.mxu0 %v1907
    %2000 = vmatprep.subr.bf16.mxu0 %v1912
    %2001 = vmatpush1.bf16.msra.mxu0 %v1911
    %2002 = vmatprep.subr.bf16.mxu0 0
    %2003 = vmatpush1.bf16.msra.mxu0 0
    %2004 = vmatprep.subr.bf16.mxu0 0
    %2005 = vmatpush1.bf16.msra.mxu0 0
    %2006 = vmatprep.subr.bf16.mxu0 0
    %2007 = vmatpush1.bf16.msra.mxu0 0
    %2008 = vmatprep.subr.bf16.mxu0 0
    %2009 = vmatpush1.bf16.msra.mxu0 0
    %2010 = vmatprep.subr.bf16.mxu0 0
    %2011 = vmatpush1.bf16.msra.mxu0 0
    %2012 = vmatprep.subr.bf16.mxu0 0
    %2013 = vmatpush1.bf16.msra.mxu0 0
    %2014 = vmatprep.subr.bf16.mxu0 0
    %2015 = vmatpush1.bf16.msra.mxu0 0
    %2016 = vmatprep.subr.bf16.mxu0 0
    %2017 = vmatpush1.bf16.msra.mxu0 0
    %2018 = vmatprep.mubr.bf16.mxu0 0
    %2019 = vmatmul.mubr.bf16.gmra.mrb[0].mxu0 %v1242
    %v2020 = vpop.f32.mrb[0].mxu0
    %v2021 = vadd.f32 0.0, %v2020
    %v2022 = vpop.f32.mrb[0].mxu0
    %v2023 = vadd.f32 0.0, %v2022
    %v2024 = vpop.f32.mrb[0].mxu0
    %v2025 = vpop.f32.mrb[0].mxu0
    %2026 = vdwg.mxu0
    %v2027 = vadd.f32 %v1749, %v1980
    %v2028 = vadd.f32 %v1750, %v1982
    %v2029 = vadd.f32 %v1751, %v2021
    %v2030 = vadd.f32 %v1752, %v2023
    %v2031 = vmul.f32 %v2027, 0.5
    %v2032 = vtanh.pop %v2031
    %v2033 = vmul.f32 %v2032, 0.5
    %v2034 = vadd.f32 %v2033, 0.5
    %v2035 = vmul.f32 %v2028, 0.5
    %v2036 = vtanh.pop %v2035
    %v2037 = vmul.f32 %v2036, 0.5
    %v2038 = vadd.f32 %v2037, 0.5
    %v2039 = vtanh.pop %v2029
    %v2040 = vmul.f32 %v2030, 0.5
    %v2041 = vtanh.pop %v2040
    %v2042 = vmul.f32 %v2041, 0.5
    %v2043 = vadd.f32 %v2042, 0.5
    %v2044 = vmul.f32 %v2038, %v1239
    %v2045 = vmul.f32 %v2034, %v2039
    %v2046 = vadd.f32 %v2044, %v2045
    %v2047 = vtanh.pop %v2046
    %v2048 = vmul.f32 %v2043, %v2047
    %v2049 = vpack.c.bf16 %v2048, %v2048
    %2050 = vst [vmem:[#allocation2] sm:$0xf] %v2049
    %v2051 = vpack.c.bf16 %v1737, %v1737
    %2052 = vst [vmem:[#allocation2 + $0x4] sm:$0xf] %v2051
    %v2053 = vld [vmem:[#allocation2] sm:$0xff]
    %v2054 = vld [vmem:[#allocation6] sm:$0xff]
    %v2055 = vld [vmem:[#allocation6 + $0x8] sm:$0xff]
    %v2056 = vld [vmem:[#allocation6 + $0x10] sm:$0xff]
    %v2057 = vld [vmem:[#allocation6 + $0x18] sm:$0xff]
    %v2058 = vld [vmem:[#allocation6 + $0x20] sm:$0xff]
    %v2059 = vld [vmem:[#allocation6 + $0x28] sm:$0xff]
    %v2060 = vld [vmem:[#allocation6 + $0x30] sm:$0xff]
    %v2061 = vld [vmem:[#allocation6 + $0x38] sm:$0xff]
    %v2062 = vld [vmem:[#allocation6 + $0x40] sm:$0xff]
    %v2063 = vld [vmem:[#allocation6 + $0x48] sm:$0xff]
    %v2064 = vld [vmem:[#allocation6 + $0x50] sm:$0xff]
    %v2065 = vld [vmem:[#allocation6 + $0x58] sm:$0xff]
    %v2066 = vld [vmem:[#allocation6 + $0x60] sm:$0xff]
    %v2067 = vld [vmem:[#allocation6 + $0x68] sm:$0xff]
    %v2068 = vld [vmem:[#allocation6 + $0x70] sm:$0xff]
    %v2069 = vld [vmem:[#allocation6 + $0x78] sm:$0xff]
    %v2070 = vld [vmem:[#allocation6 + $0x80] sm:$0xff]
    %v2071 = vld [vmem:[#allocation6 + $0x88] sm:$0xff]
    %v2072 = vld [vmem:[#allocation6 + $0x90] sm:$0xff]
    %v2073 = vld [vmem:[#allocation6 + $0x98] sm:$0xff]
    %v2074 = vld [vmem:[#allocation6 + $0xa0] sm:$0xff]
    %v2075 = vld [vmem:[#allocation6 + $0xa8] sm:$0xff]
    %v2076 = vld [vmem:[#allocation6 + $0xb0] sm:$0xff]
    %v2077 = vld [vmem:[#allocation6 + $0xb8] sm:$0xff]
    %v2078 = vld [vmem:[#allocation6 + $0xc0] sm:$0xff]
    %v2079 = vld [vmem:[#allocation6 + $0xc8] sm:$0xff]
    %v2080 = vld [vmem:[#allocation6 + $0xd0] sm:$0xff]
    %v2081 = vld [vmem:[#allocation6 + $0xd8] sm:$0xff]
    %v2082 = vld [vmem:[#allocation6 + $0xe0] sm:$0xff]
    %v2083 = vld [vmem:[#allocation6 + $0xe8] sm:$0xff]
    %v2084 = vld [vmem:[#allocation6 + $0xf0] sm:$0xff]
    %v2085 = vld [vmem:[#allocation6 + $0xf8] sm:$0xff]
    %v2086 = vld [vmem:[#allocation6 + $0x100] sm:$0xff]
    %v2087 = vld [vmem:[#allocation6 + $0x108] sm:$0xff]
    %v2088 = vld [vmem:[#allocation6 + $0x110] sm:$0xff]
    %v2089 = vld [vmem:[#allocation6 + $0x118] sm:$0xff]
    %v2090 = vld [vmem:[#allocation6 + $0x120] sm:$0xff]
    %v2091 = vld [vmem:[#allocation6 + $0x128] sm:$0xff]
    %v2092 = vld [vmem:[#allocation6 + $0x130] sm:$0xff]
    %v2093 = vld [vmem:[#allocation6 + $0x138] sm:$0xff]
    %v2094 = vld [vmem:[#allocation6 + $0x140] sm:$0xff]
    %v2095 = vld [vmem:[#allocation6 + $0x148] sm:$0xff]
    %v2096 = vld [vmem:[#allocation6 + $0x150] sm:$0xff]
    %v2097 = vld [vmem:[#allocation6 + $0x158] sm:$0xff]
    %v2098 = vld [vmem:[#allocation6 + $0x160] sm:$0xff]
    %v2099 = vld [vmem:[#allocation6 + $0x168] sm:$0xff]
    %v2100 = vld [vmem:[#allocation6 + $0x170] sm:$0xff]
    %v2101 = vld [vmem:[#allocation6 + $0x178] sm:$0xff]
    %v2102 = vld [vmem:[#allocation6 + $0x180] sm:$0xff]
    %v2103 = vld [vmem:[#allocation6 + $0x188] sm:$0xff]
    %v2104 = vld [vmem:[#allocation6 + $0x190] sm:$0xff]
    %v2105 = vld [vmem:[#allocation6 + $0x198] sm:$0xff]
    %v2106 = vld [vmem:[#allocation6 + $0x1a0] sm:$0xff]
    %v2107 = vld [vmem:[#allocation6 + $0x1a8] sm:$0xff]
    %v2108 = vld [vmem:[#allocation6 + $0x1b0] sm:$0xff]
    %v2109 = vld [vmem:[#allocation6 + $0x1b8] sm:$0xff]
    %v2110 = vld [vmem:[#allocation6 + $0x1c0] sm:$0xff]
    %v2111 = vld [vmem:[#allocation6 + $0x1c8] sm:$0xff]
    %v2112 = vld [vmem:[#allocation6 + $0x1d0] sm:$0xff]
    %v2113 = vld [vmem:[#allocation6 + $0x1d8] sm:$0xff]
    %v2114 = vld [vmem:[#allocation6 + $0x1e0] sm:$0xff]
    %v2115 = vld [vmem:[#allocation6 + $0x1e8] sm:$0xff]
    %v2116 = vld [vmem:[#allocation6 + $0x1f0] sm:$0xff]
    %v2117 = vld [vmem:[#allocation6 + $0x1f8] sm:$0xff]
    %v2119 = vunpack.c.l.b16 %v2053
    %v2120 = vunpack.c.h.b16 %v2053
    %v2121 = vpack.c.b16 %v2119, %v2119
    %v2122 = vpack.c.b16 %v2120, %v2120
    %v2189 = vunpack.c.l.b16 %v2054
    %v2190 = vunpack.c.h.b16 %v2054
    %v2191 = vunpack.c.l.b16 %v2055
    %v2192 = vunpack.c.h.b16 %v2055
    %v2193 = vunpack.c.l.b16 %v2056
    %v2194 = vunpack.c.h.b16 %v2056
    %v2195 = vunpack.c.l.b16 %v2057
    %v2196 = vunpack.c.h.b16 %v2057
    %v2197 = vunpack.c.l.b16 %v2058
    %v2198 = vunpack.c.h.b16 %v2058
    %v2199 = vunpack.c.l.b16 %v2059
    %v2200 = vunpack.c.h.b16 %v2059
    %v2201 = vunpack.c.l.b16 %v2060
    %v2202 = vunpack.c.h.b16 %v2060
    %v2203 = vunpack.c.l.b16 %v2061
    %v2204 = vunpack.c.h.b16 %v2061
    %v2205 = vunpack.c.l.b16 %v2062
    %v2206 = vunpack.c.h.b16 %v2062
    %v2207 = vunpack.c.l.b16 %v2063
    %v2208 = vunpack.c.h.b16 %v2063
    %v2209 = vunpack.c.l.b16 %v2064
    %v2210 = vunpack.c.h.b16 %v2064
    %v2211 = vunpack.c.l.b16 %v2065
    %v2212 = vunpack.c.h.b16 %v2065
    %v2213 = vunpack.c.l.b16 %v2066
    %v2214 = vunpack.c.h.b16 %v2066
    %v2215 = vunpack.c.l.b16 %v2067
    %v2216 = vunpack.c.h.b16 %v2067
    %v2217 = vunpack.c.l.b16 %v2068
    %v2218 = vunpack.c.h.b16 %v2068
    %v2219 = vunpack.c.l.b16 %v2069
    %v2220 = vunpack.c.h.b16 %v2069
    %v2221 = vunpack.c.l.b16 %v2070
    %v2222 = vunpack.c.h.b16 %v2070
    %v2223 = vunpack.c.l.b16 %v2071
    %v2224 = vunpack.c.h.b16 %v2071
    %v2225 = vunpack.c.l.b16 %v2072
    %v2226 = vunpack.c.h.b16 %v2072
    %v2227 = vunpack.c.l.b16 %v2073
    %v2228 = vunpack.c.h.b16 %v2073
    %v2229 = vunpack.c.l.b16 %v2074
    %v2230 = vunpack.c.h.b16 %v2074
    %v2231 = vunpack.c.l.b16 %v2075
    %v2232 = vunpack.c.h.b16 %v2075
    %v2233 = vunpack.c.l.b16 %v2076
    %v2234 = vunpack.c.h.b16 %v2076
    %v2235 = vunpack.c.l.b16 %v2077
    %v2236 = vunpack.c.h.b16 %v2077
    %v2237 = vunpack.c.l.b16 %v2078
    %v2238 = vunpack.c.h.b16 %v2078
    %v2239 = vunpack.c.l.b16 %v2079
    %v2240 = vunpack.c.h.b16 %v2079
    %v2241 = vunpack.c.l.b16 %v2080
    %v2242 = vunpack.c.h.b16 %v2080
    %v2243 = vunpack.c.l.b16 %v2081
    %v2244 = vunpack.c.h.b16 %v2081
    %v2245 = vunpack.c.l.b16 %v2082
    %v2246 = vunpack.c.h.b16 %v2082
    %v2247 = vunpack.c.l.b16 %v2083
    %v2248 = vunpack.c.h.b16 %v2083
    %v2249 = vunpack.c.l.b16 %v2084
    %v2250 = vunpack.c.h.b16 %v2084
    %v2251 = vunpack.c.l.b16 %v2085
    %v2252 = vunpack.c.h.b16 %v2085
    %v2253 = vunpack.c.l.b16 %v2086
    %v2254 = vunpack.c.h.b16 %v2086
    %v2255 = vunpack.c.l.b16 %v2087
    %v2256 = vunpack.c.h.b16 %v2087
    %v2257 = vunpack.c.l.b16 %v2088
    %v2258 = vunpack.c.h.b16 %v2088
    %v2259 = vunpack.c.l.b16 %v2089
    %v2260 = vunpack.c.h.b16 %v2089
    %v2261 = vunpack.c.l.b16 %v2090
    %v2262 = vunpack.c.h.b16 %v2090
    %v2263 = vunpack.c.l.b16 %v2091
    %v2264 = vunpack.c.h.b16 %v2091
    %v2265 = vunpack.c.l.b16 %v2092
    %v2266 = vunpack.c.h.b16 %v2092
    %v2267 = vunpack.c.l.b16 %v2093
    %v2268 = vunpack.c.h.b16 %v2093
    %v2269 = vunpack.c.l.b16 %v2094
    %v2270 = vunpack.c.h.b16 %v2094
    %v2271 = vunpack.c.l.b16 %v2095
    %v2272 = vunpack.c.h.b16 %v2095
    %v2273 = vunpack.c.l.b16 %v2096
    %v2274 = vunpack.c.h.b16 %v2096
    %v2275 = vunpack.c.l.b16 %v2097
    %v2276 = vunpack.c.h.b16 %v2097
    %v2277 = vunpack.c.l.b16 %v2098
    %v2278 = vunpack.c.h.b16 %v2098
    %v2279 = vunpack.c.l.b16 %v2099
    %v2280 = vunpack.c.h.b16 %v2099
    %v2281 = vunpack.c.l.b16 %v2100
    %v2282 = vunpack.c.h.b16 %v2100
    %v2283 = vunpack.c.l.b16 %v2101
    %v2284 = vunpack.c.h.b16 %v2101
    %v2285 = vunpack.c.l.b16 %v2102
    %v2286 = vunpack.c.h.b16 %v2102
    %v2287 = vunpack.c.l.b16 %v2103
    %v2288 = vunpack.c.h.b16 %v2103
    %v2289 = vunpack.c.l.b16 %v2104
    %v2290 = vunpack.c.h.b16 %v2104
    %v2291 = vunpack.c.l.b16 %v2105
    %v2292 = vunpack.c.h.b16 %v2105
    %v2293 = vunpack.c.l.b16 %v2106
    %v2294 = vunpack.c.h.b16 %v2106
    %v2295 = vunpack.c.l.b16 %v2107
    %v2296 = vunpack.c.h.b16 %v2107
    %v2297 = vunpack.c.l.b16 %v2108
    %v2298 = vunpack.c.h.b16 %v2108
    %v2299 = vunpack.c.l.b16 %v2109
    %v2300 = vunpack.c.h.b16 %v2109
    %v2301 = vunpack.c.l.b16 %v2110
    %v2302 = vunpack.c.h.b16 %v2110
    %v2303 = vunpack.c.l.b16 %v2111
    %v2304 = vunpack.c.h.b16 %v2111
    %v2305 = vunpack.c.l.b16 %v2112
    %v2306 = vunpack.c.h.b16 %v2112
    %v2307 = vunpack.c.l.b16 %v2113
    %v2308 = vunpack.c.h.b16 %v2113
    %v2309 = vunpack.c.l.b16 %v2114
    %v2310 = vunpack.c.h.b16 %v2114
    %v2311 = vunpack.c.l.b16 %v2115
    %v2312 = vunpack.c.h.b16 %v2115
    %v2313 = vunpack.c.l.b16 %v2116
    %v2314 = vunpack.c.h.b16 %v2116
    %v2315 = vunpack.c.l.b16 %v2117
    %v2316 = vunpack.c.h.b16 %v2117
    %v2317 = vpack.c.b16 %v2193, %v2189
    %v2318 = vpack.c.b16 %v2194, %v2190
    %v2319 = vpack.c.b16 %v2195, %v2191
    %v2320 = vpack.c.b16 %v2196, %v2192
    %v2321 = vpack.c.b16 %v2201, %v2197
    %v2322 = vpack.c.b16 %v2202, %v2198
    %v2323 = vpack.c.b16 %v2203, %v2199
    %v2324 = vpack.c.b16 %v2204, %v2200
    %v2325 = vpack.c.b16 %v2209, %v2205
    %v2326 = vpack.c.b16 %v2210, %v2206
    %v2327 = vpack.c.b16 %v2211, %v2207
    %v2328 = vpack.c.b16 %v2212, %v2208
    %v2329 = vpack.c.b16 %v2217, %v2213
    %v2330 = vpack.c.b16 %v2218, %v2214
    %v2331 = vpack.c.b16 %v2219, %v2215
    %v2332 = vpack.c.b16 %v2220, %v2216
    %v2333 = vpack.c.b16 %v2225, %v2221
    %v2334 = vpack.c.b16 %v2226, %v2222
    %v2335 = vpack.c.b16 %v2227, %v2223
    %v2336 = vpack.c.b16 %v2228, %v2224
    %v2337 = vpack.c.b16 %v2233, %v2229
    %v2338 = vpack.c.b16 %v2234, %v2230
    %v2339 = vpack.c.b16 %v2235, %v2231
    %v2340 = vpack.c.b16 %v2236, %v2232
    %v2341 = vpack.c.b16 %v2241, %v2237
    %v2342 = vpack.c.b16 %v2242, %v2238
    %v2343 = vpack.c.b16 %v2243, %v2239
    %v2344 = vpack.c.b16 %v2244, %v2240
    %v2345 = vpack.c.b16 %v2249, %v2245
    %v2346 = vpack.c.b16 %v2250, %v2246
    %v2347 = vpack.c.b16 %v2251, %v2247
    %v2348 = vpack.c.b16 %v2252, %v2248
    %v2349 = vpack.c.b16 %v2257, %v2253
    %v2350 = vpack.c.b16 %v2258, %v2254
    %v2351 = vpack.c.b16 %v2259, %v2255
    %v2352 = vpack.c.b16 %v2260, %v2256
    %v2353 = vpack.c.b16 %v2265, %v2261
    %v2354 = vpack.c.b16 %v2266, %v2262
    %v2355 = vpack.c.b16 %v2267, %v2263
    %v2356 = vpack.c.b16 %v2268, %v2264
    %v2357 = vpack.c.b16 %v2273, %v2269
    %v2358 = vpack.c.b16 %v2274, %v2270
    %v2359 = vpack.c.b16 %v2275, %v2271
    %v2360 = vpack.c.b16 %v2276, %v2272
    %v2361 = vpack.c.b16 %v2281, %v2277
    %v2362 = vpack.c.b16 %v2282, %v2278
    %v2363 = vpack.c.b16 %v2283, %v2279
    %v2364 = vpack.c.b16 %v2284, %v2280
    %v2365 = vpack.c.b16 %v2289, %v2285
    %v2366 = vpack.c.b16 %v2290, %v2286
    %v2367 = vpack.c.b16 %v2291, %v2287
    %v2368 = vpack.c.b16 %v2292, %v2288
    %v2369 = vpack.c.b16 %v2297, %v2293
    %v2370 = vpack.c.b16 %v2298, %v2294
    %v2371 = vpack.c.b16 %v2299, %v2295
    %v2372 = vpack.c.b16 %v2300, %v2296
    %v2373 = vpack.c.b16 %v2305, %v2301
    %v2374 = vpack.c.b16 %v2306, %v2302
    %v2375 = vpack.c.b16 %v2307, %v2303
    %v2376 = vpack.c.b16 %v2308, %v2304
    %v2377 = vpack.c.b16 %v2313, %v2309
    %v2378 = vpack.c.b16 %v2314, %v2310
    %v2379 = vpack.c.b16 %v2315, %v2311
    %v2380 = vpack.c.b16 %v2316, %v2312
    %2445 = vmatprep.subr.bf16.mxu0 %v2318
    %2446 = vmatpush1.bf16.msra.mxu0 %v2317
    %2447 = vmatprep.subr.bf16.mxu0 %v2322
    %2448 = vmatpush1.bf16.msra.mxu0 %v2321
    %2449 = vmatprep.subr.bf16.mxu0 %v2326
    %2450 = vmatpush1.bf16.msra.mxu0 %v2325
    %2451 = vmatprep.subr.bf16.mxu0 %v2330
    %2452 = vmatpush1.bf16.msra.mxu0 %v2329
    %2453 = vmatprep.subr.bf16.mxu0 %v2334
    %2454 = vmatpush1.bf16.msra.mxu0 %v2333
    %2455 = vmatprep.subr.bf16.mxu0 %v2338
    %2456 = vmatpush1.bf16.msra.mxu0 %v2337
    %2457 = vmatprep.subr.bf16.mxu0 %v2342
    %2458 = vmatpush1.bf16.msra.mxu0 %v2341
    %2459 = vmatprep.subr.bf16.mxu0 %v2346
    %2460 = vmatpush1.bf16.msra.mxu0 %v2345
    %2461 = vmatprep.subr.bf16.mxu0 %v2350
    %2462 = vmatpush1.bf16.msra.mxu0 %v2349
    %2463 = vmatprep.subr.bf16.mxu0 %v2354
    %2464 = vmatpush1.bf16.msra.mxu0 %v2353
    %2465 = vmatprep.subr.bf16.mxu0 %v2358
    %2466 = vmatpush1.bf16.msra.mxu0 %v2357
    %2467 = vmatprep.subr.bf16.mxu0 %v2362
    %2468 = vmatpush1.bf16.msra.mxu0 %v2361
    %2469 = vmatprep.subr.bf16.mxu0 %v2366
    %2470 = vmatpush1.bf16.msra.mxu0 %v2365
    %2471 = vmatprep.subr.bf16.mxu0 %v2370
    %2472 = vmatpush1.bf16.msra.mxu0 %v2369
    %2473 = vmatprep.subr.bf16.mxu0 %v2374
    %2474 = vmatpush1.bf16.msra.mxu0 %v2373
    %2475 = vmatprep.subr.bf16.mxu0 %v2378
    %2476 = vmatpush1.bf16.msra.mxu0 %v2377
    %2477 = vmatprep.mubr.bf16.mxu0 %v2122
    %2478 = vmatmul.mubr.bf16.gmra.mrb[0].mxu0 %v2121
    %v2479 = vpop.f32.mrb[0].mxu0
    %v2480 = vadd.f32 %v109, %v2479
    %v2481 = vpop.f32.mrb[0].mxu0
    %v2482 = vadd.f32 %v113, %v2481
    %v2483 = vpop.f32.mrb[0].mxu0
    %v2484 = vpop.f32.mrb[0].mxu0
    %2485 = vdwg.mxu0
    %2486 = vmatprep.subr.bf16.mxu0 %v2320
    %2487 = vmatpush1.bf16.msra.mxu0 %v2319
    %2488 = vmatprep.subr.bf16.mxu0 %v2324
    %2489 = vmatpush1.bf16.msra.mxu0 %v2323
    %2490 = vmatprep.subr.bf16.mxu0 %v2328
    %2491 = vmatpush1.bf16.msra.mxu0 %v2327
    %2492 = vmatprep.subr.bf16.mxu0 %v2332
    %2493 = vmatpush1.bf16.msra.mxu0 %v2331
    %2494 = vmatprep.subr.bf16.mxu0 %v2336
    %2495 = vmatpush1.bf16.msra.mxu0 %v2335
    %2496 = vmatprep.subr.bf16.mxu0 %v2340
    %2497 = vmatpush1.bf16.msra.mxu0 %v2339
    %2498 = vmatprep.subr.bf16.mxu0 %v2344
    %2499 = vmatpush1.bf16.msra.mxu0 %v2343
    %2500 = vmatprep.subr.bf16.mxu0 %v2348
    %2501 = vmatpush1.bf16.msra.mxu0 %v2347
    %2502 = vmatprep.subr.bf16.mxu0 %v2352
    %2503 = vmatpush1.bf16.msra.mxu0 %v2351
    %2504 = vmatprep.subr.bf16.mxu0 %v2356
    %2505 = vmatpush1.bf16.msra.mxu0 %v2355
    %2506 = vmatprep.subr.bf16.mxu0 %v2360
    %2507 = vmatpush1.bf16.msra.mxu0 %v2359
    %2508 = vmatprep.subr.bf16.mxu0 %v2364
    %2509 = vmatpush1.bf16.msra.mxu0 %v2363
    %2510 = vmatprep.subr.bf16.mxu0 %v2368
    %2511 = vmatpush1.bf16.msra.mxu0 %v2367
    %2512 = vmatprep.subr.bf16.mxu0 %v2372
    %2513 = vmatpush1.bf16.msra.mxu0 %v2371
    %2514 = vmatprep.subr.bf16.mxu0 %v2376
    %2515 = vmatpush1.bf16.msra.mxu0 %v2375
    %2516 = vmatprep.subr.bf16.mxu0 %v2380
    %2517 = vmatpush1.bf16.msra.mxu0 %v2379
    %2518 = vmatprep.mubr.bf16.mxu0 %v2122
    %2519 = vmatmul.mubr.bf16.gmra.mrb[0].mxu0 %v2121
    %v2520 = vpop.f32.mrb[0].mxu0
    %v2521 = vadd.f32 %v117, %v2520
    %v2522 = vpop.f32.mrb[0].mxu0
    %v2523 = vadd.f32 %v121, %v2522
    %v2524 = vpop.f32.mrb[0].mxu0
    %v2525 = vpop.f32.mrb[0].mxu0
    %2526 = vdwg.mxu0
    %v2527 = vmul.f32 %v2480, 0.5
    %v2528 = vtanh.pop %v2527
    %v2529 = vmul.f32 %v2528, 0.5
    %v2530 = vadd.f32 %v2529, 0.5
    %v2531 = vmul.f32 %v2482, 0.5
    %v2532 = vtanh.pop %v2531
    %v2533 = vmul.f32 %v2532, 0.5
    %v2534 = vadd.f32 %v2533, 0.5
    %v2535 = vtanh.pop %v2521
    %v2536 = vmul.f32 %v2523, 0.5
    %v2537 = vtanh.pop %v2536
    %v2538 = vmul.f32 %v2537, 0.5
    %v2539 = vadd.f32 %v2538, 0.5
    %v2540 = vmul.f32 %v2534, %v1735
    %v2541 = vmul.f32 %v2530, %v2535
    %v2542 = vadd.f32 %v2540, %v2541
    %v2543 = vtanh.pop %v2542
    %v2544 = vmul.f32 %v2539, %v2543
    %s2545 = scalar_lea.vmem %s0, 24
    %v2546 = vld [vmem:[%s2545] sm:$0xff]
    %2548 = vset.pattern.permute.xlu0 0
    %2549 = vperm.xlu0 %2548, %v2546
    %v2550 = vpop.permute.xlu0 %2549
    %v2552 = vmul.f32 %v2550, %v65
    %v2553 = vmul.f32 %v2550, %v69
    %v2554 = vmul.f32 %v2550, %v73
    %v2555 = vmul.f32 %v2550, %v77
    %v2556 = vadd.f32 %v2552, %v87
    %v2557 = vadd.f32 %v2553, %v91
    %v2558 = vadd.f32 %v2554, %v95
    %v2559 = vadd.f32 %v2555, %v99
    %v2560 = vld [vmem:[#allocation4] sm:$0xff]
    %v2561 = vld [vmem:[#allocation4 + $0x8] sm:$0xff]
    %v2562 = vld [vmem:[#allocation4 + $0x10] sm:$0xff]
    %v2563 = vld [vmem:[#allocation4 + $0x18] sm:$0xff]
    %v2564 = vld [vmem:[#allocation4 + $0x20] sm:$0xff]
    %v2565 = vld [vmem:[#allocation4 + $0x28] sm:$0xff]
    %v2566 = vld [vmem:[#allocation4 + $0x30] sm:$0xff]
    %v2567 = vld [vmem:[#allocation4 + $0x38] sm:$0xff]
    %v2568 = vld [vmem:[#allocation4 + $0x40] sm:$0xff]
    %v2569 = vld [vmem:[#allocation4 + $0x48] sm:$0xff]
    %v2570 = vld [vmem:[#allocation4 + $0x50] sm:$0xff]
    %v2571 = vld [vmem:[#allocation4 + $0x58] sm:$0xff]
    %v2572 = vld [vmem:[#allocation4 + $0x60] sm:$0xff]
    %v2573 = vld [vmem:[#allocation4 + $0x68] sm:$0xff]
    %v2574 = vld [vmem:[#allocation4 + $0x70] sm:$0xff]
    %v2575 = vld [vmem:[#allocation4 + $0x78] sm:$0xff]
    %v2576 = vld [vmem:[#allocation4 + $0x80] sm:$0xff]
    %v2577 = vld [vmem:[#allocation4 + $0x88] sm:$0xff]
    %v2578 = vld [vmem:[#allocation4 + $0x90] sm:$0xff]
    %v2579 = vld [vmem:[#allocation4 + $0x98] sm:$0xff]
    %v2580 = vld [vmem:[#allocation4 + $0xa0] sm:$0xff]
    %v2581 = vld [vmem:[#allocation4 + $0xa8] sm:$0xff]
    %v2582 = vld [vmem:[#allocation4 + $0xb0] sm:$0xff]
    %v2583 = vld [vmem:[#allocation4 + $0xb8] sm:$0xff]
    %v2584 = vld [vmem:[#allocation4 + $0xc0] sm:$0xff]
    %v2585 = vld [vmem:[#allocation4 + $0xc8] sm:$0xff]
    %v2586 = vld [vmem:[#allocation4 + $0xd0] sm:$0xff]
    %v2587 = vld [vmem:[#allocation4 + $0xd8] sm:$0xff]
    %v2588 = vld [vmem:[#allocation4 + $0xe0] sm:$0xff]
    %v2589 = vld [vmem:[#allocation4 + $0xe8] sm:$0xff]
    %v2590 = vld [vmem:[#allocation4 + $0xf0] sm:$0xff]
    %v2591 = vld [vmem:[#allocation4 + $0xf8] sm:$0xff]
    %v2624 = vunpack.c.l.b16 %v2560
    %v2625 = vunpack.c.h.b16 %v2560
    %v2626 = vunpack.c.l.b16 %v2561
    %v2627 = vunpack.c.h.b16 %v2561
    %v2628 = vunpack.c.l.b16 %v2562
    %v2629 = vunpack.c.h.b16 %v2562
    %v2630 = vunpack.c.l.b16 %v2563
    %v2631 = vunpack.c.h.b16 %v2563
    %v2632 = vunpack.c.l.b16 %v2564
    %v2633 = vunpack.c.h.b16 %v2564
    %v2634 = vunpack.c.l.b16 %v2565
    %v2635 = vunpack.c.h.b16 %v2565
    %v2636 = vunpack.c.l.b16 %v2566
    %v2637 = vunpack.c.h.b16 %v2566
    %v2638 = vunpack.c.l.b16 %v2567
    %v2639 = vunpack.c.h.b16 %v2567
    %v2640 = vunpack.c.l.b16 %v2568
    %v2641 = vunpack.c.h.b16 %v2568
    %v2642 = vunpack.c.l.b16 %v2569
    %v2643 = vunpack.c.h.b16 %v2569
    %v2644 = vunpack.c.l.b16 %v2570
    %v2645 = vunpack.c.h.b16 %v2570
    %v2646 = vunpack.c.l.b16 %v2571
    %v2647 = vunpack.c.h.b16 %v2571
    %v2648 = vunpack.c.l.b16 %v2572
    %v2649 = vunpack.c.h.b16 %v2572
    %v2650 = vunpack.c.l.b16 %v2573
    %v2651 = vunpack.c.h.b16 %v2573
    %v2652 = vunpack.c.l.b16 %v2574
    %v2653 = vunpack.c.h.b16 %v2574
    %v2654 = vunpack.c.l.b16 %v2575
    %v2655 = vunpack.c.h.b16 %v2575
    %v2656 = vunpack.c.l.b16 %v2576
    %v2657 = vunpack.c.h.b16 %v2576
    %v2658 = vunpack.c.l.b16 %v2577
    %v2659 = vunpack.c.h.b16 %v2577
    %v2660 = vunpack.c.l.b16 %v2578
    %v2661 = vunpack.c.h.b16 %v2578
    %v2662 = vunpack.c.l.b16 %v2579
    %v2663 = vunpack.c.h.b16 %v2579
    %v2664 = vunpack.c.l.b16 %v2580
    %v2665 = vunpack.c.h.b16 %v2580
    %v2666 = vunpack.c.l.b16 %v2581
    %v2667 = vunpack.c.h.b16 %v2581
    %v2668 = vunpack.c.l.b16 %v2582
    %v2669 = vunpack.c.h.b16 %v2582
    %v2670 = vunpack.c.l.b16 %v2583
    %v2671 = vunpack.c.h.b16 %v2583
    %v2672 = vunpack.c.l.b16 %v2584
    %v2673 = vunpack.c.h.b16 %v2584
    %v2674 = vunpack.c.l.b16 %v2585
    %v2675 = vunpack.c.h.b16 %v2585
    %v2676 = vunpack.c.l.b16 %v2586
    %v2677 = vunpack.c.h.b16 %v2586
    %v2678 = vunpack.c.l.b16 %v2587
    %v2679 = vunpack.c.h.b16 %v2587
    %v2680 = vunpack.c.l.b16 %v2588
    %v2681 = vunpack.c.h.b16 %v2588
    %v2682 = vunpack.c.l.b16 %v2589
    %v2683 = vunpack.c.h.b16 %v2589
    %v2684 = vunpack.c.l.b16 %v2590
    %v2685 = vunpack.c.h.b16 %v2590
    %v2686 = vunpack.c.l.b16 %v2591
    %v2687 = vunpack.c.h.b16 %v2591
    %v2688 = vpack.c.b16 %v2628, %v2624
    %v2689 = vpack.c.b16 %v2629, %v2625
    %v2690 = vpack.c.b16 %v2630, %v2626
    %v2691 = vpack.c.b16 %v2631, %v2627
    %v2692 = vpack.c.b16 %v2636, %v2632
    %v2693 = vpack.c.b16 %v2637, %v2633
    %v2694 = vpack.c.b16 %v2638, %v2634
    %v2695 = vpack.c.b16 %v2639, %v2635
    %v2696 = vpack.c.b16 %v2644, %v2640
    %v2697 = vpack.c.b16 %v2645, %v2641
    %v2698 = vpack.c.b16 %v2646, %v2642
    %v2699 = vpack.c.b16 %v2647, %v2643
    %v2700 = vpack.c.b16 %v2652, %v2648
    %v2701 = vpack.c.b16 %v2653, %v2649
    %v2702 = vpack.c.b16 %v2654, %v2650
    %v2703 = vpack.c.b16 %v2655, %v2651
    %v2704 = vpack.c.b16 %v2660, %v2656
    %v2705 = vpack.c.b16 %v2661, %v2657
    %v2706 = vpack.c.b16 %v2662, %v2658
    %v2707 = vpack.c.b16 %v2663, %v2659
    %v2708 = vpack.c.b16 %v2668, %v2664
    %v2709 = vpack.c.b16 %v2669, %v2665
    %v2710 = vpack.c.b16 %v2670, %v2666
    %v2711 = vpack.c.b16 %v2671, %v2667
    %v2712 = vpack.c.b16 %v2676, %v2672
    %v2713 = vpack.c.b16 %v2677, %v2673
    %v2714 = vpack.c.b16 %v2678, %v2674
    %v2715 = vpack.c.b16 %v2679, %v2675
    %v2716 = vpack.c.b16 %v2684, %v2680
    %v2717 = vpack.c.b16 %v2685, %v2681
    %v2718 = vpack.c.b16 %v2686, %v2682
    %v2719 = vpack.c.b16 %v2687, %v2683
    %2752 = vmatprep.subr.bf16.mxu0 %v2689
    %2753 = vmatpush1.bf16.msra.mxu0 %v2688
    %2754 = vmatprep.subr.bf16.mxu0 %v2693
    %2755 = vmatpush1.bf16.msra.mxu0 %v2692
    %2756 = vmatprep.subr.bf16.mxu0 %v2697
    %2757 = vmatpush1.bf16.msra.mxu0 %v2696
    %2758 = vmatprep.subr.bf16.mxu0 %v2701
    %2759 = vmatpush1.bf16.msra.mxu0 %v2700
    %2760 = vmatprep.subr.bf16.mxu0 %v2705
    %2761 = vmatpush1.bf16.msra.mxu0 %v2704
    %2762 = vmatprep.subr.bf16.mxu0 %v2709
    %2763 = vmatpush1.bf16.msra.mxu0 %v2708
    %2764 = vmatprep.subr.bf16.mxu0 %v2713
    %2765 = vmatpush1.bf16.msra.mxu0 %v2712
    %2766 = vmatprep.subr.bf16.mxu0 %v2717
    %2767 = vmatpush1.bf16.msra.mxu0 %v2716
    %2768 = vmatprep.subr.bf16.mxu0 0
    %2769 = vmatpush1.bf16.msra.mxu0 0
    %2770 = vmatprep.subr.bf16.mxu0 0
    %2771 = vmatpush1.bf16.msra.mxu0 0
    %2772 = vmatprep.subr.bf16.mxu0 0
    %2773 = vmatpush1.bf16.msra.mxu0 0
    %2774 = vmatprep.subr.bf16.mxu0 0
    %2775 = vmatpush1.bf16.msra.mxu0 0
    %2776 = vmatprep.subr.bf16.mxu0 0
    %2777 = vmatpush1.bf16.msra.mxu0 0
    %2778 = vmatprep.subr.bf16.mxu0 0
    %2779 = vmatpush1.bf16.msra.mxu0 0
    %2780 = vmatprep.subr.bf16.mxu0 0
    %2781 = vmatpush1.bf16.msra.mxu0 0
    %2782 = vmatprep.subr.bf16.mxu0 0
    %2783 = vmatpush1.bf16.msra.mxu0 0
    %2784 = vmatprep.mubr.bf16.mxu0 0
    %2785 = vmatmul.mubr.bf16.gmra.mrb[0].mxu0 %v2049
    %v2786 = vpop.f32.mrb[0].mxu0
    %v2787 = vadd.f32 0.0, %v2786
    %v2788 = vpop.f32.mrb[0].mxu0
    %v2789 = vadd.f32 0.0, %v2788
    %v2790 = vpop.f32.mrb[0].mxu0
    %v2791 = vpop.f32.mrb[0].mxu0
    %2792 = vdwg.mxu0
    %2793 = vmatprep.subr.bf16.mxu0 %v2691
    %2794 = vmatpush1.bf16.msra.mxu0 %v2690
    %2795 = vmatprep.subr.bf16.mxu0 %v2695
    %2796 = vmatpush1.bf16.msra.mxu0 %v2694
    %2797 = vmatprep.subr.bf16.mxu0 %v2699
    %2798 = vmatpush1.bf16.msra.mxu0 %v2698
    %2799 = vmatprep.subr.bf16.mxu0 %v2703
    %2800 = vmatpush1.bf16.msra.mxu0 %v2702
    %2801 = vmatprep.subr.bf16.mxu0 %v2707
    %2802 = vmatpush1.bf16.msra.mxu0 %v2706
    %2803 = vmatprep.subr.bf16.mxu0 %v2711
    %2804 = vmatpush1.bf16.msra.mxu0 %v2710
    %2805 = vmatprep.subr.bf16.mxu0 %v2715
    %2806 = vmatpush1.bf16.msra.mxu0 %v2714
    %2807 = vmatprep.subr.bf16.mxu0 %v2719
    %2808 = vmatpush1.bf16.msra.mxu0 %v2718
    %2809 = vmatprep.subr.bf16.mxu0 0
    %2810 = vmatpush1.bf16.msra.mxu0 0
    %2811 = vmatprep.subr.bf16.mxu0 0
    %2812 = vmatpush1.bf16.msra.mxu0 0
    %2813 = vmatprep.subr.bf16.mxu0 0
    %2814 = vmatpush1.bf16.msra.mxu0 0
    %2815 = vmatprep.subr.bf16.mxu0 0
    %2816 = vmatpush1.bf16.msra.mxu0 0
    %2817 = vmatprep.subr.bf16.mxu0 0
    %2818 = vmatpush1.bf16.msra.mxu0 0
    %2819 = vmatprep.subr.bf16.mxu0 0
    %2820 = vmatpush1.bf16.msra.mxu0 0
    %2821 = vmatprep.subr.bf16.mxu0 0
    %2822 = vmatpush1.bf16.msra.mxu0 0
    %2823 = vmatprep.subr.bf16.mxu0 0
    %2824 = vmatpush1.bf16.msra.mxu0 0
    %2825 = vmatprep.mubr.bf16.mxu0 0
    %2826 = vmatmul.mubr.bf16.gmra.mrb[0].mxu0 %v2049
    %v2827 = vpop.f32.mrb[0].mxu0
    %v2828 = vadd.f32 0.0, %v2827
    %v2829 = vpop.f32.mrb[0].mxu0
    %v2830 = vadd.f32 0.0, %v2829
    %v2831 = vpop.f32.mrb[0].mxu0
    %v2832 = vpop.f32.mrb[0].mxu0
    %2833 = vdwg.mxu0
    %v2834 = vadd.f32 %v2556, %v2787
    %v2835 = vadd.f32 %v2557, %v2789
    %v2836 = vadd.f32 %v2558, %v2828
    %v2837 = vadd.f32 %v2559, %v2830
    %v2838 = vmul.f32 %v2834, 0.5
    %v2839 = vtanh.pop %v2838
    %v2840 = vmul.f32 %v2839, 0.5
    %v2841 = vadd.f32 %v2840, 0.5
    %v2842 = vmul.f32 %v2835, 0.5
    %v2843 = vtanh.pop %v2842
    %v2844 = vmul.f32 %v2843, 0.5
    %v2845 = vadd.f32 %v2844, 0.5
    %v2846 = vtanh.pop %v2836
    %v2847 = vmul.f32 %v2837, 0.5
    %v2848 = vtanh.pop %v2847
    %v2849 = vmul.f32 %v2848, 0.5
    %v2850 = vadd.f32 %v2849, 0.5
    %v2851 = vmul.f32 %v2845, %v2046
    %v2852 = vmul.f32 %v2841, %v2846
    %v2853 = vadd.f32 %v2851, %v2852
    %v2854 = vtanh.pop %v2853
    %v2855 = vmul.f32 %v2850, %v2854
    %v2856 = vpack.c.bf16 %v2855, %v2855
    %2857 = vst [vmem:[#allocation2] sm:$0xf] %v2856
    %v2858 = vpack.c.bf16 %v2544, %v2544
    %2859 = vst [vmem:[#allocation2 + $0x4] sm:$0xf] %v2858
    %v2860 = vld [vmem:[#allocation2] sm:$0xff]
    %v2861 = vld [vmem:[#allocation6] sm:$0xff]
    %v2862 = vld [vmem:[#allocation6 + $0x8] sm:$0xff]
    %v2863 = vld [vmem:[#allocation6 + $0x10] sm:$0xff]
    %v2864 = vld [vmem:[#allocation6 + $0x18] sm:$0xff]
    %v2865 = vld [vmem:[#allocation6 + $0x20] sm:$0xff]
    %v2866 = vld [vmem:[#allocation6 + $0x28] sm:$0xff]
    %v2867 = vld [vmem:[#allocation6 + $0x30] sm:$0xff]
    %v2868 = vld [vmem:[#allocation6 + $0x38] sm:$0xff]
    %v2869 = vld [vmem:[#allocation6 + $0x40] sm:$0xff]
    %v2870 = vld [vmem:[#allocation6 + $0x48] sm:$0xff]
    %v2871 = vld [vmem:[#allocation6 + $0x50] sm:$0xff]
    %v2872 = vld [vmem:[#allocation6 + $0x58] sm:$0xff]
    %v2873 = vld [vmem:[#allocation6 + $0x60] sm:$0xff]
    %v2874 = vld [vmem:[#allocation6 + $0x68] sm:$0xff]
    %v2875 = vld [vmem:[#allocation6 + $0x70] sm:$0xff]
    %v2876 = vld [vmem:[#allocation6 + $0x78] sm:$0xff]
    %v2877 = vld [vmem:[#allocation6 + $0x80] sm:$0xff]
    %v2878 = vld [vmem:[#allocation6 + $0x88] sm:$0xff]
    %v2879 = vld [vmem:[#allocation6 + $0x90] sm:$0xff]
    %v2880 = vld [vmem:[#allocation6 + $0x98] sm:$0xff]
    %v2881 = vld [vmem:[#allocation6 + $0xa0] sm:$0xff]
    %v2882 = vld [vmem:[#allocation6 + $0xa8] sm:$0xff]
    %v2883 = vld [vmem:[#allocation6 + $0xb0] sm:$0xff]
    %v2884 = vld [vmem:[#allocation6 + $0xb8] sm:$0xff]
    %v2885 = vld [vmem:[#allocation6 + $0xc0] sm:$0xff]
    %v2886 = vld [vmem:[#allocation6 + $0xc8] sm:$0xff]
    %v2887 = vld [vmem:[#allocation6 + $0xd0] sm:$0xff]
    %v2888 = vld [vmem:[#allocation6 + $0xd8] sm:$0xff]
    %v2889 = vld [vmem:[#allocation6 + $0xe0] sm:$0xff]
    %v2890 = vld [vmem:[#allocation6 + $0xe8] sm:$0xff]
    %v2891 = vld [vmem:[#allocation6 + $0xf0] sm:$0xff]
    %v2892 = vld [vmem:[#allocation6 + $0xf8] sm:$0xff]
    %v2893 = vld [vmem:[#allocation6 + $0x100] sm:$0xff]
    %v2894 = vld [vmem:[#allocation6 + $0x108] sm:$0xff]
    %v2895 = vld [vmem:[#allocation6 + $0x110] sm:$0xff]
    %v2896 = vld [vmem:[#allocation6 + $0x118] sm:$0xff]
    %v2897 = vld [vmem:[#allocation6 + $0x120] sm:$0xff]
    %v2898 = vld [vmem:[#allocation6 + $0x128] sm:$0xff]
    %v2899 = vld [vmem:[#allocation6 + $0x130] sm:$0xff]
    %v2900 = vld [vmem:[#allocation6 + $0x138] sm:$0xff]
    %v2901 = vld [vmem:[#allocation6 + $0x140] sm:$0xff]
    %v2902 = vld [vmem:[#allocation6 + $0x148] sm:$0xff]
    %v2903 = vld [vmem:[#allocation6 + $0x150] sm:$0xff]
    %v2904 = vld [vmem:[#allocation6 + $0x158] sm:$0xff]
    %v2905 = vld [vmem:[#allocation6 + $0x160] sm:$0xff]
    %v2906 = vld [vmem:[#allocation6 + $0x168] sm:$0xff]
    %v2907 = vld [vmem:[#allocation6 + $0x170] sm:$0xff]
    %v2908 = vld [vmem:[#allocation6 + $0x178] sm:$0xff]
    %v2909 = vld [vmem:[#allocation6 + $0x180] sm:$0xff]
    %v2910 = vld [vmem:[#allocation6 + $0x188] sm:$0xff]
    %v2911 = vld [vmem:[#allocation6 + $0x190] sm:$0xff]
    %v2912 = vld [vmem:[#allocation6 + $0x198] sm:$0xff]
    %v2913 = vld [vmem:[#allocation6 + $0x1a0] sm:$0xff]
    %v2914 = vld [vmem:[#allocation6 + $0x1a8] sm:$0xff]
    %v2915 = vld [vmem:[#allocation6 + $0x1b0] sm:$0xff]
    %v2916 = vld [vmem:[#allocation6 + $0x1b8] sm:$0xff]
    %v2917 = vld [vmem:[#allocation6 + $0x1c0] sm:$0xff]
    %v2918 = vld [vmem:[#allocation6 + $0x1c8] sm:$0xff]
    %v2919 = vld [vmem:[#allocation6 + $0x1d0] sm:$0xff]
    %v2920 = vld [vmem:[#allocation6 + $0x1d8] sm:$0xff]
    %v2921 = vld [vmem:[#allocation6 + $0x1e0] sm:$0xff]
    %v2922 = vld [vmem:[#allocation6 + $0x1e8] sm:$0xff]
    %v2923 = vld [vmem:[#allocation6 + $0x1f0] sm:$0xff]
    %v2924 = vld [vmem:[#allocation6 + $0x1f8] sm:$0xff]
    %v2926 = vunpack.c.l.b16 %v2860
    %v2927 = vunpack.c.h.b16 %v2860
    %v2928 = vpack.c.b16 %v2926, %v2926
    %v2929 = vpack.c.b16 %v2927, %v2927
    %v2996 = vunpack.c.l.b16 %v2861
    %v2997 = vunpack.c.h.b16 %v2861
    %v2998 = vunpack.c.l.b16 %v2862
    %v2999 = vunpack.c.h.b16 %v2862
    %v3000 = vunpack.c.l.b16 %v2863
    %v3001 = vunpack.c.h.b16 %v2863
    %v3002 = vunpack.c.l.b16 %v2864
    %v3003 = vunpack.c.h.b16 %v2864
    %v3004 = vunpack.c.l.b16 %v2865
    %v3005 = vunpack.c.h.b16 %v2865
    %v3006 = vunpack.c.l.b16 %v2866
    %v3007 = vunpack.c.h.b16 %v2866
    %v3008 = vunpack.c.l.b16 %v2867
    %v3009 = vunpack.c.h.b16 %v2867
    %v3010 = vunpack.c.l.b16 %v2868
    %v3011 = vunpack.c.h.b16 %v2868
    %v3012 = vunpack.c.l.b16 %v2869
    %v3013 = vunpack.c.h.b16 %v2869
    %v3014 = vunpack.c.l.b16 %v2870
    %v3015 = vunpack.c.h.b16 %v2870
    %v3016 = vunpack.c.l.b16 %v2871
    %v3017 = vunpack.c.h.b16 %v2871
    %v3018 = vunpack.c.l.b16 %v2872
    %v3019 = vunpack.c.h.b16 %v2872
    %v3020 = vunpack.c.l.b16 %v2873
    %v3021 = vunpack.c.h.b16 %v2873
    %v3022 = vunpack.c.l.b16 %v2874
    %v3023 = vunpack.c.h.b16 %v2874
    %v3024 = vunpack.c.l.b16 %v2875
    %v3025 = vunpack.c.h.b16 %v2875
    %v3026 = vunpack.c.l.b16 %v2876
    %v3027 = vunpack.c.h.b16 %v2876
    %v3028 = vunpack.c.l.b16 %v2877
    %v3029 = vunpack.c.h.b16 %v2877
    %v3030 = vunpack.c.l.b16 %v2878
    %v3031 = vunpack.c.h.b16 %v2878
    %v3032 = vunpack.c.l.b16 %v2879
    %v3033 = vunpack.c.h.b16 %v2879
    %v3034 = vunpack.c.l.b16 %v2880
    %v3035 = vunpack.c.h.b16 %v2880
    %v3036 = vunpack.c.l.b16 %v2881
    %v3037 = vunpack.c.h.b16 %v2881
    %v3038 = vunpack.c.l.b16 %v2882
    %v3039 = vunpack.c.h.b16 %v2882
    %v3040 = vunpack.c.l.b16 %v2883
    %v3041 = vunpack.c.h.b16 %v2883
    %v3042 = vunpack.c.l.b16 %v2884
    %v3043 = vunpack.c.h.b16 %v2884
    %v3044 = vunpack.c.l.b16 %v2885
    %v3045 = vunpack.c.h.b16 %v2885
    %v3046 = vunpack.c.l.b16 %v2886
    %v3047 = vunpack.c.h.b16 %v2886
    %v3048 = vunpack.c.l.b16 %v2887
    %v3049 = vunpack.c.h.b16 %v2887
    %v3050 = vunpack.c.l.b16 %v2888
    %v3051 = vunpack.c.h.b16 %v2888
    %v3052 = vunpack.c.l.b16 %v2889
    %v3053 = vunpack.c.h.b16 %v2889
    %v3054 = vunpack.c.l.b16 %v2890
    %v3055 = vunpack.c.h.b16 %v2890
    %v3056 = vunpack.c.l.b16 %v2891
    %v3057 = vunpack.c.h.b16 %v2891
    %v3058 = vunpack.c.l.b16 %v2892
    %v3059 = vunpack.c.h.b16 %v2892
    %v3060 = vunpack.c.l.b16 %v2893
    %v3061 = vunpack.c.h.b16 %v2893
    %v3062 = vunpack.c.l.b16 %v2894
    %v3063 = vunpack.c.h.b16 %v2894
    %v3064 = vunpack.c.l.b16 %v2895
    %v3065 = vunpack.c.h.b16 %v2895
    %v3066 = vunpack.c.l.b16 %v2896
    %v3067 = vunpack.c.h.b16 %v2896
    %v3068 = vunpack.c.l.b16 %v2897
    %v3069 = vunpack.c.h.b16 %v2897
    %v3070 = vunpack.c.l.b16 %v2898
    %v3071 = vunpack.c.h.b16 %v2898
    %v3072 = vunpack.c.l.b16 %v2899
    %v3073 = vunpack.c.h.b16 %v2899
    %v3074 = vunpack.c.l.b16 %v2900
    %v3075 = vunpack.c.h.b16 %v2900
    %v3076 = vunpack.c.l.b16 %v2901
    %v3077 = vunpack.c.h.b16 %v2901
    %v3078 = vunpack.c.l.b16 %v2902
    %v3079 = vunpack.c.h.b16 %v2902
    %v3080 = vunpack.c.l.b16 %v2903
    %v3081 = vunpack.c.h.b16 %v2903
    %v3082 = vunpack.c.l.b16 %v2904
    %v3083 = vunpack.c.h.b16 %v2904
    %v3084 = vunpack.c.l.b16 %v2905
    %v3085 = vunpack.c.h.b16 %v2905
    %v3086 = vunpack.c.l.b16 %v2906
    %v3087 = vunpack.c.h.b16 %v2906
    %v3088 = vunpack.c.l.b16 %v2907
    %v3089 = vunpack.c.h.b16 %v2907
    %v3090 = vunpack.c.l.b16 %v2908
    %v3091 = vunpack.c.h.b16 %v2908
    %v3092 = vunpack.c.l.b16 %v2909
    %v3093 = vunpack.c.h.b16 %v2909
    %v3094 = vunpack.c.l.b16 %v2910
    %v3095 = vunpack.c.h.b16 %v2910
    %v3096 = vunpack.c.l.b16 %v2911
    %v3097 = vunpack.c.h.b16 %v2911
    %v3098 = vunpack.c.l.b16 %v2912
    %v3099 = vunpack.c.h.b16 %v2912
    %v3100 = vunpack.c.l.b16 %v2913
    %v3101 = vunpack.c.h.b16 %v2913
    %v3102 = vunpack.c.l.b16 %v2914
    %v3103 = vunpack.c.h.b16 %v2914
    %v3104 = vunpack.c.l.b16 %v2915
    %v3105 = vunpack.c.h.b16 %v2915
    %v3106 = vunpack.c.l.b16 %v2916
    %v3107 = vunpack.c.h.b16 %v2916
    %v3108 = vunpack.c.l.b16 %v2917
    %v3109 = vunpack.c.h.b16 %v2917
    %v3110 = vunpack.c.l.b16 %v2918
    %v3111 = vunpack.c.h.b16 %v2918
    %v3112 = vunpack.c.l.b16 %v2919
    %v3113 = vunpack.c.h.b16 %v2919
    %v3114 = vunpack.c.l.b16 %v2920
    %v3115 = vunpack.c.h.b16 %v2920
    %v3116 = vunpack.c.l.b16 %v2921
    %v3117 = vunpack.c.h.b16 %v2921
    %v3118 = vunpack.c.l.b16 %v2922
    %v3119 = vunpack.c.h.b16 %v2922
    %v3120 = vunpack.c.l.b16 %v2923
    %v3121 = vunpack.c.h.b16 %v2923
    %v3122 = vunpack.c.l.b16 %v2924
    %v3123 = vunpack.c.h.b16 %v2924
    %v3124 = vpack.c.b16 %v3000, %v2996
    %v3125 = vpack.c.b16 %v3001, %v2997
    %v3126 = vpack.c.b16 %v3002, %v2998
    %v3127 = vpack.c.b16 %v3003, %v2999
    %v3128 = vpack.c.b16 %v3008, %v3004
    %v3129 = vpack.c.b16 %v3009, %v3005
    %v3130 = vpack.c.b16 %v3010, %v3006
    %v3131 = vpack.c.b16 %v3011, %v3007
    %v3132 = vpack.c.b16 %v3016, %v3012
    %v3133 = vpack.c.b16 %v3017, %v3013
    %v3134 = vpack.c.b16 %v3018, %v3014
    %v3135 = vpack.c.b16 %v3019, %v3015
    %v3136 = vpack.c.b16 %v3024, %v3020
    %v3137 = vpack.c.b16 %v3025, %v3021
    %v3138 = vpack.c.b16 %v3026, %v3022
    %v3139 = vpack.c.b16 %v3027, %v3023
    %v3140 = vpack.c.b16 %v3032, %v3028
    %v3141 = vpack.c.b16 %v3033, %v3029
    %v3142 = vpack.c.b16 %v3034, %v3030
    %v3143 = vpack.c.b16 %v3035, %v3031
    %v3144 = vpack.c.b16 %v3040, %v3036
    %v3145 = vpack.c.b16 %v3041, %v3037
    %v3146 = vpack.c.b16 %v3042, %v3038
    %v3147 = vpack.c.b16 %v3043, %v3039
    %v3148 = vpack.c.b16 %v3048, %v3044
    %v3149 = vpack.c.b16 %v3049, %v3045
    %v3150 = vpack.c.b16 %v3050, %v3046
    %v3151 = vpack.c.b16 %v3051, %v3047
    %v3152 = vpack.c.b16 %v3056, %v3052
    %v3153 = vpack.c.b16 %v3057, %v3053
    %v3154 = vpack.c.b16 %v3058, %v3054
    %v3155 = vpack.c.b16 %v3059, %v3055
    %v3156 = vpack.c.b16 %v3064, %v3060
    %v3157 = vpack.c.b16 %v3065, %v3061
    %v3158 = vpack.c.b16 %v3066, %v3062
    %v3159 = vpack.c.b16 %v3067, %v3063
    %v3160 = vpack.c.b16 %v3072, %v3068
    %v3161 = vpack.c.b16 %v3073, %v3069
    %v3162 = vpack.c.b16 %v3074, %v3070
    %v3163 = vpack.c.b16 %v3075, %v3071
    %v3164 = vpack.c.b16 %v3080, %v3076
    %v3165 = vpack.c.b16 %v3081, %v3077
    %v3166 = vpack.c.b16 %v3082, %v3078
    %v3167 = vpack.c.b16 %v3083, %v3079
    %v3168 = vpack.c.b16 %v3088, %v3084
    %v3169 = vpack.c.b16 %v3089, %v3085
    %v3170 = vpack.c.b16 %v3090, %v3086
    %v3171 = vpack.c.b16 %v3091, %v3087
    %v3172 = vpack.c.b16 %v3096, %v3092
    %v3173 = vpack.c.b16 %v3097, %v3093
    %v3174 = vpack.c.b16 %v3098, %v3094
    %v3175 = vpack.c.b16 %v3099, %v3095
    %v3176 = vpack.c.b16 %v3104, %v3100
    %v3177 = vpack.c.b16 %v3105, %v3101
    %v3178 = vpack.c.b16 %v3106, %v3102
    %v3179 = vpack.c.b16 %v3107, %v3103
    %v3180 = vpack.c.b16 %v3112, %v3108
    %v3181 = vpack.c.b16 %v3113, %v3109
    %v3182 = vpack.c.b16 %v3114, %v3110
    %v3183 = vpack.c.b16 %v3115, %v3111
    %v3184 = vpack.c.b16 %v3120, %v3116
    %v3185 = vpack.c.b16 %v3121, %v3117
    %v3186 = vpack.c.b16 %v3122, %v3118
    %v3187 = vpack.c.b16 %v3123, %v3119
    %3252 = vmatprep.subr.bf16.mxu0 %v3125
    %3253 = vmatpush1.bf16.msra.mxu0 %v3124
    %3254 = vmatprep.subr.bf16.mxu0 %v3129
    %3255 = vmatpush1.bf16.msra.mxu0 %v3128
    %3256 = vmatprep.subr.bf16.mxu0 %v3133
    %3257 = vmatpush1.bf16.msra.mxu0 %v3132
    %3258 = vmatprep.subr.bf16.mxu0 %v3137
    %3259 = vmatpush1.bf16.msra.mxu0 %v3136
    %3260 = vmatprep.subr.bf16.mxu0 %v3141
    %3261 = vmatpush1.bf16.msra.mxu0 %v3140
    %3262 = vmatprep.subr.bf16.mxu0 %v3145
    %3263 = vmatpush1.bf16.msra.mxu0 %v3144
    %3264 = vmatprep.subr.bf16.mxu0 %v3149
    %3265 = vmatpush1.bf16.msra.mxu0 %v3148
    %3266 = vmatprep.subr.bf16.mxu0 %v3153
    %3267 = vmatpush1.bf16.msra.mxu0 %v3152
    %3268 = vmatprep.subr.bf16.mxu0 %v3157
    %3269 = vmatpush1.bf16.msra.mxu0 %v3156
    %3270 = vmatprep.subr.bf16.mxu0 %v3161
    %3271 = vmatpush1.bf16.msra.mxu0 %v3160
    %3272 = vmatprep.subr.bf16.mxu0 %v3165
    %3273 = vmatpush1.bf16.msra.mxu0 %v3164
    %3274 = vmatprep.subr.bf16.mxu0 %v3169
    %3275 = vmatpush1.bf16.msra.mxu0 %v3168
    %3276 = vmatprep.subr.bf16.mxu0 %v3173
    %3277 = vmatpush1.bf16.msra.mxu0 %v3172
    %3278 = vmatprep.subr.bf16.mxu0 %v3177
    %3279 = vmatpush1.bf16.msra.mxu0 %v3176
    %3280 = vmatprep.subr.bf16.mxu0 %v3181
    %3281 = vmatpush1.bf16.msra.mxu0 %v3180
    %3282 = vmatprep.subr.bf16.mxu0 %v3185
    %3283 = vmatpush1.bf16.msra.mxu0 %v3184
    %3284 = vmatprep.mubr.bf16.mxu0 %v2929
    %3285 = vmatmul.mubr.bf16.gmra.mrb[0].mxu0 %v2928
    %v3286 = vpop.f32.mrb[0].mxu0
    %v3287 = vadd.f32 %v109, %v3286
    %v3288 = vpop.f32.mrb[0].mxu0
    %v3289 = vadd.f32 %v113, %v3288
    %v3290 = vpop.f32.mrb[0].mxu0
    %v3291 = vpop.f32.mrb[0].mxu0
    %3292 = vdwg.mxu0
    %3293 = vmatprep.subr.bf16.mxu0 %v3127
    %3294 = vmatpush1.bf16.msra.mxu0 %v3126
    %3295 = vmatprep.subr.bf16.mxu0 %v3131
    %3296 = vmatpush1.bf16.msra.mxu0 %v3130
    %3297 = vmatprep.subr.bf16.mxu0 %v3135
    %3298 = vmatpush1.bf16.msra.mxu0 %v3134
    %3299 = vmatprep.subr.bf16.mxu0 %v3139
    %3300 = vmatpush1.bf16.msra.mxu0 %v3138
    %3301 = vmatprep.subr.bf16.mxu0 %v3143
    %3302 = vmatpush1.bf16.msra.mxu0 %v3142
    %3303 = vmatprep.subr.bf16.mxu0 %v3147
    %3304 = vmatpush1.bf16.msra.mxu0 %v3146
    %3305 = vmatprep.subr.bf16.mxu0 %v3151
    %3306 = vmatpush1.bf16.msra.mxu0 %v3150
    %3307 = vmatprep.subr.bf16.mxu0 %v3155
    %3308 = vmatpush1.bf16.msra.mxu0 %v3154
    %3309 = vmatprep.subr.bf16.mxu0 %v3159
    %3310 = vmatpush1.bf16.msra.mxu0 %v3158
    %3311 = vmatprep.subr.bf16.mxu0 %v3163
    %3312 = vmatpush1.bf16.msra.mxu0 %v3162
    %3313 = vmatprep.subr.bf16.mxu0 %v3167
    %3314 = vmatpush1.bf16.msra.mxu0 %v3166
    %3315 = vmatprep.subr.bf16.mxu0 %v3171
    %3316 = vmatpush1.bf16.msra.mxu0 %v3170
    %3317 = vmatprep.subr.bf16.mxu0 %v3175
    %3318 = vmatpush1.bf16.msra.mxu0 %v3174
    %3319 = vmatprep.subr.bf16.mxu0 %v3179
    %3320 = vmatpush1.bf16.msra.mxu0 %v3178
    %3321 = vmatprep.subr.bf16.mxu0 %v3183
    %3322 = vmatpush1.bf16.msra.mxu0 %v3182
    %3323 = vmatprep.subr.bf16.mxu0 %v3187
    %3324 = vmatpush1.bf16.msra.mxu0 %v3186
    %3325 = vmatprep.mubr.bf16.mxu0 %v2929
    %3326 = vmatmul.mubr.bf16.gmra.mrb[0].mxu0 %v2928
    %v3327 = vpop.f32.mrb[0].mxu0
    %v3328 = vadd.f32 %v117, %v3327
    %v3329 = vpop.f32.mrb[0].mxu0
    %v3330 = vadd.f32 %v121, %v3329
    %v3331 = vpop.f32.mrb[0].mxu0
    %v3332 = vpop.f32.mrb[0].mxu0
    %3333 = vdwg.mxu0
    %v3334 = vmul.f32 %v3287, 0.5
    %v3335 = vtanh.pop %v3334
    %v3336 = vmul.f32 %v3335, 0.5
    %v3337 = vadd.f32 %v3336, 0.5
    %v3338 = vmul.f32 %v3289, 0.5
    %v3339 = vtanh.pop %v3338
    %v3340 = vmul.f32 %v3339, 0.5
    %v3341 = vadd.f32 %v3340, 0.5
    %v3342 = vtanh.pop %v3328
    %v3343 = vmul.f32 %v3330, 0.5
    %v3344 = vtanh.pop %v3343
    %v3345 = vmul.f32 %v3344, 0.5
    %v3346 = vadd.f32 %v3345, 0.5
    %v3347 = vmul.f32 %v3341, %v2542
    %v3348 = vmul.f32 %v3337, %v3342
    %v3349 = vadd.f32 %v3347, %v3348
    %v3350 = vtanh.pop %v3349
    %v3351 = vmul.f32 %v3346, %v3350
    %s3352 = scalar_lea.vmem %s0, 32
    %v3353 = vld [vmem:[%s3352] sm:$0xff]
    %3355 = vset.pattern.permute.xlu0 0
    %3356 = vperm.xlu0 %3355, %v3353
    %v3357 = vpop.permute.xlu0 %3356
    %v3359 = vmul.f32 %v3357, %v65
    %v3360 = vmul.f32 %v3357, %v69
    %v3361 = vmul.f32 %v3357, %v73
    %v3362 = vmul.f32 %v3357, %v77
    %v3363 = vadd.f32 %v3359, %v87
    %v3364 = vadd.f32 %v3360, %v91
    %v3365 = vadd.f32 %v3361, %v95
    %v3366 = vadd.f32 %v3362, %v99
    %v3367 = vld [vmem:[#allocation4] sm:$0xff]
    %v3368 = vld [vmem:[#allocation4 + $0x8] sm:$0xff]
    %v3369 = vld [vmem:[#allocation4 + $0x10] sm:$0xff]
    %v3370 = vld [vmem:[#allocation4 + $0x18] sm:$0xff]
    %v3371 = vld [vmem:[#allocation4 + $0x20] sm:$0xff]
    %v3372 = vld [vmem:[#allocation4 + $0x28] sm:$0xff]
    %v3373 = vld [vmem:[#allocation4 + $0x30] sm:$0xff]
    %v3374 = vld [vmem:[#allocation4 + $0x38] sm:$0xff]
    %v3375 = vld [vmem:[#allocation4 + $0x40] sm:$0xff]
    %v3376 = vld [vmem:[#allocation4 + $0x48] sm:$0xff]
    %v3377 = vld [vmem:[#allocation4 + $0x50] sm:$0xff]
    %v3378 = vld [vmem:[#allocation4 + $0x58] sm:$0xff]
    %v3379 = vld [vmem:[#allocation4 + $0x60] sm:$0xff]
    %v3380 = vld [vmem:[#allocation4 + $0x68] sm:$0xff]
    %v3381 = vld [vmem:[#allocation4 + $0x70] sm:$0xff]
    %v3382 = vld [vmem:[#allocation4 + $0x78] sm:$0xff]
    %v3383 = vld [vmem:[#allocation4 + $0x80] sm:$0xff]
    %v3384 = vld [vmem:[#allocation4 + $0x88] sm:$0xff]
    %v3385 = vld [vmem:[#allocation4 + $0x90] sm:$0xff]
    %v3386 = vld [vmem:[#allocation4 + $0x98] sm:$0xff]
    %v3387 = vld [vmem:[#allocation4 + $0xa0] sm:$0xff]
    %v3388 = vld [vmem:[#allocation4 + $0xa8] sm:$0xff]
    %v3389 = vld [vmem:[#allocation4 + $0xb0] sm:$0xff]
    %v3390 = vld [vmem:[#allocation4 + $0xb8] sm:$0xff]
    %v3391 = vld [vmem:[#allocation4 + $0xc0] sm:$0xff]
    %v3392 = vld [vmem:[#allocation4 + $0xc8] sm:$0xff]
    %v3393 = vld [vmem:[#allocation4 + $0xd0] sm:$0xff]
    %v3394 = vld [vmem:[#allocation4 + $0xd8] sm:$0xff]
    %v3395 = vld [vmem:[#allocation4 + $0xe0] sm:$0xff]
    %v3396 = vld [vmem:[#allocation4 + $0xe8] sm:$0xff]
    %v3397 = vld [vmem:[#allocation4 + $0xf0] sm:$0xff]
    %v3398 = vld [vmem:[#allocation4 + $0xf8] sm:$0xff]
    %v3431 = vunpack.c.l.b16 %v3367
    %v3432 = vunpack.c.h.b16 %v3367
    %v3433 = vunpack.c.l.b16 %v3368
    %v3434 = vunpack.c.h.b16 %v3368
    %v3435 = vunpack.c.l.b16 %v3369
    %v3436 = vunpack.c.h.b16 %v3369
    %v3437 = vunpack.c.l.b16 %v3370
    %v3438 = vunpack.c.h.b16 %v3370
    %v3439 = vunpack.c.l.b16 %v3371
    %v3440 = vunpack.c.h.b16 %v3371
    %v3441 = vunpack.c.l.b16 %v3372
    %v3442 = vunpack.c.h.b16 %v3372
    %v3443 = vunpack.c.l.b16 %v3373
    %v3444 = vunpack.c.h.b16 %v3373
    %v3445 = vunpack.c.l.b16 %v3374
    %v3446 = vunpack.c.h.b16 %v3374
    %v3447 = vunpack.c.l.b16 %v3375
    %v3448 = vunpack.c.h.b16 %v3375
    %v3449 = vunpack.c.l.b16 %v3376
    %v3450 = vunpack.c.h.b16 %v3376
    %v3451 = vunpack.c.l.b16 %v3377
    %v3452 = vunpack.c.h.b16 %v3377
    %v3453 = vunpack.c.l.b16 %v3378
    %v3454 = vunpack.c.h.b16 %v3378
    %v3455 = vunpack.c.l.b16 %v3379
    %v3456 = vunpack.c.h.b16 %v3379
    %v3457 = vunpack.c.l.b16 %v3380
    %v3458 = vunpack.c.h.b16 %v3380
    %v3459 = vunpack.c.l.b16 %v3381
    %v3460 = vunpack.c.h.b16 %v3381
    %v3461 = vunpack.c.l.b16 %v3382
    %v3462 = vunpack.c.h.b16 %v3382
    %v3463 = vunpack.c.l.b16 %v3383
    %v3464 = vunpack.c.h.b16 %v3383
    %v3465 = vunpack.c.l.b16 %v3384
    %v3466 = vunpack.c.h.b16 %v3384
    %v3467 = vunpack.c.l.b16 %v3385
    %v3468 = vunpack.c.h.b16 %v3385
    %v3469 = vunpack.c.l.b16 %v3386
    %v3470 = vunpack.c.h.b16 %v3386
    %v3471 = vunpack.c.l.b16 %v3387
    %v3472 = vunpack.c.h.b16 %v3387
    %v3473 = vunpack.c.l.b16 %v3388
    %v3474 = vunpack.c.h.b16 %v3388
    %v3475 = vunpack.c.l.b16 %v3389
    %v3476 = vunpack.c.h.b16 %v3389
    %v3477 = vunpack.c.l.b16 %v3390
    %v3478 = vunpack.c.h.b16 %v3390
    %v3479 = vunpack.c.l.b16 %v3391
    %v3480 = vunpack.c.h.b16 %v3391
    %v3481 = vunpack.c.l.b16 %v3392
    %v3482 = vunpack.c.h.b16 %v3392
    %v3483 = vunpack.c.l.b16 %v3393
    %v3484 = vunpack.c.h.b16 %v3393
    %v3485 = vunpack.c.l.b16 %v3394
    %v3486 = vunpack.c.h.b16 %v3394
    %v3487 = vunpack.c.l.b16 %v3395
    %v3488 = vunpack.c.h.b16 %v3395
    %v3489 = vunpack.c.l.b16 %v3396
    %v3490 = vunpack.c.h.b16 %v3396
    %v3491 = vunpack.c.l.b16 %v3397
    %v3492 = vunpack.c.h.b16 %v3397
    %v3493 = vunpack.c.l.b16 %v3398
    %v3494 = vunpack.c.h.b16 %v3398
    %v3495 = vpack.c.b16 %v3435, %v3431
    %v3496 = vpack.c.b16 %v3436, %v3432
    %v3497 = vpack.c.b16 %v3437, %v3433
    %v3498 = vpack.c.b16 %v3438, %v3434
    %v3499 = vpack.c.b16 %v3443, %v3439
    %v3500 = vpack.c.b16 %v3444, %v3440
    %v3501 = vpack.c.b16 %v3445, %v3441
    %v3502 = vpack.c.b16 %v3446, %v3442
    %v3503 = vpack.c.b16 %v3451, %v3447
    %v3504 = vpack.c.b16 %v3452, %v3448
    %v3505 = vpack.c.b16 %v3453, %v3449
    %v3506 = vpack.c.b16 %v3454, %v3450
    %v3507 = vpack.c.b16 %v3459, %v3455
    %v3508 = vpack.c.b16 %v3460, %v3456
    %v3509 = vpack.c.b16 %v3461, %v3457
    %v3510 = vpack.c.b16 %v3462, %v3458
    %v3511 = vpack.c.b16 %v3467, %v3463
    %v3512 = vpack.c.b16 %v3468, %v3464
    %v3513 = vpack.c.b16 %v3469, %v3465
    %v3514 = vpack.c.b16 %v3470, %v3466
    %v3515 = vpack.c.b16 %v3475, %v3471
    %v3516 = vpack.c.b16 %v3476, %v3472
    %v3517 = vpack.c.b16 %v3477, %v3473
    %v3518 = vpack.c.b16 %v3478, %v3474
    %v3519 = vpack.c.b16 %v3483, %v3479
    %v3520 = vpack.c.b16 %v3484, %v3480
    %v3521 = vpack.c.b16 %v3485, %v3481
    %v3522 = vpack.c.b16 %v3486, %v3482
    %v3523 = vpack.c.b16 %v3491, %v3487
    %v3524 = vpack.c.b16 %v3492, %v3488
    %v3525 = vpack.c.b16 %v3493, %v3489
    %v3526 = vpack.c.b16 %v3494, %v3490
    %3559 = vmatprep.subr.bf16.mxu0 %v3496
    %3560 = vmatpush1.bf16.msra.mxu0 %v3495
    %3561 = vmatprep.subr.bf16.mxu0 %v3500
    %3562 = vmatpush1.bf16.msra.mxu0 %v3499
    %3563 = vmatprep.subr.bf16.mxu0 %v3504
    %3564 = vmatpush1.bf16.msra.mxu0 %v3503
    %3565 = vmatprep.subr.bf16.mxu0 %v3508
    %3566 = vmatpush1.bf16.msra.mxu0 %v3507
    %3567 = vmatprep.subr.bf16.mxu0 %v3512
    %3568 = vmatpush1.bf16.msra.mxu0 %v3511
    %3569 = vmatprep.subr.bf16.mxu0 %v3516
    %3570 = vmatpush1.bf16.msra.mxu0 %v3515
    %3571 = vmatprep.subr.bf16.mxu0 %v3520
    %3572 = vmatpush1.bf16.msra.mxu0 %v3519
    %3573 = vmatprep.subr.bf16.mxu0 %v3524
    %3574 = vmatpush1.bf16.msra.mxu0 %v3523
    %3575 = vmatprep.subr.bf16.mxu0 0
    %3576 = vmatpush1.bf16.msra.mxu0 0
    %3577 = vmatprep.subr.bf16.mxu0 0
    %3578 = vmatpush1.bf16.msra.mxu0 0
    %3579 = vmatprep.subr.bf16.mxu0 0
    %3580 = vmatpush1.bf16.msra.mxu0 0
    %3581 = vmatprep.subr.bf16.mxu0 0
    %3582 = vmatpush1.bf16.msra.mxu0 0
    %3583 = vmatprep.subr.bf16.mxu0 0
    %3584 = vmatpush1.bf16.msra.mxu0 0
    %3585 = vmatprep.subr.bf16.mxu0 0
    %3586 = vmatpush1.bf16.msra.mxu0 0
    %3587 = vmatprep.subr.bf16.mxu0 0
    %3588 = vmatpush1.bf16.msra.mxu0 0
    %3589 = vmatprep.subr.bf16.mxu0 0
    %3590 = vmatpush1.bf16.msra.mxu0 0
    %3591 = vmatprep.mubr.bf16.mxu0 0
    %3592 = vmatmul.mubr.bf16.gmra.mrb[0].mxu0 %v2856
    %v3593 = vpop.f32.mrb[0].mxu0
    %v3594 = vadd.f32 0.0, %v3593
    %v3595 = vpop.f32.mrb[0].mxu0
    %v3596 = vadd.f32 0.0, %v3595
    %v3597 = vpop.f32.mrb[0].mxu0
    %v3598 = vpop.f32.mrb[0].mxu0
    %3599 = vdwg.mxu0
    %3600 = vmatprep.subr.bf16.mxu0 %v3498
    %3601 = vmatpush1.bf16.msra.mxu0 %v3497
    %3602 = vmatprep.subr.bf16.mxu0 %v3502
    %3603 = vmatpush1.bf16.msra.mxu0 %v3501
    %3604 = vmatprep.subr.bf16.mxu0 %v3506
    %3605 = vmatpush1.bf16.msra.mxu0 %v3505
    %3606 = vmatprep.subr.bf16.mxu0 %v3510
    %3607 = vmatpush1.bf16.msra.mxu0 %v3509
    %3608 = vmatprep.subr.bf16.mxu0 %v3514
    %3609 = vmatpush1.bf16.msra.mxu0 %v3513
    %3610 = vmatprep.subr.bf16.mxu0 %v3518
    %3611 = vmatpush1.bf16.msra.mxu0 %v3517
    %3612 = vmatprep.subr.bf16.mxu0 %v3522
    %3613 = vmatpush1.bf16.msra.mxu0 %v3521
    %3614 = vmatprep.subr.bf16.mxu0 %v3526
    %3615 = vmatpush1.bf16.msra.mxu0 %v3525
    %3616 = vmatprep.subr.bf16.mxu0 0
    %3617 = vmatpush1.bf16.msra.mxu0 0
    %3618 = vmatprep.subr.bf16.mxu0 0
    %3619 = vmatpush1.bf16.msra.mxu0 0
    %3620 = vmatprep.subr.bf16.mxu0 0
    %3621 = vmatpush1.bf16.msra.mxu0 0
    %3622 = vmatprep.subr.bf16.mxu0 0
    %3623 = vmatpush1.bf16.msra.mxu0 0
    %3624 = vmatprep.subr.bf16.mxu0 0
    %3625 = vmatpush1.bf16.msra.mxu0 0
    %3626 = vmatprep.subr.bf16.mxu0 0
    %3627 = vmatpush1.bf16.msra.mxu0 0
    %3628 = vmatprep.subr.bf16.mxu0 0
    %3629 = vmatpush1.bf16.msra.mxu0 0
    %3630 = vmatprep.subr.bf16.mxu0 0
    %3631 = vmatpush1.bf16.msra.mxu0 0
    %3632 = vmatprep.mubr.bf16.mxu0 0
    %3633 = vmatmul.mubr.bf16.gmra.mrb[0].mxu0 %v2856
    %v3634 = vpop.f32.mrb[0].mxu0
    %v3635 = vadd.f32 0.0, %v3634
    %v3636 = vpop.f32.mrb[0].mxu0
    %v3637 = vadd.f32 0.0, %v3636
    %v3638 = vpop.f32.mrb[0].mxu0
    %v3639 = vpop.f32.mrb[0].mxu0
    %3640 = vdwg.mxu0
    %v3641 = vadd.f32 %v3363, %v3594
    %v3642 = vadd.f32 %v3364, %v3596
    %v3643 = vadd.f32 %v3365, %v3635
    %v3644 = vadd.f32 %v3366, %v3637
    %v3645 = vmul.f32 %v3641, 0.5
    %v3646 = vtanh.pop %v3645
    %v3647 = vmul.f32 %v3646, 0.5
    %v3648 = vadd.f32 %v3647, 0.5
    %v3649 = vmul.f32 %v3642, 0.5
    %v3650 = vtanh.pop %v3649
    %v3651 = vmul.f32 %v3650, 0.5
    %v3652 = vadd.f32 %v3651, 0.5
    %v3653 = vtanh.pop %v3643
    %v3654 = vmul.f32 %v3644, 0.5
    %v3655 = vtanh.pop %v3654
    %v3656 = vmul.f32 %v3655, 0.5
    %v3657 = vadd.f32 %v3656, 0.5
    %v3658 = vmul.f32 %v3652, %v2853
    %v3659 = vmul.f32 %v3648, %v3653
    %v3660 = vadd.f32 %v3658, %v3659
    %v3661 = vtanh.pop %v3660
    %v3662 = vmul.f32 %v3657, %v3661
    %v3663 = vpack.c.bf16 %v3662, %v3662
    %3664 = vst [vmem:[#allocation2] sm:$0xf] %v3663
    %v3665 = vpack.c.bf16 %v3351, %v3351
    %3666 = vst [vmem:[#allocation2 + $0x4] sm:$0xf] %v3665
    %v3667 = vld [vmem:[#allocation2] sm:$0xff]
    %v3668 = vld [vmem:[#allocation6] sm:$0xff]
    %v3669 = vld [vmem:[#allocation6 + $0x8] sm:$0xff]
    %v3670 = vld [vmem:[#allocation6 + $0x10] sm:$0xff]
    %v3671 = vld [vmem:[#allocation6 + $0x18] sm:$0xff]
    %v3672 = vld [vmem:[#allocation6 + $0x20] sm:$0xff]
    %v3673 = vld [vmem:[#allocation6 + $0x28] sm:$0xff]
    %v3674 = vld [vmem:[#allocation6 + $0x30] sm:$0xff]
    %v3675 = vld [vmem:[#allocation6 + $0x38] sm:$0xff]
    %v3676 = vld [vmem:[#allocation6 + $0x40] sm:$0xff]
    %v3677 = vld [vmem:[#allocation6 + $0x48] sm:$0xff]
    %v3678 = vld [vmem:[#allocation6 + $0x50] sm:$0xff]
    %v3679 = vld [vmem:[#allocation6 + $0x58] sm:$0xff]
    %v3680 = vld [vmem:[#allocation6 + $0x60] sm:$0xff]
    %v3681 = vld [vmem:[#allocation6 + $0x68] sm:$0xff]
    %v3682 = vld [vmem:[#allocation6 + $0x70] sm:$0xff]
    %v3683 = vld [vmem:[#allocation6 + $0x78] sm:$0xff]
    %v3684 = vld [vmem:[#allocation6 + $0x80] sm:$0xff]
    %v3685 = vld [vmem:[#allocation6 + $0x88] sm:$0xff]
    %v3686 = vld [vmem:[#allocation6 + $0x90] sm:$0xff]
    %v3687 = vld [vmem:[#allocation6 + $0x98] sm:$0xff]
    %v3688 = vld [vmem:[#allocation6 + $0xa0] sm:$0xff]
    %v3689 = vld [vmem:[#allocation6 + $0xa8] sm:$0xff]
    %v3690 = vld [vmem:[#allocation6 + $0xb0] sm:$0xff]
    %v3691 = vld [vmem:[#allocation6 + $0xb8] sm:$0xff]
    %v3692 = vld [vmem:[#allocation6 + $0xc0] sm:$0xff]
    %v3693 = vld [vmem:[#allocation6 + $0xc8] sm:$0xff]
    %v3694 = vld [vmem:[#allocation6 + $0xd0] sm:$0xff]
    %v3695 = vld [vmem:[#allocation6 + $0xd8] sm:$0xff]
    %v3696 = vld [vmem:[#allocation6 + $0xe0] sm:$0xff]
    %v3697 = vld [vmem:[#allocation6 + $0xe8] sm:$0xff]
    %v3698 = vld [vmem:[#allocation6 + $0xf0] sm:$0xff]
    %v3699 = vld [vmem:[#allocation6 + $0xf8] sm:$0xff]
    %v3700 = vld [vmem:[#allocation6 + $0x100] sm:$0xff]
    %v3701 = vld [vmem:[#allocation6 + $0x108] sm:$0xff]
    %v3702 = vld [vmem:[#allocation6 + $0x110] sm:$0xff]
    %v3703 = vld [vmem:[#allocation6 + $0x118] sm:$0xff]
    %v3704 = vld [vmem:[#allocation6 + $0x120] sm:$0xff]
    %v3705 = vld [vmem:[#allocation6 + $0x128] sm:$0xff]
    %v3706 = vld [vmem:[#allocation6 + $0x130] sm:$0xff]
    %v3707 = vld [vmem:[#allocation6 + $0x138] sm:$0xff]
    %v3708 = vld [vmem:[#allocation6 + $0x140] sm:$0xff]
    %v3709 = vld [vmem:[#allocation6 + $0x148] sm:$0xff]
    %v3710 = vld [vmem:[#allocation6 + $0x150] sm:$0xff]
    %v3711 = vld [vmem:[#allocation6 + $0x158] sm:$0xff]
    %v3712 = vld [vmem:[#allocation6 + $0x160] sm:$0xff]
    %v3713 = vld [vmem:[#allocation6 + $0x168] sm:$0xff]
    %v3714 = vld [vmem:[#allocation6 + $0x170] sm:$0xff]
    %v3715 = vld [vmem:[#allocation6 + $0x178] sm:$0xff]
    %v3716 = vld [vmem:[#allocation6 + $0x180] sm:$0xff]
    %v3717 = vld [vmem:[#allocation6 + $0x188] sm:$0xff]
    %v3718 = vld [vmem:[#allocation6 + $0x190] sm:$0xff]
    %v3719 = vld [vmem:[#allocation6 + $0x198] sm:$0xff]
    %v3720 = vld [vmem:[#allocation6 + $0x1a0] sm:$0xff]
    %v3721 = vld [vmem:[#allocation6 + $0x1a8] sm:$0xff]
    %v3722 = vld [vmem:[#allocation6 + $0x1b0] sm:$0xff]
    %v3723 = vld [vmem:[#allocation6 + $0x1b8] sm:$0xff]
    %v3724 = vld [vmem:[#allocation6 + $0x1c0] sm:$0xff]
    %v3725 = vld [vmem:[#allocation6 + $0x1c8] sm:$0xff]
    %v3726 = vld [vmem:[#allocation6 + $0x1d0] sm:$0xff]
    %v3727 = vld [vmem:[#allocation6 + $0x1d8] sm:$0xff]
    %v3728 = vld [vmem:[#allocation6 + $0x1e0] sm:$0xff]
    %v3729 = vld [vmem:[#allocation6 + $0x1e8] sm:$0xff]
    %v3730 = vld [vmem:[#allocation6 + $0x1f0] sm:$0xff]
    %v3731 = vld [vmem:[#allocation6 + $0x1f8] sm:$0xff]
    %v3733 = vunpack.c.l.b16 %v3667
    %v3734 = vunpack.c.h.b16 %v3667
    %v3735 = vpack.c.b16 %v3733, %v3733
    %v3736 = vpack.c.b16 %v3734, %v3734
    %v3803 = vunpack.c.l.b16 %v3668
    %v3804 = vunpack.c.h.b16 %v3668
    %v3805 = vunpack.c.l.b16 %v3669
    %v3806 = vunpack.c.h.b16 %v3669
    %v3807 = vunpack.c.l.b16 %v3670
    %v3808 = vunpack.c.h.b16 %v3670
    %v3809 = vunpack.c.l.b16 %v3671
    %v3810 = vunpack.c.h.b16 %v3671
    %v3811 = vunpack.c.l.b16 %v3672
    %v3812 = vunpack.c.h.b16 %v3672
    %v3813 = vunpack.c.l.b16 %v3673
    %v3814 = vunpack.c.h.b16 %v3673
    %v3815 = vunpack.c.l.b16 %v3674
    %v3816 = vunpack.c.h.b16 %v3674
    %v3817 = vunpack.c.l.b16 %v3675
    %v3818 = vunpack.c.h.b16 %v3675
    %v3819 = vunpack.c.l.b16 %v3676
    %v3820 = vunpack.c.h.b16 %v3676
    %v3821 = vunpack.c.l.b16 %v3677
    %v3822 = vunpack.c.h.b16 %v3677
    %v3823 = vunpack.c.l.b16 %v3678
    %v3824 = vunpack.c.h.b16 %v3678
    %v3825 = vunpack.c.l.b16 %v3679
    %v3826 = vunpack.c.h.b16 %v3679
    %v3827 = vunpack.c.l.b16 %v3680
    %v3828 = vunpack.c.h.b16 %v3680
    %v3829 = vunpack.c.l.b16 %v3681
    %v3830 = vunpack.c.h.b16 %v3681
    %v3831 = vunpack.c.l.b16 %v3682
    %v3832 = vunpack.c.h.b16 %v3682
    %v3833 = vunpack.c.l.b16 %v3683
    %v3834 = vunpack.c.h.b16 %v3683
    %v3835 = vunpack.c.l.b16 %v3684
    %v3836 = vunpack.c.h.b16 %v3684
    %v3837 = vunpack.c.l.b16 %v3685
    %v3838 = vunpack.c.h.b16 %v3685
    %v3839 = vunpack.c.l.b16 %v3686
    %v3840 = vunpack.c.h.b16 %v3686
    %v3841 = vunpack.c.l.b16 %v3687
    %v3842 = vunpack.c.h.b16 %v3687
    %v3843 = vunpack.c.l.b16 %v3688
    %v3844 = vunpack.c.h.b16 %v3688
    %v3845 = vunpack.c.l.b16 %v3689
    %v3846 = vunpack.c.h.b16 %v3689
    %v3847 = vunpack.c.l.b16 %v3690
    %v3848 = vunpack.c.h.b16 %v3690
    %v3849 = vunpack.c.l.b16 %v3691
    %v3850 = vunpack.c.h.b16 %v3691
    %v3851 = vunpack.c.l.b16 %v3692
    %v3852 = vunpack.c.h.b16 %v3692
    %v3853 = vunpack.c.l.b16 %v3693
    %v3854 = vunpack.c.h.b16 %v3693
    %v3855 = vunpack.c.l.b16 %v3694
    %v3856 = vunpack.c.h.b16 %v3694
    %v3857 = vunpack.c.l.b16 %v3695
    %v3858 = vunpack.c.h.b16 %v3695
    %v3859 = vunpack.c.l.b16 %v3696
    %v3860 = vunpack.c.h.b16 %v3696
    %v3861 = vunpack.c.l.b16 %v3697
    %v3862 = vunpack.c.h.b16 %v3697
    %v3863 = vunpack.c.l.b16 %v3698
    %v3864 = vunpack.c.h.b16 %v3698
    %v3865 = vunpack.c.l.b16 %v3699
    %v3866 = vunpack.c.h.b16 %v3699
    %v3867 = vunpack.c.l.b16 %v3700
    %v3868 = vunpack.c.h.b16 %v3700
    %v3869 = vunpack.c.l.b16 %v3701
    %v3870 = vunpack.c.h.b16 %v3701
    %v3871 = vunpack.c.l.b16 %v3702
    %v3872 = vunpack.c.h.b16 %v3702
    %v3873 = vunpack.c.l.b16 %v3703
    %v3874 = vunpack.c.h.b16 %v3703
    %v3875 = vunpack.c.l.b16 %v3704
    %v3876 = vunpack.c.h.b16 %v3704
    %v3877 = vunpack.c.l.b16 %v3705
    %v3878 = vunpack.c.h.b16 %v3705
    %v3879 = vunpack.c.l.b16 %v3706
    %v3880 = vunpack.c.h.b16 %v3706
    %v3881 = vunpack.c.l.b16 %v3707
    %v3882 = vunpack.c.h.b16 %v3707
    %v3883 = vunpack.c.l.b16 %v3708
    %v3884 = vunpack.c.h.b16 %v3708
    %v3885 = vunpack.c.l.b16 %v3709
    %v3886 = vunpack.c.h.b16 %v3709
    %v3887 = vunpack.c.l.b16 %v3710
    %v3888 = vunpack.c.h.b16 %v3710
    %v3889 = vunpack.c.l.b16 %v3711
    %v3890 = vunpack.c.h.b16 %v3711
    %v3891 = vunpack.c.l.b16 %v3712
    %v3892 = vunpack.c.h.b16 %v3712
    %v3893 = vunpack.c.l.b16 %v3713
    %v3894 = vunpack.c.h.b16 %v3713
    %v3895 = vunpack.c.l.b16 %v3714
    %v3896 = vunpack.c.h.b16 %v3714
    %v3897 = vunpack.c.l.b16 %v3715
    %v3898 = vunpack.c.h.b16 %v3715
    %v3899 = vunpack.c.l.b16 %v3716
    %v3900 = vunpack.c.h.b16 %v3716
    %v3901 = vunpack.c.l.b16 %v3717
    %v3902 = vunpack.c.h.b16 %v3717
    %v3903 = vunpack.c.l.b16 %v3718
    %v3904 = vunpack.c.h.b16 %v3718
    %v3905 = vunpack.c.l.b16 %v3719
    %v3906 = vunpack.c.h.b16 %v3719
    %v3907 = vunpack.c.l.b16 %v3720
    %v3908 = vunpack.c.h.b16 %v3720
    %v3909 = vunpack.c.l.b16 %v3721
    %v3910 = vunpack.c.h.b16 %v3721
    %v3911 = vunpack.c.l.b16 %v3722
    %v3912 = vunpack.c.h.b16 %v3722
    %v3913 = vunpack.c.l.b16 %v3723
    %v3914 = vunpack.c.h.b16 %v3723
    %v3915 = vunpack.c.l.b16 %v3724
    %v3916 = vunpack.c.h.b16 %v3724
    %v3917 = vunpack.c.l.b16 %v3725
    %v3918 = vunpack.c.h.b16 %v3725
    %v3919 = vunpack.c.l.b16 %v3726
    %v3920 = vunpack.c.h.b16 %v3726
    %v3921 = vunpack.c.l.b16 %v3727
    %v3922 = vunpack.c.h.b16 %v3727
    %v3923 = vunpack.c.l.b16 %v3728
    %v3924 = vunpack.c.h.b16 %v3728
    %v3925 = vunpack.c.l.b16 %v3729
    %v3926 = vunpack.c.h.b16 %v3729
    %v3927 = vunpack.c.l.b16 %v3730
    %v3928 = vunpack.c.h.b16 %v3730
    %v3929 = vunpack.c.l.b16 %v3731
    %v3930 = vunpack.c.h.b16 %v3731
    %v3931 = vpack.c.b16 %v3807, %v3803
    %v3932 = vpack.c.b16 %v3808, %v3804
    %v3933 = vpack.c.b16 %v3809, %v3805
    %v3934 = vpack.c.b16 %v3810, %v3806
    %v3935 = vpack.c.b16 %v3815, %v3811
    %v3936 = vpack.c.b16 %v3816, %v3812
    %v3937 = vpack.c.b16 %v3817, %v3813
    %v3938 = vpack.c.b16 %v3818, %v3814
    %v3939 = vpack.c.b16 %v3823, %v3819
    %v3940 = vpack.c.b16 %v3824, %v3820
    %v3941 = vpack.c.b16 %v3825, %v3821
    %v3942 = vpack.c.b16 %v3826, %v3822
    %v3943 = vpack.c.b16 %v3831, %v3827
    %v3944 = vpack.c.b16 %v3832, %v3828
    %v3945 = vpack.c.b16 %v3833, %v3829
    %v3946 = vpack.c.b16 %v3834, %v3830
    %v3947 = vpack.c.b16 %v3839, %v3835
    %v3948 = vpack.c.b16 %v3840, %v3836
    %v3949 = vpack.c.b16 %v3841, %v3837
    %v3950 = vpack.c.b16 %v3842, %v3838
    %v3951 = vpack.c.b16 %v3847, %v3843
    %v3952 = vpack.c.b16 %v3848, %v3844
    %v3953 = vpack.c.b16 %v3849, %v3845
    %v3954 = vpack.c.b16 %v3850, %v3846
    %v3955 = vpack.c.b16 %v3855, %v3851
    %v3956 = vpack.c.b16 %v3856, %v3852
    %v3957 = vpack.c.b16 %v3857, %v3853
    %v3958 = vpack.c.b16 %v3858, %v3854
    %v3959 = vpack.c.b16 %v3863, %v3859
    %v3960 = vpack.c.b16 %v3864, %v3860
    %v3961 = vpack.c.b16 %v3865, %v3861
    %v3962 = vpack.c.b16 %v3866, %v3862
    %v3963 = vpack.c.b16 %v3871, %v3867
    %v3964 = vpack.c.b16 %v3872, %v3868
    %v3965 = vpack.c.b16 %v3873, %v3869
    %v3966 = vpack.c.b16 %v3874, %v3870
    %v3967 = vpack.c.b16 %v3879, %v3875
    %v3968 = vpack.c.b16 %v3880, %v3876
    %v3969 = vpack.c.b16 %v3881, %v3877
    %v3970 = vpack.c.b16 %v3882, %v3878
    %v3971 = vpack.c.b16 %v3887, %v3883
    %v3972 = vpack.c.b16 %v3888, %v3884
    %v3973 = vpack.c.b16 %v3889, %v3885
    %v3974 = vpack.c.b16 %v3890, %v3886
    %v3975 = vpack.c.b16 %v3895, %v3891
    %v3976 = vpack.c.b16 %v3896, %v3892
    %v3977 = vpack.c.b16 %v3897, %v3893
    %v3978 = vpack.c.b16 %v3898, %v3894
    %v3979 = vpack.c.b16 %v3903, %v3899
    %v3980 = vpack.c.b16 %v3904, %v3900
    %v3981 = vpack.c.b16 %v3905, %v3901
    %v3982 = vpack.c.b16 %v3906, %v3902
    %v3983 = vpack.c.b16 %v3911, %v3907
    %v3984 = vpack.c.b16 %v3912, %v3908
    %v3985 = vpack.c.b16 %v3913, %v3909
    %v3986 = vpack.c.b16 %v3914, %v3910
    %v3987 = vpack.c.b16 %v3919, %v3915
    %v3988 = vpack.c.b16 %v3920, %v3916
    %v3989 = vpack.c.b16 %v3921, %v3917
    %v3990 = vpack.c.b16 %v3922, %v3918
    %v3991 = vpack.c.b16 %v3927, %v3923
    %v3992 = vpack.c.b16 %v3928, %v3924
    %v3993 = vpack.c.b16 %v3929, %v3925
    %v3994 = vpack.c.b16 %v3930, %v3926
    %4059 = vmatprep.subr.bf16.mxu0 %v3932
    %4060 = vmatpush1.bf16.msra.mxu0 %v3931
    %4061 = vmatprep.subr.bf16.mxu0 %v3936
    %4062 = vmatpush1.bf16.msra.mxu0 %v3935
    %4063 = vmatprep.subr.bf16.mxu0 %v3940
    %4064 = vmatpush1.bf16.msra.mxu0 %v3939
    %4065 = vmatprep.subr.bf16.mxu0 %v3944
    %4066 = vmatpush1.bf16.msra.mxu0 %v3943
    %4067 = vmatprep.subr.bf16.mxu0 %v3948
    %4068 = vmatpush1.bf16.msra.mxu0 %v3947
    %4069 = vmatprep.subr.bf16.mxu0 %v3952
    %4070 = vmatpush1.bf16.msra.mxu0 %v3951
    %4071 = vmatprep.subr.bf16.mxu0 %v3956
    %4072 = vmatpush1.bf16.msra.mxu0 %v3955
    %4073 = vmatprep.subr.bf16.mxu0 %v3960
    %4074 = vmatpush1.bf16.msra.mxu0 %v3959
    %4075 = vmatprep.subr.bf16.mxu0 %v3964
    %4076 = vmatpush1.bf16.msra.mxu0 %v3963
    %4077 = vmatprep.subr.bf16.mxu0 %v3968
    %4078 = vmatpush1.bf16.msra.mxu0 %v3967
    %4079 = vmatprep.subr.bf16.mxu0 %v3972
    %4080 = vmatpush1.bf16.msra.mxu0 %v3971
    %4081 = vmatprep.subr.bf16.mxu0 %v3976
    %4082 = vmatpush1.bf16.msra.mxu0 %v3975
    %4083 = vmatprep.subr.bf16.mxu0 %v3980
    %4084 = vmatpush1.bf16.msra.mxu0 %v3979
    %4085 = vmatprep.subr.bf16.mxu0 %v3984
    %4086 = vmatpush1.bf16.msra.mxu0 %v3983
    %4087 = vmatprep.subr.bf16.mxu0 %v3988
    %4088 = vmatpush1.bf16.msra.mxu0 %v3987
    %4089 = vmatprep.subr.bf16.mxu0 %v3992
    %4090 = vmatpush1.bf16.msra.mxu0 %v3991
    %4091 = vmatprep.mubr.bf16.mxu0 %v3736
    %4092 = vmatmul.mubr.bf16.gmra.mrb[0].mxu0 %v3735
    %v4093 = vpop.f32.mrb[0].mxu0
    %v4094 = vadd.f32 %v109, %v4093
    %v4095 = vpop.f32.mrb[0].mxu0
    %v4096 = vadd.f32 %v113, %v4095
    %v4097 = vpop.f32.mrb[0].mxu0
    %v4098 = vpop.f32.mrb[0].mxu0
    %4099 = vdwg.mxu0
    %4100 = vmatprep.subr.bf16.mxu0 %v3934
    %4101 = vmatpush1.bf16.msra.mxu0 %v3933
    %4102 = vmatprep.subr.bf16.mxu0 %v3938
    %4103 = vmatpush1.bf16.msra.mxu0 %v3937
    %4104 = vmatprep.subr.bf16.mxu0 %v3942
    %4105 = vmatpush1.bf16.msra.mxu0 %v3941
    %4106 = vmatprep.subr.bf16.mxu0 %v3946
    %4107 = vmatpush1.bf16.msra.mxu0 %v3945
    %4108 = vmatprep.subr.bf16.mxu0 %v3950
    %4109 = vmatpush1.bf16.msra.mxu0 %v3949
    %4110 = vmatprep.subr.bf16.mxu0 %v3954
    %4111 = vmatpush1.bf16.msra.mxu0 %v3953
    %4112 = vmatprep.subr.bf16.mxu0 %v3958
    %4113 = vmatpush1.bf16.msra.mxu0 %v3957
    %4114 = vmatprep.subr.bf16.mxu0 %v3962
    %4115 = vmatpush1.bf16.msra.mxu0 %v3961
    %4116 = vmatprep.subr.bf16.mxu0 %v3966
    %4117 = vmatpush1.bf16.msra.mxu0 %v3965
    %4118 = vmatprep.subr.bf16.mxu0 %v3970
    %4119 = vmatpush1.bf16.msra.mxu0 %v3969
    %4120 = vmatprep.subr.bf16.mxu0 %v3974
    %4121 = vmatpush1.bf16.msra.mxu0 %v3973
    %4122 = vmatprep.subr.bf16.mxu0 %v3978
    %4123 = vmatpush1.bf16.msra.mxu0 %v3977
    %4124 = vmatprep.subr.bf16.mxu0 %v3982
    %4125 = vmatpush1.bf16.msra.mxu0 %v3981
    %4126 = vmatprep.subr.bf16.mxu0 %v3986
    %4127 = vmatpush1.bf16.msra.mxu0 %v3985
    %4128 = vmatprep.subr.bf16.mxu0 %v3990
    %4129 = vmatpush1.bf16.msra.mxu0 %v3989
    %4130 = vmatprep.subr.bf16.mxu0 %v3994
    %4131 = vmatpush1.bf16.msra.mxu0 %v3993
    %4132 = vmatprep.mubr.bf16.mxu0 %v3736
    %4133 = vmatmul.mubr.bf16.gmra.mrb[0].mxu0 %v3735
    %v4134 = vpop.f32.mrb[0].mxu0
    %v4135 = vadd.f32 %v117, %v4134
    %v4136 = vpop.f32.mrb[0].mxu0
    %v4137 = vadd.f32 %v121, %v4136
    %v4138 = vpop.f32.mrb[0].mxu0
    %v4139 = vpop.f32.mrb[0].mxu0
    %4140 = vdwg.mxu0
    %v4141 = vmul.f32 %v4094, 0.5
    %v4142 = vtanh.pop %v4141
    %v4143 = vmul.f32 %v4142, 0.5
    %v4144 = vadd.f32 %v4143, 0.5
    %v4145 = vmul.f32 %v4096, 0.5
    %v4146 = vtanh.pop %v4145
    %v4147 = vmul.f32 %v4146, 0.5
    %v4148 = vadd.f32 %v4147, 0.5
    %v4149 = vtanh.pop %v4135
    %v4150 = vmul.f32 %v4137, 0.5
    %v4151 = vtanh.pop %v4150
    %v4152 = vmul.f32 %v4151, 0.5
    %v4153 = vadd.f32 %v4152, 0.5
    %v4154 = vmul.f32 %v4148, %v3349
    %v4155 = vmul.f32 %v4144, %v4149
    %v4156 = vadd.f32 %v4154, %v4155
    %v4157 = vtanh.pop %v4156
    %v4158 = vmul.f32 %v4153, %v4157
    %s4159 = scalar_lea.vmem %s0, 40
    %v4160 = vld [vmem:[%s4159] sm:$0xff]
    %4162 = vset.pattern.permute.xlu0 0
    %4163 = vperm.xlu0 %4162, %v4160
    %v4164 = vpop.permute.xlu0 %4163
    %v4166 = vmul.f32 %v4164, %v65
    %v4167 = vmul.f32 %v4164, %v69
    %v4168 = vmul.f32 %v4164, %v73
    %v4169 = vmul.f32 %v4164, %v77
    %v4170 = vadd.f32 %v4166, %v87
    %v4171 = vadd.f32 %v4167, %v91
    %v4172 = vadd.f32 %v4168, %v95
    %v4173 = vadd.f32 %v4169, %v99
    %v4174 = vld [vmem:[#allocation4] sm:$0xff]
    %v4175 = vld [vmem:[#allocation4 + $0x8] sm:$0xff]
    %v4176 = vld [vmem:[#allocation4 + $0x10] sm:$0xff]
    %v4177 = vld [vmem:[#allocation4 + $0x18] sm:$0xff]
    %v4178 = vld [vmem:[#allocation4 + $0x20] sm:$0xff]
    %v4179 = vld [vmem:[#allocation4 + $0x28] sm:$0xff]
    %v4180 = vld [vmem:[#allocation4 + $0x30] sm:$0xff]
    %v4181 = vld [vmem:[#allocation4 + $0x38] sm:$0xff]
    %v4182 = vld [vmem:[#allocation4 + $0x40] sm:$0xff]
    %v4183 = vld [vmem:[#allocation4 + $0x48] sm:$0xff]
    %v4184 = vld [vmem:[#allocation4 + $0x50] sm:$0xff]
    %v4185 = vld [vmem:[#allocation4 + $0x58] sm:$0xff]
    %v4186 = vld [vmem:[#allocation4 + $0x60] sm:$0xff]
    %v4187 = vld [vmem:[#allocation4 + $0x68] sm:$0xff]
    %v4188 = vld [vmem:[#allocation4 + $0x70] sm:$0xff]
    %v4189 = vld [vmem:[#allocation4 + $0x78] sm:$0xff]
    %v4190 = vld [vmem:[#allocation4 + $0x80] sm:$0xff]
    %v4191 = vld [vmem:[#allocation4 + $0x88] sm:$0xff]
    %v4192 = vld [vmem:[#allocation4 + $0x90] sm:$0xff]
    %v4193 = vld [vmem:[#allocation4 + $0x98] sm:$0xff]
    %v4194 = vld [vmem:[#allocation4 + $0xa0] sm:$0xff]
    %v4195 = vld [vmem:[#allocation4 + $0xa8] sm:$0xff]
    %v4196 = vld [vmem:[#allocation4 + $0xb0] sm:$0xff]
    %v4197 = vld [vmem:[#allocation4 + $0xb8] sm:$0xff]
    %v4198 = vld [vmem:[#allocation4 + $0xc0] sm:$0xff]
    %v4199 = vld [vmem:[#allocation4 + $0xc8] sm:$0xff]
    %v4200 = vld [vmem:[#allocation4 + $0xd0] sm:$0xff]
    %v4201 = vld [vmem:[#allocation4 + $0xd8] sm:$0xff]
    %v4202 = vld [vmem:[#allocation4 + $0xe0] sm:$0xff]
    %v4203 = vld [vmem:[#allocation4 + $0xe8] sm:$0xff]
    %v4204 = vld [vmem:[#allocation4 + $0xf0] sm:$0xff]
    %v4205 = vld [vmem:[#allocation4 + $0xf8] sm:$0xff]
    %v4238 = vunpack.c.l.b16 %v4174
    %v4239 = vunpack.c.h.b16 %v4174
    %v4240 = vunpack.c.l.b16 %v4175
    %v4241 = vunpack.c.h.b16 %v4175
    %v4242 = vunpack.c.l.b16 %v4176
    %v4243 = vunpack.c.h.b16 %v4176
    %v4244 = vunpack.c.l.b16 %v4177
    %v4245 = vunpack.c.h.b16 %v4177
    %v4246 = vunpack.c.l.b16 %v4178
    %v4247 = vunpack.c.h.b16 %v4178
    %v4248 = vunpack.c.l.b16 %v4179
    %v4249 = vunpack.c.h.b16 %v4179
    %v4250 = vunpack.c.l.b16 %v4180
    %v4251 = vunpack.c.h.b16 %v4180
    %v4252 = vunpack.c.l.b16 %v4181
    %v4253 = vunpack.c.h.b16 %v4181
    %v4254 = vunpack.c.l.b16 %v4182
    %v4255 = vunpack.c.h.b16 %v4182
    %v4256 = vunpack.c.l.b16 %v4183
    %v4257 = vunpack.c.h.b16 %v4183
    %v4258 = vunpack.c.l.b16 %v4184
    %v4259 = vunpack.c.h.b16 %v4184
    %v4260 = vunpack.c.l.b16 %v4185
    %v4261 = vunpack.c.h.b16 %v4185
    %v4262 = vunpack.c.l.b16 %v4186
    %v4263 = vunpack.c.h.b16 %v4186
    %v4264 = vunpack.c.l.b16 %v4187
    %v4265 = vunpack.c.h.b16 %v4187
    %v4266 = vunpack.c.l.b16 %v4188
    %v4267 = vunpack.c.h.b16 %v4188
    %v4268 = vunpack.c.l.b16 %v4189
    %v4269 = vunpack.c.h.b16 %v4189
    %v4270 = vunpack.c.l.b16 %v4190
    %v4271 = vunpack.c.h.b16 %v4190
    %v4272 = vunpack.c.l.b16 %v4191
    %v4273 = vunpack.c.h.b16 %v4191
    %v4274 = vunpack.c.l.b16 %v4192
    %v4275 = vunpack.c.h.b16 %v4192
    %v4276 = vunpack.c.l.b16 %v4193
    %v4277 = vunpack.c.h.b16 %v4193
    %v4278 = vunpack.c.l.b16 %v4194
    %v4279 = vunpack.c.h.b16 %v4194
    %v4280 = vunpack.c.l.b16 %v4195
    %v4281 = vunpack.c.h.b16 %v4195
    %v4282 = vunpack.c.l.b16 %v4196
    %v4283 = vunpack.c.h.b16 %v4196
    %v4284 = vunpack.c.l.b16 %v4197
    %v4285 = vunpack.c.h.b16 %v4197
    %v4286 = vunpack.c.l.b16 %v4198
    %v4287 = vunpack.c.h.b16 %v4198
    %v4288 = vunpack.c.l.b16 %v4199
    %v4289 = vunpack.c.h.b16 %v4199
    %v4290 = vunpack.c.l.b16 %v4200
    %v4291 = vunpack.c.h.b16 %v4200
    %v4292 = vunpack.c.l.b16 %v4201
    %v4293 = vunpack.c.h.b16 %v4201
    %v4294 = vunpack.c.l.b16 %v4202
    %v4295 = vunpack.c.h.b16 %v4202
    %v4296 = vunpack.c.l.b16 %v4203
    %v4297 = vunpack.c.h.b16 %v4203
    %v4298 = vunpack.c.l.b16 %v4204
    %v4299 = vunpack.c.h.b16 %v4204
    %v4300 = vunpack.c.l.b16 %v4205
    %v4301 = vunpack.c.h.b16 %v4205
    %v4302 = vpack.c.b16 %v4242, %v4238
    %v4303 = vpack.c.b16 %v4243, %v4239
    %v4304 = vpack.c.b16 %v4244, %v4240
    %v4305 = vpack.c.b16 %v4245, %v4241
    %v4306 = vpack.c.b16 %v4250, %v4246
    %v4307 = vpack.c.b16 %v4251, %v4247
    %v4308 = vpack.c.b16 %v4252, %v4248
    %v4309 = vpack.c.b16 %v4253, %v4249
    %v4310 = vpack.c.b16 %v4258, %v4254
    %v4311 = vpack.c.b16 %v4259, %v4255
    %v4312 = vpack.c.b16 %v4260, %v4256
    %v4313 = vpack.c.b16 %v4261, %v4257
    %v4314 = vpack.c.b16 %v4266, %v4262
    %v4315 = vpack.c.b16 %v4267, %v4263
    %v4316 = vpack.c.b16 %v4268, %v4264
    %v4317 = vpack.c.b16 %v4269, %v4265
    %v4318 = vpack.c.b16 %v4274, %v4270
    %v4319 = vpack.c.b16 %v4275, %v4271
    %v4320 = vpack.c.b16 %v4276, %v4272
    %v4321 = vpack.c.b16 %v4277, %v4273
    %v4322 = vpack.c.b16 %v4282, %v4278
    %v4323 = vpack.c.b16 %v4283, %v4279
    %v4324 = vpack.c.b16 %v4284, %v4280
    %v4325 = vpack.c.b16 %v4285, %v4281
    %v4326 = vpack.c.b16 %v4290, %v4286
    %v4327 = vpack.c.b16 %v4291, %v4287
    %v4328 = vpack.c.b16 %v4292, %v4288
    %v4329 = vpack.c.b16 %v4293, %v4289
    %v4330 = vpack.c.b16 %v4298, %v4294
    %v4331 = vpack.c.b16 %v4299, %v4295
    %v4332 = vpack.c.b16 %v4300, %v4296
    %v4333 = vpack.c.b16 %v4301, %v4297
    %4366 = vmatprep.subr.bf16.mxu0 %v4303
    %4367 = vmatpush1.bf16.msra.mxu0 %v4302
    %4368 = vmatprep.subr.bf16.mxu0 %v4307
    %4369 = vmatpush1.bf16.msra.mxu0 %v4306
    %4370 = vmatprep.subr.bf16.mxu0 %v4311
    %4371 = vmatpush1.bf16.msra.mxu0 %v4310
    %4372 = vmatprep.subr.bf16.mxu0 %v4315
    %4373 = vmatpush1.bf16.msra.mxu0 %v4314
    %4374 = vmatprep.subr.bf16.mxu0 %v4319
    %4375 = vmatpush1.bf16.msra.mxu0 %v4318
    %4376 = vmatprep.subr.bf16.mxu0 %v4323
    %4377 = vmatpush1.bf16.msra.mxu0 %v4322
    %4378 = vmatprep.subr.bf16.mxu0 %v4327
    %4379 = vmatpush1.bf16.msra.mxu0 %v4326
    %4380 = vmatprep.subr.bf16.mxu0 %v4331
    %4381 = vmatpush1.bf16.msra.mxu0 %v4330
    %4382 = vmatprep.subr.bf16.mxu0 0
    %4383 = vmatpush1.bf16.msra.mxu0 0
    %4384 = vmatprep.subr.bf16.mxu0 0
    %4385 = vmatpush1.bf16.msra.mxu0 0
    %4386 = vmatprep.subr.bf16.mxu0 0
    %4387 = vmatpush1.bf16.msra.mxu0 0
    %4388 = vmatprep.subr.bf16.mxu0 0
    %4389 = vmatpush1.bf16.msra.mxu0 0
    %4390 = vmatprep.subr.bf16.mxu0 0
    %4391 = vmatpush1.bf16.msra.mxu0 0
    %4392 = vmatprep.subr.bf16.mxu0 0
    %4393 = vmatpush1.bf16.msra.mxu0 0
    %4394 = vmatprep.subr.bf16.mxu0 0
    %4395 = vmatpush1.bf16.msra.mxu0 0
    %4396 = vmatprep.subr.bf16.mxu0 0
    %4397 = vmatpush1.bf16.msra.mxu0 0
    %4398 = vmatprep.mubr.bf16.mxu0 0
    %4399 = vmatmul.mubr.bf16.gmra.mrb[0].mxu0 %v3663
    %v4400 = vpop.f32.mrb[0].mxu0
    %v4401 = vadd.f32 0.0, %v4400
    %v4402 = vpop.f32.mrb[0].mxu0
    %v4403 = vadd.f32 0.0, %v4402
    %v4404 = vpop.f32.mrb[0].mxu0
    %v4405 = vpop.f32.mrb[0].mxu0
    %4406 = vdwg.mxu0
    %4407 = vmatprep.subr.bf16.mxu0 %v4305
    %4408 = vmatpush1.bf16.msra.mxu0 %v4304
    %4409 = vmatprep.subr.bf16.mxu0 %v4309
    %4410 = vmatpush1.bf16.msra.mxu0 %v4308
    %4411 = vmatprep.subr.bf16.mxu0 %v4313
    %4412 = vmatpush1.bf16.msra.mxu0 %v4312
    %4413 = vmatprep.subr.bf16.mxu0 %v4317
    %4414 = vmatpush1.bf16.msra.mxu0 %v4316
    %4415 = vmatprep.subr.bf16.mxu0 %v4321
    %4416 = vmatpush1.bf16.msra.mxu0 %v4320
    %4417 = vmatprep.subr.bf16.mxu0 %v4325
    %4418 = vmatpush1.bf16.msra.mxu0 %v4324
    %4419 = vmatprep.subr.bf16.mxu0 %v4329
    %4420 = vmatpush1.bf16.msra.mxu0 %v4328
    %4421 = vmatprep.subr.bf16.mxu0 %v4333
    %4422 = vmatpush1.bf16.msra.mxu0 %v4332
    %4423 = vmatprep.subr.bf16.mxu0 0
    %4424 = vmatpush1.bf16.msra.mxu0 0
    %4425 = vmatprep.subr.bf16.mxu0 0
    %4426 = vmatpush1.bf16.msra.mxu0 0
    %4427 = vmatprep.subr.bf16.mxu0 0
    %4428 = vmatpush1.bf16.msra.mxu0 0
    %4429 = vmatprep.subr.bf16.mxu0 0
    %4430 = vmatpush1.bf16.msra.mxu0 0
    %4431 = vmatprep.subr.bf16.mxu0 0
    %4432 = vmatpush1.bf16.msra.mxu0 0
    %4433 = vmatprep.subr.bf16.mxu0 0
    %4434 = vmatpush1.bf16.msra.mxu0 0
    %4435 = vmatprep.subr.bf16.mxu0 0
    %4436 = vmatpush1.bf16.msra.mxu0 0
    %4437 = vmatprep.subr.bf16.mxu0 0
    %4438 = vmatpush1.bf16.msra.mxu0 0
    %4439 = vmatprep.mubr.bf16.mxu0 0
    %4440 = vmatmul.mubr.bf16.gmra.mrb[0].mxu0 %v3663
    %v4441 = vpop.f32.mrb[0].mxu0
    %v4442 = vadd.f32 0.0, %v4441
    %v4443 = vpop.f32.mrb[0].mxu0
    %v4444 = vadd.f32 0.0, %v4443
    %v4445 = vpop.f32.mrb[0].mxu0
    %v4446 = vpop.f32.mrb[0].mxu0
    %4447 = vdwg.mxu0
    %v4448 = vadd.f32 %v4170, %v4401
    %v4449 = vadd.f32 %v4171, %v4403
    %v4450 = vadd.f32 %v4172, %v4442
    %v4451 = vadd.f32 %v4173, %v4444
    %v4452 = vmul.f32 %v4448, 0.5
    %v4453 = vtanh.pop %v4452
    %v4454 = vmul.f32 %v4453, 0.5
    %v4455 = vadd.f32 %v4454, 0.5
    %v4456 = vmul.f32 %v4449, 0.5
    %v4457 = vtanh.pop %v4456
    %v4458 = vmul.f32 %v4457, 0.5
    %v4459 = vadd.f32 %v4458, 0.5
    %v4460 = vtanh.pop %v4450
    %v4461 = vmul.f32 %v4451, 0.5
    %v4462 = vtanh.pop %v4461
    %v4463 = vmul.f32 %v4462, 0.5
    %v4464 = vadd.f32 %v4463, 0.5
    %v4465 = vmul.f32 %v4459, %v3660
    %v4466 = vmul.f32 %v4455, %v4460
    %v4467 = vadd.f32 %v4465, %v4466
    %v4468 = vtanh.pop %v4467
    %v4469 = vmul.f32 %v4464, %v4468
    %v4470 = vpack.c.bf16 %v4469, %v4469
    %4471 = vst [vmem:[#allocation2] sm:$0xf] %v4470
    %v4472 = vpack.c.bf16 %v4158, %v4158
    %4473 = vst [vmem:[#allocation2 + $0x4] sm:$0xf] %v4472
    %v4474 = vld [vmem:[#allocation2] sm:$0xff]
    %v4475 = vld [vmem:[#allocation6] sm:$0xff]
    %v4476 = vld [vmem:[#allocation6 + $0x8] sm:$0xff]
    %v4477 = vld [vmem:[#allocation6 + $0x10] sm:$0xff]
    %v4478 = vld [vmem:[#allocation6 + $0x18] sm:$0xff]
    %v4479 = vld [vmem:[#allocation6 + $0x20] sm:$0xff]
    %v4480 = vld [vmem:[#allocation6 + $0x28] sm:$0xff]
    %v4481 = vld [vmem:[#allocation6 + $0x30] sm:$0xff]
    %v4482 = vld [vmem:[#allocation6 + $0x38] sm:$0xff]
    %v4483 = vld [vmem:[#allocation6 + $0x40] sm:$0xff]
    %v4484 = vld [vmem:[#allocation6 + $0x48] sm:$0xff]
    %v4485 = vld [vmem:[#allocation6 + $0x50] sm:$0xff]
    %v4486 = vld [vmem:[#allocation6 + $0x58] sm:$0xff]
    %v4487 = vld [vmem:[#allocation6 + $0x60] sm:$0xff]
    %v4488 = vld [vmem:[#allocation6 + $0x68] sm:$0xff]
    %v4489 = vld [vmem:[#allocation6 + $0x70] sm:$0xff]
    %v4490 = vld [vmem:[#allocation6 + $0x78] sm:$0xff]
    %v4491 = vld [vmem:[#allocation6 + $0x80] sm:$0xff]
    %v4492 = vld [vmem:[#allocation6 + $0x88] sm:$0xff]
    %v4493 = vld [vmem:[#allocation6 + $0x90] sm:$0xff]
    %v4494 = vld [vmem:[#allocation6 + $0x98] sm:$0xff]
    %v4495 = vld [vmem:[#allocation6 + $0xa0] sm:$0xff]
    %v4496 = vld [vmem:[#allocation6 + $0xa8] sm:$0xff]
    %v4497 = vld [vmem:[#allocation6 + $0xb0] sm:$0xff]
    %v4498 = vld [vmem:[#allocation6 + $0xb8] sm:$0xff]
    %v4499 = vld [vmem:[#allocation6 + $0xc0] sm:$0xff]
    %v4500 = vld [vmem:[#allocation6 + $0xc8] sm:$0xff]
    %v4501 = vld [vmem:[#allocation6 + $0xd0] sm:$0xff]
    %v4502 = vld [vmem:[#allocation6 + $0xd8] sm:$0xff]
    %v4503 = vld [vmem:[#allocation6 + $0xe0] sm:$0xff]
    %v4504 = vld [vmem:[#allocation6 + $0xe8] sm:$0xff]
    %v4505 = vld [vmem:[#allocation6 + $0xf0] sm:$0xff]
    %v4506 = vld [vmem:[#allocation6 + $0xf8] sm:$0xff]
    %v4507 = vld [vmem:[#allocation6 + $0x100] sm:$0xff]
    %v4508 = vld [vmem:[#allocation6 + $0x108] sm:$0xff]
    %v4509 = vld [vmem:[#allocation6 + $0x110] sm:$0xff]
    %v4510 = vld [vmem:[#allocation6 + $0x118] sm:$0xff]
    %v4511 = vld [vmem:[#allocation6 + $0x120] sm:$0xff]
    %v4512 = vld [vmem:[#allocation6 + $0x128] sm:$0xff]
    %v4513 = vld [vmem:[#allocation6 + $0x130] sm:$0xff]
    %v4514 = vld [vmem:[#allocation6 + $0x138] sm:$0xff]
    %v4515 = vld [vmem:[#allocation6 + $0x140] sm:$0xff]
    %v4516 = vld [vmem:[#allocation6 + $0x148] sm:$0xff]
    %v4517 = vld [vmem:[#allocation6 + $0x150] sm:$0xff]
    %v4518 = vld [vmem:[#allocation6 + $0x158] sm:$0xff]
    %v4519 = vld [vmem:[#allocation6 + $0x160] sm:$0xff]
    %v4520 = vld [vmem:[#allocation6 + $0x168] sm:$0xff]
    %v4521 = vld [vmem:[#allocation6 + $0x170] sm:$0xff]
    %v4522 = vld [vmem:[#allocation6 + $0x178] sm:$0xff]
    %v4523 = vld [vmem:[#allocation6 + $0x180] sm:$0xff]
    %v4524 = vld [vmem:[#allocation6 + $0x188] sm:$0xff]
    %v4525 = vld [vmem:[#allocation6 + $0x190] sm:$0xff]
    %v4526 = vld [vmem:[#allocation6 + $0x198] sm:$0xff]
    %v4527 = vld [vmem:[#allocation6 + $0x1a0] sm:$0xff]
    %v4528 = vld [vmem:[#allocation6 + $0x1a8] sm:$0xff]
    %v4529 = vld [vmem:[#allocation6 + $0x1b0] sm:$0xff]
    %v4530 = vld [vmem:[#allocation6 + $0x1b8] sm:$0xff]
    %v4531 = vld [vmem:[#allocation6 + $0x1c0] sm:$0xff]
    %v4532 = vld [vmem:[#allocation6 + $0x1c8] sm:$0xff]
    %v4533 = vld [vmem:[#allocation6 + $0x1d0] sm:$0xff]
    %v4534 = vld [vmem:[#allocation6 + $0x1d8] sm:$0xff]
    %v4535 = vld [vmem:[#allocation6 + $0x1e0] sm:$0xff]
    %v4536 = vld [vmem:[#allocation6 + $0x1e8] sm:$0xff]
    %v4537 = vld [vmem:[#allocation6 + $0x1f0] sm:$0xff]
    %v4538 = vld [vmem:[#allocation6 + $0x1f8] sm:$0xff]
    %v4540 = vunpack.c.l.b16 %v4474
    %v4541 = vunpack.c.h.b16 %v4474
    %v4542 = vpack.c.b16 %v4540, %v4540
    %v4543 = vpack.c.b16 %v4541, %v4541
    %v4610 = vunpack.c.l.b16 %v4475
    %v4611 = vunpack.c.h.b16 %v4475
    %v4612 = vunpack.c.l.b16 %v4476
    %v4613 = vunpack.c.h.b16 %v4476
    %v4614 = vunpack.c.l.b16 %v4477
    %v4615 = vunpack.c.h.b16 %v4477
    %v4616 = vunpack.c.l.b16 %v4478
    %v4617 = vunpack.c.h.b16 %v4478
    %v4618 = vunpack.c.l.b16 %v4479
    %v4619 = vunpack.c.h.b16 %v4479
    %v4620 = vunpack.c.l.b16 %v4480
    %v4621 = vunpack.c.h.b16 %v4480
    %v4622 = vunpack.c.l.b16 %v4481
    %v4623 = vunpack.c.h.b16 %v4481
    %v4624 = vunpack.c.l.b16 %v4482
    %v4625 = vunpack.c.h.b16 %v4482
    %v4626 = vunpack.c.l.b16 %v4483
    %v4627 = vunpack.c.h.b16 %v4483
    %v4628 = vunpack.c.l.b16 %v4484
    %v4629 = vunpack.c.h.b16 %v4484
    %v4630 = vunpack.c.l.b16 %v4485
    %v4631 = vunpack.c.h.b16 %v4485
    %v4632 = vunpack.c.l.b16 %v4486
    %v4633 = vunpack.c.h.b16 %v4486
    %v4634 = vunpack.c.l.b16 %v4487
    %v4635 = vunpack.c.h.b16 %v4487
    %v4636 = vunpack.c.l.b16 %v4488
    %v4637 = vunpack.c.h.b16 %v4488
    %v4638 = vunpack.c.l.b16 %v4489
    %v4639 = vunpack.c.h.b16 %v4489
    %v4640 = vunpack.c.l.b16 %v4490
    %v4641 = vunpack.c.h.b16 %v4490
    %v4642 = vunpack.c.l.b16 %v4491
    %v4643 = vunpack.c.h.b16 %v4491
    %v4644 = vunpack.c.l.b16 %v4492
    %v4645 = vunpack.c.h.b16 %v4492
    %v4646 = vunpack.c.l.b16 %v4493
    %v4647 = vunpack.c.h.b16 %v4493
    %v4648 = vunpack.c.l.b16 %v4494
    %v4649 = vunpack.c.h.b16 %v4494
    %v4650 = vunpack.c.l.b16 %v4495
    %v4651 = vunpack.c.h.b16 %v4495
    %v4652 = vunpack.c.l.b16 %v4496
    %v4653 = vunpack.c.h.b16 %v4496
    %v4654 = vunpack.c.l.b16 %v4497
    %v4655 = vunpack.c.h.b16 %v4497
    %v4656 = vunpack.c.l.b16 %v4498
    %v4657 = vunpack.c.h.b16 %v4498
    %v4658 = vunpack.c.l.b16 %v4499
    %v4659 = vunpack.c.h.b16 %v4499
    %v4660 = vunpack.c.l.b16 %v4500
    %v4661 = vunpack.c.h.b16 %v4500
    %v4662 = vunpack.c.l.b16 %v4501
    %v4663 = vunpack.c.h.b16 %v4501
    %v4664 = vunpack.c.l.b16 %v4502
    %v4665 = vunpack.c.h.b16 %v4502
    %v4666 = vunpack.c.l.b16 %v4503
    %v4667 = vunpack.c.h.b16 %v4503
    %v4668 = vunpack.c.l.b16 %v4504
    %v4669 = vunpack.c.h.b16 %v4504
    %v4670 = vunpack.c.l.b16 %v4505
    %v4671 = vunpack.c.h.b16 %v4505
    %v4672 = vunpack.c.l.b16 %v4506
    %v4673 = vunpack.c.h.b16 %v4506
    %v4674 = vunpack.c.l.b16 %v4507
    %v4675 = vunpack.c.h.b16 %v4507
    %v4676 = vunpack.c.l.b16 %v4508
    %v4677 = vunpack.c.h.b16 %v4508
    %v4678 = vunpack.c.l.b16 %v4509
    %v4679 = vunpack.c.h.b16 %v4509
    %v4680 = vunpack.c.l.b16 %v4510
    %v4681 = vunpack.c.h.b16 %v4510
    %v4682 = vunpack.c.l.b16 %v4511
    %v4683 = vunpack.c.h.b16 %v4511
    %v4684 = vunpack.c.l.b16 %v4512
    %v4685 = vunpack.c.h.b16 %v4512
    %v4686 = vunpack.c.l.b16 %v4513
    %v4687 = vunpack.c.h.b16 %v4513
    %v4688 = vunpack.c.l.b16 %v4514
    %v4689 = vunpack.c.h.b16 %v4514
    %v4690 = vunpack.c.l.b16 %v4515
    %v4691 = vunpack.c.h.b16 %v4515
    %v4692 = vunpack.c.l.b16 %v4516
    %v4693 = vunpack.c.h.b16 %v4516
    %v4694 = vunpack.c.l.b16 %v4517
    %v4695 = vunpack.c.h.b16 %v4517
    %v4696 = vunpack.c.l.b16 %v4518
    %v4697 = vunpack.c.h.b16 %v4518
    %v4698 = vunpack.c.l.b16 %v4519
    %v4699 = vunpack.c.h.b16 %v4519
    %v4700 = vunpack.c.l.b16 %v4520
    %v4701 = vunpack.c.h.b16 %v4520
    %v4702 = vunpack.c.l.b16 %v4521
    %v4703 = vunpack.c.h.b16 %v4521
    %v4704 = vunpack.c.l.b16 %v4522
    %v4705 = vunpack.c.h.b16 %v4522
    %v4706 = vunpack.c.l.b16 %v4523
    %v4707 = vunpack.c.h.b16 %v4523
    %v4708 = vunpack.c.l.b16 %v4524
    %v4709 = vunpack.c.h.b16 %v4524
    %v4710 = vunpack.c.l.b16 %v4525
    %v4711 = vunpack.c.h.b16 %v4525
    %v4712 = vunpack.c.l.b16 %v4526
    %v4713 = vunpack.c.h.b16 %v4526
    %v4714 = vunpack.c.l.b16 %v4527
    %v4715 = vunpack.c.h.b16 %v4527
    %v4716 = vunpack.c.l.b16 %v4528
    %v4717 = vunpack.c.h.b16 %v4528
    %v4718 = vunpack.c.l.b16 %v4529
    %v4719 = vunpack.c.h.b16 %v4529
    %v4720 = vunpack.c.l.b16 %v4530
    %v4721 = vunpack.c.h.b16 %v4530
    %v4722 = vunpack.c.l.b16 %v4531
    %v4723 = vunpack.c.h.b16 %v4531
    %v4724 = vunpack.c.l.b16 %v4532
    %v4725 = vunpack.c.h.b16 %v4532
    %v4726 = vunpack.c.l.b16 %v4533
    %v4727 = vunpack.c.h.b16 %v4533
    %v4728 = vunpack.c.l.b16 %v4534
    %v4729 = vunpack.c.h.b16 %v4534
    %v4730 = vunpack.c.l.b16 %v4535
    %v4731 = vunpack.c.h.b16 %v4535
    %v4732 = vunpack.c.l.b16 %v4536
    %v4733 = vunpack.c.h.b16 %v4536
    %v4734 = vunpack.c.l.b16 %v4537
    %v4735 = vunpack.c.h.b16 %v4537
    %v4736 = vunpack.c.l.b16 %v4538
    %v4737 = vunpack.c.h.b16 %v4538
    %v4738 = vpack.c.b16 %v4614, %v4610
    %v4739 = vpack.c.b16 %v4615, %v4611
    %v4740 = vpack.c.b16 %v4616, %v4612
    %v4741 = vpack.c.b16 %v4617, %v4613
    %v4742 = vpack.c.b16 %v4622, %v4618
    %v4743 = vpack.c.b16 %v4623, %v4619
    %v4744 = vpack.c.b16 %v4624, %v4620
    %v4745 = vpack.c.b16 %v4625, %v4621
    %v4746 = vpack.c.b16 %v4630, %v4626
    %v4747 = vpack.c.b16 %v4631, %v4627
    %v4748 = vpack.c.b16 %v4632, %v4628
    %v4749 = vpack.c.b16 %v4633, %v4629
    %v4750 = vpack.c.b16 %v4638, %v4634
    %v4751 = vpack.c.b16 %v4639, %v4635
    %v4752 = vpack.c.b16 %v4640, %v4636
    %v4753 = vpack.c.b16 %v4641, %v4637
    %v4754 = vpack.c.b16 %v4646, %v4642
    %v4755 = vpack.c.b16 %v4647, %v4643
    %v4756 = vpack.c.b16 %v4648, %v4644
    %v4757 = vpack.c.b16 %v4649, %v4645
    %v4758 = vpack.c.b16 %v4654, %v4650
    %v4759 = vpack.c.b16 %v4655, %v4651
    %v4760 = vpack.c.b16 %v4656, %v4652
    %v4761 = vpack.c.b16 %v4657, %v4653
    %v4762 = vpack.c.b16 %v4662, %v4658
    %v4763 = vpack.c.b16 %v4663, %v4659
    %v4764 = vpack.c.b16 %v4664, %v4660
    %v4765 = vpack.c.b16 %v4665, %v4661
    %v4766 = vpack.c.b16 %v4670, %v4666
    %v4767 = vpack.c.b16 %v4671, %v4667
    %v4768 = vpack.c.b16 %v4672, %v4668
    %v4769 = vpack.c.b16 %v4673, %v4669
    %v4770 = vpack.c.b16 %v4678, %v4674
    %v4771 = vpack.c.b16 %v4679, %v4675
    %v4772 = vpack.c.b16 %v4680, %v4676
    %v4773 = vpack.c.b16 %v4681, %v4677
    %v4774 = vpack.c.b16 %v4686, %v4682
    %v4775 = vpack.c.b16 %v4687, %v4683
    %v4776 = vpack.c.b16 %v4688, %v4684
    %v4777 = vpack.c.b16 %v4689, %v4685
    %v4778 = vpack.c.b16 %v4694, %v4690
    %v4779 = vpack.c.b16 %v4695, %v4691
    %v4780 = vpack.c.b16 %v4696, %v4692
    %v4781 = vpack.c.b16 %v4697, %v4693
    %v4782 = vpack.c.b16 %v4702, %v4698
    %v4783 = vpack.c.b16 %v4703, %v4699
    %v4784 = vpack.c.b16 %v4704, %v4700
    %v4785 = vpack.c.b16 %v4705, %v4701
    %v4786 = vpack.c.b16 %v4710, %v4706
    %v4787 = vpack.c.b16 %v4711, %v4707
    %v4788 = vpack.c.b16 %v4712, %v4708
    %v4789 = vpack.c.b16 %v4713, %v4709
    %v4790 = vpack.c.b16 %v4718, %v4714
    %v4791 = vpack.c.b16 %v4719, %v4715
    %v4792 = vpack.c.b16 %v4720, %v4716
    %v4793 = vpack.c.b16 %v4721, %v4717
    %v4794 = vpack.c.b16 %v4726, %v4722
    %v4795 = vpack.c.b16 %v4727, %v4723
    %v4796 = vpack.c.b16 %v4728, %v4724
    %v4797 = vpack.c.b16 %v4729, %v4725
    %v4798 = vpack.c.b16 %v4734, %v4730
    %v4799 = vpack.c.b16 %v4735, %v4731
    %v4800 = vpack.c.b16 %v4736, %v4732
    %v4801 = vpack.c.b16 %v4737, %v4733
    %4866 = vmatprep.subr.bf16.mxu0 %v4739
    %4867 = vmatpush1.bf16.msra.mxu0 %v4738
    %4868 = vmatprep.subr.bf16.mxu0 %v4743
    %4869 = vmatpush1.bf16.msra.mxu0 %v4742
    %4870 = vmatprep.subr.bf16.mxu0 %v4747
    %4871 = vmatpush1.bf16.msra.mxu0 %v4746
    %4872 = vmatprep.subr.bf16.mxu0 %v4751
    %4873 = vmatpush1.bf16.msra.mxu0 %v4750
    %4874 = vmatprep.subr.bf16.mxu0 %v4755
    %4875 = vmatpush1.bf16.msra.mxu0 %v4754
    %4876 = vmatprep.subr.bf16.mxu0 %v4759
    %4877 = vmatpush1.bf16.msra.mxu0 %v4758
    %4878 = vmatprep.subr.bf16.mxu0 %v4763
    %4879 = vmatpush1.bf16.msra.mxu0 %v4762
    %4880 = vmatprep.subr.bf16.mxu0 %v4767
    %4881 = vmatpush1.bf16.msra.mxu0 %v4766
    %4882 = vmatprep.subr.bf16.mxu0 %v4771
    %4883 = vmatpush1.bf16.msra.mxu0 %v4770
    %4884 = vmatprep.subr.bf16.mxu0 %v4775
    %4885 = vmatpush1.bf16.msra.mxu0 %v4774
    %4886 = vmatprep.subr.bf16.mxu0 %v4779
    %4887 = vmatpush1.bf16.msra.mxu0 %v4778
    %4888 = vmatprep.subr.bf16.mxu0 %v4783
    %4889 = vmatpush1.bf16.msra.mxu0 %v4782
    %4890 = vmatprep.subr.bf16.mxu0 %v4787
    %4891 = vmatpush1.bf16.msra.mxu0 %v4786
    %4892 = vmatprep.subr.bf16.mxu0 %v4791
    %4893 = vmatpush1.bf16.msra.mxu0 %v4790
    %4894 = vmatprep.subr.bf16.mxu0 %v4795
    %4895 = vmatpush1.bf16.msra.mxu0 %v4794
    %4896 = vmatprep.subr.bf16.mxu0 %v4799
    %4897 = vmatpush1.bf16.msra.mxu0 %v4798
    %4898 = vmatprep.mubr.bf16.mxu0 %v4543
    %4899 = vmatmul.mubr.bf16.gmra.mrb[0].mxu0 %v4542
    %v4900 = vpop.f32.mrb[0].mxu0
    %v4901 = vadd.f32 %v109, %v4900
    %v4902 = vpop.f32.mrb[0].mxu0
    %v4903 = vadd.f32 %v113, %v4902
    %v4904 = vpop.f32.mrb[0].mxu0
    %v4905 = vpop.f32.mrb[0].mxu0
    %4906 = vdwg.mxu0
    %4907 = vmatprep.subr.bf16.mxu0 %v4741
    %4908 = vmatpush1.bf16.msra.mxu0 %v4740
    %4909 = vmatprep.subr.bf16.mxu0 %v4745
    %4910 = vmatpush1.bf16.msra.mxu0 %v4744
    %4911 = vmatprep.subr.bf16.mxu0 %v4749
    %4912 = vmatpush1.bf16.msra.mxu0 %v4748
    %4913 = vmatprep.subr.bf16.mxu0 %v4753
    %4914 = vmatpush1.bf16.msra.mxu0 %v4752
    %4915 = vmatprep.subr.bf16.mxu0 %v4757
    %4916 = vmatpush1.bf16.msra.mxu0 %v4756
    %4917 = vmatprep.subr.bf16.mxu0 %v4761
    %4918 = vmatpush1.bf16.msra.mxu0 %v4760
    %4919 = vmatprep.subr.bf16.mxu0 %v4765
    %4920 = vmatpush1.bf16.msra.mxu0 %v4764
    %4921 = vmatprep.subr.bf16.mxu0 %v4769
    %4922 = vmatpush1.bf16.msra.mxu0 %v4768
    %4923 = vmatprep.subr.bf16.mxu0 %v4773
    %4924 = vmatpush1.bf16.msra.mxu0 %v4772
    %4925 = vmatprep.subr.bf16.mxu0 %v4777
    %4926 = vmatpush1.bf16.msra.mxu0 %v4776
    %4927 = vmatprep.subr.bf16.mxu0 %v4781
    %4928 = vmatpush1.bf16.msra.mxu0 %v4780
    %4929 = vmatprep.subr.bf16.mxu0 %v4785
    %4930 = vmatpush1.bf16.msra.mxu0 %v4784
    %4931 = vmatprep.subr.bf16.mxu0 %v4789
    %4932 = vmatpush1.bf16.msra.mxu0 %v4788
    %4933 = vmatprep.subr.bf16.mxu0 %v4793
    %4934 = vmatpush1.bf16.msra.mxu0 %v4792
    %4935 = vmatprep.subr.bf16.mxu0 %v4797
    %4936 = vmatpush1.bf16.msra.mxu0 %v4796
    %4937 = vmatprep.subr.bf16.mxu0 %v4801
    %4938 = vmatpush1.bf16.msra.mxu0 %v4800
    %4939 = vmatprep.mubr.bf16.mxu0 %v4543
    %4940 = vmatmul.mubr.bf16.gmra.mrb[0].mxu0 %v4542
    %v4941 = vpop.f32.mrb[0].mxu0
    %v4942 = vadd.f32 %v117, %v4941
    %v4943 = vpop.f32.mrb[0].mxu0
    %v4944 = vadd.f32 %v121, %v4943
    %v4945 = vpop.f32.mrb[0].mxu0
    %v4946 = vpop.f32.mrb[0].mxu0
    %4947 = vdwg.mxu0
    %v4948 = vmul.f32 %v4901, 0.5
    %v4949 = vtanh.pop %v4948
    %v4950 = vmul.f32 %v4949, 0.5
    %v4951 = vadd.f32 %v4950, 0.5
    %v4952 = vmul.f32 %v4903, 0.5
    %v4953 = vtanh.pop %v4952
    %v4954 = vmul.f32 %v4953, 0.5
    %v4955 = vadd.f32 %v4954, 0.5
    %v4956 = vtanh.pop %v4942
    %v4957 = vmul.f32 %v4944, 0.5
    %v4958 = vtanh.pop %v4957
    %v4959 = vmul.f32 %v4958, 0.5
    %v4960 = vadd.f32 %v4959, 0.5
    %v4961 = vmul.f32 %v4955, %v4156
    %v4962 = vmul.f32 %v4951, %v4956
    %v4963 = vadd.f32 %v4961, %v4962
    %v4964 = vtanh.pop %v4963
    %v4965 = vmul.f32 %v4960, %v4964
    %s4966 = scalar_lea.vmem %s0, 48
    %v4967 = vld [vmem:[%s4966] sm:$0xff]
    %4969 = vset.pattern.permute.xlu0 0
    %4970 = vperm.xlu0 %4969, %v4967
    %v4971 = vpop.permute.xlu0 %4970
    %v4973 = vmul.f32 %v4971, %v65
    %v4974 = vmul.f32 %v4971, %v69
    %v4975 = vmul.f32 %v4971, %v73
    %v4976 = vmul.f32 %v4971, %v77
    %v4977 = vadd.f32 %v4973, %v87
    %v4978 = vadd.f32 %v4974, %v91
    %v4979 = vadd.f32 %v4975, %v95
    %v4980 = vadd.f32 %v4976, %v99
    %v4981 = vld [vmem:[#allocation4] sm:$0xff]
    %v4982 = vld [vmem:[#allocation4 + $0x8] sm:$0xff]
    %v4983 = vld [vmem:[#allocation4 + $0x10] sm:$0xff]
    %v4984 = vld [vmem:[#allocation4 + $0x18] sm:$0xff]
    %v4985 = vld [vmem:[#allocation4 + $0x20] sm:$0xff]
    %v4986 = vld [vmem:[#allocation4 + $0x28] sm:$0xff]
    %v4987 = vld [vmem:[#allocation4 + $0x30] sm:$0xff]
    %v4988 = vld [vmem:[#allocation4 + $0x38] sm:$0xff]
    %v4989 = vld [vmem:[#allocation4 + $0x40] sm:$0xff]
    %v4990 = vld [vmem:[#allocation4 + $0x48] sm:$0xff]
    %v4991 = vld [vmem:[#allocation4 + $0x50] sm:$0xff]
    %v4992 = vld [vmem:[#allocation4 + $0x58] sm:$0xff]
    %v4993 = vld [vmem:[#allocation4 + $0x60] sm:$0xff]
    %v4994 = vld [vmem:[#allocation4 + $0x68] sm:$0xff]
    %v4995 = vld [vmem:[#allocation4 + $0x70] sm:$0xff]
    %v4996 = vld [vmem:[#allocation4 + $0x78] sm:$0xff]
    %v4997 = vld [vmem:[#allocation4 + $0x80] sm:$0xff]
    %v4998 = vld [vmem:[#allocation4 + $0x88] sm:$0xff]
    %v4999 = vld [vmem:[#allocation4 + $0x90] sm:$0xff]
    %v5000 = vld [vmem:[#allocation4 + $0x98] sm:$0xff]
    %v5001 = vld [vmem:[#allocation4 + $0xa0] sm:$0xff]
    %v5002 = vld [vmem:[#allocation4 + $0xa8] sm:$0xff]
    %v5003 = vld [vmem:[#allocation4 + $0xb0] sm:$0xff]
    %v5004 = vld [vmem:[#allocation4 + $0xb8] sm:$0xff]
    %v5005 = vld [vmem:[#allocation4 + $0xc0] sm:$0xff]
    %v5006 = vld [vmem:[#allocation4 + $0xc8] sm:$0xff]
    %v5007 = vld [vmem:[#allocation4 + $0xd0] sm:$0xff]
    %v5008 = vld [vmem:[#allocation4 + $0xd8] sm:$0xff]
    %v5009 = vld [vmem:[#allocation4 + $0xe0] sm:$0xff]
    %v5010 = vld [vmem:[#allocation4 + $0xe8] sm:$0xff]
    %v5011 = vld [vmem:[#allocation4 + $0xf0] sm:$0xff]
    %v5012 = vld [vmem:[#allocation4 + $0xf8] sm:$0xff]
    %v5045 = vunpack.c.l.b16 %v4981
    %v5046 = vunpack.c.h.b16 %v4981
    %v5047 = vunpack.c.l.b16 %v4982
    %v5048 = vunpack.c.h.b16 %v4982
    %v5049 = vunpack.c.l.b16 %v4983
    %v5050 = vunpack.c.h.b16 %v4983
    %v5051 = vunpack.c.l.b16 %v4984
    %v5052 = vunpack.c.h.b16 %v4984
    %v5053 = vunpack.c.l.b16 %v4985
    %v5054 = vunpack.c.h.b16 %v4985
    %v5055 = vunpack.c.l.b16 %v4986
    %v5056 = vunpack.c.h.b16 %v4986
    %v5057 = vunpack.c.l.b16 %v4987
    %v5058 = vunpack.c.h.b16 %v4987
    %v5059 = vunpack.c.l.b16 %v4988
    %v5060 = vunpack.c.h.b16 %v4988
    %v5061 = vunpack.c.l.b16 %v4989
    %v5062 = vunpack.c.h.b16 %v4989
    %v5063 = vunpack.c.l.b16 %v4990
    %v5064 = vunpack.c.h.b16 %v4990
    %v5065 = vunpack.c.l.b16 %v4991
    %v5066 = vunpack.c.h.b16 %v4991
    %v5067 = vunpack.c.l.b16 %v4992
    %v5068 = vunpack.c.h.b16 %v4992
    %v5069 = vunpack.c.l.b16 %v4993
    %v5070 = vunpack.c.h.b16 %v4993
    %v5071 = vunpack.c.l.b16 %v4994
    %v5072 = vunpack.c.h.b16 %v4994
    %v5073 = vunpack.c.l.b16 %v4995
    %v5074 = vunpack.c.h.b16 %v4995
    %v5075 = vunpack.c.l.b16 %v4996
    %v5076 = vunpack.c.h.b16 %v4996
    %v5077 = vunpack.c.l.b16 %v4997
    %v5078 = vunpack.c.h.b16 %v4997
    %v5079 = vunpack.c.l.b16 %v4998
    %v5080 = vunpack.c.h.b16 %v4998
    %v5081 = vunpack.c.l.b16 %v4999
    %v5082 = vunpack.c.h.b16 %v4999
    %v5083 = vunpack.c.l.b16 %v5000
    %v5084 = vunpack.c.h.b16 %v5000
    %v5085 = vunpack.c.l.b16 %v5001
    %v5086 = vunpack.c.h.b16 %v5001
    %v5087 = vunpack.c.l.b16 %v5002
    %v5088 = vunpack.c.h.b16 %v5002
    %v5089 = vunpack.c.l.b16 %v5003
    %v5090 = vunpack.c.h.b16 %v5003
    %v5091 = vunpack.c.l.b16 %v5004
    %v5092 = vunpack.c.h.b16 %v5004
    %v5093 = vunpack.c.l.b16 %v5005
    %v5094 = vunpack.c.h.b16 %v5005
    %v5095 = vunpack.c.l.b16 %v5006
    %v5096 = vunpack.c.h.b16 %v5006
    %v5097 = vunpack.c.l.b16 %v5007
    %v5098 = vunpack.c.h.b16 %v5007
    %v5099 = vunpack.c.l.b16 %v5008
    %v5100 = vunpack.c.h.b16 %v5008
    %v5101 = vunpack.c.l.b16 %v5009
    %v5102 = vunpack.c.h.b16 %v5009
    %v5103 = vunpack.c.l.b16 %v5010
    %v5104 = vunpack.c.h.b16 %v5010
    %v5105 = vunpack.c.l.b16 %v5011
    %v5106 = vunpack.c.h.b16 %v5011
    %v5107 = vunpack.c.l.b16 %v5012
    %v5108 = vunpack.c.h.b16 %v5012
    %v5109 = vpack.c.b16 %v5049, %v5045
    %v5110 = vpack.c.b16 %v5050, %v5046
    %v5111 = vpack.c.b16 %v5051, %v5047
    %v5112 = vpack.c.b16 %v5052, %v5048
    %v5113 = vpack.c.b16 %v5057, %v5053
    %v5114 = vpack.c.b16 %v5058, %v5054
    %v5115 = vpack.c.b16 %v5059, %v5055
    %v5116 = vpack.c.b16 %v5060, %v5056
    %v5117 = vpack.c.b16 %v5065, %v5061
    %v5118 = vpack.c.b16 %v5066, %v5062
    %v5119 = vpack.c.b16 %v5067, %v5063
    %v5120 = vpack.c.b16 %v5068, %v5064
    %v5121 = vpack.c.b16 %v5073, %v5069
    %v5122 = vpack.c.b16 %v5074, %v5070
    %v5123 = vpack.c.b16 %v5075, %v5071
    %v5124 = vpack.c.b16 %v5076, %v5072
    %v5125 = vpack.c.b16 %v5081, %v5077
    %v5126 = vpack.c.b16 %v5082, %v5078
    %v5127 = vpack.c.b16 %v5083, %v5079
    %v5128 = vpack.c.b16 %v5084, %v5080
    %v5129 = vpack.c.b16 %v5089, %v5085
    %v5130 = vpack.c.b16 %v5090, %v5086
    %v5131 = vpack.c.b16 %v5091, %v5087
    %v5132 = vpack.c.b16 %v5092, %v5088
    %v5133 = vpack.c.b16 %v5097, %v5093
    %v5134 = vpack.c.b16 %v5098, %v5094
    %v5135 = vpack.c.b16 %v5099, %v5095
    %v5136 = vpack.c.b16 %v5100, %v5096
    %v5137 = vpack.c.b16 %v5105, %v5101
    %v5138 = vpack.c.b16 %v5106, %v5102
    %v5139 = vpack.c.b16 %v5107, %v5103
    %v5140 = vpack.c.b16 %v5108, %v5104
    %5173 = vmatprep.subr.bf16.mxu0 %v5110
    %5174 = vmatpush1.bf16.msra.mxu0 %v5109
    %5175 = vmatprep.subr.bf16.mxu0 %v5114
    %5176 = vmatpush1.bf16.msra.mxu0 %v5113
    %5177 = vmatprep.subr.bf16.mxu0 %v5118
    %5178 = vmatpush1.bf16.msra.mxu0 %v5117
    %5179 = vmatprep.subr.bf16.mxu0 %v5122
    %5180 = vmatpush1.bf16.msra.mxu0 %v5121
    %5181 = vmatprep.subr.bf16.mxu0 %v5126
    %5182 = vmatpush1.bf16.msra.mxu0 %v5125
    %5183 = vmatprep.subr.bf16.mxu0 %v5130
    %5184 = vmatpush1.bf16.msra.mxu0 %v5129
    %5185 = vmatprep.subr.bf16.mxu0 %v5134
    %5186 = vmatpush1.bf16.msra.mxu0 %v5133
    %5187 = vmatprep.subr.bf16.mxu0 %v5138
    %5188 = vmatpush1.bf16.msra.mxu0 %v5137
    %5189 = vmatprep.subr.bf16.mxu0 0
    %5190 = vmatpush1.bf16.msra.mxu0 0
    %5191 = vmatprep.subr.bf16.mxu0 0
    %5192 = vmatpush1.bf16.msra.mxu0 0
    %5193 = vmatprep.subr.bf16.mxu0 0
    %5194 = vmatpush1.bf16.msra.mxu0 0
    %5195 = vmatprep.subr.bf16.mxu0 0
    %5196 = vmatpush1.bf16.msra.mxu0 0
    %5197 = vmatprep.subr.bf16.mxu0 0
    %5198 = vmatpush1.bf16.msra.mxu0 0
    %5199 = vmatprep.subr.bf16.mxu0 0
    %5200 = vmatpush1.bf16.msra.mxu0 0
    %5201 = vmatprep.subr.bf16.mxu0 0
    %5202 = vmatpush1.bf16.msra.mxu0 0
    %5203 = vmatprep.subr.bf16.mxu0 0
    %5204 = vmatpush1.bf16.msra.mxu0 0
    %5205 = vmatprep.mubr.bf16.mxu0 0
    %5206 = vmatmul.mubr.bf16.gmra.mrb[0].mxu0 %v4470
    %v5207 = vpop.f32.mrb[0].mxu0
    %v5208 = vadd.f32 0.0, %v5207
    %v5209 = vpop.f32.mrb[0].mxu0
    %v5210 = vadd.f32 0.0, %v5209
    %v5211 = vpop.f32.mrb[0].mxu0
    %v5212 = vpop.f32.mrb[0].mxu0
    %5213 = vdwg.mxu0
    %5214 = vmatprep.subr.bf16.mxu0 %v5112
    %5215 = vmatpush1.bf16.msra.mxu0 %v5111
    %5216 = vmatprep.subr.bf16.mxu0 %v5116
    %5217 = vmatpush1.bf16.msra.mxu0 %v5115
    %5218 = vmatprep.subr.bf16.mxu0 %v5120
    %5219 = vmatpush1.bf16.msra.mxu0 %v5119
    %5220 = vmatprep.subr.bf16.mxu0 %v5124
    %5221 = vmatpush1.bf16.msra.mxu0 %v5123
    %5222 = vmatprep.subr.bf16.mxu0 %v5128
    %5223 = vmatpush1.bf16.msra.mxu0 %v5127
    %5224 = vmatprep.subr.bf16.mxu0 %v5132
    %5225 = vmatpush1.bf16.msra.mxu0 %v5131
    %5226 = vmatprep.subr.bf16.mxu0 %v5136
    %5227 = vmatpush1.bf16.msra.mxu0 %v5135
    %5228 = vmatprep.subr.bf16.mxu0 %v5140
    %5229 = vmatpush1.bf16.msra.mxu0 %v5139
    %5230 = vmatprep.subr.bf16.mxu0 0
    %5231 = vmatpush1.bf16.msra.mxu0 0
    %5232 = vmatprep.subr.bf16.mxu0 0
    %5233 = vmatpush1.bf16.msra.mxu0 0
    %5234 = vmatprep.subr.bf16.mxu0 0
    %5235 = vmatpush1.bf16.msra.mxu0 0
    %5236 = vmatprep.subr.bf16.mxu0 0
    %5237 = vmatpush1.bf16.msra.mxu0 0
    %5238 = vmatprep.subr.bf16.mxu0 0
    %5239 = vmatpush1.bf16.msra.mxu0 0
    %5240 = vmatprep.subr.bf16.mxu0 0
    %5241 = vmatpush1.bf16.msra.mxu0 0
    %5242 = vmatprep.subr.bf16.mxu0 0
    %5243 = vmatpush1.bf16.msra.mxu0 0
    %5244 = vmatprep.subr.bf16.mxu0 0
    %5245 = vmatpush1.bf16.msra.mxu0 0
    %5246 = vmatprep.mubr.bf16.mxu0 0
    %5247 = vmatmul.mubr.bf16.gmra.mrb[0].mxu0 %v4470
    %v5248 = vpop.f32.mrb[0].mxu0
    %v5249 = vadd.f32 0.0, %v5248
    %v5250 = vpop.f32.mrb[0].mxu0
    %v5251 = vadd.f32 0.0, %v5250
    %v5252 = vpop.f32.mrb[0].mxu0
    %v5253 = vpop.f32.mrb[0].mxu0
    %5254 = vdwg.mxu0
    %v5255 = vadd.f32 %v4977, %v5208
    %v5256 = vadd.f32 %v4978, %v5210
    %v5257 = vadd.f32 %v4979, %v5249
    %v5258 = vadd.f32 %v4980, %v5251
    %v5259 = vmul.f32 %v5255, 0.5
    %v5260 = vtanh.pop %v5259
    %v5261 = vmul.f32 %v5260, 0.5
    %v5262 = vadd.f32 %v5261, 0.5
    %v5263 = vmul.f32 %v5256, 0.5
    %v5264 = vtanh.pop %v5263
    %v5265 = vmul.f32 %v5264, 0.5
    %v5266 = vadd.f32 %v5265, 0.5
    %v5267 = vtanh.pop %v5257
    %v5268 = vmul.f32 %v5258, 0.5
    %v5269 = vtanh.pop %v5268
    %v5270 = vmul.f32 %v5269, 0.5
    %v5271 = vadd.f32 %v5270, 0.5
    %v5272 = vmul.f32 %v5266, %v4467
    %v5273 = vmul.f32 %v5262, %v5267
    %v5274 = vadd.f32 %v5272, %v5273
    %v5275 = vtanh.pop %v5274
    %v5276 = vmul.f32 %v5271, %v5275
    %v5277 = vpack.c.bf16 %v5276, %v5276
    %5278 = vst [vmem:[#allocation2] sm:$0xf] %v5277
    %v5279 = vpack.c.bf16 %v4965, %v4965
    %5280 = vst [vmem:[#allocation2 + $0x4] sm:$0xf] %v5279
    %v5281 = vld [vmem:[#allocation2] sm:$0xff]
    %v5282 = vld [vmem:[#allocation6] sm:$0xff]
    %v5283 = vld [vmem:[#allocation6 + $0x8] sm:$0xff]
    %v5284 = vld [vmem:[#allocation6 + $0x10] sm:$0xff]
    %v5285 = vld [vmem:[#allocation6 + $0x18] sm:$0xff]
    %v5286 = vld [vmem:[#allocation6 + $0x20] sm:$0xff]
    %v5287 = vld [vmem:[#allocation6 + $0x28] sm:$0xff]
    %v5288 = vld [vmem:[#allocation6 + $0x30] sm:$0xff]
    %v5289 = vld [vmem:[#allocation6 + $0x38] sm:$0xff]
    %v5290 = vld [vmem:[#allocation6 + $0x40] sm:$0xff]
    %v5291 = vld [vmem:[#allocation6 + $0x48] sm:$0xff]
    %v5292 = vld [vmem:[#allocation6 + $0x50] sm:$0xff]
    %v5293 = vld [vmem:[#allocation6 + $0x58] sm:$0xff]
    %v5294 = vld [vmem:[#allocation6 + $0x60] sm:$0xff]
    %v5295 = vld [vmem:[#allocation6 + $0x68] sm:$0xff]
    %v5296 = vld [vmem:[#allocation6 + $0x70] sm:$0xff]
    %v5297 = vld [vmem:[#allocation6 + $0x78] sm:$0xff]
    %v5298 = vld [vmem:[#allocation6 + $0x80] sm:$0xff]
    %v5299 = vld [vmem:[#allocation6 + $0x88] sm:$0xff]
    %v5300 = vld [vmem:[#allocation6 + $0x90] sm:$0xff]
    %v5301 = vld [vmem:[#allocation6 + $0x98] sm:$0xff]
    %v5302 = vld [vmem:[#allocation6 + $0xa0] sm:$0xff]
    %v5303 = vld [vmem:[#allocation6 + $0xa8] sm:$0xff]
    %v5304 = vld [vmem:[#allocation6 + $0xb0] sm:$0xff]
    %v5305 = vld [vmem:[#allocation6 + $0xb8] sm:$0xff]
    %v5306 = vld [vmem:[#allocation6 + $0xc0] sm:$0xff]
    %v5307 = vld [vmem:[#allocation6 + $0xc8] sm:$0xff]
    %v5308 = vld [vmem:[#allocation6 + $0xd0] sm:$0xff]
    %v5309 = vld [vmem:[#allocation6 + $0xd8] sm:$0xff]
    %v5310 = vld [vmem:[#allocation6 + $0xe0] sm:$0xff]
    %v5311 = vld [vmem:[#allocation6 + $0xe8] sm:$0xff]
    %v5312 = vld [vmem:[#allocation6 + $0xf0] sm:$0xff]
    %v5313 = vld [vmem:[#allocation6 + $0xf8] sm:$0xff]
    %v5314 = vld [vmem:[#allocation6 + $0x100] sm:$0xff]
    %v5315 = vld [vmem:[#allocation6 + $0x108] sm:$0xff]
    %v5316 = vld [vmem:[#allocation6 + $0x110] sm:$0xff]
    %v5317 = vld [vmem:[#allocation6 + $0x118] sm:$0xff]
    %v5318 = vld [vmem:[#allocation6 + $0x120] sm:$0xff]
    %v5319 = vld [vmem:[#allocation6 + $0x128] sm:$0xff]
    %v5320 = vld [vmem:[#allocation6 + $0x130] sm:$0xff]
    %v5321 = vld [vmem:[#allocation6 + $0x138] sm:$0xff]
    %v5322 = vld [vmem:[#allocation6 + $0x140] sm:$0xff]
    %v5323 = vld [vmem:[#allocation6 + $0x148] sm:$0xff]
    %v5324 = vld [vmem:[#allocation6 + $0x150] sm:$0xff]
    %v5325 = vld [vmem:[#allocation6 + $0x158] sm:$0xff]
    %v5326 = vld [vmem:[#allocation6 + $0x160] sm:$0xff]
    %v5327 = vld [vmem:[#allocation6 + $0x168] sm:$0xff]
    %v5328 = vld [vmem:[#allocation6 + $0x170] sm:$0xff]
    %v5329 = vld [vmem:[#allocation6 + $0x178] sm:$0xff]
    %v5330 = vld [vmem:[#allocation6 + $0x180] sm:$0xff]
    %v5331 = vld [vmem:[#allocation6 + $0x188] sm:$0xff]
    %v5332 = vld [vmem:[#allocation6 + $0x190] sm:$0xff]
    %v5333 = vld [vmem:[#allocation6 + $0x198] sm:$0xff]
    %v5334 = vld [vmem:[#allocation6 + $0x1a0] sm:$0xff]
    %v5335 = vld [vmem:[#allocation6 + $0x1a8] sm:$0xff]
    %v5336 = vld [vmem:[#allocation6 + $0x1b0] sm:$0xff]
    %v5337 = vld [vmem:[#allocation6 + $0x1b8] sm:$0xff]
    %v5338 = vld [vmem:[#allocation6 + $0x1c0] sm:$0xff]
    %v5339 = vld [vmem:[#allocation6 + $0x1c8] sm:$0xff]
    %v5340 = vld [vmem:[#allocation6 + $0x1d0] sm:$0xff]
    %v5341 = vld [vmem:[#allocation6 + $0x1d8] sm:$0xff]
    %v5342 = vld [vmem:[#allocation6 + $0x1e0] sm:$0xff]
    %v5343 = vld [vmem:[#allocation6 + $0x1e8] sm:$0xff]
    %v5344 = vld [vmem:[#allocation6 + $0x1f0] sm:$0xff]
    %v5345 = vld [vmem:[#allocation6 + $0x1f8] sm:$0xff]
    %v5347 = vunpack.c.l.b16 %v5281
    %v5348 = vunpack.c.h.b16 %v5281
    %v5349 = vpack.c.b16 %v5347, %v5347
    %v5350 = vpack.c.b16 %v5348, %v5348
    %v5417 = vunpack.c.l.b16 %v5282
    %v5418 = vunpack.c.h.b16 %v5282
    %v5419 = vunpack.c.l.b16 %v5283
    %v5420 = vunpack.c.h.b16 %v5283
    %v5421 = vunpack.c.l.b16 %v5284
    %v5422 = vunpack.c.h.b16 %v5284
    %v5423 = vunpack.c.l.b16 %v5285
    %v5424 = vunpack.c.h.b16 %v5285
    %v5425 = vunpack.c.l.b16 %v5286
    %v5426 = vunpack.c.h.b16 %v5286
    %v5427 = vunpack.c.l.b16 %v5287
    %v5428 = vunpack.c.h.b16 %v5287
    %v5429 = vunpack.c.l.b16 %v5288
    %v5430 = vunpack.c.h.b16 %v5288
    %v5431 = vunpack.c.l.b16 %v5289
    %v5432 = vunpack.c.h.b16 %v5289
    %v5433 = vunpack.c.l.b16 %v5290
    %v5434 = vunpack.c.h.b16 %v5290
    %v5435 = vunpack.c.l.b16 %v5291
    %v5436 = vunpack.c.h.b16 %v5291
    %v5437 = vunpack.c.l.b16 %v5292
    %v5438 = vunpack.c.h.b16 %v5292
    %v5439 = vunpack.c.l.b16 %v5293
    %v5440 = vunpack.c.h.b16 %v5293
    %v5441 = vunpack.c.l.b16 %v5294
    %v5442 = vunpack.c.h.b16 %v5294
    %v5443 = vunpack.c.l.b16 %v5295
    %v5444 = vunpack.c.h.b16 %v5295
    %v5445 = vunpack.c.l.b16 %v5296
    %v5446 = vunpack.c.h.b16 %v5296
    %v5447 = vunpack.c.l.b16 %v5297
    %v5448 = vunpack.c.h.b16 %v5297
    %v5449 = vunpack.c.l.b16 %v5298
    %v5450 = vunpack.c.h.b16 %v5298
    %v5451 = vunpack.c.l.b16 %v5299
    %v5452 = vunpack.c.h.b16 %v5299
    %v5453 = vunpack.c.l.b16 %v5300
    %v5454 = vunpack.c.h.b16 %v5300
    %v5455 = vunpack.c.l.b16 %v5301
    %v5456 = vunpack.c.h.b16 %v5301
    %v5457 = vunpack.c.l.b16 %v5302
    %v5458 = vunpack.c.h.b16 %v5302
    %v5459 = vunpack.c.l.b16 %v5303
    %v5460 = vunpack.c.h.b16 %v5303
    %v5461 = vunpack.c.l.b16 %v5304
    %v5462 = vunpack.c.h.b16 %v5304
    %v5463 = vunpack.c.l.b16 %v5305
    %v5464 = vunpack.c.h.b16 %v5305
    %v5465 = vunpack.c.l.b16 %v5306
    %v5466 = vunpack.c.h.b16 %v5306
    %v5467 = vunpack.c.l.b16 %v5307
    %v5468 = vunpack.c.h.b16 %v5307
    %v5469 = vunpack.c.l.b16 %v5308
    %v5470 = vunpack.c.h.b16 %v5308
    %v5471 = vunpack.c.l.b16 %v5309
    %v5472 = vunpack.c.h.b16 %v5309
    %v5473 = vunpack.c.l.b16 %v5310
    %v5474 = vunpack.c.h.b16 %v5310
    %v5475 = vunpack.c.l.b16 %v5311
    %v5476 = vunpack.c.h.b16 %v5311
    %v5477 = vunpack.c.l.b16 %v5312
    %v5478 = vunpack.c.h.b16 %v5312
    %v5479 = vunpack.c.l.b16 %v5313
    %v5480 = vunpack.c.h.b16 %v5313
    %v5481 = vunpack.c.l.b16 %v5314
    %v5482 = vunpack.c.h.b16 %v5314
    %v5483 = vunpack.c.l.b16 %v5315
    %v5484 = vunpack.c.h.b16 %v5315
    %v5485 = vunpack.c.l.b16 %v5316
    %v5486 = vunpack.c.h.b16 %v5316
    %v5487 = vunpack.c.l.b16 %v5317
    %v5488 = vunpack.c.h.b16 %v5317
    %v5489 = vunpack.c.l.b16 %v5318
    %v5490 = vunpack.c.h.b16 %v5318
    %v5491 = vunpack.c.l.b16 %v5319
    %v5492 = vunpack.c.h.b16 %v5319
    %v5493 = vunpack.c.l.b16 %v5320
    %v5494 = vunpack.c.h.b16 %v5320
    %v5495 = vunpack.c.l.b16 %v5321
    %v5496 = vunpack.c.h.b16 %v5321
    %v5497 = vunpack.c.l.b16 %v5322
    %v5498 = vunpack.c.h.b16 %v5322
    %v5499 = vunpack.c.l.b16 %v5323
    %v5500 = vunpack.c.h.b16 %v5323
    %v5501 = vunpack.c.l.b16 %v5324
    %v5502 = vunpack.c.h.b16 %v5324
    %v5503 = vunpack.c.l.b16 %v5325
    %v5504 = vunpack.c.h.b16 %v5325
    %v5505 = vunpack.c.l.b16 %v5326
    %v5506 = vunpack.c.h.b16 %v5326
    %v5507 = vunpack.c.l.b16 %v5327
    %v5508 = vunpack.c.h.b16 %v5327
    %v5509 = vunpack.c.l.b16 %v5328
    %v5510 = vunpack.c.h.b16 %v5328
    %v5511 = vunpack.c.l.b16 %v5329
    %v5512 = vunpack.c.h.b16 %v5329
    %v5513 = vunpack.c.l.b16 %v5330
    %v5514 = vunpack.c.h.b16 %v5330
    %v5515 = vunpack.c.l.b16 %v5331
    %v5516 = vunpack.c.h.b16 %v5331
    %v5517 = vunpack.c.l.b16 %v5332
    %v5518 = vunpack.c.h.b16 %v5332
    %v5519 = vunpack.c.l.b16 %v5333
    %v5520 = vunpack.c.h.b16 %v5333
    %v5521 = vunpack.c.l.b16 %v5334
    %v5522 = vunpack.c.h.b16 %v5334
    %v5523 = vunpack.c.l.b16 %v5335
    %v5524 = vunpack.c.h.b16 %v5335
    %v5525 = vunpack.c.l.b16 %v5336
    %v5526 = vunpack.c.h.b16 %v5336
    %v5527 = vunpack.c.l.b16 %v5337
    %v5528 = vunpack.c.h.b16 %v5337
    %v5529 = vunpack.c.l.b16 %v5338
    %v5530 = vunpack.c.h.b16 %v5338
    %v5531 = vunpack.c.l.b16 %v5339
    %v5532 = vunpack.c.h.b16 %v5339
    %v5533 = vunpack.c.l.b16 %v5340
    %v5534 = vunpack.c.h.b16 %v5340
    %v5535 = vunpack.c.l.b16 %v5341
    %v5536 = vunpack.c.h.b16 %v5341
    %v5537 = vunpack.c.l.b16 %v5342
    %v5538 = vunpack.c.h.b16 %v5342
    %v5539 = vunpack.c.l.b16 %v5343
    %v5540 = vunpack.c.h.b16 %v5343
    %v5541 = vunpack.c.l.b16 %v5344
    %v5542 = vunpack.c.h.b16 %v5344
    %v5543 = vunpack.c.l.b16 %v5345
    %v5544 = vunpack.c.h.b16 %v5345
    %v5545 = vpack.c.b16 %v5421, %v5417
    %v5546 = vpack.c.b16 %v5422, %v5418
    %v5547 = vpack.c.b16 %v5423, %v5419
    %v5548 = vpack.c.b16 %v5424, %v5420
    %v5549 = vpack.c.b16 %v5429, %v5425
    %v5550 = vpack.c.b16 %v5430, %v5426
    %v5551 = vpack.c.b16 %v5431, %v5427
    %v5552 = vpack.c.b16 %v5432, %v5428
    %v5553 = vpack.c.b16 %v5437, %v5433
    %v5554 = vpack.c.b16 %v5438, %v5434
    %v5555 = vpack.c.b16 %v5439, %v5435
    %v5556 = vpack.c.b16 %v5440, %v5436
    %v5557 = vpack.c.b16 %v5445, %v5441
    %v5558 = vpack.c.b16 %v5446, %v5442
    %v5559 = vpack.c.b16 %v5447, %v5443
    %v5560 = vpack.c.b16 %v5448, %v5444
    %v5561 = vpack.c.b16 %v5453, %v5449
    %v5562 = vpack.c.b16 %v5454, %v5450
    %v5563 = vpack.c.b16 %v5455, %v5451
    %v5564 = vpack.c.b16 %v5456, %v5452
    %v5565 = vpack.c.b16 %v5461, %v5457
    %v5566 = vpack.c.b16 %v5462, %v5458
    %v5567 = vpack.c.b16 %v5463, %v5459
    %v5568 = vpack.c.b16 %v5464, %v5460
    %v5569 = vpack.c.b16 %v5469, %v5465
    %v5570 = vpack.c.b16 %v5470, %v5466
    %v5571 = vpack.c.b16 %v5471, %v5467
    %v5572 = vpack.c.b16 %v5472, %v5468
    %v5573 = vpack.c.b16 %v5477, %v5473
    %v5574 = vpack.c.b16 %v5478, %v5474
    %v5575 = vpack.c.b16 %v5479, %v5475
    %v5576 = vpack.c.b16 %v5480, %v5476
    %v5577 = vpack.c.b16 %v5485, %v5481
    %v5578 = vpack.c.b16 %v5486, %v5482
    %v5579 = vpack.c.b16 %v5487, %v5483
    %v5580 = vpack.c.b16 %v5488, %v5484
    %v5581 = vpack.c.b16 %v5493, %v5489
    %v5582 = vpack.c.b16 %v5494, %v5490
    %v5583 = vpack.c.b16 %v5495, %v5491
    %v5584 = vpack.c.b16 %v5496, %v5492
    %v5585 = vpack.c.b16 %v5501, %v5497
    %v5586 = vpack.c.b16 %v5502, %v5498
    %v5587 = vpack.c.b16 %v5503, %v5499
    %v5588 = vpack.c.b16 %v5504, %v5500
    %v5589 = vpack.c.b16 %v5509, %v5505
    %v5590 = vpack.c.b16 %v5510, %v5506
    %v5591 = vpack.c.b16 %v5511, %v5507
    %v5592 = vpack.c.b16 %v5512, %v5508
    %v5593 = vpack.c.b16 %v5517, %v5513
    %v5594 = vpack.c.b16 %v5518, %v5514
    %v5595 = vpack.c.b16 %v5519, %v5515
    %v5596 = vpack.c.b16 %v5520, %v5516
    %v5597 = vpack.c.b16 %v5525, %v5521
    %v5598 = vpack.c.b16 %v5526, %v5522
    %v5599 = vpack.c.b16 %v5527, %v5523
    %v5600 = vpack.c.b16 %v5528, %v5524
    %v5601 = vpack.c.b16 %v5533, %v5529
    %v5602 = vpack.c.b16 %v5534, %v5530
    %v5603 = vpack.c.b16 %v5535, %v5531
    %v5604 = vpack.c.b16 %v5536, %v5532
    %v5605 = vpack.c.b16 %v5541, %v5537
    %v5606 = vpack.c.b16 %v5542, %v5538
    %v5607 = vpack.c.b16 %v5543, %v5539
    %v5608 = vpack.c.b16 %v5544, %v5540
    %5673 = vmatprep.subr.bf16.mxu0 %v5546
    %5674 = vmatpush1.bf16.msra.mxu0 %v5545
    %5675 = vmatprep.subr.bf16.mxu0 %v5550
    %5676 = vmatpush1.bf16.msra.mxu0 %v5549
    %5677 = vmatprep.subr.bf16.mxu0 %v5554
    %5678 = vmatpush1.bf16.msra.mxu0 %v5553
    %5679 = vmatprep.subr.bf16.mxu0 %v5558
    %5680 = vmatpush1.bf16.msra.mxu0 %v5557
    %5681 = vmatprep.subr.bf16.mxu0 %v5562
    %5682 = vmatpush1.bf16.msra.mxu0 %v5561
    %5683 = vmatprep.subr.bf16.mxu0 %v5566
    %5684 = vmatpush1.bf16.msra.mxu0 %v5565
    %5685 = vmatprep.subr.bf16.mxu0 %v5570
    %5686 = vmatpush1.bf16.msra.mxu0 %v5569
    %5687 = vmatprep.subr.bf16.mxu0 %v5574
    %5688 = vmatpush1.bf16.msra.mxu0 %v5573
    %5689 = vmatprep.subr.bf16.mxu0 %v5578
    %5690 = vmatpush1.bf16.msra.mxu0 %v5577
    %5691 = vmatprep.subr.bf16.mxu0 %v5582
    %5692 = vmatpush1.bf16.msra.mxu0 %v5581
    %5693 = vmatprep.subr.bf16.mxu0 %v5586
    %5694 = vmatpush1.bf16.msra.mxu0 %v5585
    %5695 = vmatprep.subr.bf16.mxu0 %v5590
    %5696 = vmatpush1.bf16.msra.mxu0 %v5589
    %5697 = vmatprep.subr.bf16.mxu0 %v5594
    %5698 = vmatpush1.bf16.msra.mxu0 %v5593
    %5699 = vmatprep.subr.bf16.mxu0 %v5598
    %5700 = vmatpush1.bf16.msra.mxu0 %v5597
    %5701 = vmatprep.subr.bf16.mxu0 %v5602
    %5702 = vmatpush1.bf16.msra.mxu0 %v5601
    %5703 = vmatprep.subr.bf16.mxu0 %v5606
    %5704 = vmatpush1.bf16.msra.mxu0 %v5605
    %5705 = vmatprep.mubr.bf16.mxu0 %v5350
    %5706 = vmatmul.mubr.bf16.gmra.mrb[0].mxu0 %v5349
    %v5707 = vpop.f32.mrb[0].mxu0
    %v5708 = vadd.f32 %v109, %v5707
    %v5709 = vpop.f32.mrb[0].mxu0
    %v5710 = vadd.f32 %v113, %v5709
    %v5711 = vpop.f32.mrb[0].mxu0
    %v5712 = vpop.f32.mrb[0].mxu0
    %5713 = vdwg.mxu0
    %5714 = vmatprep.subr.bf16.mxu0 %v5548
    %5715 = vmatpush1.bf16.msra.mxu0 %v5547
    %5716 = vmatprep.subr.bf16.mxu0 %v5552
    %5717 = vmatpush1.bf16.msra.mxu0 %v5551
    %5718 = vmatprep.subr.bf16.mxu0 %v5556
    %5719 = vmatpush1.bf16.msra.mxu0 %v5555
    %5720 = vmatprep.subr.bf16.mxu0 %v5560
    %5721 = vmatpush1.bf16.msra.mxu0 %v5559
    %5722 = vmatprep.subr.bf16.mxu0 %v5564
    %5723 = vmatpush1.bf16.msra.mxu0 %v5563
    %5724 = vmatprep.subr.bf16.mxu0 %v5568
    %5725 = vmatpush1.bf16.msra.mxu0 %v5567
    %5726 = vmatprep.subr.bf16.mxu0 %v5572
    %5727 = vmatpush1.bf16.msra.mxu0 %v5571
    %5728 = vmatprep.subr.bf16.mxu0 %v5576
    %5729 = vmatpush1.bf16.msra.mxu0 %v5575
    %5730 = vmatprep.subr.bf16.mxu0 %v5580
    %5731 = vmatpush1.bf16.msra.mxu0 %v5579
    %5732 = vmatprep.subr.bf16.mxu0 %v5584
    %5733 = vmatpush1.bf16.msra.mxu0 %v5583
    %5734 = vmatprep.subr.bf16.mxu0 %v5588
    %5735 = vmatpush1.bf16.msra.mxu0 %v5587
    %5736 = vmatprep.subr.bf16.mxu0 %v5592
    %5737 = vmatpush1.bf16.msra.mxu0 %v5591
    %5738 = vmatprep.subr.bf16.mxu0 %v5596
    %5739 = vmatpush1.bf16.msra.mxu0 %v5595
    %5740 = vmatprep.subr.bf16.mxu0 %v5600
    %5741 = vmatpush1.bf16.msra.mxu0 %v5599
    %5742 = vmatprep.subr.bf16.mxu0 %v5604
    %5743 = vmatpush1.bf16.msra.mxu0 %v5603
    %5744 = vmatprep.subr.bf16.mxu0 %v5608
    %5745 = vmatpush1.bf16.msra.mxu0 %v5607
    %5746 = vmatprep.mubr.bf16.mxu0 %v5350
    %5747 = vmatmul.mubr.bf16.gmra.mrb[0].mxu0 %v5349
    %v5748 = vpop.f32.mrb[0].mxu0
    %v5749 = vadd.f32 %v117, %v5748
    %v5750 = vpop.f32.mrb[0].mxu0
    %v5751 = vadd.f32 %v121, %v5750
    %v5752 = vpop.f32.mrb[0].mxu0
    %v5753 = vpop.f32.mrb[0].mxu0
    %5754 = vdwg.mxu0
    %v5755 = vmul.f32 %v5708, 0.5
    %v5756 = vtanh.pop %v5755
    %v5757 = vmul.f32 %v5756, 0.5
    %v5758 = vadd.f32 %v5757, 0.5
    %v5759 = vmul.f32 %v5710, 0.5
    %v5760 = vtanh.pop %v5759
    %v5761 = vmul.f32 %v5760, 0.5
    %v5762 = vadd.f32 %v5761, 0.5
    %v5763 = vtanh.pop %v5749
    %v5764 = vmul.f32 %v5751, 0.5
    %v5765 = vtanh.pop %v5764
    %v5766 = vmul.f32 %v5765, 0.5
    %v5767 = vadd.f32 %v5766, 0.5
    %v5768 = vmul.f32 %v5762, %v4963
    %v5769 = vmul.f32 %v5758, %v5763
    %v5770 = vadd.f32 %v5768, %v5769
    %v5771 = vtanh.pop %v5770
    %v5772 = vmul.f32 %v5767, %v5771
    %s5773 = scalar_lea.vmem %s0, 56
    %v5774 = vld [vmem:[%s5773] sm:$0xff]
    %5776 = vset.pattern.permute.xlu0 0
    %5777 = vperm.xlu0 %5776, %v5774
    %v5778 = vpop.permute.xlu0 %5777
    %v5780 = vmul.f32 %v5778, %v65
    %v5781 = vmul.f32 %v5778, %v69
    %v5782 = vmul.f32 %v5778, %v73
    %v5783 = vmul.f32 %v5778, %v77
    %v5784 = vadd.f32 %v5780, %v87
    %v5785 = vadd.f32 %v5781, %v91
    %v5786 = vadd.f32 %v5782, %v95
    %v5787 = vadd.f32 %v5783, %v99
    %v5788 = vld [vmem:[#allocation4] sm:$0xff]
    %v5789 = vld [vmem:[#allocation4 + $0x8] sm:$0xff]
    %v5790 = vld [vmem:[#allocation4 + $0x10] sm:$0xff]
    %v5791 = vld [vmem:[#allocation4 + $0x18] sm:$0xff]
    %v5792 = vld [vmem:[#allocation4 + $0x20] sm:$0xff]
    %v5793 = vld [vmem:[#allocation4 + $0x28] sm:$0xff]
    %v5794 = vld [vmem:[#allocation4 + $0x30] sm:$0xff]
    %v5795 = vld [vmem:[#allocation4 + $0x38] sm:$0xff]
    %v5796 = vld [vmem:[#allocation4 + $0x40] sm:$0xff]
    %v5797 = vld [vmem:[#allocation4 + $0x48] sm:$0xff]
    %v5798 = vld [vmem:[#allocation4 + $0x50] sm:$0xff]
    %v5799 = vld [vmem:[#allocation4 + $0x58] sm:$0xff]
    %v5800 = vld [vmem:[#allocation4 + $0x60] sm:$0xff]
    %v5801 = vld [vmem:[#allocation4 + $0x68] sm:$0xff]
    %v5802 = vld [vmem:[#allocation4 + $0x70] sm:$0xff]
    %v5803 = vld [vmem:[#allocation4 + $0x78] sm:$0xff]
    %v5804 = vld [vmem:[#allocation4 + $0x80] sm:$0xff]
    %v5805 = vld [vmem:[#allocation4 + $0x88] sm:$0xff]
    %v5806 = vld [vmem:[#allocation4 + $0x90] sm:$0xff]
    %v5807 = vld [vmem:[#allocation4 + $0x98] sm:$0xff]
    %v5808 = vld [vmem:[#allocation4 + $0xa0] sm:$0xff]
    %v5809 = vld [vmem:[#allocation4 + $0xa8] sm:$0xff]
    %v5810 = vld [vmem:[#allocation4 + $0xb0] sm:$0xff]
    %v5811 = vld [vmem:[#allocation4 + $0xb8] sm:$0xff]
    %v5812 = vld [vmem:[#allocation4 + $0xc0] sm:$0xff]
    %v5813 = vld [vmem:[#allocation4 + $0xc8] sm:$0xff]
    %v5814 = vld [vmem:[#allocation4 + $0xd0] sm:$0xff]
    %v5815 = vld [vmem:[#allocation4 + $0xd8] sm:$0xff]
    %v5816 = vld [vmem:[#allocation4 + $0xe0] sm:$0xff]
    %v5817 = vld [vmem:[#allocation4 + $0xe8] sm:$0xff]
    %v5818 = vld [vmem:[#allocation4 + $0xf0] sm:$0xff]
    %v5819 = vld [vmem:[#allocation4 + $0xf8] sm:$0xff]
    %v5852 = vunpack.c.l.b16 %v5788
    %v5853 = vunpack.c.h.b16 %v5788
    %v5854 = vunpack.c.l.b16 %v5789
    %v5855 = vunpack.c.h.b16 %v5789
    %v5856 = vunpack.c.l.b16 %v5790
    %v5857 = vunpack.c.h.b16 %v5790
    %v5858 = vunpack.c.l.b16 %v5791
    %v5859 = vunpack.c.h.b16 %v5791
    %v5860 = vunpack.c.l.b16 %v5792
    %v5861 = vunpack.c.h.b16 %v5792
    %v5862 = vunpack.c.l.b16 %v5793
    %v5863 = vunpack.c.h.b16 %v5793
    %v5864 = vunpack.c.l.b16 %v5794
    %v5865 = vunpack.c.h.b16 %v5794
    %v5866 = vunpack.c.l.b16 %v5795
    %v5867 = vunpack.c.h.b16 %v5795
    %v5868 = vunpack.c.l.b16 %v5796
    %v5869 = vunpack.c.h.b16 %v5796
    %v5870 = vunpack.c.l.b16 %v5797
    %v5871 = vunpack.c.h.b16 %v5797
    %v5872 = vunpack.c.l.b16 %v5798
    %v5873 = vunpack.c.h.b16 %v5798
    %v5874 = vunpack.c.l.b16 %v5799
    %v5875 = vunpack.c.h.b16 %v5799
    %v5876 = vunpack.c.l.b16 %v5800
    %v5877 = vunpack.c.h.b16 %v5800
    %v5878 = vunpack.c.l.b16 %v5801
    %v5879 = vunpack.c.h.b16 %v5801
    %v5880 = vunpack.c.l.b16 %v5802
    %v5881 = vunpack.c.h.b16 %v5802
    %v5882 = vunpack.c.l.b16 %v5803
    %v5883 = vunpack.c.h.b16 %v5803
    %v5884 = vunpack.c.l.b16 %v5804
    %v5885 = vunpack.c.h.b16 %v5804
    %v5886 = vunpack.c.l.b16 %v5805
    %v5887 = vunpack.c.h.b16 %v5805
    %v5888 = vunpack.c.l.b16 %v5806
    %v5889 = vunpack.c.h.b16 %v5806
    %v5890 = vunpack.c.l.b16 %v5807
    %v5891 = vunpack.c.h.b16 %v5807
    %v5892 = vunpack.c.l.b16 %v5808
    %v5893 = vunpack.c.h.b16 %v5808
    %v5894 = vunpack.c.l.b16 %v5809
    %v5895 = vunpack.c.h.b16 %v5809
    %v5896 = vunpack.c.l.b16 %v5810
    %v5897 = vunpack.c.h.b16 %v5810
    %v5898 = vunpack.c.l.b16 %v5811
    %v5899 = vunpack.c.h.b16 %v5811
    %v5900 = vunpack.c.l.b16 %v5812
    %v5901 = vunpack.c.h.b16 %v5812
    %v5902 = vunpack.c.l.b16 %v5813
    %v5903 = vunpack.c.h.b16 %v5813
    %v5904 = vunpack.c.l.b16 %v5814
    %v5905 = vunpack.c.h.b16 %v5814
    %v5906 = vunpack.c.l.b16 %v5815
    %v5907 = vunpack.c.h.b16 %v5815
    %v5908 = vunpack.c.l.b16 %v5816
    %v5909 = vunpack.c.h.b16 %v5816
    %v5910 = vunpack.c.l.b16 %v5817
    %v5911 = vunpack.c.h.b16 %v5817
    %v5912 = vunpack.c.l.b16 %v5818
    %v5913 = vunpack.c.h.b16 %v5818
    %v5914 = vunpack.c.l.b16 %v5819
    %v5915 = vunpack.c.h.b16 %v5819
    %v5916 = vpack.c.b16 %v5856, %v5852
    %v5917 = vpack.c.b16 %v5857, %v5853
    %v5918 = vpack.c.b16 %v5858, %v5854
    %v5919 = vpack.c.b16 %v5859, %v5855
    %v5920 = vpack.c.b16 %v5864, %v5860
    %v5921 = vpack.c.b16 %v5865, %v5861
    %v5922 = vpack.c.b16 %v5866, %v5862
    %v5923 = vpack.c.b16 %v5867, %v5863
    %v5924 = vpack.c.b16 %v5872, %v5868
    %v5925 = vpack.c.b16 %v5873, %v5869
    %v5926 = vpack.c.b16 %v5874, %v5870
    %v5927 = vpack.c.b16 %v5875, %v5871
    %v5928 = vpack.c.b16 %v5880, %v5876
    %v5929 = vpack.c.b16 %v5881, %v5877
    %v5930 = vpack.c.b16 %v5882, %v5878
    %v5931 = vpack.c.b16 %v5883, %v5879
    %v5932 = vpack.c.b16 %v5888, %v5884
    %v5933 = vpack.c.b16 %v5889, %v5885
    %v5934 = vpack.c.b16 %v5890, %v5886
    %v5935 = vpack.c.b16 %v5891, %v5887
    %v5936 = vpack.c.b16 %v5896, %v5892
    %v5937 = vpack.c.b16 %v5897, %v5893
    %v5938 = vpack.c.b16 %v5898, %v5894
    %v5939 = vpack.c.b16 %v5899, %v5895
    %v5940 = vpack.c.b16 %v5904, %v5900
    %v5941 = vpack.c.b16 %v5905, %v5901
    %v5942 = vpack.c.b16 %v5906, %v5902
    %v5943 = vpack.c.b16 %v5907, %v5903
    %v5944 = vpack.c.b16 %v5912, %v5908
    %v5945 = vpack.c.b16 %v5913, %v5909
    %v5946 = vpack.c.b16 %v5914, %v5910
    %v5947 = vpack.c.b16 %v5915, %v5911
    %5980 = vmatprep.subr.bf16.mxu0 %v5917
    %5981 = vmatpush1.bf16.msra.mxu0 %v5916
    %5982 = vmatprep.subr.bf16.mxu0 %v5921
    %5983 = vmatpush1.bf16.msra.mxu0 %v5920
    %5984 = vmatprep.subr.bf16.mxu0 %v5925
    %5985 = vmatpush1.bf16.msra.mxu0 %v5924
    %5986 = vmatprep.subr.bf16.mxu0 %v5929
    %5987 = vmatpush1.bf16.msra.mxu0 %v5928
    %5988 = vmatprep.subr.bf16.mxu0 %v5933
    %5989 = vmatpush1.bf16.msra.mxu0 %v5932
    %5990 = vmatprep.subr.bf16.mxu0 %v5937
    %5991 = vmatpush1.bf16.msra.mxu0 %v5936
    %5992 = vmatprep.subr.bf16.mxu0 %v5941
    %5993 = vmatpush1.bf16.msra.mxu0 %v5940
    %5994 = vmatprep.subr.bf16.mxu0 %v5945
    %5995 = vmatpush1.bf16.msra.mxu0 %v5944
    %5996 = vmatprep.subr.bf16.mxu0 0
    %5997 = vmatpush1.bf16.msra.mxu0 0
    %5998 = vmatprep.subr.bf16.mxu0 0
    %5999 = vmatpush1.bf16.msra.mxu0 0
    %6000 = vmatprep.subr.bf16.mxu0 0
    %6001 = vmatpush1.bf16.msra.mxu0 0
    %6002 = vmatprep.subr.bf16.mxu0 0
    %6003 = vmatpush1.bf16.msra.mxu0 0
    %6004 = vmatprep.subr.bf16.mxu0 0
    %6005 = vmatpush1.bf16.msra.mxu0 0
    %6006 = vmatprep.subr.bf16.mxu0 0
    %6007 = vmatpush1.bf16.msra.mxu0 0
    %6008 = vmatprep.subr.bf16.mxu0 0
    %6009 = vmatpush1.bf16.msra.mxu0 0
    %6010 = vmatprep.subr.bf16.mxu0 0
    %6011 = vmatpush1.bf16.msra.mxu0 0
    %6012 = vmatprep.mubr.bf16.mxu0 0
    %6013 = vmatmul.mubr.bf16.gmra.mrb[0].mxu0 %v5277
    %v6014 = vpop.f32.mrb[0].mxu0
    %v6015 = vadd.f32 0.0, %v6014
    %v6016 = vpop.f32.mrb[0].mxu0
    %v6017 = vadd.f32 0.0, %v6016
    %v6018 = vpop.f32.mrb[0].mxu0
    %v6019 = vpop.f32.mrb[0].mxu0
    %6020 = vdwg.mxu0
    %6021 = vmatprep.subr.bf16.mxu0 %v5919
    %6022 = vmatpush1.bf16.msra.mxu0 %v5918
    %6023 = vmatprep.subr.bf16.mxu0 %v5923
    %6024 = vmatpush1.bf16.msra.mxu0 %v5922
    %6025 = vmatprep.subr.bf16.mxu0 %v5927
    %6026 = vmatpush1.bf16.msra.mxu0 %v5926
    %6027 = vmatprep.subr.bf16.mxu0 %v5931
    %6028 = vmatpush1.bf16.msra.mxu0 %v5930
    %6029 = vmatprep.subr.bf16.mxu0 %v5935
    %6030 = vmatpush1.bf16.msra.mxu0 %v5934
    %6031 = vmatprep.subr.bf16.mxu0 %v5939
    %6032 = vmatpush1.bf16.msra.mxu0 %v5938
    %6033 = vmatprep.subr.bf16.mxu0 %v5943
    %6034 = vmatpush1.bf16.msra.mxu0 %v5942
    %6035 = vmatprep.subr.bf16.mxu0 %v5947
    %6036 = vmatpush1.bf16.msra.mxu0 %v5946
    %6037 = vmatprep.subr.bf16.mxu0 0
    %6038 = vmatpush1.bf16.msra.mxu0 0
    %6039 = vmatprep.subr.bf16.mxu0 0
    %6040 = vmatpush1.bf16.msra.mxu0 0
    %6041 = vmatprep.subr.bf16.mxu0 0
    %6042 = vmatpush1.bf16.msra.mxu0 0
    %6043 = vmatprep.subr.bf16.mxu0 0
    %6044 = vmatpush1.bf16.msra.mxu0 0
    %6045 = vmatprep.subr.bf16.mxu0 0
    %6046 = vmatpush1.bf16.msra.mxu0 0
    %6047 = vmatprep.subr.bf16.mxu0 0
    %6048 = vmatpush1.bf16.msra.mxu0 0
    %6049 = vmatprep.subr.bf16.mxu0 0
    %6050 = vmatpush1.bf16.msra.mxu0 0
    %6051 = vmatprep.subr.bf16.mxu0 0
    %6052 = vmatpush1.bf16.msra.mxu0 0
    %6053 = vmatprep.mubr.bf16.mxu0 0
    %6054 = vmatmul.mubr.bf16.gmra.mrb[0].mxu0 %v5277
    %v6055 = vpop.f32.mrb[0].mxu0
    %v6056 = vadd.f32 0.0, %v6055
    %v6057 = vpop.f32.mrb[0].mxu0
    %v6058 = vadd.f32 0.0, %v6057
    %v6059 = vpop.f32.mrb[0].mxu0
    %v6060 = vpop.f32.mrb[0].mxu0
    %6061 = vdwg.mxu0
    %v6062 = vadd.f32 %v5784, %v6015
    %v6063 = vadd.f32 %v5785, %v6017
    %v6064 = vadd.f32 %v5786, %v6056
    %v6065 = vadd.f32 %v5787, %v6058
    %v6066 = vmul.f32 %v6062, 0.5
    %v6067 = vtanh.pop %v6066
    %v6068 = vmul.f32 %v6067, 0.5
    %v6069 = vadd.f32 %v6068, 0.5
    %v6070 = vmul.f32 %v6063, 0.5
    %v6071 = vtanh.pop %v6070
    %v6072 = vmul.f32 %v6071, 0.5
    %v6073 = vadd.f32 %v6072, 0.5
    %v6074 = vtanh.pop %v6064
    %v6075 = vmul.f32 %v6065, 0.5
    %v6076 = vtanh.pop %v6075
    %v6077 = vmul.f32 %v6076, 0.5
    %v6078 = vadd.f32 %v6077, 0.5
    %v6079 = vmul.f32 %v6073, %v5274
    %v6080 = vmul.f32 %v6069, %v6074
    %v6081 = vadd.f32 %v6079, %v6080
    %v6082 = vtanh.pop %v6081
    %v6083 = vmul.f32 %v6078, %v6082
    %v6084 = vpack.c.bf16 %v6083, %v6083
    %6085 = vst [vmem:[#allocation2] sm:$0xf] %v6084
    %v6086 = vpack.c.bf16 %v5772, %v5772
    %6087 = vst [vmem:[#allocation2 + $0x4] sm:$0xf] %v6086
    %v6088 = vld [vmem:[#allocation2] sm:$0xff]
    %v6089 = vld [vmem:[#allocation6] sm:$0xff]
    %v6090 = vld [vmem:[#allocation6 + $0x8] sm:$0xff]
    %v6091 = vld [vmem:[#allocation6 + $0x10] sm:$0xff]
    %v6092 = vld [vmem:[#allocation6 + $0x18] sm:$0xff]
    %v6093 = vld [vmem:[#allocation6 + $0x20] sm:$0xff]
    %v6094 = vld [vmem:[#allocation6 + $0x28] sm:$0xff]
    %v6095 = vld [vmem:[#allocation6 + $0x30] sm:$0xff]
    %v6096 = vld [vmem:[#allocation6 + $0x38] sm:$0xff]
    %v6097 = vld [vmem:[#allocation6 + $0x40] sm:$0xff]
    %v6098 = vld [vmem:[#allocation6 + $0x48] sm:$0xff]
    %v6099 = vld [vmem:[#allocation6 + $0x50] sm:$0xff]
    %v6100 = vld [vmem:[#allocation6 + $0x58] sm:$0xff]
    %v6101 = vld [vmem:[#allocation6 + $0x60] sm:$0xff]
    %v6102 = vld [vmem:[#allocation6 + $0x68] sm:$0xff]
    %v6103 = vld [vmem:[#allocation6 + $0x70] sm:$0xff]
    %v6104 = vld [vmem:[#allocation6 + $0x78] sm:$0xff]
    %v6105 = vld [vmem:[#allocation6 + $0x80] sm:$0xff]
    %v6106 = vld [vmem:[#allocation6 + $0x88] sm:$0xff]
    %v6107 = vld [vmem:[#allocation6 + $0x90] sm:$0xff]
    %v6108 = vld [vmem:[#allocation6 + $0x98] sm:$0xff]
    %v6109 = vld [vmem:[#allocation6 + $0xa0] sm:$0xff]
    %v6110 = vld [vmem:[#allocation6 + $0xa8] sm:$0xff]
    %v6111 = vld [vmem:[#allocation6 + $0xb0] sm:$0xff]
    %v6112 = vld [vmem:[#allocation6 + $0xb8] sm:$0xff]
    %v6113 = vld [vmem:[#allocation6 + $0xc0] sm:$0xff]
    %v6114 = vld [vmem:[#allocation6 + $0xc8] sm:$0xff]
    %v6115 = vld [vmem:[#allocation6 + $0xd0] sm:$0xff]
    %v6116 = vld [vmem:[#allocation6 + $0xd8] sm:$0xff]
    %v6117 = vld [vmem:[#allocation6 + $0xe0] sm:$0xff]
    %v6118 = vld [vmem:[#allocation6 + $0xe8] sm:$0xff]
    %v6119 = vld [vmem:[#allocation6 + $0xf0] sm:$0xff]
    %v6120 = vld [vmem:[#allocation6 + $0xf8] sm:$0xff]
    %v6121 = vld [vmem:[#allocation6 + $0x100] sm:$0xff]
    %v6122 = vld [vmem:[#allocation6 + $0x108] sm:$0xff]
    %v6123 = vld [vmem:[#allocation6 + $0x110] sm:$0xff]
    %v6124 = vld [vmem:[#allocation6 + $0x118] sm:$0xff]
    %v6125 = vld [vmem:[#allocation6 + $0x120] sm:$0xff]
    %v6126 = vld [vmem:[#allocation6 + $0x128] sm:$0xff]
    %v6127 = vld [vmem:[#allocation6 + $0x130] sm:$0xff]
    %v6128 = vld [vmem:[#allocation6 + $0x138] sm:$0xff]
    %v6129 = vld [vmem:[#allocation6 + $0x140] sm:$0xff]
    %v6130 = vld [vmem:[#allocation6 + $0x148] sm:$0xff]
    %v6131 = vld [vmem:[#allocation6 + $0x150] sm:$0xff]
    %v6132 = vld [vmem:[#allocation6 + $0x158] sm:$0xff]
    %v6133 = vld [vmem:[#allocation6 + $0x160] sm:$0xff]
    %v6134 = vld [vmem:[#allocation6 + $0x168] sm:$0xff]
    %v6135 = vld [vmem:[#allocation6 + $0x170] sm:$0xff]
    %v6136 = vld [vmem:[#allocation6 + $0x178] sm:$0xff]
    %v6137 = vld [vmem:[#allocation6 + $0x180] sm:$0xff]
    %v6138 = vld [vmem:[#allocation6 + $0x188] sm:$0xff]
    %v6139 = vld [vmem:[#allocation6 + $0x190] sm:$0xff]
    %v6140 = vld [vmem:[#allocation6 + $0x198] sm:$0xff]
    %v6141 = vld [vmem:[#allocation6 + $0x1a0] sm:$0xff]
    %v6142 = vld [vmem:[#allocation6 + $0x1a8] sm:$0xff]
    %v6143 = vld [vmem:[#allocation6 + $0x1b0] sm:$0xff]
    %v6144 = vld [vmem:[#allocation6 + $0x1b8] sm:$0xff]
    %v6145 = vld [vmem:[#allocation6 + $0x1c0] sm:$0xff]
    %v6146 = vld [vmem:[#allocation6 + $0x1c8] sm:$0xff]
    %v6147 = vld [vmem:[#allocation6 + $0x1d0] sm:$0xff]
    %v6148 = vld [vmem:[#allocation6 + $0x1d8] sm:$0xff]
    %v6149 = vld [vmem:[#allocation6 + $0x1e0] sm:$0xff]
    %v6150 = vld [vmem:[#allocation6 + $0x1e8] sm:$0xff]
    %v6151 = vld [vmem:[#allocation6 + $0x1f0] sm:$0xff]
    %v6152 = vld [vmem:[#allocation6 + $0x1f8] sm:$0xff]
    %v6154 = vunpack.c.l.b16 %v6088
    %v6155 = vunpack.c.h.b16 %v6088
    %v6156 = vpack.c.b16 %v6154, %v6154
    %v6157 = vpack.c.b16 %v6155, %v6155
    %v6224 = vunpack.c.l.b16 %v6089
    %v6225 = vunpack.c.h.b16 %v6089
    %v6226 = vunpack.c.l.b16 %v6090
    %v6227 = vunpack.c.h.b16 %v6090
    %v6228 = vunpack.c.l.b16 %v6091
    %v6229 = vunpack.c.h.b16 %v6091
    %v6230 = vunpack.c.l.b16 %v6092
    %v6231 = vunpack.c.h.b16 %v6092
    %v6232 = vunpack.c.l.b16 %v6093
    %v6233 = vunpack.c.h.b16 %v6093
    %v6234 = vunpack.c.l.b16 %v6094
    %v6235 = vunpack.c.h.b16 %v6094
    %v6236 = vunpack.c.l.b16 %v6095
    %v6237 = vunpack.c.h.b16 %v6095
    %v6238 = vunpack.c.l.b16 %v6096
    %v6239 = vunpack.c.h.b16 %v6096
    %v6240 = vunpack.c.l.b16 %v6097
    %v6241 = vunpack.c.h.b16 %v6097
    %v6242 = vunpack.c.l.b16 %v6098
    %v6243 = vunpack.c.h.b16 %v6098
    %v6244 = vunpack.c.l.b16 %v6099
    %v6245 = vunpack.c.h.b16 %v6099
    %v6246 = vunpack.c.l.b16 %v6100
    %v6247 = vunpack.c.h.b16 %v6100
    %v6248 = vunpack.c.l.b16 %v6101
    %v6249 = vunpack.c.h.b16 %v6101
    %v6250 = vunpack.c.l.b16 %v6102
    %v6251 = vunpack.c.h.b16 %v6102
    %v6252 = vunpack.c.l.b16 %v6103
    %v6253 = vunpack.c.h.b16 %v6103
    %v6254 = vunpack.c.l.b16 %v6104
    %v6255 = vunpack.c.h.b16 %v6104
    %v6256 = vunpack.c.l.b16 %v6105
    %v6257 = vunpack.c.h.b16 %v6105
    %v6258 = vunpack.c.l.b16 %v6106
    %v6259 = vunpack.c.h.b16 %v6106
    %v6260 = vunpack.c.l.b16 %v6107
    %v6261 = vunpack.c.h.b16 %v6107
    %v6262 = vunpack.c.l.b16 %v6108
    %v6263 = vunpack.c.h.b16 %v6108
    %v6264 = vunpack.c.l.b16 %v6109
    %v6265 = vunpack.c.h.b16 %v6109
    %v6266 = vunpack.c.l.b16 %v6110
    %v6267 = vunpack.c.h.b16 %v6110
    %v6268 = vunpack.c.l.b16 %v6111
    %v6269 = vunpack.c.h.b16 %v6111
    %v6270 = vunpack.c.l.b16 %v6112
    %v6271 = vunpack.c.h.b16 %v6112
    %v6272 = vunpack.c.l.b16 %v6113
    %v6273 = vunpack.c.h.b16 %v6113
    %v6274 = vunpack.c.l.b16 %v6114
    %v6275 = vunpack.c.h.b16 %v6114
    %v6276 = vunpack.c.l.b16 %v6115
    %v6277 = vunpack.c.h.b16 %v6115
    %v6278 = vunpack.c.l.b16 %v6116
    %v6279 = vunpack.c.h.b16 %v6116
    %v6280 = vunpack.c.l.b16 %v6117
    %v6281 = vunpack.c.h.b16 %v6117
    %v6282 = vunpack.c.l.b16 %v6118
    %v6283 = vunpack.c.h.b16 %v6118
    %v6284 = vunpack.c.l.b16 %v6119
    %v6285 = vunpack.c.h.b16 %v6119
    %v6286 = vunpack.c.l.b16 %v6120
    %v6287 = vunpack.c.h.b16 %v6120
    %v6288 = vunpack.c.l.b16 %v6121
    %v6289 = vunpack.c.h.b16 %v6121
    %v6290 = vunpack.c.l.b16 %v6122
    %v6291 = vunpack.c.h.b16 %v6122
    %v6292 = vunpack.c.l.b16 %v6123
    %v6293 = vunpack.c.h.b16 %v6123
    %v6294 = vunpack.c.l.b16 %v6124
    %v6295 = vunpack.c.h.b16 %v6124
    %v6296 = vunpack.c.l.b16 %v6125
    %v6297 = vunpack.c.h.b16 %v6125
    %v6298 = vunpack.c.l.b16 %v6126
    %v6299 = vunpack.c.h.b16 %v6126
    %v6300 = vunpack.c.l.b16 %v6127
    %v6301 = vunpack.c.h.b16 %v6127
    %v6302 = vunpack.c.l.b16 %v6128
    %v6303 = vunpack.c.h.b16 %v6128
    %v6304 = vunpack.c.l.b16 %v6129
    %v6305 = vunpack.c.h.b16 %v6129
    %v6306 = vunpack.c.l.b16 %v6130
    %v6307 = vunpack.c.h.b16 %v6130
    %v6308 = vunpack.c.l.b16 %v6131
    %v6309 = vunpack.c.h.b16 %v6131
    %v6310 = vunpack.c.l.b16 %v6132
    %v6311 = vunpack.c.h.b16 %v6132
    %v6312 = vunpack.c.l.b16 %v6133
    %v6313 = vunpack.c.h.b16 %v6133
    %v6314 = vunpack.c.l.b16 %v6134
    %v6315 = vunpack.c.h.b16 %v6134
    %v6316 = vunpack.c.l.b16 %v6135
    %v6317 = vunpack.c.h.b16 %v6135
    %v6318 = vunpack.c.l.b16 %v6136
    %v6319 = vunpack.c.h.b16 %v6136
    %v6320 = vunpack.c.l.b16 %v6137
    %v6321 = vunpack.c.h.b16 %v6137
    %v6322 = vunpack.c.l.b16 %v6138
    %v6323 = vunpack.c.h.b16 %v6138
    %v6324 = vunpack.c.l.b16 %v6139
    %v6325 = vunpack.c.h.b16 %v6139
    %v6326 = vunpack.c.l.b16 %v6140
    %v6327 = vunpack.c.h.b16 %v6140
    %v6328 = vunpack.c.l.b16 %v6141
    %v6329 = vunpack.c.h.b16 %v6141
    %v6330 = vunpack.c.l.b16 %v6142
    %v6331 = vunpack.c.h.b16 %v6142
    %v6332 = vunpack.c.l.b16 %v6143
    %v6333 = vunpack.c.h.b16 %v6143
    %v6334 = vunpack.c.l.b16 %v6144
    %v6335 = vunpack.c.h.b16 %v6144
    %v6336 = vunpack.c.l.b16 %v6145
    %v6337 = vunpack.c.h.b16 %v6145
    %v6338 = vunpack.c.l.b16 %v6146
    %v6339 = vunpack.c.h.b16 %v6146
    %v6340 = vunpack.c.l.b16 %v6147
    %v6341 = vunpack.c.h.b16 %v6147
    %v6342 = vunpack.c.l.b16 %v6148
    %v6343 = vunpack.c.h.b16 %v6148
    %v6344 = vunpack.c.l.b16 %v6149
    %v6345 = vunpack.c.h.b16 %v6149
    %v6346 = vunpack.c.l.b16 %v6150
    %v6347 = vunpack.c.h.b16 %v6150
    %v6348 = vunpack.c.l.b16 %v6151
    %v6349 = vunpack.c.h.b16 %v6151
    %v6350 = vunpack.c.l.b16 %v6152
    %v6351 = vunpack.c.h.b16 %v6152
    %v6352 = vpack.c.b16 %v6228, %v6224
    %v6353 = vpack.c.b16 %v6229, %v6225
    %v6354 = vpack.c.b16 %v6230, %v6226
    %v6355 = vpack.c.b16 %v6231, %v6227
    %v6356 = vpack.c.b16 %v6236, %v6232
    %v6357 = vpack.c.b16 %v6237, %v6233
    %v6358 = vpack.c.b16 %v6238, %v6234
    %v6359 = vpack.c.b16 %v6239, %v6235
    %v6360 = vpack.c.b16 %v6244, %v6240
    %v6361 = vpack.c.b16 %v6245, %v6241
    %v6362 = vpack.c.b16 %v6246, %v6242
    %v6363 = vpack.c.b16 %v6247, %v6243
    %v6364 = vpack.c.b16 %v6252, %v6248
    %v6365 = vpack.c.b16 %v6253, %v6249
    %v6366 = vpack.c.b16 %v6254, %v6250
    %v6367 = vpack.c.b16 %v6255, %v6251
    %v6368 = vpack.c.b16 %v6260, %v6256
    %v6369 = vpack.c.b16 %v6261, %v6257
    %v6370 = vpack.c.b16 %v6262, %v6258
    %v6371 = vpack.c.b16 %v6263, %v6259
    %v6372 = vpack.c.b16 %v6268, %v6264
    %v6373 = vpack.c.b16 %v6269, %v6265
    %v6374 = vpack.c.b16 %v6270, %v6266
    %v6375 = vpack.c.b16 %v6271, %v6267
    %v6376 = vpack.c.b16 %v6276, %v6272
    %v6377 = vpack.c.b16 %v6277, %v6273
    %v6378 = vpack.c.b16 %v6278, %v6274
    %v6379 = vpack.c.b16 %v6279, %v6275
    %v6380 = vpack.c.b16 %v6284, %v6280
    %v6381 = vpack.c.b16 %v6285, %v6281
    %v6382 = vpack.c.b16 %v6286, %v6282
    %v6383 = vpack.c.b16 %v6287, %v6283
    %v6384 = vpack.c.b16 %v6292, %v6288
    %v6385 = vpack.c.b16 %v6293, %v6289
    %v6386 = vpack.c.b16 %v6294, %v6290
    %v6387 = vpack.c.b16 %v6295, %v6291
    %v6388 = vpack.c.b16 %v6300, %v6296
    %v6389 = vpack.c.b16 %v6301, %v6297
    %v6390 = vpack.c.b16 %v6302, %v6298
    %v6391 = vpack.c.b16 %v6303, %v6299
    %v6392 = vpack.c.b16 %v6308, %v6304
    %v6393 = vpack.c.b16 %v6309, %v6305
    %v6394 = vpack.c.b16 %v6310, %v6306
    %v6395 = vpack.c.b16 %v6311, %v6307
    %v6396 = vpack.c.b16 %v6316, %v6312
    %v6397 = vpack.c.b16 %v6317, %v6313
    %v6398 = vpack.c.b16 %v6318, %v6314
    %v6399 = vpack.c.b16 %v6319, %v6315
    %v6400 = vpack.c.b16 %v6324, %v6320
    %v6401 = vpack.c.b16 %v6325, %v6321
    %v6402 = vpack.c.b16 %v6326, %v6322
    %v6403 = vpack.c.b16 %v6327, %v6323
    %v6404 = vpack.c.b16 %v6332, %v6328
    %v6405 = vpack.c.b16 %v6333, %v6329
    %v6406 = vpack.c.b16 %v6334, %v6330
    %v6407 = vpack.c.b16 %v6335, %v6331
    %v6408 = vpack.c.b16 %v6340, %v6336
    %v6409 = vpack.c.b16 %v6341, %v6337
    %v6410 = vpack.c.b16 %v6342, %v6338
    %v6411 = vpack.c.b16 %v6343, %v6339
    %v6412 = vpack.c.b16 %v6348, %v6344
    %v6413 = vpack.c.b16 %v6349, %v6345
    %v6414 = vpack.c.b16 %v6350, %v6346
    %v6415 = vpack.c.b16 %v6351, %v6347
    %6480 = vmatprep.subr.bf16.mxu0 %v6353
    %6481 = vmatpush1.bf16.msra.mxu0 %v6352
    %6482 = vmatprep.subr.bf16.mxu0 %v6357
    %6483 = vmatpush1.bf16.msra.mxu0 %v6356
    %6484 = vmatprep.subr.bf16.mxu0 %v6361
    %6485 = vmatpush1.bf16.msra.mxu0 %v6360
    %6486 = vmatprep.subr.bf16.mxu0 %v6365
    %6487 = vmatpush1.bf16.msra.mxu0 %v6364
    %6488 = vmatprep.subr.bf16.mxu0 %v6369
    %6489 = vmatpush1.bf16.msra.mxu0 %v6368
    %6490 = vmatprep.subr.bf16.mxu0 %v6373
    %6491 = vmatpush1.bf16.msra.mxu0 %v6372
    %6492 = vmatprep.subr.bf16.mxu0 %v6377
    %6493 = vmatpush1.bf16.msra.mxu0 %v6376
    %6494 = vmatprep.subr.bf16.mxu0 %v6381
    %6495 = vmatpush1.bf16.msra.mxu0 %v6380
    %6496 = vmatprep.subr.bf16.mxu0 %v6385
    %6497 = vmatpush1.bf16.msra.mxu0 %v6384
    %6498 = vmatprep.subr.bf16.mxu0 %v6389
    %6499 = vmatpush1.bf16.msra.mxu0 %v6388
    %6500 = vmatprep.subr.bf16.mxu0 %v6393
    %6501 = vmatpush1.bf16.msra.mxu0 %v6392
    %6502 = vmatprep.subr.bf16.mxu0 %v6397
    %6503 = vmatpush1.bf16.msra.mxu0 %v6396
    %6504 = vmatprep.subr.bf16.mxu0 %v6401
    %6505 = vmatpush1.bf16.msra.mxu0 %v6400
    %6506 = vmatprep.subr.bf16.mxu0 %v6405
    %6507 = vmatpush1.bf16.msra.mxu0 %v6404
    %6508 = vmatprep.subr.bf16.mxu0 %v6409
    %6509 = vmatpush1.bf16.msra.mxu0 %v6408
    %6510 = vmatprep.subr.bf16.mxu0 %v6413
    %6511 = vmatpush1.bf16.msra.mxu0 %v6412
    %6512 = vmatprep.mubr.bf16.mxu0 %v6157
    %6513 = vmatmul.mubr.bf16.gmra.mrb[0].mxu0 %v6156
    %v6514 = vpop.f32.mrb[0].mxu0
    %v6515 = vadd.f32 %v109, %v6514
    %v6516 = vpop.f32.mrb[0].mxu0
    %v6517 = vadd.f32 %v113, %v6516
    %v6518 = vpop.f32.mrb[0].mxu0
    %v6519 = vpop.f32.mrb[0].mxu0
    %6520 = vdwg.mxu0
    %6521 = vmatprep.subr.bf16.mxu0 %v6355
    %6522 = vmatpush1.bf16.msra.mxu0 %v6354
    %6523 = vmatprep.subr.bf16.mxu0 %v6359
    %6524 = vmatpush1.bf16.msra.mxu0 %v6358
    %6525 = vmatprep.subr.bf16.mxu0 %v6363
    %6526 = vmatpush1.bf16.msra.mxu0 %v6362
    %6527 = vmatprep.subr.bf16.mxu0 %v6367
    %6528 = vmatpush1.bf16.msra.mxu0 %v6366
    %6529 = vmatprep.subr.bf16.mxu0 %v6371
    %6530 = vmatpush1.bf16.msra.mxu0 %v6370
    %6531 = vmatprep.subr.bf16.mxu0 %v6375
    %6532 = vmatpush1.bf16.msra.mxu0 %v6374
    %6533 = vmatprep.subr.bf16.mxu0 %v6379
    %6534 = vmatpush1.bf16.msra.mxu0 %v6378
    %6535 = vmatprep.subr.bf16.mxu0 %v6383
    %6536 = vmatpush1.bf16.msra.mxu0 %v6382
    %6537 = vmatprep.subr.bf16.mxu0 %v6387
    %6538 = vmatpush1.bf16.msra.mxu0 %v6386
    %6539 = vmatprep.subr.bf16.mxu0 %v6391
    %6540 = vmatpush1.bf16.msra.mxu0 %v6390
    %6541 = vmatprep.subr.bf16.mxu0 %v6395
    %6542 = vmatpush1.bf16.msra.mxu0 %v6394
    %6543 = vmatprep.subr.bf16.mxu0 %v6399
    %6544 = vmatpush1.bf16.msra.mxu0 %v6398
    %6545 = vmatprep.subr.bf16.mxu0 %v6403
    %6546 = vmatpush1.bf16.msra.mxu0 %v6402
    %6547 = vmatprep.subr.bf16.mxu0 %v6407
    %6548 = vmatpush1.bf16.msra.mxu0 %v6406
    %6549 = vmatprep.subr.bf16.mxu0 %v6411
    %6550 = vmatpush1.bf16.msra.mxu0 %v6410
    %6551 = vmatprep.subr.bf16.mxu0 %v6415
    %6552 = vmatpush1.bf16.msra.mxu0 %v6414
    %6553 = vmatprep.mubr.bf16.mxu0 %v6157
    %6554 = vmatmul.mubr.bf16.gmra.mrb[0].mxu0 %v6156
    %v6555 = vpop.f32.mrb[0].mxu0
    %v6556 = vadd.f32 %v117, %v6555
    %v6557 = vpop.f32.mrb[0].mxu0
    %v6558 = vadd.f32 %v121, %v6557
    %v6559 = vpop.f32.mrb[0].mxu0
    %v6560 = vpop.f32.mrb[0].mxu0
    %6561 = vdwg.mxu0
    %v6562 = vmul.f32 %v6515, 0.5
    %v6563 = vtanh.pop %v6562
    %v6564 = vmul.f32 %v6563, 0.5
    %v6565 = vadd.f32 %v6564, 0.5
    %v6566 = vmul.f32 %v6517, 0.5
    %v6567 = vtanh.pop %v6566
    %v6568 = vmul.f32 %v6567, 0.5
    %v6569 = vadd.f32 %v6568, 0.5
    %v6570 = vtanh.pop %v6556
    %v6571 = vmul.f32 %v6558, 0.5
    %v6572 = vtanh.pop %v6571
    %v6573 = vmul.f32 %v6572, 0.5
    %v6574 = vadd.f32 %v6573, 0.5
    %v6575 = vmul.f32 %v6569, %v5770
    %v6576 = vmul.f32 %v6565, %v6570
    %v6577 = vadd.f32 %v6575, %v6576
    %v6578 = vtanh.pop %v6577
    %v6579 = vmul.f32 %v6574, %v6578
    %v6580 = vld [vmem:[%s6] sm:$0x1]
    %v6582 = vlaneseq
    %v6583 = vshrl.u32 %v6582, 7
    %v6584 = vsub.s32 0, %v6583
    %v6585 = vrot.slane %v6580, %v6584
    %v6587 = vmul.f32 %v6579, %v6585
    %6588 = vadd.xlane.f32.xlu0 %v6587
    %v6589 = vpop.xlane.xlu0 %6588
    %v6590 = vld [vmem:[#allocation3] sm:$0x1]
    %v6592 = vlaneseq
    %v6593 = vshrl.u32 %v6592, 7
    %v6594 = vsub.s32 0, %v6593
    %v6595 = vrot.slane %v6590, %v6594
    %v6597 = vadd.f32 %v6589, %v6595
    %vm6598 = vcmask 7168
    %6599 = vst.msk [vmem:[%s8] sm:$0xff] %vm6598, %v6597
    // Predicated region
    $region42: #{lstm_model_forward.1} parent=1 // pred_check
      _
    $region43: #{lstm_model_forward.1} parent=1 // pred_check_branch
      %6601 = sbr.rel (0) target = $region45
    $region44: #{lstm_model_forward.1} parent=1 // pred_region
      _
    $region45: #{lstm_model_forward.1} parent=1 // pred_fallthru
      _
    // Predicated region
    $region46: #{lstm_model_forward.1} parent=1 // pred_check
      _
    $region47: #{lstm_model_forward.1} parent=1 // pred_check_branch
      %6603 = sbr.rel (0) target = $region49
    $region48: #{lstm_model_forward.1} parent=1 // pred_region
      _
    $region49: #{lstm_model_forward.1} parent=1 // pred_fallthru
      _
    %6604 = vsyncpa [#allocation5], 1
    %6605 = vsyncpa [#allocation7], 1

</llo_original>
